<compile_context>
chip_gen: v7x
topology: tpu7x:2x2x1
jax: 0.10.0
libtpu: 0.0.40
codegen_flags: <defaults>
</compile_context>

<pallas_src>
import jax
import jax.numpy as jnp
from jax.experimental import pallas as pl
from jax.experimental.pallas import tpu as pltpu


# ---------------------------------------------------------------------------
# Fused Pallas kernel: the whole AWSRN-like forward for one batch element.
# ---------------------------------------------------------------------------
def _fused_awsrn_kernel(x_ref, w_ref, b_ref, o_ref, pad_scr, feat_scr):
    # x_ref   : (1, H, W, Cin)          input image (one batch element)
    # w_ref   : (L, 9*C, C)   bf16      packed im2col weights, L = 2 + 2*n_blocks
    #                                   (head cin and tail cout zero-padded to C)
    # b_ref   : (L, 1, C)     f32       packed biases (tail padded with zeros)
    # o_ref   : (1, H, W, Ct)           tail-conv output (pre pixel-shuffle)
    # pad_scr : (H+2, W+2, C) f32       zero-padded activation of current layer
    # feat_scr: (H, W, C)     f32       residual-branch anchor ("feat")
    H, W, C = feat_scr.shape
    n_layers = w_ref.shape[0]
    n_blocks = (n_layers - 2) // 2
    cin = x_ref.shape[-1]
    cout = o_ref.shape[-1]

    # Zero the padded activation buffer (border + unused input channels), then
    # drop the input image into its interior.  Padding lives purely in VMEM.
    pad_scr[...] = jnp.zeros_like(pad_scr)
    pad_scr[1:H + 1, 1:W + 1, 0:cin] = x_ref[0]

    def conv(layer):
        # im2col: the 9 shifted (H, W, C) views of the padded activation are
        # fused along the channel/lane axis -> a single (H*W, 9*C) operand, so
        # the whole 3x3 conv is one K = 9*C MXU matmul (f32 accumulation).
        cols = []
        for dy in range(3):
            for dx in range(3):
                cols.append(pad_scr[dy:dy + H, dx:dx + W, :].reshape(H * W, C))
        patches = jnp.concatenate(cols, axis=-1).astype(jnp.bfloat16)
        acc = jnp.dot(patches, w_ref[layer],
                      preferred_element_type=jnp.float32)       # (H*W, C) f32
        return acc + b_ref[layer]                                # + (1, C) bias

    def to_next_layer(val):                                      # (H*W, C) f32
        pad_scr[1:H + 1, 1:W + 1, :] = val.reshape(H, W, C)

    # -- head ----------------------------------------------------------------
    h = conv(0)
    feat_scr[...] = h.reshape(H, W, C)
    to_next_layer(h)

    # -- residual body blocks (conv-relu-conv + skip), fully fused ------------
    for k in range(n_blocks):
        y = jnp.maximum(conv(2 * k + 1), 0.0)     # conv + bias + ReLU
        to_next_layer(y)
        y = conv(2 * k + 2)                       # conv + bias
        feat = feat_scr[...] + y.reshape(H, W, C)     # fused residual skip
        feat_scr[...] = feat
        pad_scr[1:H + 1, 1:W + 1, :] = feat

    # -- tail ----------------------------------------------------------------
    t = conv(n_layers - 1)                        # (H*W, C); cols >= cout are 0
    o_ref[...] = t[:, :cout].reshape(1, H, W, cout).astype(o_ref.dtype)


def fused_forward(x_nhwc, w_all, b_all, cout_tail):
    """Run the fused network.  x:(B,H,W,Cin), w_all:(L,9*C,C) bf16, b_all:(L,1,C)."""
    B, H, W, Cin = x_nhwc.shape
    L, _, C = w_all.shape
    return pl.pallas_call(
        _fused_awsrn_kernel,
        out_shape=jax.ShapeDtypeStruct((B, H, W, cout_tail), jnp.float32),
        grid_spec=pltpu.PrefetchScalarGridSpec(
            num_scalar_prefetch=0,
            grid=(B,),
            in_specs=[
                pl.BlockSpec((1, H, W, Cin), lambda b: (b, 0, 0, 0)),
                pl.BlockSpec((L, 9 * C, C), lambda b: (0, 0, 0)),   # resident
                pl.BlockSpec((L, 1, C), lambda b: (0, 0, 0)),       # resident
            ],
            out_specs=pl.BlockSpec((1, H, W, cout_tail), lambda b: (b, 0, 0, 0)),
            scratch_shapes=[
                pltpu.VMEM((H + 2, W + 2, C), jnp.float32),   # padded activation
                pltpu.VMEM((H, W, C), jnp.float32),           # residual anchor
            ],
        ),
        compiler_params=pltpu.CompilerParams(
            dimension_semantics=("parallel",)),
    )(x_nhwc, w_all, b_all)


# ---------------------------------------------------------------------------
# Parameter packing / plain-JAX glue
# ---------------------------------------------------------------------------
def _pack_layers(params):
    """Stack all conv weights as (L, 9*nf, nf) bf16 (im2col layout, zero-padded
    on head cin / tail cout) and biases as (L, 1, nf) f32."""
    nf = params["head"][0].shape[-1]
    layers = [params["head"]]
    for c1, c2 in params["body"]:
        layers += [c1, c2]
    layers.append(params["tail"])
    ws, bs = [], []
    for w, b in layers:
        kh, kw, cin, cout = w.shape
        wp = jnp.zeros((kh, kw, nf, nf), jnp.float32).at[:, :, :cin, :cout].set(w)
        ws.append(wp.reshape(kh * kw * nf, nf))
        bs.append(jnp.zeros((nf,), jnp.float32).at[:cout].set(b))
    w_all = jnp.stack(ws, 0).astype(jnp.bfloat16)   # (L, 9*nf, nf)
    b_all = jnp.stack(bs, 0)[:, None, :]            # (L, 1, nf)
    return w_all, b_all


def pixel_shuffle_nhwc(x, r):
    """PyTorch-semantics pixel shuffle on NHWC: (B,H,W,C*r*r) -> (B,H*r,W*r,C)."""
    B, H, W, Crr = x.shape
    C = Crr // (r * r)
    x = x.reshape(B, H, W, C, r, r)
    x = jnp.transpose(x, (0, 1, 4, 2, 5, 3))
    return x.reshape(B, H * r, W * r, C)


def init_params(key, n_colors=3, nf=16, n_blocks=2, scale=2):
    """Deterministic (seeded) parameter initialization; shapes follow the net."""
    def conv_init(k, cin, cout):
        w = jax.random.normal(k, (3, 3, cin, cout), jnp.float32)
        w = w / jnp.sqrt(float(cin * 9))
        return w, jnp.zeros((cout,), jnp.float32)

    n_convs = 1 + 2 * n_blocks + 1
    keys = jax.random.split(key, n_convs)
    params = {"head": conv_init(keys[0], n_colors, nf), "body": []}
    ki = 1
    for _ in range(n_blocks):
        c1 = conv_init(keys[ki], nf, nf)
        c2 = conv_init(keys[ki + 1], nf, nf)
        params["body"].append((c1, c2))
        ki += 2
    params["tail"] = conv_init(keys[ki], nf, n_colors * scale * scale)
    params["scale"] = scale
    return params


class PallasSRModel:
    """JAX analogue of the PyTorch `Model` wrapper (default dispatch path:
    self_ensemble=False, chop=False, so forward(x, idx_scale) == model(x))."""

    def __init__(self, params):
        self.params = params
        self.scale = [params["scale"]]
        self.idx_scale = 0
        self.nf = params["head"][0].shape[-1]
        self.cout_tail = params["tail"][0].shape[-1]
        self.w_all, self.b_all = _pack_layers(params)
        # TODO(synk): forward_chop / forward_x8 / checkpoint load-save paths of
        # the wrapper are config-dependent dispatch and are not exercised here.
        # TODO(synk): at real SR resolutions a spatially-tiled (halo'd grid over
        # H/W) variant would be needed to stay inside v7x's 64 MiB VMEM; at the
        # test shapes the fused whole-image kernel fits on every generation.

    def __call__(self, x_nchw, idx_scale=0):
        self.idx_scale = idx_scale
        x_nhwc = jnp.transpose(x_nchw, (0, 2, 3, 1))          # NCHW -> NHWC
        t = fused_forward(x_nhwc, self.w_all, self.b_all, self.cout_tail)
        y_nhwc = pixel_shuffle_nhwc(t, self.params["scale"])
        return jnp.transpose(y_nhwc, (0, 3, 1, 2))            # NHWC -> NCHW


# ---------------------------------------------------------------------------
# Pure-JAX reference (lax.conv, same bf16-operand / f32-accumulate recipe).
# ---------------------------------------------------------------------------
def _conv3x3_ref(x_nhwc, w, b, relu=False):
    y = jax.lax.conv_general_dilated(
        x_nhwc.astype(jnp.bfloat16), w.astype(jnp.bfloat16),
        window_strides=(1, 1), padding="SAME",
        dimension_numbers=("NHWC", "HWIO", "NHWC"),
        preferred_element_type=jnp.float32)
    y = y + b
    return jnp.maximum(y, 0.0) if relu else y


def _model_ref(params, x_nchw):
    x = jnp.transpose(x_nchw, (0, 2, 3, 1))
    h = _conv3x3_ref(x, *params["head"])
    feat = h
    for (w1, b1), (w2, b2) in params["body"]:
        y = _conv3x3_ref(feat, w1, b1, relu=True)
        y = _conv3x3_ref(y, w2, b2, relu=False)
        feat = feat + y
    t = _conv3x3_ref(feat, *params["tail"])
    y = pixel_shuffle_nhwc(t, params["scale"])
    return jnp.transpose(y, (0, 3, 1, 2))


if __name__ == "__main__":
    key = jax.random.PRNGKey(0)
    kx, kp = jax.random.split(key)

    B, C, H, W = 2, 3, 16, 16                     # small NCHW RGB input
    x = jax.random.normal(kx, (B, C, H, W), jnp.float32)

    params = init_params(kp, n_colors=C, nf=16, n_blocks=2, scale=2)
    model = PallasSRModel(params)

    out = model(x, idx_scale=0)
    out = jax.block_until_ready(out)

    assert out.shape == (B, C, H * 2, W * 2), out.shape

    ref = jax.block_until_ready(_model_ref(params, x))
    # Both paths use bf16 matmul operands with f32 accumulation; residual
    # divergence comes only from accumulation order / bf16 rounding-boundary
    # flips (typically ~1e-4), so 1e-2 is a comfortable bound.
    assert jnp.allclose(out, ref, rtol=1e-2, atol=1e-2), "mismatch vs reference"

    print("KERNEL_OK")
</pallas_src>

<mosaic_0001>
module attributes {stable_mosaic.version = 11 : i64} {
  func.func @_fused_awsrn_kernel(%arg0: i32, %arg1: memref<1x16x16x3xf32, #tpu.memory_space<vmem>>, %arg2: memref<6x144x16xbf16, #tpu.memory_space<vmem>>, %arg3: memref<6x1x16xf32, #tpu.memory_space<vmem>>, %arg4: memref<1x16x16x12xf32, #tpu.memory_space<vmem>>, %arg5: memref<18x18x16xf32, #tpu.memory_space<vmem>>, %arg6: memref<16x16x16xf32, #tpu.memory_space<vmem>>) attributes {dimension_semantics = [#tpu.dimension_semantics<parallel>], iteration_bounds = array<i64: 2>, scalar_prefetch = 0 : i64, scratch_operands = 2 : i64, tpu.core_type = #tpu.core_type<tc>, window_params = [{transform_indices = @transform_0, window_bounds = array<i64: 1, 16, 16, 3>}, {pipeline_mode = #tpu.pipeline_mode<synchronous>, transform_indices = @transform_1, window_bounds = array<i64: 6, 144, 16>}, {pipeline_mode = #tpu.pipeline_mode<synchronous>, transform_indices = @transform_2, window_bounds = array<i64: 6, 1, 16>}, {transform_indices = @transform_3, window_bounds = array<i64: 1, 16, 16, 12>}]} {
    %cst = arith.constant 0.000000e+00 : f32
    %0 = vector.broadcast %cst : f32 to vector<18x18x16xf32>
    %c0 = arith.constant 0 : index
    %c0_0 = arith.constant 0 : index
    %c0_1 = arith.constant 0 : index
    %1 = vector.load %arg5[%c0, %c0_0, %c0_1] : memref<18x18x16xf32, #tpu.memory_space<vmem>>, vector<18x18x16xf32>
    tpu.vector_store %arg5[%c0, %c0_0, %c0_1], %0 {strides = array<i32>} : memref<18x18x16xf32, #tpu.memory_space<vmem>>, vector<18x18x16xf32>,
    %c0_2 = arith.constant 0 : index
    %c0_3 = arith.constant 0 : index
    %c0_4 = arith.constant 0 : index
    %c0_5 = arith.constant 0 : index
    %2 = vector.load %arg1[%c0_2, %c0_3, %c0_4, %c0_5] : memref<1x16x16x3xf32, #tpu.memory_space<vmem>>, vector<1x16x16x3xf32>
    %3 = vector.shape_cast %2 : vector<1x16x16x3xf32> to vector<16x16x3xf32>
    %c1 = arith.constant 1 : index
    %c1_6 = arith.constant 1 : index
    %c0_7 = arith.constant 0 : index
    %4 = vector.load %arg5[%c1, %c1_6, %c0_7] : memref<18x18x16xf32, #tpu.memory_space<vmem>>, vector<16x16x3xf32>
    tpu.vector_store %arg5[%c1, %c1_6, %c0_7], %3 {strides = array<i32>} : memref<18x18x16xf32, #tpu.memory_space<vmem>>, vector<16x16x3xf32>,
    %c0_8 = arith.constant 0 : index
    %c0_9 = arith.constant 0 : index
    %c0_10 = arith.constant 0 : index
    %5 = vector.load %arg5[%c0_8, %c0_9, %c0_10] : memref<18x18x16xf32, #tpu.memory_space<vmem>>, vector<16x16x16xf32>
    %6 = vector.shape_cast %5 : vector<16x16x16xf32> to vector<256x16xf32>
    %c0_11 = arith.constant 0 : index
    %c1_12 = arith.constant 1 : index
    %c0_13 = arith.constant 0 : index
    %7 = vector.load %arg5[%c0_11, %c1_12, %c0_13] : memref<18x18x16xf32, #tpu.memory_space<vmem>>, vector<16x16x16xf32>
    %8 = vector.shape_cast %7 : vector<16x16x16xf32> to vector<256x16xf32>
    %c0_14 = arith.constant 0 : index
    %c2 = arith.constant 2 : index
    %c0_15 = arith.constant 0 : index
    %9 = vector.load %arg5[%c0_14, %c2, %c0_15] : memref<18x18x16xf32, #tpu.memory_space<vmem>>, vector<16x16x16xf32>
    %10 = vector.shape_cast %9 : vector<16x16x16xf32> to vector<256x16xf32>
    %c1_16 = arith.constant 1 : index
    %c0_17 = arith.constant 0 : index
    %c0_18 = arith.constant 0 : index
    %11 = vector.load %arg5[%c1_16, %c0_17, %c0_18] : memref<18x18x16xf32, #tpu.memory_space<vmem>>, vector<16x16x16xf32>
    %12 = vector.shape_cast %11 : vector<16x16x16xf32> to vector<256x16xf32>
    %c1_19 = arith.constant 1 : index
    %c1_20 = arith.constant 1 : index
    %c0_21 = arith.constant 0 : index
    %13 = vector.load %arg5[%c1_19, %c1_20, %c0_21] : memref<18x18x16xf32, #tpu.memory_space<vmem>>, vector<16x16x16xf32>
    %14 = vector.shape_cast %13 : vector<16x16x16xf32> to vector<256x16xf32>
    %c1_22 = arith.constant 1 : index
    %c2_23 = arith.constant 2 : index
    %c0_24 = arith.constant 0 : index
    %15 = vector.load %arg5[%c1_22, %c2_23, %c0_24] : memref<18x18x16xf32, #tpu.memory_space<vmem>>, vector<16x16x16xf32>
    %16 = vector.shape_cast %15 : vector<16x16x16xf32> to vector<256x16xf32>
    %c2_25 = arith.constant 2 : index
    %c0_26 = arith.constant 0 : index
    %c0_27 = arith.constant 0 : index
    %17 = vector.load %arg5[%c2_25, %c0_26, %c0_27] : memref<18x18x16xf32, #tpu.memory_space<vmem>>, vector<16x16x16xf32>
    %18 = vector.shape_cast %17 : vector<16x16x16xf32> to vector<256x16xf32>
    %c2_28 = arith.constant 2 : index
    %c1_29 = arith.constant 1 : index
    %c0_30 = arith.constant 0 : index
    %19 = vector.load %arg5[%c2_28, %c1_29, %c0_30] : memref<18x18x16xf32, #tpu.memory_space<vmem>>, vector<16x16x16xf32>
    %20 = vector.shape_cast %19 : vector<16x16x16xf32> to vector<256x16xf32>
    %c2_31 = arith.constant 2 : index
    %c2_32 = arith.constant 2 : index
    %c0_33 = arith.constant 0 : index
    %21 = vector.load %arg5[%c2_31, %c2_32, %c0_33] : memref<18x18x16xf32, #tpu.memory_space<vmem>>, vector<16x16x16xf32>
    %22 = vector.shape_cast %21 : vector<16x16x16xf32> to vector<256x16xf32>
    %23 = tpu.concatenate %6, %8, %10, %12, %14, %16, %18, %20, %22 in 1 : vector<256x16xf32>, vector<256x16xf32>, vector<256x16xf32>, vector<256x16xf32>, vector<256x16xf32>, vector<256x16xf32>, vector<256x16xf32>, vector<256x16xf32>, vector<256x16xf32> -> vector<256x144xf32>
    %24 = arith.truncf %23 : vector<256x144xf32> to vector<256x144xbf16>
    %c0_34 = arith.constant 0 : index
    %c0_35 = arith.constant 0 : index
    %c0_36 = arith.constant 0 : index
    %25 = vector.load %arg2[%c0_34, %c0_35, %c0_36] : memref<6x144x16xbf16, #tpu.memory_space<vmem>>, vector<1x144x16xbf16>
    %26 = vector.shape_cast %25 : vector<1x144x16xbf16> to vector<144x16xbf16>
    %cst_37 = arith.constant dense<0.000000e+00> : vector<256x16xf32>
    %27 = tpu.matmul %24, %26, %cst_37 {dimension_numbers = #tpu.dot_dimension_numbers<[1], [0], [0], [1], [0, 0, 1, 1], [], []>} : vector<256x144xbf16>, vector<144x16xbf16>, vector<256x16xf32> -> vector<256x16xf32>
    %c0_38 = arith.constant 0 : index
    %c0_39 = arith.constant 0 : index
    %c0_40 = arith.constant 0 : index
    %28 = vector.load %arg3[%c0_38, %c0_39, %c0_40] : memref<6x1x16xf32, #tpu.memory_space<vmem>>, vector<1x1x16xf32>
    %29 = vector.shape_cast %28 : vector<1x1x16xf32> to vector<1x16xf32>
    %30 = vector.broadcast %29 : vector<1x16xf32> to vector<256x16xf32>
    %31 = arith.addf %27, %30 : vector<256x16xf32>
    %32 = vector.shape_cast %31 : vector<256x16xf32> to vector<16x16x16xf32>
    %c0_41 = arith.constant 0 : index
    %c0_42 = arith.constant 0 : index
    %c0_43 = arith.constant 0 : index
    %33 = vector.load %arg6[%c0_41, %c0_42, %c0_43] : memref<16x16x16xf32, #tpu.memory_space<vmem>>, vector<16x16x16xf32>
    tpu.vector_store %arg6[%c0_41, %c0_42, %c0_43], %32 {strides = array<i32>} : memref<16x16x16xf32, #tpu.memory_space<vmem>>, vector<16x16x16xf32>,
    %34 = vector.shape_cast %31 : vector<256x16xf32> to vector<16x16x16xf32>
    %c1_44 = arith.constant 1 : index
    %c1_45 = arith.constant 1 : index
    %c0_46 = arith.constant 0 : index
    %35 = vector.load %arg5[%c1_44, %c1_45, %c0_46] : memref<18x18x16xf32, #tpu.memory_space<vmem>>, vector<16x16x16xf32>
    tpu.vector_store %arg5[%c1_44, %c1_45, %c0_46], %34 {strides = array<i32>} : memref<18x18x16xf32, #tpu.memory_space<vmem>>, vector<16x16x16xf32>,
    %c0_47 = arith.constant 0 : index
    %c0_48 = arith.constant 0 : index
    %c0_49 = arith.constant 0 : index
    %36 = vector.load %arg5[%c0_47, %c0_48, %c0_49] : memref<18x18x16xf32, #tpu.memory_space<vmem>>, vector<16x16x16xf32>
    %37 = vector.shape_cast %36 : vector<16x16x16xf32> to vector<256x16xf32>
    %c0_50 = arith.constant 0 : index
    %c1_51 = arith.constant 1 : index
    %c0_52 = arith.constant 0 : index
    %38 = vector.load %arg5[%c0_50, %c1_51, %c0_52] : memref<18x18x16xf32, #tpu.memory_space<vmem>>, vector<16x16x16xf32>
    %39 = vector.shape_cast %38 : vector<16x16x16xf32> to vector<256x16xf32>
    %c0_53 = arith.constant 0 : index
    %c2_54 = arith.constant 2 : index
    %c0_55 = arith.constant 0 : index
    %40 = vector.load %arg5[%c0_53, %c2_54, %c0_55] : memref<18x18x16xf32, #tpu.memory_space<vmem>>, vector<16x16x16xf32>
    %41 = vector.shape_cast %40 : vector<16x16x16xf32> to vector<256x16xf32>
    %c1_56 = arith.constant 1 : index
    %c0_57 = arith.constant 0 : index
    %c0_58 = arith.constant 0 : index
    %42 = vector.load %arg5[%c1_56, %c0_57, %c0_58] : memref<18x18x16xf32, #tpu.memory_space<vmem>>, vector<16x16x16xf32>
    %43 = vector.shape_cast %42 : vector<16x16x16xf32> to vector<256x16xf32>
    %c1_59 = arith.constant 1 : index
    %c1_60 = arith.constant 1 : index
    %c0_61 = arith.constant 0 : index
    %44 = vector.load %arg5[%c1_59, %c1_60, %c0_61] : memref<18x18x16xf32, #tpu.memory_space<vmem>>, vector<16x16x16xf32>
    %45 = vector.shape_cast %44 : vector<16x16x16xf32> to vector<256x16xf32>
    %c1_62 = arith.constant 1 : index
    %c2_63 = arith.constant 2 : index
    %c0_64 = arith.constant 0 : index
    %46 = vector.load %arg5[%c1_62, %c2_63, %c0_64] : memref<18x18x16xf32, #tpu.memory_space<vmem>>, vector<16x16x16xf32>
    %47 = vector.shape_cast %46 : vector<16x16x16xf32> to vector<256x16xf32>
    %c2_65 = arith.constant 2 : index
    %c0_66 = arith.constant 0 : index
    %c0_67 = arith.constant 0 : index
    %48 = vector.load %arg5[%c2_65, %c0_66, %c0_67] : memref<18x18x16xf32, #tpu.memory_space<vmem>>, vector<16x16x16xf32>
    %49 = vector.shape_cast %48 : vector<16x16x16xf32> to vector<256x16xf32>
    %c2_68 = arith.constant 2 : index
    %c1_69 = arith.constant 1 : index
    %c0_70 = arith.constant 0 : index
    %50 = vector.load %arg5[%c2_68, %c1_69, %c0_70] : memref<18x18x16xf32, #tpu.memory_space<vmem>>, vector<16x16x16xf32>
    %51 = vector.shape_cast %50 : vector<16x16x16xf32> to vector<256x16xf32>
    %c2_71 = arith.constant 2 : index
    %c2_72 = arith.constant 2 : index
    %c0_73 = arith.constant 0 : index
    %52 = vector.load %arg5[%c2_71, %c2_72, %c0_73] : memref<18x18x16xf32, #tpu.memory_space<vmem>>, vector<16x16x16xf32>
    %53 = vector.shape_cast %52 : vector<16x16x16xf32> to vector<256x16xf32>
    %54 = tpu.concatenate %37, %39, %41, %43, %45, %47, %49, %51, %53 in 1 : vector<256x16xf32>, vector<256x16xf32>, vector<256x16xf32>, vector<256x16xf32>, vector<256x16xf32>, vector<256x16xf32>, vector<256x16xf32>, vector<256x16xf32>, vector<256x16xf32> -> vector<256x144xf32>
    %55 = arith.truncf %54 : vector<256x144xf32> to vector<256x144xbf16>
    %c1_74 = arith.constant 1 : index
    %c0_75 = arith.constant 0 : index
    %c0_76 = arith.constant 0 : index
    %56 = vector.load %arg2[%c1_74, %c0_75, %c0_76] : memref<6x144x16xbf16, #tpu.memory_space<vmem>>, vector<1x144x16xbf16>
    %57 = vector.shape_cast %56 : vector<1x144x16xbf16> to vector<144x16xbf16>
    %cst_77 = arith.constant dense<0.000000e+00> : vector<256x16xf32>
    %58 = tpu.matmul %55, %57, %cst_77 {dimension_numbers = #tpu.dot_dimension_numbers<[1], [0], [0], [1], [0, 0, 1, 1], [], []>} : vector<256x144xbf16>, vector<144x16xbf16>, vector<256x16xf32> -> vector<256x16xf32>
    %c1_78 = arith.constant 1 : index
    %c0_79 = arith.constant 0 : index
    %c0_80 = arith.constant 0 : index
    %59 = vector.load %arg3[%c1_78, %c0_79, %c0_80] : memref<6x1x16xf32, #tpu.memory_space<vmem>>, vector<1x1x16xf32>
    %60 = vector.shape_cast %59 : vector<1x1x16xf32> to vector<1x16xf32>
    %61 = vector.broadcast %60 : vector<1x16xf32> to vector<256x16xf32>
    %62 = arith.addf %58, %61 : vector<256x16xf32>
    %cst_81 = arith.constant 0.000000e+00 : f32
    %63 = vector.broadcast %cst_81 : f32 to vector<256x16xf32>
    %64 = arith.maximumf %62, %63 : vector<256x16xf32>
    %65 = vector.shape_cast %64 : vector<256x16xf32> to vector<16x16x16xf32>
    %c1_82 = arith.constant 1 : index
    %c1_83 = arith.constant 1 : index
    %c0_84 = arith.constant 0 : index
    %66 = vector.load %arg5[%c1_82, %c1_83, %c0_84] : memref<18x18x16xf32, #tpu.memory_space<vmem>>, vector<16x16x16xf32>
    tpu.vector_store %arg5[%c1_82, %c1_83, %c0_84], %65 {strides = array<i32>} : memref<18x18x16xf32, #tpu.memory_space<vmem>>, vector<16x16x16xf32>,
    %c0_85 = arith.constant 0 : index
    %c0_86 = arith.constant 0 : index
    %c0_87 = arith.constant 0 : index
    %67 = vector.load %arg5[%c0_85, %c0_86, %c0_87] : memref<18x18x16xf32, #tpu.memory_space<vmem>>, vector<16x16x16xf32>
    %68 = vector.shape_cast %67 : vector<16x16x16xf32> to vector<256x16xf32>
    %c0_88 = arith.constant 0 : index
    %c1_89 = arith.constant 1 : index
    %c0_90 = arith.constant 0 : index
    %69 = vector.load %arg5[%c0_88, %c1_89, %c0_90] : memref<18x18x16xf32, #tpu.memory_space<vmem>>, vector<16x16x16xf32>
    %70 = vector.shape_cast %69 : vector<16x16x16xf32> to vector<256x16xf32>
    %c0_91 = arith.constant 0 : index
    %c2_92 = arith.constant 2 : index
    %c0_93 = arith.constant 0 : index
    %71 = vector.load %arg5[%c0_91, %c2_92, %c0_93] : memref<18x18x16xf32, #tpu.memory_space<vmem>>, vector<16x16x16xf32>
    %72 = vector.shape_cast %71 : vector<16x16x16xf32> to vector<256x16xf32>
    %c1_94 = arith.constant 1 : index
    %c0_95 = arith.constant 0 : index
    %c0_96 = arith.constant 0 : index
    %73 = vector.load %arg5[%c1_94, %c0_95, %c0_96] : memref<18x18x16xf32, #tpu.memory_space<vmem>>, vector<16x16x16xf32>
    %74 = vector.shape_cast %73 : vector<16x16x16xf32> to vector<256x16xf32>
    %c1_97 = arith.constant 1 : index
    %c1_98 = arith.constant 1 : index
    %c0_99 = arith.constant 0 : index
    %75 = vector.load %arg5[%c1_97, %c1_98, %c0_99] : memref<18x18x16xf32, #tpu.memory_space<vmem>>, vector<16x16x16xf32>
    %76 = vector.shape_cast %75 : vector<16x16x16xf32> to vector<256x16xf32>
    %c1_100 = arith.constant 1 : index
    %c2_101 = arith.constant 2 : index
    %c0_102 = arith.constant 0 : index
    %77 = vector.load %arg5[%c1_100, %c2_101, %c0_102] : memref<18x18x16xf32, #tpu.memory_space<vmem>>, vector<16x16x16xf32>
    %78 = vector.shape_cast %77 : vector<16x16x16xf32> to vector<256x16xf32>
    %c2_103 = arith.constant 2 : index
    %c0_104 = arith.constant 0 : index
    %c0_105 = arith.constant 0 : index
    %79 = vector.load %arg5[%c2_103, %c0_104, %c0_105] : memref<18x18x16xf32, #tpu.memory_space<vmem>>, vector<16x16x16xf32>
    %80 = vector.shape_cast %79 : vector<16x16x16xf32> to vector<256x16xf32>
    %c2_106 = arith.constant 2 : index
    %c1_107 = arith.constant 1 : index
    %c0_108 = arith.constant 0 : index
    %81 = vector.load %arg5[%c2_106, %c1_107, %c0_108] : memref<18x18x16xf32, #tpu.memory_space<vmem>>, vector<16x16x16xf32>
    %82 = vector.shape_cast %81 : vector<16x16x16xf32> to vector<256x16xf32>
    %c2_109 = arith.constant 2 : index
    %c2_110 = arith.constant 2 : index
    %c0_111 = arith.constant 0 : index
    %83 = vector.load %arg5[%c2_109, %c2_110, %c0_111] : memref<18x18x16xf32, #tpu.memory_space<vmem>>, vector<16x16x16xf32>
    %84 = vector.shape_cast %83 : vector<16x16x16xf32> to vector<256x16xf32>
    %85 = tpu.concatenate %68, %70, %72, %74, %76, %78, %80, %82, %84 in 1 : vector<256x16xf32>, vector<256x16xf32>, vector<256x16xf32>, vector<256x16xf32>, vector<256x16xf32>, vector<256x16xf32>, vector<256x16xf32>, vector<256x16xf32>, vector<256x16xf32> -> vector<256x144xf32>
    %86 = arith.truncf %85 : vector<256x144xf32> to vector<256x144xbf16>
    %c2_112 = arith.constant 2 : index
    %c0_113 = arith.constant 0 : index
    %c0_114 = arith.constant 0 : index
    %87 = vector.load %arg2[%c2_112, %c0_113, %c0_114] : memref<6x144x16xbf16, #tpu.memory_space<vmem>>, vector<1x144x16xbf16>
    %88 = vector.shape_cast %87 : vector<1x144x16xbf16> to vector<144x16xbf16>
    %cst_115 = arith.constant dense<0.000000e+00> : vector<256x16xf32>
    %89 = tpu.matmul %86, %88, %cst_115 {dimension_numbers = #tpu.dot_dimension_numbers<[1], [0], [0], [1], [0, 0, 1, 1], [], []>} : vector<256x144xbf16>, vector<144x16xbf16>, vector<256x16xf32> -> vector<256x16xf32>
    %c2_116 = arith.constant 2 : index
    %c0_117 = arith.constant 0 : index
    %c0_118 = arith.constant 0 : index
    %90 = vector.load %arg3[%c2_116, %c0_117, %c0_118] : memref<6x1x16xf32, #tpu.memory_space<vmem>>, vector<1x1x16xf32>
    %91 = vector.shape_cast %90 : vector<1x1x16xf32> to vector<1x16xf32>
    %92 = vector.broadcast %91 : vector<1x16xf32> to vector<256x16xf32>
    %93 = arith.addf %89, %92 : vector<256x16xf32>
    %c0_119 = arith.constant 0 : index
    %c0_120 = arith.constant 0 : index
    %c0_121 = arith.constant 0 : index
    %94 = vector.load %arg6[%c0_119, %c0_120, %c0_121] : memref<16x16x16xf32, #tpu.memory_space<vmem>>, vector<16x16x16xf32>
    %95 = vector.shape_cast %93 : vector<256x16xf32> to vector<16x16x16xf32>
    %96 = arith.addf %94, %95 : vector<16x16x16xf32>
    %c0_122 = arith.constant 0 : index
    %c0_123 = arith.constant 0 : index
    %c0_124 = arith.constant 0 : index
    %97 = vector.load %arg6[%c0_122, %c0_123, %c0_124] : memref<16x16x16xf32, #tpu.memory_space<vmem>>, vector<16x16x16xf32>
    tpu.vector_store %arg6[%c0_122, %c0_123, %c0_124], %96 {strides = array<i32>} : memref<16x16x16xf32, #tpu.memory_space<vmem>>, vector<16x16x16xf32>,
    %c1_125 = arith.constant 1 : index
    %c1_126 = arith.constant 1 : index
    %c0_127 = arith.constant 0 : index
    %98 = vector.load %arg5[%c1_125, %c1_126, %c0_127] : memref<18x18x16xf32, #tpu.memory_space<vmem>>, vector<16x16x16xf32>
    tpu.vector_store %arg5[%c1_125, %c1_126, %c0_127], %96 {strides = array<i32>} : memref<18x18x16xf32, #tpu.memory_space<vmem>>, vector<16x16x16xf32>,
    %c0_128 = arith.constant 0 : index
    %c0_129 = arith.constant 0 : index
    %c0_130 = arith.constant 0 : index
    %99 = vector.load %arg5[%c0_128, %c0_129, %c0_130] : memref<18x18x16xf32, #tpu.memory_space<vmem>>, vector<16x16x16xf32>
    %100 = vector.shape_cast %99 : vector<16x16x16xf32> to vector<256x16xf32>
    %c0_131 = arith.constant 0 : index
    %c1_132 = arith.constant 1 : index
    %c0_133 = arith.constant 0 : index
    %101 = vector.load %arg5[%c0_131, %c1_132, %c0_133] : memref<18x18x16xf32, #tpu.memory_space<vmem>>, vector<16x16x16xf32>
    %102 = vector.shape_cast %101 : vector<16x16x16xf32> to vector<256x16xf32>
    %c0_134 = arith.constant 0 : index
    %c2_135 = arith.constant 2 : index
    %c0_136 = arith.constant 0 : index
    %103 = vector.load %arg5[%c0_134, %c2_135, %c0_136] : memref<18x18x16xf32, #tpu.memory_space<vmem>>, vector<16x16x16xf32>
    %104 = vector.shape_cast %103 : vector<16x16x16xf32> to vector<256x16xf32>
    %c1_137 = arith.constant 1 : index
    %c0_138 = arith.constant 0 : index
    %c0_139 = arith.constant 0 : index
    %105 = vector.load %arg5[%c1_137, %c0_138, %c0_139] : memref<18x18x16xf32, #tpu.memory_space<vmem>>, vector<16x16x16xf32>
    %106 = vector.shape_cast %105 : vector<16x16x16xf32> to vector<256x16xf32>
    %c1_140 = arith.constant 1 : index
    %c1_141 = arith.constant 1 : index
    %c0_142 = arith.constant 0 : index
    %107 = vector.load %arg5[%c1_140, %c1_141, %c0_142] : memref<18x18x16xf32, #tpu.memory_space<vmem>>, vector<16x16x16xf32>
    %108 = vector.shape_cast %107 : vector<16x16x16xf32> to vector<256x16xf32>
    %c1_143 = arith.constant 1 : index
    %c2_144 = arith.constant 2 : index
    %c0_145 = arith.constant 0 : index
    %109 = vector.load %arg5[%c1_143, %c2_144, %c0_145] : memref<18x18x16xf32, #tpu.memory_space<vmem>>, vector<16x16x16xf32>
    %110 = vector.shape_cast %109 : vector<16x16x16xf32> to vector<256x16xf32>
    %c2_146 = arith.constant 2 : index
    %c0_147 = arith.constant 0 : index
    %c0_148 = arith.constant 0 : index
    %111 = vector.load %arg5[%c2_146, %c0_147, %c0_148] : memref<18x18x16xf32, #tpu.memory_space<vmem>>, vector<16x16x16xf32>
    %112 = vector.shape_cast %111 : vector<16x16x16xf32> to vector<256x16xf32>
    %c2_149 = arith.constant 2 : index
    %c1_150 = arith.constant 1 : index
    %c0_151 = arith.constant 0 : index
    %113 = vector.load %arg5[%c2_149, %c1_150, %c0_151] : memref<18x18x16xf32, #tpu.memory_space<vmem>>, vector<16x16x16xf32>
    %114 = vector.shape_cast %113 : vector<16x16x16xf32> to vector<256x16xf32>
    %c2_152 = arith.constant 2 : index
    %c2_153 = arith.constant 2 : index
    %c0_154 = arith.constant 0 : index
    %115 = vector.load %arg5[%c2_152, %c2_153, %c0_154] : memref<18x18x16xf32, #tpu.memory_space<vmem>>, vector<16x16x16xf32>
    %116 = vector.shape_cast %115 : vector<16x16x16xf32> to vector<256x16xf32>
    %117 = tpu.concatenate %100, %102, %104, %106, %108, %110, %112, %114, %116 in 1 : vector<256x16xf32>, vector<256x16xf32>, vector<256x16xf32>, vector<256x16xf32>, vector<256x16xf32>, vector<256x16xf32>, vector<256x16xf32>, vector<256x16xf32>, vector<256x16xf32> -> vector<256x144xf32>
    %118 = arith.truncf %117 : vector<256x144xf32> to vector<256x144xbf16>
    %c3 = arith.constant 3 : index
    %c0_155 = arith.constant 0 : index
    %c0_156 = arith.constant 0 : index
    %119 = vector.load %arg2[%c3, %c0_155, %c0_156] : memref<6x144x16xbf16, #tpu.memory_space<vmem>>, vector<1x144x16xbf16>
    %120 = vector.shape_cast %119 : vector<1x144x16xbf16> to vector<144x16xbf16>
    %cst_157 = arith.constant dense<0.000000e+00> : vector<256x16xf32>
    %121 = tpu.matmul %118, %120, %cst_157 {dimension_numbers = #tpu.dot_dimension_numbers<[1], [0], [0], [1], [0, 0, 1, 1], [], []>} : vector<256x144xbf16>, vector<144x16xbf16>, vector<256x16xf32> -> vector<256x16xf32>
    %c3_158 = arith.constant 3 : index
    %c0_159 = arith.constant 0 : index
    %c0_160 = arith.constant 0 : index
    %122 = vector.load %arg3[%c3_158, %c0_159, %c0_160] : memref<6x1x16xf32, #tpu.memory_space<vmem>>, vector<1x1x16xf32>
    %123 = vector.shape_cast %122 : vector<1x1x16xf32> to vector<1x16xf32>
    %124 = vector.broadcast %123 : vector<1x16xf32> to vector<256x16xf32>
    %125 = arith.addf %121, %124 : vector<256x16xf32>
    %cst_161 = arith.constant 0.000000e+00 : f32
    %126 = vector.broadcast %cst_161 : f32 to vector<256x16xf32>
    %127 = arith.maximumf %125, %126 : vector<256x16xf32>
    %128 = vector.shape_cast %127 : vector<256x16xf32> to vector<16x16x16xf32>
    %c1_162 = arith.constant 1 : index
    %c1_163 = arith.constant 1 : index
    %c0_164 = arith.constant 0 : index
    %129 = vector.load %arg5[%c1_162, %c1_163, %c0_164] : memref<18x18x16xf32, #tpu.memory_space<vmem>>, vector<16x16x16xf32>
    tpu.vector_store %arg5[%c1_162, %c1_163, %c0_164], %128 {strides = array<i32>} : memref<18x18x16xf32, #tpu.memory_space<vmem>>, vector<16x16x16xf32>,
    %c0_165 = arith.constant 0 : index
    %c0_166 = arith.constant 0 : index
    %c0_167 = arith.constant 0 : index
    %130 = vector.load %arg5[%c0_165, %c0_166, %c0_167] : memref<18x18x16xf32, #tpu.memory_space<vmem>>, vector<16x16x16xf32>
    %131 = vector.shape_cast %130 : vector<16x16x16xf32> to vector<256x16xf32>
    %c0_168 = arith.constant 0 : index
    %c1_169 = arith.constant 1 : index
    %c0_170 = arith.constant 0 : index
    %132 = vector.load %arg5[%c0_168, %c1_169, %c0_170] : memref<18x18x16xf32, #tpu.memory_space<vmem>>, vector<16x16x16xf32>
    %133 = vector.shape_cast %132 : vector<16x16x16xf32> to vector<256x16xf32>
    %c0_171 = arith.constant 0 : index
    %c2_172 = arith.constant 2 : index
    %c0_173 = arith.constant 0 : index
    %134 = vector.load %arg5[%c0_171, %c2_172, %c0_173] : memref<18x18x16xf32, #tpu.memory_space<vmem>>, vector<16x16x16xf32>
    %135 = vector.shape_cast %134 : vector<16x16x16xf32> to vector<256x16xf32>
    %c1_174 = arith.constant 1 : index
    %c0_175 = arith.constant 0 : index
    %c0_176 = arith.constant 0 : index
    %136 = vector.load %arg5[%c1_174, %c0_175, %c0_176] : memref<18x18x16xf32, #tpu.memory_space<vmem>>, vector<16x16x16xf32>
    %137 = vector.shape_cast %136 : vector<16x16x16xf32> to vector<256x16xf32>
    %c1_177 = arith.constant 1 : index
    %c1_178 = arith.constant 1 : index
    %c0_179 = arith.constant 0 : index
    %138 = vector.load %arg5[%c1_177, %c1_178, %c0_179] : memref<18x18x16xf32, #tpu.memory_space<vmem>>, vector<16x16x16xf32>
    %139 = vector.shape_cast %138 : vector<16x16x16xf32> to vector<256x16xf32>
    %c1_180 = arith.constant 1 : index
    %c2_181 = arith.constant 2 : index
    %c0_182 = arith.constant 0 : index
    %140 = vector.load %arg5[%c1_180, %c2_181, %c0_182] : memref<18x18x16xf32, #tpu.memory_space<vmem>>, vector<16x16x16xf32>
    %141 = vector.shape_cast %140 : vector<16x16x16xf32> to vector<256x16xf32>
    %c2_183 = arith.constant 2 : index
    %c0_184 = arith.constant 0 : index
    %c0_185 = arith.constant 0 : index
    %142 = vector.load %arg5[%c2_183, %c0_184, %c0_185] : memref<18x18x16xf32, #tpu.memory_space<vmem>>, vector<16x16x16xf32>
    %143 = vector.shape_cast %142 : vector<16x16x16xf32> to vector<256x16xf32>
    %c2_186 = arith.constant 2 : index
    %c1_187 = arith.constant 1 : index
    %c0_188 = arith.constant 0 : index
    %144 = vector.load %arg5[%c2_186, %c1_187, %c0_188] : memref<18x18x16xf32, #tpu.memory_space<vmem>>, vector<16x16x16xf32>
    %145 = vector.shape_cast %144 : vector<16x16x16xf32> to vector<256x16xf32>
    %c2_189 = arith.constant 2 : index
    %c2_190 = arith.constant 2 : index
    %c0_191 = arith.constant 0 : index
    %146 = vector.load %arg5[%c2_189, %c2_190, %c0_191] : memref<18x18x16xf32, #tpu.memory_space<vmem>>, vector<16x16x16xf32>
    %147 = vector.shape_cast %146 : vector<16x16x16xf32> to vector<256x16xf32>
    %148 = tpu.concatenate %131, %133, %135, %137, %139, %141, %143, %145, %147 in 1 : vector<256x16xf32>, vector<256x16xf32>, vector<256x16xf32>, vector<256x16xf32>, vector<256x16xf32>, vector<256x16xf32>, vector<256x16xf32>, vector<256x16xf32>, vector<256x16xf32> -> vector<256x144xf32>
    %149 = arith.truncf %148 : vector<256x144xf32> to vector<256x144xbf16>
    %c4 = arith.constant 4 : index
    %c0_192 = arith.constant 0 : index
    %c0_193 = arith.constant 0 : index
    %150 = vector.load %arg2[%c4, %c0_192, %c0_193] : memref<6x144x16xbf16, #tpu.memory_space<vmem>>, vector<1x144x16xbf16>
    %151 = vector.shape_cast %150 : vector<1x144x16xbf16> to vector<144x16xbf16>
    %cst_194 = arith.constant dense<0.000000e+00> : vector<256x16xf32>
    %152 = tpu.matmul %149, %151, %cst_194 {dimension_numbers = #tpu.dot_dimension_numbers<[1], [0], [0], [1], [0, 0, 1, 1], [], []>} : vector<256x144xbf16>, vector<144x16xbf16>, vector<256x16xf32> -> vector<256x16xf32>
    %c4_195 = arith.constant 4 : index
    %c0_196 = arith.constant 0 : index
    %c0_197 = arith.constant 0 : index
    %153 = vector.load %arg3[%c4_195, %c0_196, %c0_197] : memref<6x1x16xf32, #tpu.memory_space<vmem>>, vector<1x1x16xf32>
    %154 = vector.shape_cast %153 : vector<1x1x16xf32> to vector<1x16xf32>
    %155 = vector.broadcast %154 : vector<1x16xf32> to vector<256x16xf32>
    %156 = arith.addf %152, %155 : vector<256x16xf32>
    %c0_198 = arith.constant 0 : index
    %c0_199 = arith.constant 0 : index
    %c0_200 = arith.constant 0 : index
    %157 = vector.load %arg6[%c0_198, %c0_199, %c0_200] : memref<16x16x16xf32, #tpu.memory_space<vmem>>, vector<16x16x16xf32>
    %158 = vector.shape_cast %156 : vector<256x16xf32> to vector<16x16x16xf32>
    %159 = arith.addf %157, %158 : vector<16x16x16xf32>
    %c0_201 = arith.constant 0 : index
    %c0_202 = arith.constant 0 : index
    %c0_203 = arith.constant 0 : index
    %160 = vector.load %arg6[%c0_201, %c0_202, %c0_203] : memref<16x16x16xf32, #tpu.memory_space<vmem>>, vector<16x16x16xf32>
    tpu.vector_store %arg6[%c0_201, %c0_202, %c0_203], %159 {strides = array<i32>} : memref<16x16x16xf32, #tpu.memory_space<vmem>>, vector<16x16x16xf32>,
    %c1_204 = arith.constant 1 : index
    %c1_205 = arith.constant 1 : index
    %c0_206 = arith.constant 0 : index
    %161 = vector.load %arg5[%c1_204, %c1_205, %c0_206] : memref<18x18x16xf32, #tpu.memory_space<vmem>>, vector<16x16x16xf32>
    tpu.vector_store %arg5[%c1_204, %c1_205, %c0_206], %159 {strides = array<i32>} : memref<18x18x16xf32, #tpu.memory_space<vmem>>, vector<16x16x16xf32>,
    %c0_207 = arith.constant 0 : index
    %c0_208 = arith.constant 0 : index
    %c0_209 = arith.constant 0 : index
    %162 = vector.load %arg5[%c0_207, %c0_208, %c0_209] : memref<18x18x16xf32, #tpu.memory_space<vmem>>, vector<16x16x16xf32>
    %163 = vector.shape_cast %162 : vector<16x16x16xf32> to vector<256x16xf32>
    %c0_210 = arith.constant 0 : index
    %c1_211 = arith.constant 1 : index
    %c0_212 = arith.constant 0 : index
    %164 = vector.load %arg5[%c0_210, %c1_211, %c0_212] : memref<18x18x16xf32, #tpu.memory_space<vmem>>, vector<16x16x16xf32>
    %165 = vector.shape_cast %164 : vector<16x16x16xf32> to vector<256x16xf32>
    %c0_213 = arith.constant 0 : index
    %c2_214 = arith.constant 2 : index
    %c0_215 = arith.constant 0 : index
    %166 = vector.load %arg5[%c0_213, %c2_214, %c0_215] : memref<18x18x16xf32, #tpu.memory_space<vmem>>, vector<16x16x16xf32>
    %167 = vector.shape_cast %166 : vector<16x16x16xf32> to vector<256x16xf32>
    %c1_216 = arith.constant 1 : index
    %c0_217 = arith.constant 0 : index
    %c0_218 = arith.constant 0 : index
    %168 = vector.load %arg5[%c1_216, %c0_217, %c0_218] : memref<18x18x16xf32, #tpu.memory_space<vmem>>, vector<16x16x16xf32>
    %169 = vector.shape_cast %168 : vector<16x16x16xf32> to vector<256x16xf32>
    %c1_219 = arith.constant 1 : index
    %c1_220 = arith.constant 1 : index
    %c0_221 = arith.constant 0 : index
    %170 = vector.load %arg5[%c1_219, %c1_220, %c0_221] : memref<18x18x16xf32, #tpu.memory_space<vmem>>, vector<16x16x16xf32>
    %171 = vector.shape_cast %170 : vector<16x16x16xf32> to vector<256x16xf32>
    %c1_222 = arith.constant 1 : index
    %c2_223 = arith.constant 2 : index
    %c0_224 = arith.constant 0 : index
    %172 = vector.load %arg5[%c1_222, %c2_223, %c0_224] : memref<18x18x16xf32, #tpu.memory_space<vmem>>, vector<16x16x16xf32>
    %173 = vector.shape_cast %172 : vector<16x16x16xf32> to vector<256x16xf32>
    %c2_225 = arith.constant 2 : index
    %c0_226 = arith.constant 0 : index
    %c0_227 = arith.constant 0 : index
    %174 = vector.load %arg5[%c2_225, %c0_226, %c0_227] : memref<18x18x16xf32, #tpu.memory_space<vmem>>, vector<16x16x16xf32>
    %175 = vector.shape_cast %174 : vector<16x16x16xf32> to vector<256x16xf32>
    %c2_228 = arith.constant 2 : index
    %c1_229 = arith.constant 1 : index
    %c0_230 = arith.constant 0 : index
    %176 = vector.load %arg5[%c2_228, %c1_229, %c0_230] : memref<18x18x16xf32, #tpu.memory_space<vmem>>, vector<16x16x16xf32>
    %177 = vector.shape_cast %176 : vector<16x16x16xf32> to vector<256x16xf32>
    %c2_231 = arith.constant 2 : index
    %c2_232 = arith.constant 2 : index
    %c0_233 = arith.constant 0 : index
    %178 = vector.load %arg5[%c2_231, %c2_232, %c0_233] : memref<18x18x16xf32, #tpu.memory_space<vmem>>, vector<16x16x16xf32>
    %179 = vector.shape_cast %178 : vector<16x16x16xf32> to vector<256x16xf32>
    %180 = tpu.concatenate %163, %165, %167, %169, %171, %173, %175, %177, %179 in 1 : vector<256x16xf32>, vector<256x16xf32>, vector<256x16xf32>, vector<256x16xf32>, vector<256x16xf32>, vector<256x16xf32>, vector<256x16xf32>, vector<256x16xf32>, vector<256x16xf32> -> vector<256x144xf32>
    %181 = arith.truncf %180 : vector<256x144xf32> to vector<256x144xbf16>
    %c5 = arith.constant 5 : index
    %c0_234 = arith.constant 0 : index
    %c0_235 = arith.constant 0 : index
    %182 = vector.load %arg2[%c5, %c0_234, %c0_235] : memref<6x144x16xbf16, #tpu.memory_space<vmem>>, vector<1x144x16xbf16>
    %183 = vector.shape_cast %182 : vector<1x144x16xbf16> to vector<144x16xbf16>
    %cst_236 = arith.constant dense<0.000000e+00> : vector<256x16xf32>
    %184 = tpu.matmul %181, %183, %cst_236 {dimension_numbers = #tpu.dot_dimension_numbers<[1], [0], [0], [1], [0, 0, 1, 1], [], []>} : vector<256x144xbf16>, vector<144x16xbf16>, vector<256x16xf32> -> vector<256x16xf32>
    %c5_237 = arith.constant 5 : index
    %c0_238 = arith.constant 0 : index
    %c0_239 = arith.constant 0 : index
    %185 = vector.load %arg3[%c5_237, %c0_238, %c0_239] : memref<6x1x16xf32, #tpu.memory_space<vmem>>, vector<1x1x16xf32>
    %186 = vector.shape_cast %185 : vector<1x1x16xf32> to vector<1x16xf32>
    %187 = vector.broadcast %186 : vector<1x16xf32> to vector<256x16xf32>
    %188 = arith.addf %184, %187 : vector<256x16xf32>
    %189 = vector.extract_strided_slice %188 {offsets = [0, 0], sizes = [256, 12], strides = [1, 1]} : vector<256x16xf32> to vector<256x12xf32>
    %190 = vector.shape_cast %189 : vector<256x12xf32> to vector<1x16x16x12xf32>
    %c0_240 = arith.constant 0 : index
    %c0_241 = arith.constant 0 : index
    %c0_242 = arith.constant 0 : index
    %c0_243 = arith.constant 0 : index
    %191 = vector.load %arg4[%c0_240, %c0_241, %c0_242, %c0_243] : memref<1x16x16x12xf32, #tpu.memory_space<vmem>>, vector<1x16x16x12xf32>
    tpu.vector_store %arg4[%c0_240, %c0_241, %c0_242, %c0_243], %190 {strides = array<i32>} : memref<1x16x16x12xf32, #tpu.memory_space<vmem>>, vector<1x16x16x12xf32>,
    return
  }
  func.func @transform_0(%arg0: i32) -> (i32, i32, i32, i32) {
    %c0_i32 = arith.constant 0 : i32
    %c0_i32_0 = arith.constant 0 : i32
    %c0_i32_1 = arith.constant 0 : i32
    %c0_i32_2 = arith.constant 0 : i32
    return %arg0, %c0_i32, %c0_i32_0, %c0_i32_1 : i32, i32, i32, i32
  }
  func.func @transform_1(%arg0: i32) -> (i32, i32, i32) {
    %c0_i32 = arith.constant 0 : i32
    %c0_i32_0 = arith.constant 0 : i32
    %c0_i32_1 = arith.constant 0 : i32
    %c0_i32_2 = arith.constant 0 : i32
    return %c0_i32, %c0_i32_0, %c0_i32_1 : i32, i32, i32
  }
  func.func @transform_2(%arg0: i32) -> (i32, i32, i32) {
    %c0_i32 = arith.constant 0 : i32
    %c0_i32_0 = arith.constant 0 : i32
    %c0_i32_1 = arith.constant 0 : i32
    %c0_i32_2 = arith.constant 0 : i32
    return %c0_i32, %c0_i32_0, %c0_i32_1 : i32, i32, i32
  }
  func.func @transform_3(%arg0: i32) -> (i32, i32, i32, i32) {
    %c0_i32 = arith.constant 0 : i32
    %c0_i32_0 = arith.constant 0 : i32
    %c0_i32_1 = arith.constant 0 : i32
    %c0_i32_2 = arith.constant 0 : i32
    return %arg0, %c0_i32, %c0_i32_0, %c0_i32_1 : i32, i32, i32, i32
  }
}

</mosaic_0001>

<llo_original>
// kernel: tpu_custom_call.1
$region0: #{tpu_custom_call.1}
  #allocation0 [shape = 'u32[]', space=smem, size = 0x4, offset = 0x4, fixed_abs, tag = 'smem constant byte address 0x4 - core index']
  #allocation1 [shape = 'u32[144,128]{1,0:T(1,128)}', space=vmem, size = 0x12000, scoped, tag = 'internal scratch']
  #allocation2 [shape = 'f32[18,18,16]{2,1,0:T(8,128)}', space=vmem, size = 0x36000, scoped, tag = 'scratch operand']
  #allocation3 [shape = 'f32[16,16,16]{2,1,0:T(8,128)}', space=vmem, size = 0x20000, scoped, tag = 'scratch operand']
  %s0 = inlined_call_operand.vmem [shape: f32[2,16,16,3], index: 0, kind: input, shape index: {}]
  %s1 = inlined_call_operand.vmem [shape: bf16[6,144,16], index: 1, kind: input, shape index: {}]
  %s2 = inlined_call_operand.vmem [shape: f32[6,1,16], index: 2, kind: input, shape index: {}]
  %s3 = inlined_call_operand.vmem [shape: f32[2,16,16,12], index: 3, kind: output, shape index: {}]
  %s4 = sld [smem:[#allocation0]]
  $region45: #{tpu_custom_call.1} parent=0
    _
  %s6 = ssub.s32 1, %s4
  %s7 = scalar_select 0, %s6, %s4
  loop: start=0, step=1, limit=4
  $region2: #{tpu_custom_call.1} parent=0 // loop_pre_header
    _
  $region3: #{tpu_custom_call.1} parent=0 // loop_header
    %s9 = sphi 0, %s13
    %p10 = scmp.ge.s32.totalorder %s9, 4
    %s19 = sphi 0, %s21
    %s22 = sphi 0, %s19
    %s23 = sphi 0, %s22
    %s39 = sphi 0, %s23
    %s43 = sphi 0, %s43
    %s45 = sphi 0, %s43
    %s46 = sphi 0, %s45
    %s60 = sphi 0, %s46
    %s64 = sphi 0, %s64
    %s66 = sphi 0, %s64
    %s67 = sphi 0, %s66
    %s81 = sphi 0, %s67
    %s87 = sphi 0, %s89
    %s90 = sphi 0, %s87
    %s91 = sphi 0, %s90
    %s107 = sphi 0, %s91
  $region4: #{tpu_custom_call.1} parent=0 // loop_header_branch
    %12 = sbr.rel (%p10) target = $region8
  $region5: #{tpu_custom_call.1} parent=0 // loop_body
    %s14 = ssub.s32 %s9, 1
    %s15 = ssub.s32 %s9, 2
    %s16 = sadd.s32 %s9, 1
    %s17 = ssub.s32 %s9, %s16
    %p18 = scmp.eq.s32.totalorder %s17, 0
    %s20 = sadd.s32 %s19, 1
    %s21 = scalar_select %p18, %s19, %s20
    %p24 = pneg %p18
    %p25 = scmp.eq.s32.totalorder %s9, 1
    %p26 = por %p24, %p25
    %p27 = scmp.ne.s32.totalorder %s19, %s22
    %p28 = scmp.eq.s32.totalorder %s9, 0
    %p29 = por %p27, %p28
    %p30 = scmp.ne.s32.totalorder %s19, %s22
    %p31 = scmp.eq.s32.totalorder %s14, 1
    %p32 = por %p30, %p31
    %p33 = scmp.ne.s32.totalorder %s22, %s23
    %p34 = scmp.eq.s32.totalorder %s14, 0
    %p35 = por %p33, %p34
    %p36 = scmp.ne.s32.totalorder %s22, %s23
    %p37 = scmp.eq.s32.totalorder %s15, 1
    %p38 = por %p36, %p37
    %p40 = scmp.ne.s32.totalorder %s23, %s39
    %p41 = scmp.eq.s32.totalorder %s15, 0
    %p42 = por %p40, %p41
    %s44 = sadd.s32 %s43, 1
    %p47 = scmp.eq.s32.totalorder %s9, 1
    %p48 = scmp.ne.s32.totalorder %s43, %s45
    %p49 = scmp.eq.s32.totalorder %s9, 0
    %p50 = por %p48, %p49
    %p51 = scmp.ne.s32.totalorder %s43, %s45
    %p52 = scmp.eq.s32.totalorder %s14, 1
    %p53 = por %p51, %p52
    %p54 = scmp.ne.s32.totalorder %s45, %s46
    %p55 = scmp.eq.s32.totalorder %s14, 0
    %p56 = por %p54, %p55
    %p57 = scmp.ne.s32.totalorder %s45, %s46
    %p58 = scmp.eq.s32.totalorder %s15, 1
    %p59 = por %p57, %p58
    %p61 = scmp.ne.s32.totalorder %s46, %s60
    %p62 = scmp.eq.s32.totalorder %s15, 0
    %p63 = por %p61, %p62
    %s65 = sadd.s32 %s64, 1
    %p68 = scmp.eq.s32.totalorder %s9, 1
    %p69 = scmp.ne.s32.totalorder %s64, %s66
    %p70 = scmp.eq.s32.totalorder %s9, 0
    %p71 = por %p69, %p70
    %p72 = scmp.ne.s32.totalorder %s64, %s66
    %p73 = scmp.eq.s32.totalorder %s14, 1
    %p74 = por %p72, %p73
    %p75 = scmp.ne.s32.totalorder %s66, %s67
    %p76 = scmp.eq.s32.totalorder %s14, 0
    %p77 = por %p75, %p76
    %p78 = scmp.ne.s32.totalorder %s66, %s67
    %p79 = scmp.eq.s32.totalorder %s15, 1
    %p80 = por %p78, %p79
    %p82 = scmp.ne.s32.totalorder %s67, %s81
    %p83 = scmp.eq.s32.totalorder %s15, 0
    %p84 = por %p82, %p83
    %s85 = ssub.s32 %s9, %s16
    %p86 = scmp.eq.s32.totalorder %s85, 0
    %s88 = sadd.s32 %s87, 1
    %s89 = scalar_select %p86, %s87, %s88
    %p92 = pneg %p86
    %p93 = scmp.eq.s32.totalorder %s9, 1
    %p94 = por %p92, %p93
    %p95 = scmp.ne.s32.totalorder %s87, %s90
    %p96 = scmp.eq.s32.totalorder %s9, 0
    %p97 = por %p95, %p96
    %p98 = scmp.ne.s32.totalorder %s87, %s90
    %p99 = scmp.eq.s32.totalorder %s14, 1
    %p100 = por %p98, %p99
    %p101 = scmp.ne.s32.totalorder %s90, %s91
    %p102 = scmp.eq.s32.totalorder %s14, 0
    %p103 = por %p101, %p102
    %p104 = scmp.ne.s32.totalorder %s90, %s91
    %p105 = scmp.eq.s32.totalorder %s15, 1
    %p106 = por %p104, %p105
    %p108 = scmp.ne.s32.totalorder %s91, %s107
    %p109 = scmp.eq.s32.totalorder %s15, 0
    %p110 = por %p108, %p109
    %p111 = scmp.le.s32.totalorder 1, %s9
    %p112 = scmp.lt.s32.totalorder %s9, 3
    %p113 = pnand %p111, %p112
    %p114 = pneg %p113
    // Predicated region
    $region9: #{tpu_custom_call.1} parent=5 // pred_check
      _
    $region10: #{tpu_custom_call.1} parent=5 // pred_check_branch
      %116 = sbr.rel (%p113) target = $region12
    $region11: #{tpu_custom_call.1} parent=5 // pred_region
      %s117 = ssub.s32 %s9, 1
      // Predicated region
      $region13: #{tpu_custom_call.1} parent=11 // pred_check
        %p118 = pneg %p56
      $region14: #{tpu_custom_call.1} parent=11 // pred_check_branch
        %120 = sbr.rel (%p118) target = $region16
      $region15: #{tpu_custom_call.1} parent=11 // pred_region
        _
      $region16: #{tpu_custom_call.1} parent=11 // pred_fallthru
        _
      // Predicated region
      $region17: #{tpu_custom_call.1} parent=11 // pred_check
        %p121 = pneg %p77
      $region18: #{tpu_custom_call.1} parent=11 // pred_check_branch
        %123 = sbr.rel (%p121) target = $region20
      $region19: #{tpu_custom_call.1} parent=11 // pred_region
        _
      $region20: #{tpu_custom_call.1} parent=11 // pred_fallthru
        _
    $region12: #{tpu_custom_call.1} parent=5 // pred_fallthru
      _
    %p124 = scmp.lt.s32.totalorder %s9, 2
    // Predicated region
    $region21: #{tpu_custom_call.1} parent=5 // pred_check
      %p125 = pneg %p124
    $region22: #{tpu_custom_call.1} parent=5 // pred_check_branch
      %127 = sbr.rel (%p125) target = $region24
    $region23: #{tpu_custom_call.1} parent=5 // pred_region
      // Predicated region
      $region25: #{tpu_custom_call.1} parent=23 // pred_check
        %p128 = pneg %p29
      $region26: #{tpu_custom_call.1} parent=23 // pred_check_branch
        %130 = sbr.rel (%p128) target = $region28
      $region27: #{tpu_custom_call.1} parent=23 // pred_region
        %p131 = scmp.lt.s32.totalorder %s9, 1
        %s132 = scalar_select %p131, %s9, 1
        %s133 = smul.addr %s132, 32
        %s134 = smul.addr %s133, 8
        %s135 = scalar_lea.vmem %s0, %s134
      $region28: #{tpu_custom_call.1} parent=23 // pred_fallthru
        _
    $region24: #{tpu_custom_call.1} parent=5 // pred_fallthru
      _
    %p136 = scmp.le.s32.totalorder 1, %s9
    %p137 = scmp.lt.s32.totalorder %s9, 3
    %p138 = pnand %p136, %p137
    %p139 = pneg %p138
    // Predicated region
    $region29: #{tpu_custom_call.1} parent=5 // pred_check
      _
    $region30: #{tpu_custom_call.1} parent=5 // pred_check_branch
      %141 = sbr.rel (%p138) target = $region32
    $region31: #{tpu_custom_call.1} parent=5 // pred_region
      %s142 = ssub.s32 %s9, 1
      %p143 = scmp.lt.s32.totalorder %s14, 1
      %s144 = scalar_select %p143, %s14, 1
      %s145 = smul.addr %s144, 32
      %s146 = smul.addr %s145, 8
      %s147 = scalar_lea.vmem %s0, %s146
      %p148 = pneg %p35
      %p149 = pneg %p32
      %p150 = pneg %p56
      %p151 = pneg %p53
      %p152 = pneg %p77
      %p153 = pneg %p74
      %p154 = pneg %p103
      %p155 = pneg %p100
      %p156 = scmp.lt.s32.totalorder %s14, 1
      %s157 = scalar_select %p156, %s14, 1
      %s158 = smul.addr %s157, 32
      %s159 = smul.addr %s158, 8
      %s160 = scalar_lea.vmem %s3, %s159
      %p161 = scmp.lt.s32.totalorder %s14, 1
      %s162 = scalar_select %p161, %s14, 1
      %s163 = smul.addr %s162, 32
      %s164 = smul.addr %s163, 8
      %s165 = scalar_lea.vmem %s0, %s164
      %p166 = scmp.lt.s32.totalorder %s14, 1
      %s167 = scalar_select %p166, %s14, 1
      %s168 = smul.addr %s167, 32
      %s169 = smul.addr %s168, 8
      %s170 = scalar_lea.vmem %s3, %s169
      %vm172 = vcmask 130048
      %173 = vst.msk [vmem:[#allocation2] sm:$0xff] %vm172, 0.0
      %174 = vst.msk [vmem:[#allocation2 + $0x8] sm:$0xff] %vm172, 0.0
      %vm175 = vcmask 123904
      %176 = vst.msk [vmem:[#allocation2 + $0x10] sm:$0x3] %vm175, 0.0
      %177 = vst.msk [vmem:[#allocation2 + $0x18] sm:$0xff] %vm172, 0.0
      %178 = vst.msk [vmem:[#allocation2 + $0x20] sm:$0xff] %vm172, 0.0
      %179 = vst.msk [vmem:[#allocation2 + $0x28] sm:$0x3] %vm175, 0.0
      %180 = vst.msk [vmem:[#allocation2 + $0x30] sm:$0xff] %vm172, 0.0
      %181 = vst.msk [vmem:[#allocation2 + $0x38] sm:$0xff] %vm172, 0.0
      %182 = vst.msk [vmem:[#allocation2 + $0x40] sm:$0x3] %vm175, 0.0
      %183 = vst.msk [vmem:[#allocation2 + $0x48] sm:$0xff] %vm172, 0.0
      %184 = vst.msk [vmem:[#allocation2 + $0x50] sm:$0xff] %vm172, 0.0
      %185 = vst.msk [vmem:[#allocation2 + $0x58] sm:$0x3] %vm175, 0.0
      %186 = vst.msk [vmem:[#allocation2 + $0x60] sm:$0xff] %vm172, 0.0
      %187 = vst.msk [vmem:[#allocation2 + $0x68] sm:$0xff] %vm172, 0.0
      %188 = vst.msk [vmem:[#allocation2 + $0x70] sm:$0x3] %vm175, 0.0
      %189 = vst.msk [vmem:[#allocation2 + $0x78] sm:$0xff] %vm172, 0.0
      %190 = vst.msk [vmem:[#allocation2 + $0x80] sm:$0xff] %vm172, 0.0
      %191 = vst.msk [vmem:[#allocation2 + $0x88] sm:$0x3] %vm175, 0.0
      %192 = vst.msk [vmem:[#allocation2 + $0x90] sm:$0xff] %vm172, 0.0
      %193 = vst.msk [vmem:[#allocation2 + $0x98] sm:$0xff] %vm172, 0.0
      %194 = vst.msk [vmem:[#allocation2 + $0xa0] sm:$0x3] %vm175, 0.0
      %195 = vst.msk [vmem:[#allocation2 + $0xa8] sm:$0xff] %vm172, 0.0
      %196 = vst.msk [vmem:[#allocation2 + $0xb0] sm:$0xff] %vm172, 0.0
      %197 = vst.msk [vmem:[#allocation2 + $0xb8] sm:$0x3] %vm175, 0.0
      %198 = vst.msk [vmem:[#allocation2 + $0xc0] sm:$0xff] %vm172, 0.0
      %199 = vst.msk [vmem:[#allocation2 + $0xc8] sm:$0xff] %vm172, 0.0
      %200 = vst.msk [vmem:[#allocation2 + $0xd0] sm:$0x3] %vm175, 0.0
      %201 = vst.msk [vmem:[#allocation2 + $0xd8] sm:$0xff] %vm172, 0.0
      %202 = vst.msk [vmem:[#allocation2 + $0xe0] sm:$0xff] %vm172, 0.0
      %203 = vst.msk [vmem:[#allocation2 + $0xe8] sm:$0x3] %vm175, 0.0
      %204 = vst.msk [vmem:[#allocation2 + $0xf0] sm:$0xff] %vm172, 0.0
      %205 = vst.msk [vmem:[#allocation2 + $0xf8] sm:$0xff] %vm172, 0.0
      %206 = vst.msk [vmem:[#allocation2 + $0x100] sm:$0x3] %vm175, 0.0
      %207 = vst.msk [vmem:[#allocation2 + $0x108] sm:$0xff] %vm172, 0.0
      %208 = vst.msk [vmem:[#allocation2 + $0x110] sm:$0xff] %vm172, 0.0
      %209 = vst.msk [vmem:[#allocation2 + $0x118] sm:$0x3] %vm175, 0.0
      %210 = vst.msk [vmem:[#allocation2 + $0x120] sm:$0xff] %vm172, 0.0
      %211 = vst.msk [vmem:[#allocation2 + $0x128] sm:$0xff] %vm172, 0.0
      %212 = vst.msk [vmem:[#allocation2 + $0x130] sm:$0x3] %vm175, 0.0
      %213 = vst.msk [vmem:[#allocation2 + $0x138] sm:$0xff] %vm172, 0.0
      %214 = vst.msk [vmem:[#allocation2 + $0x140] sm:$0xff] %vm172, 0.0
      %215 = vst.msk [vmem:[#allocation2 + $0x148] sm:$0x3] %vm175, 0.0
      %216 = vst.msk [vmem:[#allocation2 + $0x150] sm:$0xff] %vm172, 0.0
      %217 = vst.msk [vmem:[#allocation2 + $0x158] sm:$0xff] %vm172, 0.0
      %218 = vst.msk [vmem:[#allocation2 + $0x160] sm:$0x3] %vm175, 0.0
      %219 = vst.msk [vmem:[#allocation2 + $0x168] sm:$0xff] %vm172, 0.0
      %220 = vst.msk [vmem:[#allocation2 + $0x170] sm:$0xff] %vm172, 0.0
      %221 = vst.msk [vmem:[#allocation2 + $0x178] sm:$0x3] %vm175, 0.0
      %222 = vst.msk [vmem:[#allocation2 + $0x180] sm:$0xff] %vm172, 0.0
      %223 = vst.msk [vmem:[#allocation2 + $0x188] sm:$0xff] %vm172, 0.0
      %224 = vst.msk [vmem:[#allocation2 + $0x190] sm:$0x3] %vm175, 0.0
      %225 = vst.msk [vmem:[#allocation2 + $0x198] sm:$0xff] %vm172, 0.0
      %226 = vst.msk [vmem:[#allocation2 + $0x1a0] sm:$0xff] %vm172, 0.0
      %227 = vst.msk [vmem:[#allocation2 + $0x1a8] sm:$0x3] %vm175, 0.0
      %v228 = vld [vmem:[%s165] sm:$0xff]
      %v229 = vld [vmem:[%s165 + $0x8] sm:$0xff]
      %v230 = vld [vmem:[%s165 + $0x10] sm:$0xff]
      %v231 = vld [vmem:[%s165 + $0x18] sm:$0xff]
      %v232 = vld [vmem:[%s165 + $0x20] sm:$0xff]
      %v233 = vld [vmem:[%s165 + $0x28] sm:$0xff]
      %v234 = vld [vmem:[%s165 + $0x30] sm:$0xff]
      %v235 = vld [vmem:[%s165 + $0x38] sm:$0xff]
      %v236 = vld [vmem:[%s165 + $0x40] sm:$0xff]
      %v237 = vld [vmem:[%s165 + $0x48] sm:$0xff]
      %v238 = vld [vmem:[%s165 + $0x50] sm:$0xff]
      %v239 = vld [vmem:[%s165 + $0x58] sm:$0xff]
      %v240 = vld [vmem:[%s165 + $0x60] sm:$0xff]
      %v241 = vld [vmem:[%s165 + $0x68] sm:$0xff]
      %v242 = vld [vmem:[%s165 + $0x70] sm:$0xff]
      %v243 = vld [vmem:[%s165 + $0x78] sm:$0xff]
      %v244 = vld [vmem:[%s165 + $0x80] sm:$0xff]
      %v245 = vld [vmem:[%s165 + $0x88] sm:$0xff]
      %v246 = vld [vmem:[%s165 + $0x90] sm:$0xff]
      %v247 = vld [vmem:[%s165 + $0x98] sm:$0xff]
      %v248 = vld [vmem:[%s165 + $0xa0] sm:$0xff]
      %v249 = vld [vmem:[%s165 + $0xa8] sm:$0xff]
      %v250 = vld [vmem:[%s165 + $0xb0] sm:$0xff]
      %v251 = vld [vmem:[%s165 + $0xb8] sm:$0xff]
      %v252 = vld [vmem:[%s165 + $0xc0] sm:$0xff]
      %v253 = vld [vmem:[%s165 + $0xc8] sm:$0xff]
      %v254 = vld [vmem:[%s165 + $0xd0] sm:$0xff]
      %v255 = vld [vmem:[%s165 + $0xd8] sm:$0xff]
      %v256 = vld [vmem:[%s165 + $0xe0] sm:$0xff]
      %v257 = vld [vmem:[%s165 + $0xe8] sm:$0xff]
      %v258 = vld [vmem:[%s165 + $0xf0] sm:$0xff]
      %v259 = vld [vmem:[%s165 + $0xf8] sm:$0xff]
      %s260 = scalar_lea.vmem [#allocation2], 24
      %vm261 = vcmask 23552
      %262 = vst.msk [vmem:[%s260 + $0x1] sm:$0xff] %vm261, %v228
      %263 = vst.msk [vmem:[%s260 + $0x9] sm:$0xff] %vm261, %v229
      %264 = vst.msk [vmem:[%s260 + $0x19] sm:$0xff] %vm261, %v230
      %265 = vst.msk [vmem:[%s260 + $0x21] sm:$0xff] %vm261, %v231
      %266 = vst.msk [vmem:[%s260 + $0x31] sm:$0xff] %vm261, %v232
      %267 = vst.msk [vmem:[%s260 + $0x39] sm:$0xff] %vm261, %v233
      %268 = vst.msk [vmem:[%s260 + $0x49] sm:$0xff] %vm261, %v234
      %269 = vst.msk [vmem:[%s260 + $0x51] sm:$0xff] %vm261, %v235
      %270 = vst.msk [vmem:[%s260 + $0x61] sm:$0xff] %vm261, %v236
      %271 = vst.msk [vmem:[%s260 + $0x69] sm:$0xff] %vm261, %v237
      %272 = vst.msk [vmem:[%s260 + $0x79] sm:$0xff] %vm261, %v238
      %273 = vst.msk [vmem:[%s260 + $0x81] sm:$0xff] %vm261, %v239
      %274 = vst.msk [vmem:[%s260 + $0x91] sm:$0xff] %vm261, %v240
      %275 = vst.msk [vmem:[%s260 + $0x99] sm:$0xff] %vm261, %v241
      %276 = vst.msk [vmem:[%s260 + $0xa9] sm:$0xff] %vm261, %v242
      %277 = vst.msk [vmem:[%s260 + $0xb1] sm:$0xff] %vm261, %v243
      %278 = vst.msk [vmem:[%s260 + $0xc1] sm:$0xff] %vm261, %v244
      %279 = vst.msk [vmem:[%s260 + $0xc9] sm:$0xff] %vm261, %v245
      %280 = vst.msk [vmem:[%s260 + $0xd9] sm:$0xff] %vm261, %v246
      %281 = vst.msk [vmem:[%s260 + $0xe1] sm:$0xff] %vm261, %v247
      %282 = vst.msk [vmem:[%s260 + $0xf1] sm:$0xff] %vm261, %v248
      %283 = vst.msk [vmem:[%s260 + $0xf9] sm:$0xff] %vm261, %v249
      %284 = vst.msk [vmem:[%s260 + $0x109] sm:$0xff] %vm261, %v250
      %285 = vst.msk [vmem:[%s260 + $0x111] sm:$0xff] %vm261, %v251
      %286 = vst.msk [vmem:[%s260 + $0x121] sm:$0xff] %vm261, %v252
      %287 = vst.msk [vmem:[%s260 + $0x129] sm:$0xff] %vm261, %v253
      %288 = vst.msk [vmem:[%s260 + $0x139] sm:$0xff] %vm261, %v254
      %289 = vst.msk [vmem:[%s260 + $0x141] sm:$0xff] %vm261, %v255
      %290 = vst.msk [vmem:[%s260 + $0x151] sm:$0xff] %vm261, %v256
      %291 = vst.msk [vmem:[%s260 + $0x159] sm:$0xff] %vm261, %v257
      %292 = vst.msk [vmem:[%s260 + $0x169] sm:$0xff] %vm261, %v258
      %293 = vst.msk [vmem:[%s260 + $0x171] sm:$0xff] %vm261, %v259
      %v294 = vld [vmem:[#allocation2] sm:$0xff]
      %v295 = vld [vmem:[#allocation2 + $0x8] sm:$0xff]
      %v296 = vld [vmem:[#allocation2 + $0x18] sm:$0xff]
      %v297 = vld [vmem:[#allocation2 + $0x20] sm:$0xff]
      %v298 = vld [vmem:[#allocation2 + $0x30] sm:$0xff]
      %v299 = vld [vmem:[#allocation2 + $0x38] sm:$0xff]
      %v300 = vld [vmem:[#allocation2 + $0x48] sm:$0xff]
      %v301 = vld [vmem:[#allocation2 + $0x50] sm:$0xff]
      %v302 = vld [vmem:[#allocation2 + $0x60] sm:$0xff]
      %v303 = vld [vmem:[#allocation2 + $0x68] sm:$0xff]
      %v304 = vld [vmem:[#allocation2 + $0x78] sm:$0xff]
      %v305 = vld [vmem:[#allocation2 + $0x80] sm:$0xff]
      %v306 = vld [vmem:[#allocation2 + $0x90] sm:$0xff]
      %v307 = vld [vmem:[#allocation2 + $0x98] sm:$0xff]
      %v308 = vld [vmem:[#allocation2 + $0xa8] sm:$0xff]
      %v309 = vld [vmem:[#allocation2 + $0xb0] sm:$0xff]
      %v310 = vld [vmem:[#allocation2 + $0xc0] sm:$0xff]
      %v311 = vld [vmem:[#allocation2 + $0xc8] sm:$0xff]
      %v312 = vld [vmem:[#allocation2 + $0xd8] sm:$0xff]
      %v313 = vld [vmem:[#allocation2 + $0xe0] sm:$0xff]
      %v314 = vld [vmem:[#allocation2 + $0xf0] sm:$0xff]
      %v315 = vld [vmem:[#allocation2 + $0xf8] sm:$0xff]
      %v316 = vld [vmem:[#allocation2 + $0x108] sm:$0xff]
      %v317 = vld [vmem:[#allocation2 + $0x110] sm:$0xff]
      %v318 = vld [vmem:[#allocation2 + $0x120] sm:$0xff]
      %v319 = vld [vmem:[#allocation2 + $0x128] sm:$0xff]
      %v320 = vld [vmem:[#allocation2 + $0x138] sm:$0xff]
      %v321 = vld [vmem:[#allocation2 + $0x140] sm:$0xff]
      %v322 = vld [vmem:[#allocation2 + $0x150] sm:$0xff]
      %v323 = vld [vmem:[#allocation2 + $0x158] sm:$0xff]
      %v324 = vld [vmem:[#allocation2 + $0x168] sm:$0xff]
      %v325 = vld [vmem:[#allocation2 + $0x170] sm:$0xff]
      %v326 = vld [vmem:[#allocation2 + $0x1] sm:$0xff]
      %v327 = vld [vmem:[#allocation2 + $0x9] sm:$0xff]
      %v328 = vld [vmem:[#allocation2 + $0x19] sm:$0xff]
      %v329 = vld [vmem:[#allocation2 + $0x21] sm:$0xff]
      %v330 = vld [vmem:[#allocation2 + $0x31] sm:$0xff]
      %v331 = vld [vmem:[#allocation2 + $0x39] sm:$0xff]
      %v332 = vld [vmem:[#allocation2 + $0x49] sm:$0xff]
      %v333 = vld [vmem:[#allocation2 + $0x51] sm:$0xff]
      %v334 = vld [vmem:[#allocation2 + $0x61] sm:$0xff]
      %v335 = vld [vmem:[#allocation2 + $0x69] sm:$0xff]
      %v336 = vld [vmem:[#allocation2 + $0x79] sm:$0xff]
      %v337 = vld [vmem:[#allocation2 + $0x81] sm:$0xff]
      %v338 = vld [vmem:[#allocation2 + $0x91] sm:$0xff]
      %v339 = vld [vmem:[#allocation2 + $0x99] sm:$0xff]
      %v340 = vld [vmem:[#allocation2 + $0xa9] sm:$0xff]
      %v341 = vld [vmem:[#allocation2 + $0xb1] sm:$0xff]
      %v342 = vld [vmem:[#allocation2 + $0xc1] sm:$0xff]
      %v343 = vld [vmem:[#allocation2 + $0xc9] sm:$0xff]
      %v344 = vld [vmem:[#allocation2 + $0xd9] sm:$0xff]
      %v345 = vld [vmem:[#allocation2 + $0xe1] sm:$0xff]
      %v346 = vld [vmem:[#allocation2 + $0xf1] sm:$0xff]
      %v347 = vld [vmem:[#allocation2 + $0xf9] sm:$0xff]
      %v348 = vld [vmem:[#allocation2 + $0x109] sm:$0xff]
      %v349 = vld [vmem:[#allocation2 + $0x111] sm:$0xff]
      %v350 = vld [vmem:[#allocation2 + $0x121] sm:$0xff]
      %v351 = vld [vmem:[#allocation2 + $0x129] sm:$0xff]
      %v352 = vld [vmem:[#allocation2 + $0x139] sm:$0xff]
      %v353 = vld [vmem:[#allocation2 + $0x141] sm:$0xff]
      %v354 = vld [vmem:[#allocation2 + $0x151] sm:$0xff]
      %v355 = vld [vmem:[#allocation2 + $0x159] sm:$0xff]
      %v356 = vld [vmem:[#allocation2 + $0x169] sm:$0xff]
      %v357 = vld [vmem:[#allocation2 + $0x171] sm:$0xff]
      %v358 = vld [vmem:[#allocation2 + $0x2] sm:$0xff]
      %v359 = vld [vmem:[#allocation2 + $0xa] sm:$0xff]
      %v360 = vld [vmem:[#allocation2 + $0x1a] sm:$0xff]
      %v361 = vld [vmem:[#allocation2 + $0x22] sm:$0xff]
      %v362 = vld [vmem:[#allocation2 + $0x32] sm:$0xff]
      %v363 = vld [vmem:[#allocation2 + $0x3a] sm:$0xff]
      %v364 = vld [vmem:[#allocation2 + $0x4a] sm:$0xff]
      %v365 = vld [vmem:[#allocation2 + $0x52] sm:$0xff]
      %v366 = vld [vmem:[#allocation2 + $0x62] sm:$0xff]
      %v367 = vld [vmem:[#allocation2 + $0x6a] sm:$0xff]
      %v368 = vld [vmem:[#allocation2 + $0x7a] sm:$0xff]
      %v369 = vld [vmem:[#allocation2 + $0x82] sm:$0xff]
      %v370 = vld [vmem:[#allocation2 + $0x92] sm:$0xff]
      %v371 = vld [vmem:[#allocation2 + $0x9a] sm:$0xff]
      %v372 = vld [vmem:[#allocation2 + $0xaa] sm:$0xff]
      %v373 = vld [vmem:[#allocation2 + $0xb2] sm:$0xff]
      %v374 = vld [vmem:[#allocation2 + $0xc2] sm:$0xff]
      %v375 = vld [vmem:[#allocation2 + $0xca] sm:$0xff]
      %v376 = vld [vmem:[#allocation2 + $0xda] sm:$0xff]
      %v377 = vld [vmem:[#allocation2 + $0xe2] sm:$0xff]
      %v378 = vld [vmem:[#allocation2 + $0xf2] sm:$0xff]
      %v379 = vld [vmem:[#allocation2 + $0xfa] sm:$0xff]
      %v380 = vld [vmem:[#allocation2 + $0x10a] sm:$0xff]
      %v381 = vld [vmem:[#allocation2 + $0x112] sm:$0xff]
      %v382 = vld [vmem:[#allocation2 + $0x122] sm:$0xff]
      %v383 = vld [vmem:[#allocation2 + $0x12a] sm:$0xff]
      %v384 = vld [vmem:[#allocation2 + $0x13a] sm:$0xff]
      %v385 = vld [vmem:[#allocation2 + $0x142] sm:$0xff]
      %v386 = vld [vmem:[#allocation2 + $0x152] sm:$0xff]
      %v387 = vld [vmem:[#allocation2 + $0x15a] sm:$0xff]
      %v388 = vld [vmem:[#allocation2 + $0x16a] sm:$0xff]
      %v389 = vld [vmem:[#allocation2 + $0x172] sm:$0xff]
      %v390 = vld [vmem:[%s260] sm:$0xff]
      %v391 = vld [vmem:[%s260 + $0x8] sm:$0xff]
      %v392 = vld [vmem:[%s260 + $0x18] sm:$0xff]
      %v393 = vld [vmem:[%s260 + $0x20] sm:$0xff]
      %v394 = vld [vmem:[%s260 + $0x30] sm:$0xff]
      %v395 = vld [vmem:[%s260 + $0x38] sm:$0xff]
      %v396 = vld [vmem:[%s260 + $0x48] sm:$0xff]
      %v397 = vld [vmem:[%s260 + $0x50] sm:$0xff]
      %v398 = vld [vmem:[%s260 + $0x60] sm:$0xff]
      %v399 = vld [vmem:[%s260 + $0x68] sm:$0xff]
      %v400 = vld [vmem:[%s260 + $0x78] sm:$0xff]
      %v401 = vld [vmem:[%s260 + $0x80] sm:$0xff]
      %v402 = vld [vmem:[%s260 + $0x90] sm:$0xff]
      %v403 = vld [vmem:[%s260 + $0x98] sm:$0xff]
      %v404 = vld [vmem:[%s260 + $0xa8] sm:$0xff]
      %v405 = vld [vmem:[%s260 + $0xb0] sm:$0xff]
      %v406 = vld [vmem:[%s260 + $0xc0] sm:$0xff]
      %v407 = vld [vmem:[%s260 + $0xc8] sm:$0xff]
      %v408 = vld [vmem:[%s260 + $0xd8] sm:$0xff]
      %v409 = vld [vmem:[%s260 + $0xe0] sm:$0xff]
      %v410 = vld [vmem:[%s260 + $0xf0] sm:$0xff]
      %v411 = vld [vmem:[%s260 + $0xf8] sm:$0xff]
      %v412 = vld [vmem:[%s260 + $0x108] sm:$0xff]
      %v413 = vld [vmem:[%s260 + $0x110] sm:$0xff]
      %v414 = vld [vmem:[%s260 + $0x120] sm:$0xff]
      %v415 = vld [vmem:[%s260 + $0x128] sm:$0xff]
      %v416 = vld [vmem:[%s260 + $0x138] sm:$0xff]
      %v417 = vld [vmem:[%s260 + $0x140] sm:$0xff]
      %v418 = vld [vmem:[%s260 + $0x150] sm:$0xff]
      %v419 = vld [vmem:[%s260 + $0x158] sm:$0xff]
      %v420 = vld [vmem:[%s260 + $0x168] sm:$0xff]
      %v421 = vld [vmem:[%s260 + $0x170] sm:$0xff]
      %v422 = vld [vmem:[%s260 + $0x1] sm:$0xff]
      %v423 = vld [vmem:[%s260 + $0x9] sm:$0xff]
      %v424 = vld [vmem:[%s260 + $0x19] sm:$0xff]
      %v425 = vld [vmem:[%s260 + $0x21] sm:$0xff]
      %v426 = vld [vmem:[%s260 + $0x31] sm:$0xff]
      %v427 = vld [vmem:[%s260 + $0x39] sm:$0xff]
      %v428 = vld [vmem:[%s260 + $0x49] sm:$0xff]
      %v429 = vld [vmem:[%s260 + $0x51] sm:$0xff]
      %v430 = vld [vmem:[%s260 + $0x61] sm:$0xff]
      %v431 = vld [vmem:[%s260 + $0x69] sm:$0xff]
      %v432 = vld [vmem:[%s260 + $0x79] sm:$0xff]
      %v433 = vld [vmem:[%s260 + $0x81] sm:$0xff]
      %v434 = vld [vmem:[%s260 + $0x91] sm:$0xff]
      %v435 = vld [vmem:[%s260 + $0x99] sm:$0xff]
      %v436 = vld [vmem:[%s260 + $0xa9] sm:$0xff]
      %v437 = vld [vmem:[%s260 + $0xb1] sm:$0xff]
      %v438 = vld [vmem:[%s260 + $0xc1] sm:$0xff]
      %v439 = vld [vmem:[%s260 + $0xc9] sm:$0xff]
      %v440 = vld [vmem:[%s260 + $0xd9] sm:$0xff]
      %v441 = vld [vmem:[%s260 + $0xe1] sm:$0xff]
      %v442 = vld [vmem:[%s260 + $0xf1] sm:$0xff]
      %v443 = vld [vmem:[%s260 + $0xf9] sm:$0xff]
      %v444 = vld [vmem:[%s260 + $0x109] sm:$0xff]
      %v445 = vld [vmem:[%s260 + $0x111] sm:$0xff]
      %v446 = vld [vmem:[%s260 + $0x121] sm:$0xff]
      %v447 = vld [vmem:[%s260 + $0x129] sm:$0xff]
      %v448 = vld [vmem:[%s260 + $0x139] sm:$0xff]
      %v449 = vld [vmem:[%s260 + $0x141] sm:$0xff]
      %v450 = vld [vmem:[%s260 + $0x151] sm:$0xff]
      %v451 = vld [vmem:[%s260 + $0x159] sm:$0xff]
      %v452 = vld [vmem:[%s260 + $0x169] sm:$0xff]
      %v453 = vld [vmem:[%s260 + $0x171] sm:$0xff]
      %v454 = vld [vmem:[%s260 + $0x2] sm:$0xff]
      %v455 = vld [vmem:[%s260 + $0xa] sm:$0xff]
      %v456 = vld [vmem:[%s260 + $0x1a] sm:$0xff]
      %v457 = vld [vmem:[%s260 + $0x22] sm:$0xff]
      %v458 = vld [vmem:[%s260 + $0x32] sm:$0xff]
      %v459 = vld [vmem:[%s260 + $0x3a] sm:$0xff]
      %v460 = vld [vmem:[%s260 + $0x4a] sm:$0xff]
      %v461 = vld [vmem:[%s260 + $0x52] sm:$0xff]
      %v462 = vld [vmem:[%s260 + $0x62] sm:$0xff]
      %v463 = vld [vmem:[%s260 + $0x6a] sm:$0xff]
      %v464 = vld [vmem:[%s260 + $0x7a] sm:$0xff]
      %v465 = vld [vmem:[%s260 + $0x82] sm:$0xff]
      %v466 = vld [vmem:[%s260 + $0x92] sm:$0xff]
      %v467 = vld [vmem:[%s260 + $0x9a] sm:$0xff]
      %v468 = vld [vmem:[%s260 + $0xaa] sm:$0xff]
      %v469 = vld [vmem:[%s260 + $0xb2] sm:$0xff]
      %v470 = vld [vmem:[%s260 + $0xc2] sm:$0xff]
      %v471 = vld [vmem:[%s260 + $0xca] sm:$0xff]
      %v472 = vld [vmem:[%s260 + $0xda] sm:$0xff]
      %v473 = vld [vmem:[%s260 + $0xe2] sm:$0xff]
      %v474 = vld [vmem:[%s260 + $0xf2] sm:$0xff]
      %v475 = vld [vmem:[%s260 + $0xfa] sm:$0xff]
      %v476 = vld [vmem:[%s260 + $0x10a] sm:$0xff]
      %v477 = vld [vmem:[%s260 + $0x112] sm:$0xff]
      %v478 = vld [vmem:[%s260 + $0x122] sm:$0xff]
      %v479 = vld [vmem:[%s260 + $0x12a] sm:$0xff]
      %v480 = vld [vmem:[%s260 + $0x13a] sm:$0xff]
      %v481 = vld [vmem:[%s260 + $0x142] sm:$0xff]
      %v482 = vld [vmem:[%s260 + $0x152] sm:$0xff]
      %v483 = vld [vmem:[%s260 + $0x15a] sm:$0xff]
      %v484 = vld [vmem:[%s260 + $0x16a] sm:$0xff]
      %v485 = vld [vmem:[%s260 + $0x172] sm:$0xff]
      %s486 = scalar_lea.vmem [#allocation2], 48
      %v487 = vld [vmem:[%s486] sm:$0xff]
      %v488 = vld [vmem:[%s486 + $0x8] sm:$0xff]
      %v489 = vld [vmem:[%s486 + $0x18] sm:$0xff]
      %v490 = vld [vmem:[%s486 + $0x20] sm:$0xff]
      %v491 = vld [vmem:[%s486 + $0x30] sm:$0xff]
      %v492 = vld [vmem:[%s486 + $0x38] sm:$0xff]
      %v493 = vld [vmem:[%s486 + $0x48] sm:$0xff]
      %v494 = vld [vmem:[%s486 + $0x50] sm:$0xff]
      %v495 = vld [vmem:[%s486 + $0x60] sm:$0xff]
      %v496 = vld [vmem:[%s486 + $0x68] sm:$0xff]
      %v497 = vld [vmem:[%s486 + $0x78] sm:$0xff]
      %v498 = vld [vmem:[%s486 + $0x80] sm:$0xff]
      %v499 = vld [vmem:[%s486 + $0x90] sm:$0xff]
      %v500 = vld [vmem:[%s486 + $0x98] sm:$0xff]
      %v501 = vld [vmem:[%s486 + $0xa8] sm:$0xff]
      %v502 = vld [vmem:[%s486 + $0xb0] sm:$0xff]
      %v503 = vld [vmem:[%s486 + $0xc0] sm:$0xff]
      %v504 = vld [vmem:[%s486 + $0xc8] sm:$0xff]
      %v505 = vld [vmem:[%s486 + $0xd8] sm:$0xff]
      %v506 = vld [vmem:[%s486 + $0xe0] sm:$0xff]
      %v507 = vld [vmem:[%s486 + $0xf0] sm:$0xff]
      %v508 = vld [vmem:[%s486 + $0xf8] sm:$0xff]
      %v509 = vld [vmem:[%s486 + $0x108] sm:$0xff]
      %v510 = vld [vmem:[%s486 + $0x110] sm:$0xff]
      %v511 = vld [vmem:[%s486 + $0x120] sm:$0xff]
      %v512 = vld [vmem:[%s486 + $0x128] sm:$0xff]
      %v513 = vld [vmem:[%s486 + $0x138] sm:$0xff]
      %v514 = vld [vmem:[%s486 + $0x140] sm:$0xff]
      %v515 = vld [vmem:[%s486 + $0x150] sm:$0xff]
      %v516 = vld [vmem:[%s486 + $0x158] sm:$0xff]
      %v517 = vld [vmem:[%s486 + $0x168] sm:$0xff]
      %v518 = vld [vmem:[%s486 + $0x170] sm:$0xff]
      %v519 = vld [vmem:[%s486 + $0x1] sm:$0xff]
      %v520 = vld [vmem:[%s486 + $0x9] sm:$0xff]
      %v521 = vld [vmem:[%s486 + $0x19] sm:$0xff]
      %v522 = vld [vmem:[%s486 + $0x21] sm:$0xff]
      %v523 = vld [vmem:[%s486 + $0x31] sm:$0xff]
      %v524 = vld [vmem:[%s486 + $0x39] sm:$0xff]
      %v525 = vld [vmem:[%s486 + $0x49] sm:$0xff]
      %v526 = vld [vmem:[%s486 + $0x51] sm:$0xff]
      %v527 = vld [vmem:[%s486 + $0x61] sm:$0xff]
      %v528 = vld [vmem:[%s486 + $0x69] sm:$0xff]
      %v529 = vld [vmem:[%s486 + $0x79] sm:$0xff]
      %v530 = vld [vmem:[%s486 + $0x81] sm:$0xff]
      %v531 = vld [vmem:[%s486 + $0x91] sm:$0xff]
      %v532 = vld [vmem:[%s486 + $0x99] sm:$0xff]
      %v533 = vld [vmem:[%s486 + $0xa9] sm:$0xff]
      %v534 = vld [vmem:[%s486 + $0xb1] sm:$0xff]
      %v535 = vld [vmem:[%s486 + $0xc1] sm:$0xff]
      %v536 = vld [vmem:[%s486 + $0xc9] sm:$0xff]
      %v537 = vld [vmem:[%s486 + $0xd9] sm:$0xff]
      %v538 = vld [vmem:[%s486 + $0xe1] sm:$0xff]
      %v539 = vld [vmem:[%s486 + $0xf1] sm:$0xff]
      %v540 = vld [vmem:[%s486 + $0xf9] sm:$0xff]
      %v541 = vld [vmem:[%s486 + $0x109] sm:$0xff]
      %v542 = vld [vmem:[%s486 + $0x111] sm:$0xff]
      %v543 = vld [vmem:[%s486 + $0x121] sm:$0xff]
      %v544 = vld [vmem:[%s486 + $0x129] sm:$0xff]
      %v545 = vld [vmem:[%s486 + $0x139] sm:$0xff]
      %v546 = vld [vmem:[%s486 + $0x141] sm:$0xff]
      %v547 = vld [vmem:[%s486 + $0x151] sm:$0xff]
      %v548 = vld [vmem:[%s486 + $0x159] sm:$0xff]
      %v549 = vld [vmem:[%s486 + $0x169] sm:$0xff]
      %v550 = vld [vmem:[%s486 + $0x171] sm:$0xff]
      %v551 = vld [vmem:[%s486 + $0x2] sm:$0xff]
      %v552 = vld [vmem:[%s486 + $0xa] sm:$0xff]
      %v553 = vld [vmem:[%s486 + $0x1a] sm:$0xff]
      %v554 = vld [vmem:[%s486 + $0x22] sm:$0xff]
      %v555 = vld [vmem:[%s486 + $0x32] sm:$0xff]
      %v556 = vld [vmem:[%s486 + $0x3a] sm:$0xff]
      %v557 = vld [vmem:[%s486 + $0x4a] sm:$0xff]
      %v558 = vld [vmem:[%s486 + $0x52] sm:$0xff]
      %v559 = vld [vmem:[%s486 + $0x62] sm:$0xff]
      %v560 = vld [vmem:[%s486 + $0x6a] sm:$0xff]
      %v561 = vld [vmem:[%s486 + $0x7a] sm:$0xff]
      %v562 = vld [vmem:[%s486 + $0x82] sm:$0xff]
      %v563 = vld [vmem:[%s486 + $0x92] sm:$0xff]
      %v564 = vld [vmem:[%s486 + $0x9a] sm:$0xff]
      %v565 = vld [vmem:[%s486 + $0xaa] sm:$0xff]
      %v566 = vld [vmem:[%s486 + $0xb2] sm:$0xff]
      %v567 = vld [vmem:[%s486 + $0xc2] sm:$0xff]
      %v568 = vld [vmem:[%s486 + $0xca] sm:$0xff]
      %v569 = vld [vmem:[%s486 + $0xda] sm:$0xff]
      %v570 = vld [vmem:[%s486 + $0xe2] sm:$0xff]
      %v571 = vld [vmem:[%s486 + $0xf2] sm:$0xff]
      %v572 = vld [vmem:[%s486 + $0xfa] sm:$0xff]
      %v573 = vld [vmem:[%s486 + $0x10a] sm:$0xff]
      %v574 = vld [vmem:[%s486 + $0x112] sm:$0xff]
      %v575 = vld [vmem:[%s486 + $0x122] sm:$0xff]
      %v576 = vld [vmem:[%s486 + $0x12a] sm:$0xff]
      %v577 = vld [vmem:[%s486 + $0x13a] sm:$0xff]
      %v578 = vld [vmem:[%s486 + $0x142] sm:$0xff]
      %v579 = vld [vmem:[%s486 + $0x152] sm:$0xff]
      %v580 = vld [vmem:[%s486 + $0x15a] sm:$0xff]
      %v581 = vld [vmem:[%s486 + $0x16a] sm:$0xff]
      %v582 = vld [vmem:[%s486 + $0x172] sm:$0xff]
      %615 = vrot.lane.b32.xlu0 %v326, 16
      %v616 = vpop.permute.xlu0 %615
      %617 = vrot.lane.b32.xlu0 %v327, 16
      %v618 = vpop.permute.xlu0 %617
      %619 = vrot.lane.b32.xlu0 %v328, 16
      %v620 = vpop.permute.xlu0 %619
      %621 = vrot.lane.b32.xlu0 %v329, 16
      %v622 = vpop.permute.xlu0 %621
      %623 = vrot.lane.b32.xlu0 %v330, 16
      %v624 = vpop.permute.xlu0 %623
      %625 = vrot.lane.b32.xlu0 %v331, 16
      %v626 = vpop.permute.xlu0 %625
      %627 = vrot.lane.b32.xlu0 %v332, 16
      %v628 = vpop.permute.xlu0 %627
      %629 = vrot.lane.b32.xlu0 %v333, 16
      %v630 = vpop.permute.xlu0 %629
      %631 = vrot.lane.b32.xlu0 %v334, 16
      %v632 = vpop.permute.xlu0 %631
      %633 = vrot.lane.b32.xlu0 %v335, 16
      %v634 = vpop.permute.xlu0 %633
      %635 = vrot.lane.b32.xlu0 %v336, 16
      %v636 = vpop.permute.xlu0 %635
      %637 = vrot.lane.b32.xlu0 %v337, 16
      %v638 = vpop.permute.xlu0 %637
      %639 = vrot.lane.b32.xlu0 %v338, 16
      %v640 = vpop.permute.xlu0 %639
      %641 = vrot.lane.b32.xlu0 %v339, 16
      %v642 = vpop.permute.xlu0 %641
      %643 = vrot.lane.b32.xlu0 %v340, 16
      %v644 = vpop.permute.xlu0 %643
      %645 = vrot.lane.b32.xlu0 %v341, 16
      %v646 = vpop.permute.xlu0 %645
      %647 = vrot.lane.b32.xlu0 %v342, 16
      %v648 = vpop.permute.xlu0 %647
      %649 = vrot.lane.b32.xlu0 %v343, 16
      %v650 = vpop.permute.xlu0 %649
      %651 = vrot.lane.b32.xlu0 %v344, 16
      %v652 = vpop.permute.xlu0 %651
      %653 = vrot.lane.b32.xlu0 %v345, 16
      %v654 = vpop.permute.xlu0 %653
      %655 = vrot.lane.b32.xlu0 %v346, 16
      %v656 = vpop.permute.xlu0 %655
      %657 = vrot.lane.b32.xlu0 %v347, 16
      %v658 = vpop.permute.xlu0 %657
      %659 = vrot.lane.b32.xlu0 %v348, 16
      %v660 = vpop.permute.xlu0 %659
      %661 = vrot.lane.b32.xlu0 %v349, 16
      %v662 = vpop.permute.xlu0 %661
      %663 = vrot.lane.b32.xlu0 %v350, 16
      %v664 = vpop.permute.xlu0 %663
      %665 = vrot.lane.b32.xlu0 %v351, 16
      %v666 = vpop.permute.xlu0 %665
      %667 = vrot.lane.b32.xlu0 %v352, 16
      %v668 = vpop.permute.xlu0 %667
      %669 = vrot.lane.b32.xlu0 %v353, 16
      %v670 = vpop.permute.xlu0 %669
      %671 = vrot.lane.b32.xlu0 %v354, 16
      %v672 = vpop.permute.xlu0 %671
      %673 = vrot.lane.b32.xlu0 %v355, 16
      %v674 = vpop.permute.xlu0 %673
      %675 = vrot.lane.b32.xlu0 %v356, 16
      %v676 = vpop.permute.xlu0 %675
      %677 = vrot.lane.b32.xlu0 %v357, 16
      %v678 = vpop.permute.xlu0 %677
      %743 = vrot.lane.b32.xlu0 %v358, 32
      %v744 = vpop.permute.xlu0 %743
      %745 = vrot.lane.b32.xlu0 %v359, 32
      %v746 = vpop.permute.xlu0 %745
      %747 = vrot.lane.b32.xlu0 %v360, 32
      %v748 = vpop.permute.xlu0 %747
      %749 = vrot.lane.b32.xlu0 %v361, 32
      %v750 = vpop.permute.xlu0 %749
      %751 = vrot.lane.b32.xlu0 %v362, 32
      %v752 = vpop.permute.xlu0 %751
      %753 = vrot.lane.b32.xlu0 %v363, 32
      %v754 = vpop.permute.xlu0 %753
      %755 = vrot.lane.b32.xlu0 %v364, 32
      %v756 = vpop.permute.xlu0 %755
      %757 = vrot.lane.b32.xlu0 %v365, 32
      %v758 = vpop.permute.xlu0 %757
      %759 = vrot.lane.b32.xlu0 %v366, 32
      %v760 = vpop.permute.xlu0 %759
      %761 = vrot.lane.b32.xlu0 %v367, 32
      %v762 = vpop.permute.xlu0 %761
      %763 = vrot.lane.b32.xlu0 %v368, 32
      %v764 = vpop.permute.xlu0 %763
      %765 = vrot.lane.b32.xlu0 %v369, 32
      %v766 = vpop.permute.xlu0 %765
      %767 = vrot.lane.b32.xlu0 %v370, 32
      %v768 = vpop.permute.xlu0 %767
      %769 = vrot.lane.b32.xlu0 %v371, 32
      %v770 = vpop.permute.xlu0 %769
      %771 = vrot.lane.b32.xlu0 %v372, 32
      %v772 = vpop.permute.xlu0 %771
      %773 = vrot.lane.b32.xlu0 %v373, 32
      %v774 = vpop.permute.xlu0 %773
      %775 = vrot.lane.b32.xlu0 %v374, 32
      %v776 = vpop.permute.xlu0 %775
      %777 = vrot.lane.b32.xlu0 %v375, 32
      %v778 = vpop.permute.xlu0 %777
      %779 = vrot.lane.b32.xlu0 %v376, 32
      %v780 = vpop.permute.xlu0 %779
      %781 = vrot.lane.b32.xlu0 %v377, 32
      %v782 = vpop.permute.xlu0 %781
      %783 = vrot.lane.b32.xlu0 %v378, 32
      %v784 = vpop.permute.xlu0 %783
      %785 = vrot.lane.b32.xlu0 %v379, 32
      %v786 = vpop.permute.xlu0 %785
      %787 = vrot.lane.b32.xlu0 %v380, 32
      %v788 = vpop.permute.xlu0 %787
      %789 = vrot.lane.b32.xlu0 %v381, 32
      %v790 = vpop.permute.xlu0 %789
      %791 = vrot.lane.b32.xlu0 %v382, 32
      %v792 = vpop.permute.xlu0 %791
      %793 = vrot.lane.b32.xlu0 %v383, 32
      %v794 = vpop.permute.xlu0 %793
      %795 = vrot.lane.b32.xlu0 %v384, 32
      %v796 = vpop.permute.xlu0 %795
      %797 = vrot.lane.b32.xlu0 %v385, 32
      %v798 = vpop.permute.xlu0 %797
      %799 = vrot.lane.b32.xlu0 %v386, 32
      %v800 = vpop.permute.xlu0 %799
      %801 = vrot.lane.b32.xlu0 %v387, 32
      %v802 = vpop.permute.xlu0 %801
      %803 = vrot.lane.b32.xlu0 %v388, 32
      %v804 = vpop.permute.xlu0 %803
      %805 = vrot.lane.b32.xlu0 %v389, 32
      %v806 = vpop.permute.xlu0 %805
      %871 = vrot.lane.b32.xlu0 %v390, 48
      %v872 = vpop.permute.xlu0 %871
      %873 = vrot.lane.b32.xlu0 %v391, 48
      %v874 = vpop.permute.xlu0 %873
      %875 = vrot.lane.b32.xlu0 %v392, 48
      %v876 = vpop.permute.xlu0 %875
      %877 = vrot.lane.b32.xlu0 %v393, 48
      %v878 = vpop.permute.xlu0 %877
      %879 = vrot.lane.b32.xlu0 %v394, 48
      %v880 = vpop.permute.xlu0 %879
      %881 = vrot.lane.b32.xlu0 %v395, 48
      %v882 = vpop.permute.xlu0 %881
      %883 = vrot.lane.b32.xlu0 %v396, 48
      %v884 = vpop.permute.xlu0 %883
      %885 = vrot.lane.b32.xlu0 %v397, 48
      %v886 = vpop.permute.xlu0 %885
      %887 = vrot.lane.b32.xlu0 %v398, 48
      %v888 = vpop.permute.xlu0 %887
      %889 = vrot.lane.b32.xlu0 %v399, 48
      %v890 = vpop.permute.xlu0 %889
      %891 = vrot.lane.b32.xlu0 %v400, 48
      %v892 = vpop.permute.xlu0 %891
      %893 = vrot.lane.b32.xlu0 %v401, 48
      %v894 = vpop.permute.xlu0 %893
      %895 = vrot.lane.b32.xlu0 %v402, 48
      %v896 = vpop.permute.xlu0 %895
      %897 = vrot.lane.b32.xlu0 %v403, 48
      %v898 = vpop.permute.xlu0 %897
      %899 = vrot.lane.b32.xlu0 %v404, 48
      %v900 = vpop.permute.xlu0 %899
      %901 = vrot.lane.b32.xlu0 %v405, 48
      %v902 = vpop.permute.xlu0 %901
      %903 = vrot.lane.b32.xlu0 %v406, 48
      %v904 = vpop.permute.xlu0 %903
      %905 = vrot.lane.b32.xlu0 %v407, 48
      %v906 = vpop.permute.xlu0 %905
      %907 = vrot.lane.b32.xlu0 %v408, 48
      %v908 = vpop.permute.xlu0 %907
      %909 = vrot.lane.b32.xlu0 %v409, 48
      %v910 = vpop.permute.xlu0 %909
      %911 = vrot.lane.b32.xlu0 %v410, 48
      %v912 = vpop.permute.xlu0 %911
      %913 = vrot.lane.b32.xlu0 %v411, 48
      %v914 = vpop.permute.xlu0 %913
      %915 = vrot.lane.b32.xlu0 %v412, 48
      %v916 = vpop.permute.xlu0 %915
      %917 = vrot.lane.b32.xlu0 %v413, 48
      %v918 = vpop.permute.xlu0 %917
      %919 = vrot.lane.b32.xlu0 %v414, 48
      %v920 = vpop.permute.xlu0 %919
      %921 = vrot.lane.b32.xlu0 %v415, 48
      %v922 = vpop.permute.xlu0 %921
      %923 = vrot.lane.b32.xlu0 %v416, 48
      %v924 = vpop.permute.xlu0 %923
      %925 = vrot.lane.b32.xlu0 %v417, 48
      %v926 = vpop.permute.xlu0 %925
      %927 = vrot.lane.b32.xlu0 %v418, 48
      %v928 = vpop.permute.xlu0 %927
      %929 = vrot.lane.b32.xlu0 %v419, 48
      %v930 = vpop.permute.xlu0 %929
      %931 = vrot.lane.b32.xlu0 %v420, 48
      %v932 = vpop.permute.xlu0 %931
      %933 = vrot.lane.b32.xlu0 %v421, 48
      %v934 = vpop.permute.xlu0 %933
      %999 = vrot.lane.b32.xlu0 %v422, 64
      %v1000 = vpop.permute.xlu0 %999
      %1001 = vrot.lane.b32.xlu0 %v423, 64
      %v1002 = vpop.permute.xlu0 %1001
      %1003 = vrot.lane.b32.xlu0 %v424, 64
      %v1004 = vpop.permute.xlu0 %1003
      %1005 = vrot.lane.b32.xlu0 %v425, 64
      %v1006 = vpop.permute.xlu0 %1005
      %1007 = vrot.lane.b32.xlu0 %v426, 64
      %v1008 = vpop.permute.xlu0 %1007
      %1009 = vrot.lane.b32.xlu0 %v427, 64
      %v1010 = vpop.permute.xlu0 %1009
      %1011 = vrot.lane.b32.xlu0 %v428, 64
      %v1012 = vpop.permute.xlu0 %1011
      %1013 = vrot.lane.b32.xlu0 %v429, 64
      %v1014 = vpop.permute.xlu0 %1013
      %1015 = vrot.lane.b32.xlu0 %v430, 64
      %v1016 = vpop.permute.xlu0 %1015
      %1017 = vrot.lane.b32.xlu0 %v431, 64
      %v1018 = vpop.permute.xlu0 %1017
      %1019 = vrot.lane.b32.xlu0 %v432, 64
      %v1020 = vpop.permute.xlu0 %1019
      %1021 = vrot.lane.b32.xlu0 %v433, 64
      %v1022 = vpop.permute.xlu0 %1021
      %1023 = vrot.lane.b32.xlu0 %v434, 64
      %v1024 = vpop.permute.xlu0 %1023
      %1025 = vrot.lane.b32.xlu0 %v435, 64
      %v1026 = vpop.permute.xlu0 %1025
      %1027 = vrot.lane.b32.xlu0 %v436, 64
      %v1028 = vpop.permute.xlu0 %1027
      %1029 = vrot.lane.b32.xlu0 %v437, 64
      %v1030 = vpop.permute.xlu0 %1029
      %1031 = vrot.lane.b32.xlu0 %v438, 64
      %v1032 = vpop.permute.xlu0 %1031
      %1033 = vrot.lane.b32.xlu0 %v439, 64
      %v1034 = vpop.permute.xlu0 %1033
      %1035 = vrot.lane.b32.xlu0 %v440, 64
      %v1036 = vpop.permute.xlu0 %1035
      %1037 = vrot.lane.b32.xlu0 %v441, 64
      %v1038 = vpop.permute.xlu0 %1037
      %1039 = vrot.lane.b32.xlu0 %v442, 64
      %v1040 = vpop.permute.xlu0 %1039
      %1041 = vrot.lane.b32.xlu0 %v443, 64
      %v1042 = vpop.permute.xlu0 %1041
      %1043 = vrot.lane.b32.xlu0 %v444, 64
      %v1044 = vpop.permute.xlu0 %1043
      %1045 = vrot.lane.b32.xlu0 %v445, 64
      %v1046 = vpop.permute.xlu0 %1045
      %1047 = vrot.lane.b32.xlu0 %v446, 64
      %v1048 = vpop.permute.xlu0 %1047
      %1049 = vrot.lane.b32.xlu0 %v447, 64
      %v1050 = vpop.permute.xlu0 %1049
      %1051 = vrot.lane.b32.xlu0 %v448, 64
      %v1052 = vpop.permute.xlu0 %1051
      %1053 = vrot.lane.b32.xlu0 %v449, 64
      %v1054 = vpop.permute.xlu0 %1053
      %1055 = vrot.lane.b32.xlu0 %v450, 64
      %v1056 = vpop.permute.xlu0 %1055
      %1057 = vrot.lane.b32.xlu0 %v451, 64
      %v1058 = vpop.permute.xlu0 %1057
      %1059 = vrot.lane.b32.xlu0 %v452, 64
      %v1060 = vpop.permute.xlu0 %1059
      %1061 = vrot.lane.b32.xlu0 %v453, 64
      %v1062 = vpop.permute.xlu0 %1061
      %1127 = vrot.lane.b32.xlu0 %v454, 80
      %v1128 = vpop.permute.xlu0 %1127
      %1129 = vrot.lane.b32.xlu0 %v455, 80
      %v1130 = vpop.permute.xlu0 %1129
      %1131 = vrot.lane.b32.xlu0 %v456, 80
      %v1132 = vpop.permute.xlu0 %1131
      %1133 = vrot.lane.b32.xlu0 %v457, 80
      %v1134 = vpop.permute.xlu0 %1133
      %1135 = vrot.lane.b32.xlu0 %v458, 80
      %v1136 = vpop.permute.xlu0 %1135
      %1137 = vrot.lane.b32.xlu0 %v459, 80
      %v1138 = vpop.permute.xlu0 %1137
      %1139 = vrot.lane.b32.xlu0 %v460, 80
      %v1140 = vpop.permute.xlu0 %1139
      %1141 = vrot.lane.b32.xlu0 %v461, 80
      %v1142 = vpop.permute.xlu0 %1141
      %1143 = vrot.lane.b32.xlu0 %v462, 80
      %v1144 = vpop.permute.xlu0 %1143
      %1145 = vrot.lane.b32.xlu0 %v463, 80
      %v1146 = vpop.permute.xlu0 %1145
      %1147 = vrot.lane.b32.xlu0 %v464, 80
      %v1148 = vpop.permute.xlu0 %1147
      %1149 = vrot.lane.b32.xlu0 %v465, 80
      %v1150 = vpop.permute.xlu0 %1149
      %1151 = vrot.lane.b32.xlu0 %v466, 80
      %v1152 = vpop.permute.xlu0 %1151
      %1153 = vrot.lane.b32.xlu0 %v467, 80
      %v1154 = vpop.permute.xlu0 %1153
      %1155 = vrot.lane.b32.xlu0 %v468, 80
      %v1156 = vpop.permute.xlu0 %1155
      %1157 = vrot.lane.b32.xlu0 %v469, 80
      %v1158 = vpop.permute.xlu0 %1157
      %1159 = vrot.lane.b32.xlu0 %v470, 80
      %v1160 = vpop.permute.xlu0 %1159
      %1161 = vrot.lane.b32.xlu0 %v471, 80
      %v1162 = vpop.permute.xlu0 %1161
      %1163 = vrot.lane.b32.xlu0 %v472, 80
      %v1164 = vpop.permute.xlu0 %1163
      %1165 = vrot.lane.b32.xlu0 %v473, 80
      %v1166 = vpop.permute.xlu0 %1165
      %1167 = vrot.lane.b32.xlu0 %v474, 80
      %v1168 = vpop.permute.xlu0 %1167
      %1169 = vrot.lane.b32.xlu0 %v475, 80
      %v1170 = vpop.permute.xlu0 %1169
      %1171 = vrot.lane.b32.xlu0 %v476, 80
      %v1172 = vpop.permute.xlu0 %1171
      %1173 = vrot.lane.b32.xlu0 %v477, 80
      %v1174 = vpop.permute.xlu0 %1173
      %1175 = vrot.lane.b32.xlu0 %v478, 80
      %v1176 = vpop.permute.xlu0 %1175
      %1177 = vrot.lane.b32.xlu0 %v479, 80
      %v1178 = vpop.permute.xlu0 %1177
      %1179 = vrot.lane.b32.xlu0 %v480, 80
      %v1180 = vpop.permute.xlu0 %1179
      %1181 = vrot.lane.b32.xlu0 %v481, 80
      %v1182 = vpop.permute.xlu0 %1181
      %1183 = vrot.lane.b32.xlu0 %v482, 80
      %v1184 = vpop.permute.xlu0 %1183
      %1185 = vrot.lane.b32.xlu0 %v483, 80
      %v1186 = vpop.permute.xlu0 %1185
      %1187 = vrot.lane.b32.xlu0 %v484, 80
      %v1188 = vpop.permute.xlu0 %1187
      %1189 = vrot.lane.b32.xlu0 %v485, 80
      %v1190 = vpop.permute.xlu0 %1189
      %1255 = vrot.lane.b32.xlu0 %v487, 96
      %v1256 = vpop.permute.xlu0 %1255
      %1257 = vrot.lane.b32.xlu0 %v488, 96
      %v1258 = vpop.permute.xlu0 %1257
      %1259 = vrot.lane.b32.xlu0 %v489, 96
      %v1260 = vpop.permute.xlu0 %1259
      %1261 = vrot.lane.b32.xlu0 %v490, 96
      %v1262 = vpop.permute.xlu0 %1261
      %1263 = vrot.lane.b32.xlu0 %v491, 96
      %v1264 = vpop.permute.xlu0 %1263
      %1265 = vrot.lane.b32.xlu0 %v492, 96
      %v1266 = vpop.permute.xlu0 %1265
      %1267 = vrot.lane.b32.xlu0 %v493, 96
      %v1268 = vpop.permute.xlu0 %1267
      %1269 = vrot.lane.b32.xlu0 %v494, 96
      %v1270 = vpop.permute.xlu0 %1269
      %1271 = vrot.lane.b32.xlu0 %v495, 96
      %v1272 = vpop.permute.xlu0 %1271
      %1273 = vrot.lane.b32.xlu0 %v496, 96
      %v1274 = vpop.permute.xlu0 %1273
      %1275 = vrot.lane.b32.xlu0 %v497, 96
      %v1276 = vpop.permute.xlu0 %1275
      %1277 = vrot.lane.b32.xlu0 %v498, 96
      %v1278 = vpop.permute.xlu0 %1277
      %1279 = vrot.lane.b32.xlu0 %v499, 96
      %v1280 = vpop.permute.xlu0 %1279
      %1281 = vrot.lane.b32.xlu0 %v500, 96
      %v1282 = vpop.permute.xlu0 %1281
      %1283 = vrot.lane.b32.xlu0 %v501, 96
      %v1284 = vpop.permute.xlu0 %1283
      %1285 = vrot.lane.b32.xlu0 %v502, 96
      %v1286 = vpop.permute.xlu0 %1285
      %1287 = vrot.lane.b32.xlu0 %v503, 96
      %v1288 = vpop.permute.xlu0 %1287
      %1289 = vrot.lane.b32.xlu0 %v504, 96
      %v1290 = vpop.permute.xlu0 %1289
      %1291 = vrot.lane.b32.xlu0 %v505, 96
      %v1292 = vpop.permute.xlu0 %1291
      %1293 = vrot.lane.b32.xlu0 %v506, 96
      %v1294 = vpop.permute.xlu0 %1293
      %1295 = vrot.lane.b32.xlu0 %v507, 96
      %v1296 = vpop.permute.xlu0 %1295
      %1297 = vrot.lane.b32.xlu0 %v508, 96
      %v1298 = vpop.permute.xlu0 %1297
      %1299 = vrot.lane.b32.xlu0 %v509, 96
      %v1300 = vpop.permute.xlu0 %1299
      %1301 = vrot.lane.b32.xlu0 %v510, 96
      %v1302 = vpop.permute.xlu0 %1301
      %1303 = vrot.lane.b32.xlu0 %v511, 96
      %v1304 = vpop.permute.xlu0 %1303
      %1305 = vrot.lane.b32.xlu0 %v512, 96
      %v1306 = vpop.permute.xlu0 %1305
      %1307 = vrot.lane.b32.xlu0 %v513, 96
      %v1308 = vpop.permute.xlu0 %1307
      %1309 = vrot.lane.b32.xlu0 %v514, 96
      %v1310 = vpop.permute.xlu0 %1309
      %1311 = vrot.lane.b32.xlu0 %v515, 96
      %v1312 = vpop.permute.xlu0 %1311
      %1313 = vrot.lane.b32.xlu0 %v516, 96
      %v1314 = vpop.permute.xlu0 %1313
      %1315 = vrot.lane.b32.xlu0 %v517, 96
      %v1316 = vpop.permute.xlu0 %1315
      %1317 = vrot.lane.b32.xlu0 %v518, 96
      %v1318 = vpop.permute.xlu0 %1317
      %1383 = vrot.lane.b32.xlu0 %v519, 112
      %v1384 = vpop.permute.xlu0 %1383
      %1385 = vrot.lane.b32.xlu0 %v520, 112
      %v1386 = vpop.permute.xlu0 %1385
      %1387 = vrot.lane.b32.xlu0 %v521, 112
      %v1388 = vpop.permute.xlu0 %1387
      %1389 = vrot.lane.b32.xlu0 %v522, 112
      %v1390 = vpop.permute.xlu0 %1389
      %1391 = vrot.lane.b32.xlu0 %v523, 112
      %v1392 = vpop.permute.xlu0 %1391
      %1393 = vrot.lane.b32.xlu0 %v524, 112
      %v1394 = vpop.permute.xlu0 %1393
      %1395 = vrot.lane.b32.xlu0 %v525, 112
      %v1396 = vpop.permute.xlu0 %1395
      %1397 = vrot.lane.b32.xlu0 %v526, 112
      %v1398 = vpop.permute.xlu0 %1397
      %1399 = vrot.lane.b32.xlu0 %v527, 112
      %v1400 = vpop.permute.xlu0 %1399
      %1401 = vrot.lane.b32.xlu0 %v528, 112
      %v1402 = vpop.permute.xlu0 %1401
      %1403 = vrot.lane.b32.xlu0 %v529, 112
      %v1404 = vpop.permute.xlu0 %1403
      %1405 = vrot.lane.b32.xlu0 %v530, 112
      %v1406 = vpop.permute.xlu0 %1405
      %1407 = vrot.lane.b32.xlu0 %v531, 112
      %v1408 = vpop.permute.xlu0 %1407
      %1409 = vrot.lane.b32.xlu0 %v532, 112
      %v1410 = vpop.permute.xlu0 %1409
      %1411 = vrot.lane.b32.xlu0 %v533, 112
      %v1412 = vpop.permute.xlu0 %1411
      %1413 = vrot.lane.b32.xlu0 %v534, 112
      %v1414 = vpop.permute.xlu0 %1413
      %1415 = vrot.lane.b32.xlu0 %v535, 112
      %v1416 = vpop.permute.xlu0 %1415
      %1417 = vrot.lane.b32.xlu0 %v536, 112
      %v1418 = vpop.permute.xlu0 %1417
      %1419 = vrot.lane.b32.xlu0 %v537, 112
      %v1420 = vpop.permute.xlu0 %1419
      %1421 = vrot.lane.b32.xlu0 %v538, 112
      %v1422 = vpop.permute.xlu0 %1421
      %1423 = vrot.lane.b32.xlu0 %v539, 112
      %v1424 = vpop.permute.xlu0 %1423
      %1425 = vrot.lane.b32.xlu0 %v540, 112
      %v1426 = vpop.permute.xlu0 %1425
      %1427 = vrot.lane.b32.xlu0 %v541, 112
      %v1428 = vpop.permute.xlu0 %1427
      %1429 = vrot.lane.b32.xlu0 %v542, 112
      %v1430 = vpop.permute.xlu0 %1429
      %1431 = vrot.lane.b32.xlu0 %v543, 112
      %v1432 = vpop.permute.xlu0 %1431
      %1433 = vrot.lane.b32.xlu0 %v544, 112
      %v1434 = vpop.permute.xlu0 %1433
      %1435 = vrot.lane.b32.xlu0 %v545, 112
      %v1436 = vpop.permute.xlu0 %1435
      %1437 = vrot.lane.b32.xlu0 %v546, 112
      %v1438 = vpop.permute.xlu0 %1437
      %1439 = vrot.lane.b32.xlu0 %v547, 112
      %v1440 = vpop.permute.xlu0 %1439
      %1441 = vrot.lane.b32.xlu0 %v548, 112
      %v1442 = vpop.permute.xlu0 %1441
      %1443 = vrot.lane.b32.xlu0 %v549, 112
      %v1444 = vpop.permute.xlu0 %1443
      %1445 = vrot.lane.b32.xlu0 %v550, 112
      %v1446 = vpop.permute.xlu0 %1445
      %v1479 = vsel %vm172, %v294, %v616
      %v1480 = vsel %vm172, %v295, %v618
      %v1481 = vsel %vm172, %v296, %v620
      %v1482 = vsel %vm172, %v297, %v622
      %v1483 = vsel %vm172, %v298, %v624
      %v1484 = vsel %vm172, %v299, %v626
      %v1485 = vsel %vm172, %v300, %v628
      %v1486 = vsel %vm172, %v301, %v630
      %v1487 = vsel %vm172, %v302, %v632
      %v1488 = vsel %vm172, %v303, %v634
      %v1489 = vsel %vm172, %v304, %v636
      %v1490 = vsel %vm172, %v305, %v638
      %v1491 = vsel %vm172, %v306, %v640
      %v1492 = vsel %vm172, %v307, %v642
      %v1493 = vsel %vm172, %v308, %v644
      %v1494 = vsel %vm172, %v309, %v646
      %v1495 = vsel %vm172, %v310, %v648
      %v1496 = vsel %vm172, %v311, %v650
      %v1497 = vsel %vm172, %v312, %v652
      %v1498 = vsel %vm172, %v313, %v654
      %v1499 = vsel %vm172, %v314, %v656
      %v1500 = vsel %vm172, %v315, %v658
      %v1501 = vsel %vm172, %v316, %v660
      %v1502 = vsel %vm172, %v317, %v662
      %v1503 = vsel %vm172, %v318, %v664
      %v1504 = vsel %vm172, %v319, %v666
      %v1505 = vsel %vm172, %v320, %v668
      %v1506 = vsel %vm172, %v321, %v670
      %v1507 = vsel %vm172, %v322, %v672
      %v1508 = vsel %vm172, %v323, %v674
      %v1509 = vsel %vm172, %v324, %v676
      %v1510 = vsel %vm172, %v325, %v678
      %vm1511 = vcmask 261120
      %v1512 = vsel %vm1511, %v1479, %v744
      %v1513 = vsel %vm1511, %v1480, %v746
      %v1514 = vsel %vm1511, %v1481, %v748
      %v1515 = vsel %vm1511, %v1482, %v750
      %v1516 = vsel %vm1511, %v1483, %v752
      %v1517 = vsel %vm1511, %v1484, %v754
      %v1518 = vsel %vm1511, %v1485, %v756
      %v1519 = vsel %vm1511, %v1486, %v758
      %v1520 = vsel %vm1511, %v1487, %v760
      %v1521 = vsel %vm1511, %v1488, %v762
      %v1522 = vsel %vm1511, %v1489, %v764
      %v1523 = vsel %vm1511, %v1490, %v766
      %v1524 = vsel %vm1511, %v1491, %v768
      %v1525 = vsel %vm1511, %v1492, %v770
      %v1526 = vsel %vm1511, %v1493, %v772
      %v1527 = vsel %vm1511, %v1494, %v774
      %v1528 = vsel %vm1511, %v1495, %v776
      %v1529 = vsel %vm1511, %v1496, %v778
      %v1530 = vsel %vm1511, %v1497, %v780
      %v1531 = vsel %vm1511, %v1498, %v782
      %v1532 = vsel %vm1511, %v1499, %v784
      %v1533 = vsel %vm1511, %v1500, %v786
      %v1534 = vsel %vm1511, %v1501, %v788
      %v1535 = vsel %vm1511, %v1502, %v790
      %v1536 = vsel %vm1511, %v1503, %v792
      %v1537 = vsel %vm1511, %v1504, %v794
      %v1538 = vsel %vm1511, %v1505, %v796
      %v1539 = vsel %vm1511, %v1506, %v798
      %v1540 = vsel %vm1511, %v1507, %v800
      %v1541 = vsel %vm1511, %v1508, %v802
      %v1542 = vsel %vm1511, %v1509, %v804
      %v1543 = vsel %vm1511, %v1510, %v806
      %vm1544 = vcmask 392192
      %v1545 = vsel %vm1544, %v1512, %v872
      %v1546 = vsel %vm1544, %v1513, %v874
      %v1547 = vsel %vm1544, %v1514, %v876
      %v1548 = vsel %vm1544, %v1515, %v878
      %v1549 = vsel %vm1544, %v1516, %v880
      %v1550 = vsel %vm1544, %v1517, %v882
      %v1551 = vsel %vm1544, %v1518, %v884
      %v1552 = vsel %vm1544, %v1519, %v886
      %v1553 = vsel %vm1544, %v1520, %v888
      %v1554 = vsel %vm1544, %v1521, %v890
      %v1555 = vsel %vm1544, %v1522, %v892
      %v1556 = vsel %vm1544, %v1523, %v894
      %v1557 = vsel %vm1544, %v1524, %v896
      %v1558 = vsel %vm1544, %v1525, %v898
      %v1559 = vsel %vm1544, %v1526, %v900
      %v1560 = vsel %vm1544, %v1527, %v902
      %v1561 = vsel %vm1544, %v1528, %v904
      %v1562 = vsel %vm1544, %v1529, %v906
      %v1563 = vsel %vm1544, %v1530, %v908
      %v1564 = vsel %vm1544, %v1531, %v910
      %v1565 = vsel %vm1544, %v1532, %v912
      %v1566 = vsel %vm1544, %v1533, %v914
      %v1567 = vsel %vm1544, %v1534, %v916
      %v1568 = vsel %vm1544, %v1535, %v918
      %v1569 = vsel %vm1544, %v1536, %v920
      %v1570 = vsel %vm1544, %v1537, %v922
      %v1571 = vsel %vm1544, %v1538, %v924
      %v1572 = vsel %vm1544, %v1539, %v926
      %v1573 = vsel %vm1544, %v1540, %v928
      %v1574 = vsel %vm1544, %v1541, %v930
      %v1575 = vsel %vm1544, %v1542, %v932
      %v1576 = vsel %vm1544, %v1543, %v934
      %vm1577 = vcmask 523264
      %v1578 = vsel %vm1577, %v1545, %v1000
      %v1579 = vsel %vm1577, %v1546, %v1002
      %v1580 = vsel %vm1577, %v1547, %v1004
      %v1581 = vsel %vm1577, %v1548, %v1006
      %v1582 = vsel %vm1577, %v1549, %v1008
      %v1583 = vsel %vm1577, %v1550, %v1010
      %v1584 = vsel %vm1577, %v1551, %v1012
      %v1585 = vsel %vm1577, %v1552, %v1014
      %v1586 = vsel %vm1577, %v1553, %v1016
      %v1587 = vsel %vm1577, %v1554, %v1018
      %v1588 = vsel %vm1577, %v1555, %v1020
      %v1589 = vsel %vm1577, %v1556, %v1022
      %v1590 = vsel %vm1577, %v1557, %v1024
      %v1591 = vsel %vm1577, %v1558, %v1026
      %v1592 = vsel %vm1577, %v1559, %v1028
      %v1593 = vsel %vm1577, %v1560, %v1030
      %v1594 = vsel %vm1577, %v1561, %v1032
      %v1595 = vsel %vm1577, %v1562, %v1034
      %v1596 = vsel %vm1577, %v1563, %v1036
      %v1597 = vsel %vm1577, %v1564, %v1038
      %v1598 = vsel %vm1577, %v1565, %v1040
      %v1599 = vsel %vm1577, %v1566, %v1042
      %v1600 = vsel %vm1577, %v1567, %v1044
      %v1601 = vsel %vm1577, %v1568, %v1046
      %v1602 = vsel %vm1577, %v1569, %v1048
      %v1603 = vsel %vm1577, %v1570, %v1050
      %v1604 = vsel %vm1577, %v1571, %v1052
      %v1605 = vsel %vm1577, %v1572, %v1054
      %v1606 = vsel %vm1577, %v1573, %v1056
      %v1607 = vsel %vm1577, %v1574, %v1058
      %v1608 = vsel %vm1577, %v1575, %v1060
      %v1609 = vsel %vm1577, %v1576, %v1062
      %vm1610 = vcmask 654336
      %v1611 = vsel %vm1610, %v1578, %v1128
      %v1612 = vsel %vm1610, %v1579, %v1130
      %v1613 = vsel %vm1610, %v1580, %v1132
      %v1614 = vsel %vm1610, %v1581, %v1134
      %v1615 = vsel %vm1610, %v1582, %v1136
      %v1616 = vsel %vm1610, %v1583, %v1138
      %v1617 = vsel %vm1610, %v1584, %v1140
      %v1618 = vsel %vm1610, %v1585, %v1142
      %v1619 = vsel %vm1610, %v1586, %v1144
      %v1620 = vsel %vm1610, %v1587, %v1146
      %v1621 = vsel %vm1610, %v1588, %v1148
      %v1622 = vsel %vm1610, %v1589, %v1150
      %v1623 = vsel %vm1610, %v1590, %v1152
      %v1624 = vsel %vm1610, %v1591, %v1154
      %v1625 = vsel %vm1610, %v1592, %v1156
      %v1626 = vsel %vm1610, %v1593, %v1158
      %v1627 = vsel %vm1610, %v1594, %v1160
      %v1628 = vsel %vm1610, %v1595, %v1162
      %v1629 = vsel %vm1610, %v1596, %v1164
      %v1630 = vsel %vm1610, %v1597, %v1166
      %v1631 = vsel %vm1610, %v1598, %v1168
      %v1632 = vsel %vm1610, %v1599, %v1170
      %v1633 = vsel %vm1610, %v1600, %v1172
      %v1634 = vsel %vm1610, %v1601, %v1174
      %v1635 = vsel %vm1610, %v1602, %v1176
      %v1636 = vsel %vm1610, %v1603, %v1178
      %v1637 = vsel %vm1610, %v1604, %v1180
      %v1638 = vsel %vm1610, %v1605, %v1182
      %v1639 = vsel %vm1610, %v1606, %v1184
      %v1640 = vsel %vm1610, %v1607, %v1186
      %v1641 = vsel %vm1610, %v1608, %v1188
      %v1642 = vsel %vm1610, %v1609, %v1190
      %vm1643 = vcmask 785408
      %v1644 = vsel %vm1643, %v1611, %v1256
      %v1645 = vsel %vm1643, %v1612, %v1258
      %v1646 = vsel %vm1643, %v1613, %v1260
      %v1647 = vsel %vm1643, %v1614, %v1262
      %v1648 = vsel %vm1643, %v1615, %v1264
      %v1649 = vsel %vm1643, %v1616, %v1266
      %v1650 = vsel %vm1643, %v1617, %v1268
      %v1651 = vsel %vm1643, %v1618, %v1270
      %v1652 = vsel %vm1643, %v1619, %v1272
      %v1653 = vsel %vm1643, %v1620, %v1274
      %v1654 = vsel %vm1643, %v1621, %v1276
      %v1655 = vsel %vm1643, %v1622, %v1278
      %v1656 = vsel %vm1643, %v1623, %v1280
      %v1657 = vsel %vm1643, %v1624, %v1282
      %v1658 = vsel %vm1643, %v1625, %v1284
      %v1659 = vsel %vm1643, %v1626, %v1286
      %v1660 = vsel %vm1643, %v1627, %v1288
      %v1661 = vsel %vm1643, %v1628, %v1290
      %v1662 = vsel %vm1643, %v1629, %v1292
      %v1663 = vsel %vm1643, %v1630, %v1294
      %v1664 = vsel %vm1643, %v1631, %v1296
      %v1665 = vsel %vm1643, %v1632, %v1298
      %v1666 = vsel %vm1643, %v1633, %v1300
      %v1667 = vsel %vm1643, %v1634, %v1302
      %v1668 = vsel %vm1643, %v1635, %v1304
      %v1669 = vsel %vm1643, %v1636, %v1306
      %v1670 = vsel %vm1643, %v1637, %v1308
      %v1671 = vsel %vm1643, %v1638, %v1310
      %v1672 = vsel %vm1643, %v1639, %v1312
      %v1673 = vsel %vm1643, %v1640, %v1314
      %v1674 = vsel %vm1643, %v1641, %v1316
      %v1675 = vsel %vm1643, %v1642, %v1318
      %vm1676 = vcmask 916480
      %v1677 = vsel %vm1676, %v1644, %v1384
      %v1678 = vsel %vm1676, %v1645, %v1386
      %v1679 = vsel %vm1676, %v1646, %v1388
      %v1680 = vsel %vm1676, %v1647, %v1390
      %v1681 = vsel %vm1676, %v1648, %v1392
      %v1682 = vsel %vm1676, %v1649, %v1394
      %v1683 = vsel %vm1676, %v1650, %v1396
      %v1684 = vsel %vm1676, %v1651, %v1398
      %v1685 = vsel %vm1676, %v1652, %v1400
      %v1686 = vsel %vm1676, %v1653, %v1402
      %v1687 = vsel %vm1676, %v1654, %v1404
      %v1688 = vsel %vm1676, %v1655, %v1406
      %v1689 = vsel %vm1676, %v1656, %v1408
      %v1690 = vsel %vm1676, %v1657, %v1410
      %v1691 = vsel %vm1676, %v1658, %v1412
      %v1692 = vsel %vm1676, %v1659, %v1414
      %v1693 = vsel %vm1676, %v1660, %v1416
      %v1694 = vsel %vm1676, %v1661, %v1418
      %v1695 = vsel %vm1676, %v1662, %v1420
      %v1696 = vsel %vm1676, %v1663, %v1422
      %v1697 = vsel %vm1676, %v1664, %v1424
      %v1698 = vsel %vm1676, %v1665, %v1426
      %v1699 = vsel %vm1676, %v1666, %v1428
      %v1700 = vsel %vm1676, %v1667, %v1430
      %v1701 = vsel %vm1676, %v1668, %v1432
      %v1702 = vsel %vm1676, %v1669, %v1434
      %v1703 = vsel %vm1676, %v1670, %v1436
      %v1704 = vsel %vm1676, %v1671, %v1438
      %v1705 = vsel %vm1676, %v1672, %v1440
      %v1706 = vsel %vm1676, %v1673, %v1442
      %v1707 = vsel %vm1676, %v1674, %v1444
      %v1708 = vsel %vm1676, %v1675, %v1446
      %v1709 = vpack.c.bf16 %v1678, %v1677
      %v1710 = vpack.c.bf16 %v552, %v551
      %v1711 = vpack.c.bf16 %v1680, %v1679
      %v1712 = vpack.c.bf16 %v554, %v553
      %v1713 = vpack.c.bf16 %v1682, %v1681
      %v1714 = vpack.c.bf16 %v556, %v555
      %v1715 = vpack.c.bf16 %v1684, %v1683
      %v1716 = vpack.c.bf16 %v558, %v557
      %v1717 = vpack.c.bf16 %v1686, %v1685
      %v1718 = vpack.c.bf16 %v560, %v559
      %v1719 = vpack.c.bf16 %v1688, %v1687
      %v1720 = vpack.c.bf16 %v562, %v561
      %v1721 = vpack.c.bf16 %v1690, %v1689
      %v1722 = vpack.c.bf16 %v564, %v563
      %v1723 = vpack.c.bf16 %v1692, %v1691
      %v1724 = vpack.c.bf16 %v566, %v565
      %v1725 = vpack.c.bf16 %v1694, %v1693
      %v1726 = vpack.c.bf16 %v568, %v567
      %v1727 = vpack.c.bf16 %v1696, %v1695
      %v1728 = vpack.c.bf16 %v570, %v569
      %v1729 = vpack.c.bf16 %v1698, %v1697
      %v1730 = vpack.c.bf16 %v572, %v571
      %v1731 = vpack.c.bf16 %v1700, %v1699
      %v1732 = vpack.c.bf16 %v574, %v573
      %v1733 = vpack.c.bf16 %v1702, %v1701
      %v1734 = vpack.c.bf16 %v576, %v575
      %v1735 = vpack.c.bf16 %v1704, %v1703
      %v1736 = vpack.c.bf16 %v578, %v577
      %v1737 = vpack.c.bf16 %v1706, %v1705
      %v1738 = vpack.c.bf16 %v580, %v579
      %v1739 = vpack.c.bf16 %v1708, %v1707
      %v1740 = vpack.c.bf16 %v582, %v581
      %v1741 = vld [vmem:[%s1] sm:$0xf]
      %v1742 = vld [vmem:[%s1 + $0x4] sm:$0xf]
      %v1743 = vld [vmem:[%s1 + $0x8] sm:$0xf]
      %v1744 = vld [vmem:[%s1 + $0xc] sm:$0xf]
      %v1745 = vld [vmem:[%s1 + $0x10] sm:$0xf]
      %v1746 = vld [vmem:[%s1 + $0x14] sm:$0xf]
      %v1747 = vld [vmem:[%s1 + $0x18] sm:$0xf]
      %v1748 = vld [vmem:[%s1 + $0x1c] sm:$0xf]
      %v1749 = vld [vmem:[%s1 + $0x20] sm:$0xf]
      %v1750 = vld [vmem:[%s1 + $0x24] sm:$0xf]
      %v1751 = vld [vmem:[%s1 + $0x28] sm:$0xf]
      %v1752 = vld [vmem:[%s1 + $0x2c] sm:$0xf]
      %v1753 = vld [vmem:[%s1 + $0x30] sm:$0xf]
      %v1754 = vld [vmem:[%s1 + $0x34] sm:$0xf]
      %v1755 = vld [vmem:[%s1 + $0x38] sm:$0xf]
      %v1756 = vld [vmem:[%s1 + $0x3c] sm:$0xf]
      %v1757 = vld [vmem:[%s1 + $0x40] sm:$0xf]
      %v1758 = vld [vmem:[%s1 + $0x44] sm:$0xf]
      %v1759 = vld [vmem:[%s2] sm:$0x1]
      %v1761 = vlaneseq
      %v1762 = vshrl.u32 %v1761, 7
      %v1763 = vsub.s32 0, %v1762
      %v1764 = vrot.slane %v1759, %v1763
      %v1784 = vunpack.c.l.b16 %v1741
      %v1785 = vunpack.c.l.b16 %v1742
      %v1786 = vunpack.c.l.b16 %v1743
      %v1787 = vunpack.c.l.b16 %v1744
      %v1788 = vunpack.c.l.b16 %v1745
      %v1789 = vunpack.c.l.b16 %v1746
      %v1790 = vunpack.c.l.b16 %v1747
      %v1791 = vunpack.c.l.b16 %v1748
      %v1792 = vunpack.c.l.b16 %v1749
      %v1793 = vunpack.c.l.b16 %v1750
      %v1794 = vunpack.c.l.b16 %v1751
      %v1795 = vunpack.c.l.b16 %v1752
      %v1796 = vunpack.c.l.b16 %v1753
      %v1797 = vunpack.c.l.b16 %v1754
      %v1798 = vunpack.c.l.b16 %v1755
      %v1799 = vunpack.c.l.b16 %v1756
      %v1800 = vunpack.c.l.b16 %v1757
      %v1801 = vunpack.c.l.b16 %v1758
      %v1802 = vpack.c.b16 %v1785, %v1784
      %v1803 = vpack.c.b16 %v1787, %v1786
      %v1804 = vpack.c.b16 %v1789, %v1788
      %v1805 = vpack.c.b16 %v1791, %v1790
      %v1806 = vpack.c.b16 %v1793, %v1792
      %v1807 = vpack.c.b16 %v1795, %v1794
      %v1808 = vpack.c.b16 %v1797, %v1796
      %v1809 = vpack.c.b16 %v1799, %v1798
      %v1810 = vpack.c.b16 %v1801, %v1800
      %v1821 = vsel %vm172, %v1710, 0
      %v1824 = vsel %vm172, %v1712, 0
      %v1827 = vsel %vm172, %v1714, 0
      %v1830 = vsel %vm172, %v1716, 0
      %v1833 = vsel %vm172, %v1718, 0
      %v1836 = vsel %vm172, %v1720, 0
      %v1839 = vsel %vm172, %v1722, 0
      %v1842 = vsel %vm172, %v1724, 0
      %v1845 = vsel %vm172, %v1726, 0
      %v1848 = vsel %vm172, %v1728, 0
      %v1851 = vsel %vm172, %v1730, 0
      %v1854 = vsel %vm172, %v1732, 0
      %v1857 = vsel %vm172, %v1734, 0
      %v1860 = vsel %vm172, %v1736, 0
      %v1863 = vsel %vm172, %v1738, 0
      %v1866 = vsel %vm172, %v1740, 0
      %1868 = vmatprep.subr.bf16.mxu0 0
      %1869 = vmatpush1.bf16.msra.mxu0 %v1802
      %1870 = vmatprep.subr.bf16.mxu0 0
      %1871 = vmatpush1.bf16.msra.mxu0 %v1803
      %1872 = vmatprep.subr.bf16.mxu0 0
      %1873 = vmatpush1.bf16.msra.mxu0 %v1804
      %1874 = vmatprep.subr.bf16.mxu0 0
      %1875 = vmatpush1.bf16.msra.mxu0 %v1805
      %1876 = vmatprep.subr.bf16.mxu0 0
      %1877 = vmatpush1.bf16.msra.mxu0 %v1806
      %1878 = vmatprep.subr.bf16.mxu0 0
      %1879 = vmatpush1.bf16.msra.mxu0 %v1807
      %1880 = vmatprep.subr.bf16.mxu0 0
      %1881 = vmatpush1.bf16.msra.mxu0 %v1808
      %1882 = vmatprep.subr.bf16.mxu0 0
      %1883 = vmatpush1.bf16.msra.mxu0 %v1809
      %1884 = vmatprep.subr.bf16.mxu0 0
      %1885 = vmatpush1.bf16.msra.mxu0 %v1810
      %1886 = vmatprep.subr.bf16.mxu0 0
      %1887 = vmatpush1.bf16.msra.mxu0 0
      %1888 = vmatprep.subr.bf16.mxu0 0
      %1889 = vmatpush1.bf16.msra.mxu0 0
      %1890 = vmatprep.subr.bf16.mxu0 0
      %1891 = vmatpush1.bf16.msra.mxu0 0
      %1892 = vmatprep.subr.bf16.mxu0 0
      %1893 = vmatpush1.bf16.msra.mxu0 0
      %1894 = vmatprep.subr.bf16.mxu0 0
      %1895 = vmatpush1.bf16.msra.mxu0 0
      %1896 = vmatprep.subr.bf16.mxu0 0
      %1897 = vmatpush1.bf16.msra.mxu0 0
      %1898 = vmatprep.subr.bf16.mxu0 0
      %1899 = vmatpush1.bf16.msra.mxu0 0
      %1900 = vmatprep.mubr.bf16.mxu0 %v1821
      %1901 = vmatmul.mubr.bf16.gmra.mrb[0].mxu0 %v1709
      %v1902 = vpop.f32.mrb[0].mxu0
      %v1903 = vadd.f32 %v1764, %v1902
      %v1904 = vpop.f32.mrb[0].mxu0
      %v1905 = vpop.f32.mrb[0].mxu0
      %v1906 = vadd.f32 %v1764, %v1905
      %v1907 = vpop.f32.mrb[0].mxu0
      %1908 = vmatprep.mubr.bf16.mxu0 %v1824
      %1909 = vmatmul.mubr.bf16.gmra.mrb[0].mxu0 %v1711
      %v1910 = vpop.f32.mrb[0].mxu0
      %v1911 = vadd.f32 %v1764, %v1910
      %v1912 = vpop.f32.mrb[0].mxu0
      %v1913 = vpop.f32.mrb[0].mxu0
      %v1914 = vadd.f32 %v1764, %v1913
      %v1915 = vpop.f32.mrb[0].mxu0
      %1916 = vmatprep.mubr.bf16.mxu0 %v1827
      %1917 = vmatmul.mubr.bf16.gmra.mrb[0].mxu0 %v1713
      %v1918 = vpop.f32.mrb[0].mxu0
      %v1919 = vadd.f32 %v1764, %v1918
      %v1920 = vpop.f32.mrb[0].mxu0
      %v1921 = vpop.f32.mrb[0].mxu0
      %v1922 = vadd.f32 %v1764, %v1921
      %v1923 = vpop.f32.mrb[0].mxu0
      %1924 = vmatprep.mubr.bf16.mxu0 %v1830
      %1925 = vmatmul.mubr.bf16.gmra.mrb[0].mxu0 %v1715
      %v1926 = vpop.f32.mrb[0].mxu0
      %v1927 = vadd.f32 %v1764, %v1926
      %v1928 = vpop.f32.mrb[0].mxu0
      %v1929 = vpop.f32.mrb[0].mxu0
      %v1930 = vadd.f32 %v1764, %v1929
      %v1931 = vpop.f32.mrb[0].mxu0
      %1932 = vmatprep.mubr.bf16.mxu0 %v1833
      %1933 = vmatmul.mubr.bf16.gmra.mrb[0].mxu0 %v1717
      %v1934 = vpop.f32.mrb[0].mxu0
      %v1935 = vadd.f32 %v1764, %v1934
      %v1936 = vpop.f32.mrb[0].mxu0
      %v1937 = vpop.f32.mrb[0].mxu0
      %v1938 = vadd.f32 %v1764, %v1937
      %v1939 = vpop.f32.mrb[0].mxu0
      %1940 = vmatprep.mubr.bf16.mxu0 %v1836
      %1941 = vmatmul.mubr.bf16.gmra.mrb[0].mxu0 %v1719
      %v1942 = vpop.f32.mrb[0].mxu0
      %v1943 = vadd.f32 %v1764, %v1942
      %v1944 = vpop.f32.mrb[0].mxu0
      %v1945 = vpop.f32.mrb[0].mxu0
      %v1946 = vadd.f32 %v1764, %v1945
      %v1947 = vpop.f32.mrb[0].mxu0
      %1948 = vmatprep.mubr.bf16.mxu0 %v1839
      %1949 = vmatmul.mubr.bf16.gmra.mrb[0].mxu0 %v1721
      %v1950 = vpop.f32.mrb[0].mxu0
      %v1951 = vadd.f32 %v1764, %v1950
      %v1952 = vpop.f32.mrb[0].mxu0
      %v1953 = vpop.f32.mrb[0].mxu0
      %v1954 = vadd.f32 %v1764, %v1953
      %v1955 = vpop.f32.mrb[0].mxu0
      %1956 = vmatprep.mubr.bf16.mxu0 %v1842
      %1957 = vmatmul.mubr.bf16.gmra.mrb[0].mxu0 %v1723
      %v1958 = vpop.f32.mrb[0].mxu0
      %v1959 = vadd.f32 %v1764, %v1958
      %v1960 = vpop.f32.mrb[0].mxu0
      %v1961 = vpop.f32.mrb[0].mxu0
      %v1962 = vadd.f32 %v1764, %v1961
      %v1963 = vpop.f32.mrb[0].mxu0
      %1964 = vmatprep.mubr.bf16.mxu0 %v1845
      %1965 = vmatmul.mubr.bf16.gmra.mrb[0].mxu0 %v1725
      %v1966 = vpop.f32.mrb[0].mxu0
      %v1967 = vadd.f32 %v1764, %v1966
      %v1968 = vpop.f32.mrb[0].mxu0
      %v1969 = vpop.f32.mrb[0].mxu0
      %v1970 = vadd.f32 %v1764, %v1969
      %v1971 = vpop.f32.mrb[0].mxu0
      %1972 = vmatprep.mubr.bf16.mxu0 %v1848
      %1973 = vmatmul.mubr.bf16.gmra.mrb[0].mxu0 %v1727
      %v1974 = vpop.f32.mrb[0].mxu0
      %v1975 = vadd.f32 %v1764, %v1974
      %v1976 = vpop.f32.mrb[0].mxu0
      %v1977 = vpop.f32.mrb[0].mxu0
      %v1978 = vadd.f32 %v1764, %v1977
      %v1979 = vpop.f32.mrb[0].mxu0
      %1980 = vmatprep.mubr.bf16.mxu0 %v1851
      %1981 = vmatmul.mubr.bf16.gmra.mrb[0].mxu0 %v1729
      %v1982 = vpop.f32.mrb[0].mxu0
      %v1983 = vadd.f32 %v1764, %v1982
      %v1984 = vpop.f32.mrb[0].mxu0
      %v1985 = vpop.f32.mrb[0].mxu0
      %v1986 = vadd.f32 %v1764, %v1985
      %v1987 = vpop.f32.mrb[0].mxu0
      %1988 = vmatprep.mubr.bf16.mxu0 %v1854
      %1989 = vmatmul.mubr.bf16.gmra.mrb[0].mxu0 %v1731
      %v1990 = vpop.f32.mrb[0].mxu0
      %v1991 = vadd.f32 %v1764, %v1990
      %v1992 = vpop.f32.mrb[0].mxu0
      %v1993 = vpop.f32.mrb[0].mxu0
      %v1994 = vadd.f32 %v1764, %v1993
      %v1995 = vpop.f32.mrb[0].mxu0
      %1996 = vmatprep.mubr.bf16.mxu0 %v1857
      %1997 = vmatmul.mubr.bf16.gmra.mrb[0].mxu0 %v1733
      %v1998 = vpop.f32.mrb[0].mxu0
      %v1999 = vadd.f32 %v1764, %v1998
      %v2000 = vpop.f32.mrb[0].mxu0
      %v2001 = vpop.f32.mrb[0].mxu0
      %v2002 = vadd.f32 %v1764, %v2001
      %v2003 = vpop.f32.mrb[0].mxu0
      %2004 = vmatprep.mubr.bf16.mxu0 %v1860
      %2005 = vmatmul.mubr.bf16.gmra.mrb[0].mxu0 %v1735
      %v2006 = vpop.f32.mrb[0].mxu0
      %v2007 = vadd.f32 %v1764, %v2006
      %v2008 = vpop.f32.mrb[0].mxu0
      %v2009 = vpop.f32.mrb[0].mxu0
      %v2010 = vadd.f32 %v1764, %v2009
      %v2011 = vpop.f32.mrb[0].mxu0
      %2012 = vmatprep.mubr.bf16.mxu0 %v1863
      %2013 = vmatmul.mubr.bf16.gmra.mrb[0].mxu0 %v1737
      %v2014 = vpop.f32.mrb[0].mxu0
      %v2015 = vadd.f32 %v1764, %v2014
      %v2016 = vpop.f32.mrb[0].mxu0
      %v2017 = vpop.f32.mrb[0].mxu0
      %v2018 = vadd.f32 %v1764, %v2017
      %v2019 = vpop.f32.mrb[0].mxu0
      %2020 = vmatprep.mubr.bf16.mxu0 %v1866
      %2021 = vmatmul.mubr.bf16.gmra.mrb[0].mxu0 %v1739
      %v2022 = vpop.f32.mrb[0].mxu0
      %v2023 = vadd.f32 %v1764, %v2022
      %v2024 = vpop.f32.mrb[0].mxu0
      %v2025 = vpop.f32.mrb[0].mxu0
      %v2026 = vadd.f32 %v1764, %v2025
      %v2027 = vpop.f32.mrb[0].mxu0
      %2028 = vdwg.mxu0
      %2029 = vst.msk [vmem:[#allocation3] sm:$0xff] %vm172, %v1903
      %2030 = vst.msk [vmem:[#allocation3 + $0x8] sm:$0xff] %vm172, %v1906
      %2031 = vst.msk [vmem:[#allocation3 + $0x10] sm:$0xff] %vm172, %v1911
      %2032 = vst.msk [vmem:[#allocation3 + $0x18] sm:$0xff] %vm172, %v1914
      %2033 = vst.msk [vmem:[#allocation3 + $0x20] sm:$0xff] %vm172, %v1919
      %2034 = vst.msk [vmem:[#allocation3 + $0x28] sm:$0xff] %vm172, %v1922
      %2035 = vst.msk [vmem:[#allocation3 + $0x30] sm:$0xff] %vm172, %v1927
      %2036 = vst.msk [vmem:[#allocation3 + $0x38] sm:$0xff] %vm172, %v1930
      %2037 = vst.msk [vmem:[#allocation3 + $0x40] sm:$0xff] %vm172, %v1935
      %2038 = vst.msk [vmem:[#allocation3 + $0x48] sm:$0xff] %vm172, %v1938
      %2039 = vst.msk [vmem:[#allocation3 + $0x50] sm:$0xff] %vm172, %v1943
      %2040 = vst.msk [vmem:[#allocation3 + $0x58] sm:$0xff] %vm172, %v1946
      %2041 = vst.msk [vmem:[#allocation3 + $0x60] sm:$0xff] %vm172, %v1951
      %2042 = vst.msk [vmem:[#allocation3 + $0x68] sm:$0xff] %vm172, %v1954
      %2043 = vst.msk [vmem:[#allocation3 + $0x70] sm:$0xff] %vm172, %v1959
      %2044 = vst.msk [vmem:[#allocation3 + $0x78] sm:$0xff] %vm172, %v1962
      %2045 = vst.msk [vmem:[#allocation3 + $0x80] sm:$0xff] %vm172, %v1967
      %2046 = vst.msk [vmem:[#allocation3 + $0x88] sm:$0xff] %vm172, %v1970
      %2047 = vst.msk [vmem:[#allocation3 + $0x90] sm:$0xff] %vm172, %v1975
      %2048 = vst.msk [vmem:[#allocation3 + $0x98] sm:$0xff] %vm172, %v1978
      %2049 = vst.msk [vmem:[#allocation3 + $0xa0] sm:$0xff] %vm172, %v1983
      %2050 = vst.msk [vmem:[#allocation3 + $0xa8] sm:$0xff] %vm172, %v1986
      %2051 = vst.msk [vmem:[#allocation3 + $0xb0] sm:$0xff] %vm172, %v1991
      %2052 = vst.msk [vmem:[#allocation3 + $0xb8] sm:$0xff] %vm172, %v1994
      %2053 = vst.msk [vmem:[#allocation3 + $0xc0] sm:$0xff] %vm172, %v1999
      %2054 = vst.msk [vmem:[#allocation3 + $0xc8] sm:$0xff] %vm172, %v2002
      %2055 = vst.msk [vmem:[#allocation3 + $0xd0] sm:$0xff] %vm172, %v2007
      %2056 = vst.msk [vmem:[#allocation3 + $0xd8] sm:$0xff] %vm172, %v2010
      %2057 = vst.msk [vmem:[#allocation3 + $0xe0] sm:$0xff] %vm172, %v2015
      %2058 = vst.msk [vmem:[#allocation3 + $0xe8] sm:$0xff] %vm172, %v2018
      %2059 = vst.msk [vmem:[#allocation3 + $0xf0] sm:$0xff] %vm172, %v2023
      %2060 = vst.msk [vmem:[#allocation3 + $0xf8] sm:$0xff] %vm172, %v2026
      %2061 = vst.msk [vmem:[%s260 + $0x1] sm:$0xff] %vm172, %v1903
      %2062 = vst.msk [vmem:[%s260 + $0x9] sm:$0xff] %vm172, %v1906
      %2063 = vst.msk [vmem:[%s260 + $0x19] sm:$0xff] %vm172, %v1911
      %2064 = vst.msk [vmem:[%s260 + $0x21] sm:$0xff] %vm172, %v1914
      %2065 = vst.msk [vmem:[%s260 + $0x31] sm:$0xff] %vm172, %v1919
      %2066 = vst.msk [vmem:[%s260 + $0x39] sm:$0xff] %vm172, %v1922
      %2067 = vst.msk [vmem:[%s260 + $0x49] sm:$0xff] %vm172, %v1927
      %2068 = vst.msk [vmem:[%s260 + $0x51] sm:$0xff] %vm172, %v1930
      %2069 = vst.msk [vmem:[%s260 + $0x61] sm:$0xff] %vm172, %v1935
      %2070 = vst.msk [vmem:[%s260 + $0x69] sm:$0xff] %vm172, %v1938
      %2071 = vst.msk [vmem:[%s260 + $0x79] sm:$0xff] %vm172, %v1943
      %2072 = vst.msk [vmem:[%s260 + $0x81] sm:$0xff] %vm172, %v1946
      %2073 = vst.msk [vmem:[%s260 + $0x91] sm:$0xff] %vm172, %v1951
      %2074 = vst.msk [vmem:[%s260 + $0x99] sm:$0xff] %vm172, %v1954
      %2075 = vst.msk [vmem:[%s260 + $0xa9] sm:$0xff] %vm172, %v1959
      %2076 = vst.msk [vmem:[%s260 + $0xb1] sm:$0xff] %vm172, %v1962
      %2077 = vst.msk [vmem:[%s260 + $0xc1] sm:$0xff] %vm172, %v1967
      %2078 = vst.msk [vmem:[%s260 + $0xc9] sm:$0xff] %vm172, %v1970
      %2079 = vst.msk [vmem:[%s260 + $0xd9] sm:$0xff] %vm172, %v1975
      %2080 = vst.msk [vmem:[%s260 + $0xe1] sm:$0xff] %vm172, %v1978
      %2081 = vst.msk [vmem:[%s260 + $0xf1] sm:$0xff] %vm172, %v1983
      %2082 = vst.msk [vmem:[%s260 + $0xf9] sm:$0xff] %vm172, %v1986
      %2083 = vst.msk [vmem:[%s260 + $0x109] sm:$0xff] %vm172, %v1991
      %2084 = vst.msk [vmem:[%s260 + $0x111] sm:$0xff] %vm172, %v1994
      %2085 = vst.msk [vmem:[%s260 + $0x121] sm:$0xff] %vm172, %v1999
      %2086 = vst.msk [vmem:[%s260 + $0x129] sm:$0xff] %vm172, %v2002
      %2087 = vst.msk [vmem:[%s260 + $0x139] sm:$0xff] %vm172, %v2007
      %2088 = vst.msk [vmem:[%s260 + $0x141] sm:$0xff] %vm172, %v2010
      %2089 = vst.msk [vmem:[%s260 + $0x151] sm:$0xff] %vm172, %v2015
      %2090 = vst.msk [vmem:[%s260 + $0x159] sm:$0xff] %vm172, %v2018
      %2091 = vst.msk [vmem:[%s260 + $0x169] sm:$0xff] %vm172, %v2023
      %2092 = vst.msk [vmem:[%s260 + $0x171] sm:$0xff] %vm172, %v2026
      %v2093 = vld [vmem:[#allocation2] sm:$0xff]
      %v2094 = vld [vmem:[#allocation2 + $0x8] sm:$0xff]
      %v2095 = vld [vmem:[#allocation2 + $0x18] sm:$0xff]
      %v2096 = vld [vmem:[#allocation2 + $0x20] sm:$0xff]
      %v2097 = vld [vmem:[#allocation2 + $0x30] sm:$0xff]
      %v2098 = vld [vmem:[#allocation2 + $0x38] sm:$0xff]
      %v2099 = vld [vmem:[#allocation2 + $0x48] sm:$0xff]
      %v2100 = vld [vmem:[#allocation2 + $0x50] sm:$0xff]
      %v2101 = vld [vmem:[#allocation2 + $0x60] sm:$0xff]
      %v2102 = vld [vmem:[#allocation2 + $0x68] sm:$0xff]
      %v2103 = vld [vmem:[#allocation2 + $0x78] sm:$0xff]
      %v2104 = vld [vmem:[#allocation2 + $0x80] sm:$0xff]
      %v2105 = vld [vmem:[#allocation2 + $0x90] sm:$0xff]
      %v2106 = vld [vmem:[#allocation2 + $0x98] sm:$0xff]
      %v2107 = vld [vmem:[#allocation2 + $0xa8] sm:$0xff]
      %v2108 = vld [vmem:[#allocation2 + $0xb0] sm:$0xff]
      %v2109 = vld [vmem:[#allocation2 + $0xc0] sm:$0xff]
      %v2110 = vld [vmem:[#allocation2 + $0xc8] sm:$0xff]
      %v2111 = vld [vmem:[#allocation2 + $0xd8] sm:$0xff]
      %v2112 = vld [vmem:[#allocation2 + $0xe0] sm:$0xff]
      %v2113 = vld [vmem:[#allocation2 + $0xf0] sm:$0xff]
      %v2114 = vld [vmem:[#allocation2 + $0xf8] sm:$0xff]
      %v2115 = vld [vmem:[#allocation2 + $0x108] sm:$0xff]
      %v2116 = vld [vmem:[#allocation2 + $0x110] sm:$0xff]
      %v2117 = vld [vmem:[#allocation2 + $0x120] sm:$0xff]
      %v2118 = vld [vmem:[#allocation2 + $0x128] sm:$0xff]
      %v2119 = vld [vmem:[#allocation2 + $0x138] sm:$0xff]
      %v2120 = vld [vmem:[#allocation2 + $0x140] sm:$0xff]
      %v2121 = vld [vmem:[#allocation2 + $0x150] sm:$0xff]
      %v2122 = vld [vmem:[#allocation2 + $0x158] sm:$0xff]
      %v2123 = vld [vmem:[#allocation2 + $0x168] sm:$0xff]
      %v2124 = vld [vmem:[#allocation2 + $0x170] sm:$0xff]
      %v2125 = vld [vmem:[#allocation2 + $0x1] sm:$0xff]
      %v2126 = vld [vmem:[#allocation2 + $0x9] sm:$0xff]
      %v2127 = vld [vmem:[#allocation2 + $0x19] sm:$0xff]
      %v2128 = vld [vmem:[#allocation2 + $0x21] sm:$0xff]
      %v2129 = vld [vmem:[#allocation2 + $0x31] sm:$0xff]
      %v2130 = vld [vmem:[#allocation2 + $0x39] sm:$0xff]
      %v2131 = vld [vmem:[#allocation2 + $0x49] sm:$0xff]
      %v2132 = vld [vmem:[#allocation2 + $0x51] sm:$0xff]
      %v2133 = vld [vmem:[#allocation2 + $0x61] sm:$0xff]
      %v2134 = vld [vmem:[#allocation2 + $0x69] sm:$0xff]
      %v2135 = vld [vmem:[#allocation2 + $0x79] sm:$0xff]
      %v2136 = vld [vmem:[#allocation2 + $0x81] sm:$0xff]
      %v2137 = vld [vmem:[#allocation2 + $0x91] sm:$0xff]
      %v2138 = vld [vmem:[#allocation2 + $0x99] sm:$0xff]
      %v2139 = vld [vmem:[#allocation2 + $0xa9] sm:$0xff]
      %v2140 = vld [vmem:[#allocation2 + $0xb1] sm:$0xff]
      %v2141 = vld [vmem:[#allocation2 + $0xc1] sm:$0xff]
      %v2142 = vld [vmem:[#allocation2 + $0xc9] sm:$0xff]
      %v2143 = vld [vmem:[#allocation2 + $0xd9] sm:$0xff]
      %v2144 = vld [vmem:[#allocation2 + $0xe1] sm:$0xff]
      %v2145 = vld [vmem:[#allocation2 + $0xf1] sm:$0xff]
      %v2146 = vld [vmem:[#allocation2 + $0xf9] sm:$0xff]
      %v2147 = vld [vmem:[#allocation2 + $0x109] sm:$0xff]
      %v2148 = vld [vmem:[#allocation2 + $0x111] sm:$0xff]
      %v2149 = vld [vmem:[#allocation2 + $0x121] sm:$0xff]
      %v2150 = vld [vmem:[#allocation2 + $0x129] sm:$0xff]
      %v2151 = vld [vmem:[#allocation2 + $0x139] sm:$0xff]
      %v2152 = vld [vmem:[#allocation2 + $0x141] sm:$0xff]
      %v2153 = vld [vmem:[#allocation2 + $0x151] sm:$0xff]
      %v2154 = vld [vmem:[#allocation2 + $0x159] sm:$0xff]
      %v2155 = vld [vmem:[#allocation2 + $0x169] sm:$0xff]
      %v2156 = vld [vmem:[#allocation2 + $0x171] sm:$0xff]
      %v2157 = vld [vmem:[#allocation2 + $0x2] sm:$0xff]
      %v2158 = vld [vmem:[#allocation2 + $0xa] sm:$0xff]
      %v2159 = vld [vmem:[#allocation2 + $0x1a] sm:$0xff]
      %v2160 = vld [vmem:[#allocation2 + $0x22] sm:$0xff]
      %v2161 = vld [vmem:[#allocation2 + $0x32] sm:$0xff]
      %v2162 = vld [vmem:[#allocation2 + $0x3a] sm:$0xff]
      %v2163 = vld [vmem:[#allocation2 + $0x4a] sm:$0xff]
      %v2164 = vld [vmem:[#allocation2 + $0x52] sm:$0xff]
      %v2165 = vld [vmem:[#allocation2 + $0x62] sm:$0xff]
      %v2166 = vld [vmem:[#allocation2 + $0x6a] sm:$0xff]
      %v2167 = vld [vmem:[#allocation2 + $0x7a] sm:$0xff]
      %v2168 = vld [vmem:[#allocation2 + $0x82] sm:$0xff]
      %v2169 = vld [vmem:[#allocation2 + $0x92] sm:$0xff]
      %v2170 = vld [vmem:[#allocation2 + $0x9a] sm:$0xff]
      %v2171 = vld [vmem:[#allocation2 + $0xaa] sm:$0xff]
      %v2172 = vld [vmem:[#allocation2 + $0xb2] sm:$0xff]
      %v2173 = vld [vmem:[#allocation2 + $0xc2] sm:$0xff]
      %v2174 = vld [vmem:[#allocation2 + $0xca] sm:$0xff]
      %v2175 = vld [vmem:[#allocation2 + $0xda] sm:$0xff]
      %v2176 = vld [vmem:[#allocation2 + $0xe2] sm:$0xff]
      %v2177 = vld [vmem:[#allocation2 + $0xf2] sm:$0xff]
      %v2178 = vld [vmem:[#allocation2 + $0xfa] sm:$0xff]
      %v2179 = vld [vmem:[#allocation2 + $0x10a] sm:$0xff]
      %v2180 = vld [vmem:[#allocation2 + $0x112] sm:$0xff]
      %v2181 = vld [vmem:[#allocation2 + $0x122] sm:$0xff]
      %v2182 = vld [vmem:[#allocation2 + $0x12a] sm:$0xff]
      %v2183 = vld [vmem:[#allocation2 + $0x13a] sm:$0xff]
      %v2184 = vld [vmem:[#allocation2 + $0x142] sm:$0xff]
      %v2185 = vld [vmem:[#allocation2 + $0x152] sm:$0xff]
      %v2186 = vld [vmem:[#allocation2 + $0x15a] sm:$0xff]
      %v2187 = vld [vmem:[#allocation2 + $0x16a] sm:$0xff]
      %v2188 = vld [vmem:[#allocation2 + $0x172] sm:$0xff]
      %v2189 = vld [vmem:[%s260] sm:$0xff]
      %v2190 = vld [vmem:[%s260 + $0x8] sm:$0xff]
      %v2191 = vld [vmem:[%s260 + $0x18] sm:$0xff]
      %v2192 = vld [vmem:[%s260 + $0x20] sm:$0xff]
      %v2193 = vld [vmem:[%s260 + $0x30] sm:$0xff]
      %v2194 = vld [vmem:[%s260 + $0x38] sm:$0xff]
      %v2195 = vld [vmem:[%s260 + $0x48] sm:$0xff]
      %v2196 = vld [vmem:[%s260 + $0x50] sm:$0xff]
      %v2197 = vld [vmem:[%s260 + $0x60] sm:$0xff]
      %v2198 = vld [vmem:[%s260 + $0x68] sm:$0xff]
      %v2199 = vld [vmem:[%s260 + $0x78] sm:$0xff]
      %v2200 = vld [vmem:[%s260 + $0x80] sm:$0xff]
      %v2201 = vld [vmem:[%s260 + $0x90] sm:$0xff]
      %v2202 = vld [vmem:[%s260 + $0x98] sm:$0xff]
      %v2203 = vld [vmem:[%s260 + $0xa8] sm:$0xff]
      %v2204 = vld [vmem:[%s260 + $0xb0] sm:$0xff]
      %v2205 = vld [vmem:[%s260 + $0xc0] sm:$0xff]
      %v2206 = vld [vmem:[%s260 + $0xc8] sm:$0xff]
      %v2207 = vld [vmem:[%s260 + $0xd8] sm:$0xff]
      %v2208 = vld [vmem:[%s260 + $0xe0] sm:$0xff]
      %v2209 = vld [vmem:[%s260 + $0xf0] sm:$0xff]
      %v2210 = vld [vmem:[%s260 + $0xf8] sm:$0xff]
      %v2211 = vld [vmem:[%s260 + $0x108] sm:$0xff]
      %v2212 = vld [vmem:[%s260 + $0x110] sm:$0xff]
      %v2213 = vld [vmem:[%s260 + $0x120] sm:$0xff]
      %v2214 = vld [vmem:[%s260 + $0x128] sm:$0xff]
      %v2215 = vld [vmem:[%s260 + $0x138] sm:$0xff]
      %v2216 = vld [vmem:[%s260 + $0x140] sm:$0xff]
      %v2217 = vld [vmem:[%s260 + $0x150] sm:$0xff]
      %v2218 = vld [vmem:[%s260 + $0x158] sm:$0xff]
      %v2219 = vld [vmem:[%s260 + $0x168] sm:$0xff]
      %v2220 = vld [vmem:[%s260 + $0x170] sm:$0xff]
      %v2221 = vld [vmem:[%s260 + $0x1] sm:$0xff]
      %v2222 = vld [vmem:[%s260 + $0x9] sm:$0xff]
      %v2223 = vld [vmem:[%s260 + $0x19] sm:$0xff]
      %v2224 = vld [vmem:[%s260 + $0x21] sm:$0xff]
      %v2225 = vld [vmem:[%s260 + $0x31] sm:$0xff]
      %v2226 = vld [vmem:[%s260 + $0x39] sm:$0xff]
      %v2227 = vld [vmem:[%s260 + $0x49] sm:$0xff]
      %v2228 = vld [vmem:[%s260 + $0x51] sm:$0xff]
      %v2229 = vld [vmem:[%s260 + $0x61] sm:$0xff]
      %v2230 = vld [vmem:[%s260 + $0x69] sm:$0xff]
      %v2231 = vld [vmem:[%s260 + $0x79] sm:$0xff]
      %v2232 = vld [vmem:[%s260 + $0x81] sm:$0xff]
      %v2233 = vld [vmem:[%s260 + $0x91] sm:$0xff]
      %v2234 = vld [vmem:[%s260 + $0x99] sm:$0xff]
      %v2235 = vld [vmem:[%s260 + $0xa9] sm:$0xff]
      %v2236 = vld [vmem:[%s260 + $0xb1] sm:$0xff]
      %v2237 = vld [vmem:[%s260 + $0xc1] sm:$0xff]
      %v2238 = vld [vmem:[%s260 + $0xc9] sm:$0xff]
      %v2239 = vld [vmem:[%s260 + $0xd9] sm:$0xff]
      %v2240 = vld [vmem:[%s260 + $0xe1] sm:$0xff]
      %v2241 = vld [vmem:[%s260 + $0xf1] sm:$0xff]
      %v2242 = vld [vmem:[%s260 + $0xf9] sm:$0xff]
      %v2243 = vld [vmem:[%s260 + $0x109] sm:$0xff]
      %v2244 = vld [vmem:[%s260 + $0x111] sm:$0xff]
      %v2245 = vld [vmem:[%s260 + $0x121] sm:$0xff]
      %v2246 = vld [vmem:[%s260 + $0x129] sm:$0xff]
      %v2247 = vld [vmem:[%s260 + $0x139] sm:$0xff]
      %v2248 = vld [vmem:[%s260 + $0x141] sm:$0xff]
      %v2249 = vld [vmem:[%s260 + $0x151] sm:$0xff]
      %v2250 = vld [vmem:[%s260 + $0x159] sm:$0xff]
      %v2251 = vld [vmem:[%s260 + $0x169] sm:$0xff]
      %v2252 = vld [vmem:[%s260 + $0x171] sm:$0xff]
      %v2253 = vld [vmem:[%s260 + $0x2] sm:$0xff]
      %v2254 = vld [vmem:[%s260 + $0xa] sm:$0xff]
      %v2255 = vld [vmem:[%s260 + $0x1a] sm:$0xff]
      %v2256 = vld [vmem:[%s260 + $0x22] sm:$0xff]
      %v2257 = vld [vmem:[%s260 + $0x32] sm:$0xff]
      %v2258 = vld [vmem:[%s260 + $0x3a] sm:$0xff]
      %v2259 = vld [vmem:[%s260 + $0x4a] sm:$0xff]
      %v2260 = vld [vmem:[%s260 + $0x52] sm:$0xff]
      %v2261 = vld [vmem:[%s260 + $0x62] sm:$0xff]
      %v2262 = vld [vmem:[%s260 + $0x6a] sm:$0xff]
      %v2263 = vld [vmem:[%s260 + $0x7a] sm:$0xff]
      %v2264 = vld [vmem:[%s260 + $0x82] sm:$0xff]
      %v2265 = vld [vmem:[%s260 + $0x92] sm:$0xff]
      %v2266 = vld [vmem:[%s260 + $0x9a] sm:$0xff]
      %v2267 = vld [vmem:[%s260 + $0xaa] sm:$0xff]
      %v2268 = vld [vmem:[%s260 + $0xb2] sm:$0xff]
      %v2269 = vld [vmem:[%s260 + $0xc2] sm:$0xff]
      %v2270 = vld [vmem:[%s260 + $0xca] sm:$0xff]
      %v2271 = vld [vmem:[%s260 + $0xda] sm:$0xff]
      %v2272 = vld [vmem:[%s260 + $0xe2] sm:$0xff]
      %v2273 = vld [vmem:[%s260 + $0xf2] sm:$0xff]
      %v2274 = vld [vmem:[%s260 + $0xfa] sm:$0xff]
      %v2275 = vld [vmem:[%s260 + $0x10a] sm:$0xff]
      %v2276 = vld [vmem:[%s260 + $0x112] sm:$0xff]
      %v2277 = vld [vmem:[%s260 + $0x122] sm:$0xff]
      %v2278 = vld [vmem:[%s260 + $0x12a] sm:$0xff]
      %v2279 = vld [vmem:[%s260 + $0x13a] sm:$0xff]
      %v2280 = vld [vmem:[%s260 + $0x142] sm:$0xff]
      %v2281 = vld [vmem:[%s260 + $0x152] sm:$0xff]
      %v2282 = vld [vmem:[%s260 + $0x15a] sm:$0xff]
      %v2283 = vld [vmem:[%s260 + $0x16a] sm:$0xff]
      %v2284 = vld [vmem:[%s260 + $0x172] sm:$0xff]
      %v2285 = vld [vmem:[%s486] sm:$0xff]
      %v2286 = vld [vmem:[%s486 + $0x8] sm:$0xff]
      %v2287 = vld [vmem:[%s486 + $0x18] sm:$0xff]
      %v2288 = vld [vmem:[%s486 + $0x20] sm:$0xff]
      %v2289 = vld [vmem:[%s486 + $0x30] sm:$0xff]
      %v2290 = vld [vmem:[%s486 + $0x38] sm:$0xff]
      %v2291 = vld [vmem:[%s486 + $0x48] sm:$0xff]
      %v2292 = vld [vmem:[%s486 + $0x50] sm:$0xff]
      %v2293 = vld [vmem:[%s486 + $0x60] sm:$0xff]
      %v2294 = vld [vmem:[%s486 + $0x68] sm:$0xff]
      %v2295 = vld [vmem:[%s486 + $0x78] sm:$0xff]
      %v2296 = vld [vmem:[%s486 + $0x80] sm:$0xff]
      %v2297 = vld [vmem:[%s486 + $0x90] sm:$0xff]
      %v2298 = vld [vmem:[%s486 + $0x98] sm:$0xff]
      %v2299 = vld [vmem:[%s486 + $0xa8] sm:$0xff]
      %v2300 = vld [vmem:[%s486 + $0xb0] sm:$0xff]
      %v2301 = vld [vmem:[%s486 + $0xc0] sm:$0xff]
      %v2302 = vld [vmem:[%s486 + $0xc8] sm:$0xff]
      %v2303 = vld [vmem:[%s486 + $0xd8] sm:$0xff]
      %v2304 = vld [vmem:[%s486 + $0xe0] sm:$0xff]
      %v2305 = vld [vmem:[%s486 + $0xf0] sm:$0xff]
      %v2306 = vld [vmem:[%s486 + $0xf8] sm:$0xff]
      %v2307 = vld [vmem:[%s486 + $0x108] sm:$0xff]
      %v2308 = vld [vmem:[%s486 + $0x110] sm:$0xff]
      %v2309 = vld [vmem:[%s486 + $0x120] sm:$0xff]
      %v2310 = vld [vmem:[%s486 + $0x128] sm:$0xff]
      %v2311 = vld [vmem:[%s486 + $0x138] sm:$0xff]
      %v2312 = vld [vmem:[%s486 + $0x140] sm:$0xff]
      %v2313 = vld [vmem:[%s486 + $0x150] sm:$0xff]
      %v2314 = vld [vmem:[%s486 + $0x158] sm:$0xff]
      %v2315 = vld [vmem:[%s486 + $0x168] sm:$0xff]
      %v2316 = vld [vmem:[%s486 + $0x170] sm:$0xff]
      %v2317 = vld [vmem:[%s486 + $0x1] sm:$0xff]
      %v2318 = vld [vmem:[%s486 + $0x9] sm:$0xff]
      %v2319 = vld [vmem:[%s486 + $0x19] sm:$0xff]
      %v2320 = vld [vmem:[%s486 + $0x21] sm:$0xff]
      %v2321 = vld [vmem:[%s486 + $0x31] sm:$0xff]
      %v2322 = vld [vmem:[%s486 + $0x39] sm:$0xff]
      %v2323 = vld [vmem:[%s486 + $0x49] sm:$0xff]
      %v2324 = vld [vmem:[%s486 + $0x51] sm:$0xff]
      %v2325 = vld [vmem:[%s486 + $0x61] sm:$0xff]
      %v2326 = vld [vmem:[%s486 + $0x69] sm:$0xff]
      %v2327 = vld [vmem:[%s486 + $0x79] sm:$0xff]
      %v2328 = vld [vmem:[%s486 + $0x81] sm:$0xff]
      %v2329 = vld [vmem:[%s486 + $0x91] sm:$0xff]
      %v2330 = vld [vmem:[%s486 + $0x99] sm:$0xff]
      %v2331 = vld [vmem:[%s486 + $0xa9] sm:$0xff]
      %v2332 = vld [vmem:[%s486 + $0xb1] sm:$0xff]
      %v2333 = vld [vmem:[%s486 + $0xc1] sm:$0xff]
      %v2334 = vld [vmem:[%s486 + $0xc9] sm:$0xff]
      %v2335 = vld [vmem:[%s486 + $0xd9] sm:$0xff]
      %v2336 = vld [vmem:[%s486 + $0xe1] sm:$0xff]
      %v2337 = vld [vmem:[%s486 + $0xf1] sm:$0xff]
      %v2338 = vld [vmem:[%s486 + $0xf9] sm:$0xff]
      %v2339 = vld [vmem:[%s486 + $0x109] sm:$0xff]
      %v2340 = vld [vmem:[%s486 + $0x111] sm:$0xff]
      %v2341 = vld [vmem:[%s486 + $0x121] sm:$0xff]
      %v2342 = vld [vmem:[%s486 + $0x129] sm:$0xff]
      %v2343 = vld [vmem:[%s486 + $0x139] sm:$0xff]
      %v2344 = vld [vmem:[%s486 + $0x141] sm:$0xff]
      %v2345 = vld [vmem:[%s486 + $0x151] sm:$0xff]
      %v2346 = vld [vmem:[%s486 + $0x159] sm:$0xff]
      %v2347 = vld [vmem:[%s486 + $0x169] sm:$0xff]
      %v2348 = vld [vmem:[%s486 + $0x171] sm:$0xff]
      %v2349 = vld [vmem:[%s486 + $0x2] sm:$0xff]
      %v2350 = vld [vmem:[%s486 + $0xa] sm:$0xff]
      %v2351 = vld [vmem:[%s486 + $0x1a] sm:$0xff]
      %v2352 = vld [vmem:[%s486 + $0x22] sm:$0xff]
      %v2353 = vld [vmem:[%s486 + $0x32] sm:$0xff]
      %v2354 = vld [vmem:[%s486 + $0x3a] sm:$0xff]
      %v2355 = vld [vmem:[%s486 + $0x4a] sm:$0xff]
      %v2356 = vld [vmem:[%s486 + $0x52] sm:$0xff]
      %v2357 = vld [vmem:[%s486 + $0x62] sm:$0xff]
      %v2358 = vld [vmem:[%s486 + $0x6a] sm:$0xff]
      %v2359 = vld [vmem:[%s486 + $0x7a] sm:$0xff]
      %v2360 = vld [vmem:[%s486 + $0x82] sm:$0xff]
      %v2361 = vld [vmem:[%s486 + $0x92] sm:$0xff]
      %v2362 = vld [vmem:[%s486 + $0x9a] sm:$0xff]
      %v2363 = vld [vmem:[%s486 + $0xaa] sm:$0xff]
      %v2364 = vld [vmem:[%s486 + $0xb2] sm:$0xff]
      %v2365 = vld [vmem:[%s486 + $0xc2] sm:$0xff]
      %v2366 = vld [vmem:[%s486 + $0xca] sm:$0xff]
      %v2367 = vld [vmem:[%s486 + $0xda] sm:$0xff]
      %v2368 = vld [vmem:[%s486 + $0xe2] sm:$0xff]
      %v2369 = vld [vmem:[%s486 + $0xf2] sm:$0xff]
      %v2370 = vld [vmem:[%s486 + $0xfa] sm:$0xff]
      %v2371 = vld [vmem:[%s486 + $0x10a] sm:$0xff]
      %v2372 = vld [vmem:[%s486 + $0x112] sm:$0xff]
      %v2373 = vld [vmem:[%s486 + $0x122] sm:$0xff]
      %v2374 = vld [vmem:[%s486 + $0x12a] sm:$0xff]
      %v2375 = vld [vmem:[%s486 + $0x13a] sm:$0xff]
      %v2376 = vld [vmem:[%s486 + $0x142] sm:$0xff]
      %v2377 = vld [vmem:[%s486 + $0x152] sm:$0xff]
      %v2378 = vld [vmem:[%s486 + $0x15a] sm:$0xff]
      %v2379 = vld [vmem:[%s486 + $0x16a] sm:$0xff]
      %v2380 = vld [vmem:[%s486 + $0x172] sm:$0xff]
      %2413 = vrot.lane.b32.xlu0 %v2125, 16
      %v2414 = vpop.permute.xlu0 %2413
      %2415 = vrot.lane.b32.xlu0 %v2126, 16
      %v2416 = vpop.permute.xlu0 %2415
      %2417 = vrot.lane.b32.xlu0 %v2127, 16
      %v2418 = vpop.permute.xlu0 %2417
      %2419 = vrot.lane.b32.xlu0 %v2128, 16
      %v2420 = vpop.permute.xlu0 %2419
      %2421 = vrot.lane.b32.xlu0 %v2129, 16
      %v2422 = vpop.permute.xlu0 %2421
      %2423 = vrot.lane.b32.xlu0 %v2130, 16
      %v2424 = vpop.permute.xlu0 %2423
      %2425 = vrot.lane.b32.xlu0 %v2131, 16
      %v2426 = vpop.permute.xlu0 %2425
      %2427 = vrot.lane.b32.xlu0 %v2132, 16
      %v2428 = vpop.permute.xlu0 %2427
      %2429 = vrot.lane.b32.xlu0 %v2133, 16
      %v2430 = vpop.permute.xlu0 %2429
      %2431 = vrot.lane.b32.xlu0 %v2134, 16
      %v2432 = vpop.permute.xlu0 %2431
      %2433 = vrot.lane.b32.xlu0 %v2135, 16
      %v2434 = vpop.permute.xlu0 %2433
      %2435 = vrot.lane.b32.xlu0 %v2136, 16
      %v2436 = vpop.permute.xlu0 %2435
      %2437 = vrot.lane.b32.xlu0 %v2137, 16
      %v2438 = vpop.permute.xlu0 %2437
      %2439 = vrot.lane.b32.xlu0 %v2138, 16
      %v2440 = vpop.permute.xlu0 %2439
      %2441 = vrot.lane.b32.xlu0 %v2139, 16
      %v2442 = vpop.permute.xlu0 %2441
      %2443 = vrot.lane.b32.xlu0 %v2140, 16
      %v2444 = vpop.permute.xlu0 %2443
      %2445 = vrot.lane.b32.xlu0 %v2141, 16
      %v2446 = vpop.permute.xlu0 %2445
      %2447 = vrot.lane.b32.xlu0 %v2142, 16
      %v2448 = vpop.permute.xlu0 %2447
      %2449 = vrot.lane.b32.xlu0 %v2143, 16
      %v2450 = vpop.permute.xlu0 %2449
      %2451 = vrot.lane.b32.xlu0 %v2144, 16
      %v2452 = vpop.permute.xlu0 %2451
      %2453 = vrot.lane.b32.xlu0 %v2145, 16
      %v2454 = vpop.permute.xlu0 %2453
      %2455 = vrot.lane.b32.xlu0 %v2146, 16
      %v2456 = vpop.permute.xlu0 %2455
      %2457 = vrot.lane.b32.xlu0 %v2147, 16
      %v2458 = vpop.permute.xlu0 %2457
      %2459 = vrot.lane.b32.xlu0 %v2148, 16
      %v2460 = vpop.permute.xlu0 %2459
      %2461 = vrot.lane.b32.xlu0 %v2149, 16
      %v2462 = vpop.permute.xlu0 %2461
      %2463 = vrot.lane.b32.xlu0 %v2150, 16
      %v2464 = vpop.permute.xlu0 %2463
      %2465 = vrot.lane.b32.xlu0 %v2151, 16
      %v2466 = vpop.permute.xlu0 %2465
      %2467 = vrot.lane.b32.xlu0 %v2152, 16
      %v2468 = vpop.permute.xlu0 %2467
      %2469 = vrot.lane.b32.xlu0 %v2153, 16
      %v2470 = vpop.permute.xlu0 %2469
      %2471 = vrot.lane.b32.xlu0 %v2154, 16
      %v2472 = vpop.permute.xlu0 %2471
      %2473 = vrot.lane.b32.xlu0 %v2155, 16
      %v2474 = vpop.permute.xlu0 %2473
      %2475 = vrot.lane.b32.xlu0 %v2156, 16
      %v2476 = vpop.permute.xlu0 %2475
      %2541 = vrot.lane.b32.xlu0 %v2157, 32
      %v2542 = vpop.permute.xlu0 %2541
      %2543 = vrot.lane.b32.xlu0 %v2158, 32
      %v2544 = vpop.permute.xlu0 %2543
      %2545 = vrot.lane.b32.xlu0 %v2159, 32
      %v2546 = vpop.permute.xlu0 %2545
      %2547 = vrot.lane.b32.xlu0 %v2160, 32
      %v2548 = vpop.permute.xlu0 %2547
      %2549 = vrot.lane.b32.xlu0 %v2161, 32
      %v2550 = vpop.permute.xlu0 %2549
      %2551 = vrot.lane.b32.xlu0 %v2162, 32
      %v2552 = vpop.permute.xlu0 %2551
      %2553 = vrot.lane.b32.xlu0 %v2163, 32
      %v2554 = vpop.permute.xlu0 %2553
      %2555 = vrot.lane.b32.xlu0 %v2164, 32
      %v2556 = vpop.permute.xlu0 %2555
      %2557 = vrot.lane.b32.xlu0 %v2165, 32
      %v2558 = vpop.permute.xlu0 %2557
      %2559 = vrot.lane.b32.xlu0 %v2166, 32
      %v2560 = vpop.permute.xlu0 %2559
      %2561 = vrot.lane.b32.xlu0 %v2167, 32
      %v2562 = vpop.permute.xlu0 %2561
      %2563 = vrot.lane.b32.xlu0 %v2168, 32
      %v2564 = vpop.permute.xlu0 %2563
      %2565 = vrot.lane.b32.xlu0 %v2169, 32
      %v2566 = vpop.permute.xlu0 %2565
      %2567 = vrot.lane.b32.xlu0 %v2170, 32
      %v2568 = vpop.permute.xlu0 %2567
      %2569 = vrot.lane.b32.xlu0 %v2171, 32
      %v2570 = vpop.permute.xlu0 %2569
      %2571 = vrot.lane.b32.xlu0 %v2172, 32
      %v2572 = vpop.permute.xlu0 %2571
      %2573 = vrot.lane.b32.xlu0 %v2173, 32
      %v2574 = vpop.permute.xlu0 %2573
      %2575 = vrot.lane.b32.xlu0 %v2174, 32
      %v2576 = vpop.permute.xlu0 %2575
      %2577 = vrot.lane.b32.xlu0 %v2175, 32
      %v2578 = vpop.permute.xlu0 %2577
      %2579 = vrot.lane.b32.xlu0 %v2176, 32
      %v2580 = vpop.permute.xlu0 %2579
      %2581 = vrot.lane.b32.xlu0 %v2177, 32
      %v2582 = vpop.permute.xlu0 %2581
      %2583 = vrot.lane.b32.xlu0 %v2178, 32
      %v2584 = vpop.permute.xlu0 %2583
      %2585 = vrot.lane.b32.xlu0 %v2179, 32
      %v2586 = vpop.permute.xlu0 %2585
      %2587 = vrot.lane.b32.xlu0 %v2180, 32
      %v2588 = vpop.permute.xlu0 %2587
      %2589 = vrot.lane.b32.xlu0 %v2181, 32
      %v2590 = vpop.permute.xlu0 %2589
      %2591 = vrot.lane.b32.xlu0 %v2182, 32
      %v2592 = vpop.permute.xlu0 %2591
      %2593 = vrot.lane.b32.xlu0 %v2183, 32
      %v2594 = vpop.permute.xlu0 %2593
      %2595 = vrot.lane.b32.xlu0 %v2184, 32
      %v2596 = vpop.permute.xlu0 %2595
      %2597 = vrot.lane.b32.xlu0 %v2185, 32
      %v2598 = vpop.permute.xlu0 %2597
      %2599 = vrot.lane.b32.xlu0 %v2186, 32
      %v2600 = vpop.permute.xlu0 %2599
      %2601 = vrot.lane.b32.xlu0 %v2187, 32
      %v2602 = vpop.permute.xlu0 %2601
      %2603 = vrot.lane.b32.xlu0 %v2188, 32
      %v2604 = vpop.permute.xlu0 %2603
      %2669 = vrot.lane.b32.xlu0 %v2189, 48
      %v2670 = vpop.permute.xlu0 %2669
      %2671 = vrot.lane.b32.xlu0 %v2190, 48
      %v2672 = vpop.permute.xlu0 %2671
      %2673 = vrot.lane.b32.xlu0 %v2191, 48
      %v2674 = vpop.permute.xlu0 %2673
      %2675 = vrot.lane.b32.xlu0 %v2192, 48
      %v2676 = vpop.permute.xlu0 %2675
      %2677 = vrot.lane.b32.xlu0 %v2193, 48
      %v2678 = vpop.permute.xlu0 %2677
      %2679 = vrot.lane.b32.xlu0 %v2194, 48
      %v2680 = vpop.permute.xlu0 %2679
      %2681 = vrot.lane.b32.xlu0 %v2195, 48
      %v2682 = vpop.permute.xlu0 %2681
      %2683 = vrot.lane.b32.xlu0 %v2196, 48
      %v2684 = vpop.permute.xlu0 %2683
      %2685 = vrot.lane.b32.xlu0 %v2197, 48
      %v2686 = vpop.permute.xlu0 %2685
      %2687 = vrot.lane.b32.xlu0 %v2198, 48
      %v2688 = vpop.permute.xlu0 %2687
      %2689 = vrot.lane.b32.xlu0 %v2199, 48
      %v2690 = vpop.permute.xlu0 %2689
      %2691 = vrot.lane.b32.xlu0 %v2200, 48
      %v2692 = vpop.permute.xlu0 %2691
      %2693 = vrot.lane.b32.xlu0 %v2201, 48
      %v2694 = vpop.permute.xlu0 %2693
      %2695 = vrot.lane.b32.xlu0 %v2202, 48
      %v2696 = vpop.permute.xlu0 %2695
      %2697 = vrot.lane.b32.xlu0 %v2203, 48
      %v2698 = vpop.permute.xlu0 %2697
      %2699 = vrot.lane.b32.xlu0 %v2204, 48
      %v2700 = vpop.permute.xlu0 %2699
      %2701 = vrot.lane.b32.xlu0 %v2205, 48
      %v2702 = vpop.permute.xlu0 %2701
      %2703 = vrot.lane.b32.xlu0 %v2206, 48
      %v2704 = vpop.permute.xlu0 %2703
      %2705 = vrot.lane.b32.xlu0 %v2207, 48
      %v2706 = vpop.permute.xlu0 %2705
      %2707 = vrot.lane.b32.xlu0 %v2208, 48
      %v2708 = vpop.permute.xlu0 %2707
      %2709 = vrot.lane.b32.xlu0 %v2209, 48
      %v2710 = vpop.permute.xlu0 %2709
      %2711 = vrot.lane.b32.xlu0 %v2210, 48
      %v2712 = vpop.permute.xlu0 %2711
      %2713 = vrot.lane.b32.xlu0 %v2211, 48
      %v2714 = vpop.permute.xlu0 %2713
      %2715 = vrot.lane.b32.xlu0 %v2212, 48
      %v2716 = vpop.permute.xlu0 %2715
      %2717 = vrot.lane.b32.xlu0 %v2213, 48
      %v2718 = vpop.permute.xlu0 %2717
      %2719 = vrot.lane.b32.xlu0 %v2214, 48
      %v2720 = vpop.permute.xlu0 %2719
      %2721 = vrot.lane.b32.xlu0 %v2215, 48
      %v2722 = vpop.permute.xlu0 %2721
      %2723 = vrot.lane.b32.xlu0 %v2216, 48
      %v2724 = vpop.permute.xlu0 %2723
      %2725 = vrot.lane.b32.xlu0 %v2217, 48
      %v2726 = vpop.permute.xlu0 %2725
      %2727 = vrot.lane.b32.xlu0 %v2218, 48
      %v2728 = vpop.permute.xlu0 %2727
      %2729 = vrot.lane.b32.xlu0 %v2219, 48
      %v2730 = vpop.permute.xlu0 %2729
      %2731 = vrot.lane.b32.xlu0 %v2220, 48
      %v2732 = vpop.permute.xlu0 %2731
      %2797 = vrot.lane.b32.xlu0 %v2221, 64
      %v2798 = vpop.permute.xlu0 %2797
      %2799 = vrot.lane.b32.xlu0 %v2222, 64
      %v2800 = vpop.permute.xlu0 %2799
      %2801 = vrot.lane.b32.xlu0 %v2223, 64
      %v2802 = vpop.permute.xlu0 %2801
      %2803 = vrot.lane.b32.xlu0 %v2224, 64
      %v2804 = vpop.permute.xlu0 %2803
      %2805 = vrot.lane.b32.xlu0 %v2225, 64
      %v2806 = vpop.permute.xlu0 %2805
      %2807 = vrot.lane.b32.xlu0 %v2226, 64
      %v2808 = vpop.permute.xlu0 %2807
      %2809 = vrot.lane.b32.xlu0 %v2227, 64
      %v2810 = vpop.permute.xlu0 %2809
      %2811 = vrot.lane.b32.xlu0 %v2228, 64
      %v2812 = vpop.permute.xlu0 %2811
      %2813 = vrot.lane.b32.xlu0 %v2229, 64
      %v2814 = vpop.permute.xlu0 %2813
      %2815 = vrot.lane.b32.xlu0 %v2230, 64
      %v2816 = vpop.permute.xlu0 %2815
      %2817 = vrot.lane.b32.xlu0 %v2231, 64
      %v2818 = vpop.permute.xlu0 %2817
      %2819 = vrot.lane.b32.xlu0 %v2232, 64
      %v2820 = vpop.permute.xlu0 %2819
      %2821 = vrot.lane.b32.xlu0 %v2233, 64
      %v2822 = vpop.permute.xlu0 %2821
      %2823 = vrot.lane.b32.xlu0 %v2234, 64
      %v2824 = vpop.permute.xlu0 %2823
      %2825 = vrot.lane.b32.xlu0 %v2235, 64
      %v2826 = vpop.permute.xlu0 %2825
      %2827 = vrot.lane.b32.xlu0 %v2236, 64
      %v2828 = vpop.permute.xlu0 %2827
      %2829 = vrot.lane.b32.xlu0 %v2237, 64
      %v2830 = vpop.permute.xlu0 %2829
      %2831 = vrot.lane.b32.xlu0 %v2238, 64
      %v2832 = vpop.permute.xlu0 %2831
      %2833 = vrot.lane.b32.xlu0 %v2239, 64
      %v2834 = vpop.permute.xlu0 %2833
      %2835 = vrot.lane.b32.xlu0 %v2240, 64
      %v2836 = vpop.permute.xlu0 %2835
      %2837 = vrot.lane.b32.xlu0 %v2241, 64
      %v2838 = vpop.permute.xlu0 %2837
      %2839 = vrot.lane.b32.xlu0 %v2242, 64
      %v2840 = vpop.permute.xlu0 %2839
      %2841 = vrot.lane.b32.xlu0 %v2243, 64
      %v2842 = vpop.permute.xlu0 %2841
      %2843 = vrot.lane.b32.xlu0 %v2244, 64
      %v2844 = vpop.permute.xlu0 %2843
      %2845 = vrot.lane.b32.xlu0 %v2245, 64
      %v2846 = vpop.permute.xlu0 %2845
      %2847 = vrot.lane.b32.xlu0 %v2246, 64
      %v2848 = vpop.permute.xlu0 %2847
      %2849 = vrot.lane.b32.xlu0 %v2247, 64
      %v2850 = vpop.permute.xlu0 %2849
      %2851 = vrot.lane.b32.xlu0 %v2248, 64
      %v2852 = vpop.permute.xlu0 %2851
      %2853 = vrot.lane.b32.xlu0 %v2249, 64
      %v2854 = vpop.permute.xlu0 %2853
      %2855 = vrot.lane.b32.xlu0 %v2250, 64
      %v2856 = vpop.permute.xlu0 %2855
      %2857 = vrot.lane.b32.xlu0 %v2251, 64
      %v2858 = vpop.permute.xlu0 %2857
      %2859 = vrot.lane.b32.xlu0 %v2252, 64
      %v2860 = vpop.permute.xlu0 %2859
      %2925 = vrot.lane.b32.xlu0 %v2253, 80
      %v2926 = vpop.permute.xlu0 %2925
      %2927 = vrot.lane.b32.xlu0 %v2254, 80
      %v2928 = vpop.permute.xlu0 %2927
      %2929 = vrot.lane.b32.xlu0 %v2255, 80
      %v2930 = vpop.permute.xlu0 %2929
      %2931 = vrot.lane.b32.xlu0 %v2256, 80
      %v2932 = vpop.permute.xlu0 %2931
      %2933 = vrot.lane.b32.xlu0 %v2257, 80
      %v2934 = vpop.permute.xlu0 %2933
      %2935 = vrot.lane.b32.xlu0 %v2258, 80
      %v2936 = vpop.permute.xlu0 %2935
      %2937 = vrot.lane.b32.xlu0 %v2259, 80
      %v2938 = vpop.permute.xlu0 %2937
      %2939 = vrot.lane.b32.xlu0 %v2260, 80
      %v2940 = vpop.permute.xlu0 %2939
      %2941 = vrot.lane.b32.xlu0 %v2261, 80
      %v2942 = vpop.permute.xlu0 %2941
      %2943 = vrot.lane.b32.xlu0 %v2262, 80
      %v2944 = vpop.permute.xlu0 %2943
      %2945 = vrot.lane.b32.xlu0 %v2263, 80
      %v2946 = vpop.permute.xlu0 %2945
      %2947 = vrot.lane.b32.xlu0 %v2264, 80
      %v2948 = vpop.permute.xlu0 %2947
      %2949 = vrot.lane.b32.xlu0 %v2265, 80
      %v2950 = vpop.permute.xlu0 %2949
      %2951 = vrot.lane.b32.xlu0 %v2266, 80
      %v2952 = vpop.permute.xlu0 %2951
      %2953 = vrot.lane.b32.xlu0 %v2267, 80
      %v2954 = vpop.permute.xlu0 %2953
      %2955 = vrot.lane.b32.xlu0 %v2268, 80
      %v2956 = vpop.permute.xlu0 %2955
      %2957 = vrot.lane.b32.xlu0 %v2269, 80
      %v2958 = vpop.permute.xlu0 %2957
      %2959 = vrot.lane.b32.xlu0 %v2270, 80
      %v2960 = vpop.permute.xlu0 %2959
      %2961 = vrot.lane.b32.xlu0 %v2271, 80
      %v2962 = vpop.permute.xlu0 %2961
      %2963 = vrot.lane.b32.xlu0 %v2272, 80
      %v2964 = vpop.permute.xlu0 %2963
      %2965 = vrot.lane.b32.xlu0 %v2273, 80
      %v2966 = vpop.permute.xlu0 %2965
      %2967 = vrot.lane.b32.xlu0 %v2274, 80
      %v2968 = vpop.permute.xlu0 %2967
      %2969 = vrot.lane.b32.xlu0 %v2275, 80
      %v2970 = vpop.permute.xlu0 %2969
      %2971 = vrot.lane.b32.xlu0 %v2276, 80
      %v2972 = vpop.permute.xlu0 %2971
      %2973 = vrot.lane.b32.xlu0 %v2277, 80
      %v2974 = vpop.permute.xlu0 %2973
      %2975 = vrot.lane.b32.xlu0 %v2278, 80
      %v2976 = vpop.permute.xlu0 %2975
      %2977 = vrot.lane.b32.xlu0 %v2279, 80
      %v2978 = vpop.permute.xlu0 %2977
      %2979 = vrot.lane.b32.xlu0 %v2280, 80
      %v2980 = vpop.permute.xlu0 %2979
      %2981 = vrot.lane.b32.xlu0 %v2281, 80
      %v2982 = vpop.permute.xlu0 %2981
      %2983 = vrot.lane.b32.xlu0 %v2282, 80
      %v2984 = vpop.permute.xlu0 %2983
      %2985 = vrot.lane.b32.xlu0 %v2283, 80
      %v2986 = vpop.permute.xlu0 %2985
      %2987 = vrot.lane.b32.xlu0 %v2284, 80
      %v2988 = vpop.permute.xlu0 %2987
      %3053 = vrot.lane.b32.xlu0 %v2285, 96
      %v3054 = vpop.permute.xlu0 %3053
      %3055 = vrot.lane.b32.xlu0 %v2286, 96
      %v3056 = vpop.permute.xlu0 %3055
      %3057 = vrot.lane.b32.xlu0 %v2287, 96
      %v3058 = vpop.permute.xlu0 %3057
      %3059 = vrot.lane.b32.xlu0 %v2288, 96
      %v3060 = vpop.permute.xlu0 %3059
      %3061 = vrot.lane.b32.xlu0 %v2289, 96
      %v3062 = vpop.permute.xlu0 %3061
      %3063 = vrot.lane.b32.xlu0 %v2290, 96
      %v3064 = vpop.permute.xlu0 %3063
      %3065 = vrot.lane.b32.xlu0 %v2291, 96
      %v3066 = vpop.permute.xlu0 %3065
      %3067 = vrot.lane.b32.xlu0 %v2292, 96
      %v3068 = vpop.permute.xlu0 %3067
      %3069 = vrot.lane.b32.xlu0 %v2293, 96
      %v3070 = vpop.permute.xlu0 %3069
      %3071 = vrot.lane.b32.xlu0 %v2294, 96
      %v3072 = vpop.permute.xlu0 %3071
      %3073 = vrot.lane.b32.xlu0 %v2295, 96
      %v3074 = vpop.permute.xlu0 %3073
      %3075 = vrot.lane.b32.xlu0 %v2296, 96
      %v3076 = vpop.permute.xlu0 %3075
      %3077 = vrot.lane.b32.xlu0 %v2297, 96
      %v3078 = vpop.permute.xlu0 %3077
      %3079 = vrot.lane.b32.xlu0 %v2298, 96
      %v3080 = vpop.permute.xlu0 %3079
      %3081 = vrot.lane.b32.xlu0 %v2299, 96
      %v3082 = vpop.permute.xlu0 %3081
      %3083 = vrot.lane.b32.xlu0 %v2300, 96
      %v3084 = vpop.permute.xlu0 %3083
      %3085 = vrot.lane.b32.xlu0 %v2301, 96
      %v3086 = vpop.permute.xlu0 %3085
      %3087 = vrot.lane.b32.xlu0 %v2302, 96
      %v3088 = vpop.permute.xlu0 %3087
      %3089 = vrot.lane.b32.xlu0 %v2303, 96
      %v3090 = vpop.permute.xlu0 %3089
      %3091 = vrot.lane.b32.xlu0 %v2304, 96
      %v3092 = vpop.permute.xlu0 %3091
      %3093 = vrot.lane.b32.xlu0 %v2305, 96
      %v3094 = vpop.permute.xlu0 %3093
      %3095 = vrot.lane.b32.xlu0 %v2306, 96
      %v3096 = vpop.permute.xlu0 %3095
      %3097 = vrot.lane.b32.xlu0 %v2307, 96
      %v3098 = vpop.permute.xlu0 %3097
      %3099 = vrot.lane.b32.xlu0 %v2308, 96
      %v3100 = vpop.permute.xlu0 %3099
      %3101 = vrot.lane.b32.xlu0 %v2309, 96
      %v3102 = vpop.permute.xlu0 %3101
      %3103 = vrot.lane.b32.xlu0 %v2310, 96
      %v3104 = vpop.permute.xlu0 %3103
      %3105 = vrot.lane.b32.xlu0 %v2311, 96
      %v3106 = vpop.permute.xlu0 %3105
      %3107 = vrot.lane.b32.xlu0 %v2312, 96
      %v3108 = vpop.permute.xlu0 %3107
      %3109 = vrot.lane.b32.xlu0 %v2313, 96
      %v3110 = vpop.permute.xlu0 %3109
      %3111 = vrot.lane.b32.xlu0 %v2314, 96
      %v3112 = vpop.permute.xlu0 %3111
      %3113 = vrot.lane.b32.xlu0 %v2315, 96
      %v3114 = vpop.permute.xlu0 %3113
      %3115 = vrot.lane.b32.xlu0 %v2316, 96
      %v3116 = vpop.permute.xlu0 %3115
      %3181 = vrot.lane.b32.xlu0 %v2317, 112
      %v3182 = vpop.permute.xlu0 %3181
      %3183 = vrot.lane.b32.xlu0 %v2318, 112
      %v3184 = vpop.permute.xlu0 %3183
      %3185 = vrot.lane.b32.xlu0 %v2319, 112
      %v3186 = vpop.permute.xlu0 %3185
      %3187 = vrot.lane.b32.xlu0 %v2320, 112
      %v3188 = vpop.permute.xlu0 %3187
      %3189 = vrot.lane.b32.xlu0 %v2321, 112
      %v3190 = vpop.permute.xlu0 %3189
      %3191 = vrot.lane.b32.xlu0 %v2322, 112
      %v3192 = vpop.permute.xlu0 %3191
      %3193 = vrot.lane.b32.xlu0 %v2323, 112
      %v3194 = vpop.permute.xlu0 %3193
      %3195 = vrot.lane.b32.xlu0 %v2324, 112
      %v3196 = vpop.permute.xlu0 %3195
      %3197 = vrot.lane.b32.xlu0 %v2325, 112
      %v3198 = vpop.permute.xlu0 %3197
      %3199 = vrot.lane.b32.xlu0 %v2326, 112
      %v3200 = vpop.permute.xlu0 %3199
      %3201 = vrot.lane.b32.xlu0 %v2327, 112
      %v3202 = vpop.permute.xlu0 %3201
      %3203 = vrot.lane.b32.xlu0 %v2328, 112
      %v3204 = vpop.permute.xlu0 %3203
      %3205 = vrot.lane.b32.xlu0 %v2329, 112
      %v3206 = vpop.permute.xlu0 %3205
      %3207 = vrot.lane.b32.xlu0 %v2330, 112
      %v3208 = vpop.permute.xlu0 %3207
      %3209 = vrot.lane.b32.xlu0 %v2331, 112
      %v3210 = vpop.permute.xlu0 %3209
      %3211 = vrot.lane.b32.xlu0 %v2332, 112
      %v3212 = vpop.permute.xlu0 %3211
      %3213 = vrot.lane.b32.xlu0 %v2333, 112
      %v3214 = vpop.permute.xlu0 %3213
      %3215 = vrot.lane.b32.xlu0 %v2334, 112
      %v3216 = vpop.permute.xlu0 %3215
      %3217 = vrot.lane.b32.xlu0 %v2335, 112
      %v3218 = vpop.permute.xlu0 %3217
      %3219 = vrot.lane.b32.xlu0 %v2336, 112
      %v3220 = vpop.permute.xlu0 %3219
      %3221 = vrot.lane.b32.xlu0 %v2337, 112
      %v3222 = vpop.permute.xlu0 %3221
      %3223 = vrot.lane.b32.xlu0 %v2338, 112
      %v3224 = vpop.permute.xlu0 %3223
      %3225 = vrot.lane.b32.xlu0 %v2339, 112
      %v3226 = vpop.permute.xlu0 %3225
      %3227 = vrot.lane.b32.xlu0 %v2340, 112
      %v3228 = vpop.permute.xlu0 %3227
      %3229 = vrot.lane.b32.xlu0 %v2341, 112
      %v3230 = vpop.permute.xlu0 %3229
      %3231 = vrot.lane.b32.xlu0 %v2342, 112
      %v3232 = vpop.permute.xlu0 %3231
      %3233 = vrot.lane.b32.xlu0 %v2343, 112
      %v3234 = vpop.permute.xlu0 %3233
      %3235 = vrot.lane.b32.xlu0 %v2344, 112
      %v3236 = vpop.permute.xlu0 %3235
      %3237 = vrot.lane.b32.xlu0 %v2345, 112
      %v3238 = vpop.permute.xlu0 %3237
      %3239 = vrot.lane.b32.xlu0 %v2346, 112
      %v3240 = vpop.permute.xlu0 %3239
      %3241 = vrot.lane.b32.xlu0 %v2347, 112
      %v3242 = vpop.permute.xlu0 %3241
      %3243 = vrot.lane.b32.xlu0 %v2348, 112
      %v3244 = vpop.permute.xlu0 %3243
      %v3277 = vsel %vm172, %v2093, %v2414
      %v3278 = vsel %vm172, %v2094, %v2416
      %v3279 = vsel %vm172, %v2095, %v2418
      %v3280 = vsel %vm172, %v2096, %v2420
      %v3281 = vsel %vm172, %v2097, %v2422
      %v3282 = vsel %vm172, %v2098, %v2424
      %v3283 = vsel %vm172, %v2099, %v2426
      %v3284 = vsel %vm172, %v2100, %v2428
      %v3285 = vsel %vm172, %v2101, %v2430
      %v3286 = vsel %vm172, %v2102, %v2432
      %v3287 = vsel %vm172, %v2103, %v2434
      %v3288 = vsel %vm172, %v2104, %v2436
      %v3289 = vsel %vm172, %v2105, %v2438
      %v3290 = vsel %vm172, %v2106, %v2440
      %v3291 = vsel %vm172, %v2107, %v2442
      %v3292 = vsel %vm172, %v2108, %v2444
      %v3293 = vsel %vm172, %v2109, %v2446
      %v3294 = vsel %vm172, %v2110, %v2448
      %v3295 = vsel %vm172, %v2111, %v2450
      %v3296 = vsel %vm172, %v2112, %v2452
      %v3297 = vsel %vm172, %v2113, %v2454
      %v3298 = vsel %vm172, %v2114, %v2456
      %v3299 = vsel %vm172, %v2115, %v2458
      %v3300 = vsel %vm172, %v2116, %v2460
      %v3301 = vsel %vm172, %v2117, %v2462
      %v3302 = vsel %vm172, %v2118, %v2464
      %v3303 = vsel %vm172, %v2119, %v2466
      %v3304 = vsel %vm172, %v2120, %v2468
      %v3305 = vsel %vm172, %v2121, %v2470
      %v3306 = vsel %vm172, %v2122, %v2472
      %v3307 = vsel %vm172, %v2123, %v2474
      %v3308 = vsel %vm172, %v2124, %v2476
      %v3309 = vsel %vm1511, %v3277, %v2542
      %v3310 = vsel %vm1511, %v3278, %v2544
      %v3311 = vsel %vm1511, %v3279, %v2546
      %v3312 = vsel %vm1511, %v3280, %v2548
      %v3313 = vsel %vm1511, %v3281, %v2550
      %v3314 = vsel %vm1511, %v3282, %v2552
      %v3315 = vsel %vm1511, %v3283, %v2554
      %v3316 = vsel %vm1511, %v3284, %v2556
      %v3317 = vsel %vm1511, %v3285, %v2558
      %v3318 = vsel %vm1511, %v3286, %v2560
      %v3319 = vsel %vm1511, %v3287, %v2562
      %v3320 = vsel %vm1511, %v3288, %v2564
      %v3321 = vsel %vm1511, %v3289, %v2566
      %v3322 = vsel %vm1511, %v3290, %v2568
      %v3323 = vsel %vm1511, %v3291, %v2570
      %v3324 = vsel %vm1511, %v3292, %v2572
      %v3325 = vsel %vm1511, %v3293, %v2574
      %v3326 = vsel %vm1511, %v3294, %v2576
      %v3327 = vsel %vm1511, %v3295, %v2578
      %v3328 = vsel %vm1511, %v3296, %v2580
      %v3329 = vsel %vm1511, %v3297, %v2582
      %v3330 = vsel %vm1511, %v3298, %v2584
      %v3331 = vsel %vm1511, %v3299, %v2586
      %v3332 = vsel %vm1511, %v3300, %v2588
      %v3333 = vsel %vm1511, %v3301, %v2590
      %v3334 = vsel %vm1511, %v3302, %v2592
      %v3335 = vsel %vm1511, %v3303, %v2594
      %v3336 = vsel %vm1511, %v3304, %v2596
      %v3337 = vsel %vm1511, %v3305, %v2598
      %v3338 = vsel %vm1511, %v3306, %v2600
      %v3339 = vsel %vm1511, %v3307, %v2602
      %v3340 = vsel %vm1511, %v3308, %v2604
      %v3341 = vsel %vm1544, %v3309, %v2670
      %v3342 = vsel %vm1544, %v3310, %v2672
      %v3343 = vsel %vm1544, %v3311, %v2674
      %v3344 = vsel %vm1544, %v3312, %v2676
      %v3345 = vsel %vm1544, %v3313, %v2678
      %v3346 = vsel %vm1544, %v3314, %v2680
      %v3347 = vsel %vm1544, %v3315, %v2682
      %v3348 = vsel %vm1544, %v3316, %v2684
      %v3349 = vsel %vm1544, %v3317, %v2686
      %v3350 = vsel %vm1544, %v3318, %v2688
      %v3351 = vsel %vm1544, %v3319, %v2690
      %v3352 = vsel %vm1544, %v3320, %v2692
      %v3353 = vsel %vm1544, %v3321, %v2694
      %v3354 = vsel %vm1544, %v3322, %v2696
      %v3355 = vsel %vm1544, %v3323, %v2698
      %v3356 = vsel %vm1544, %v3324, %v2700
      %v3357 = vsel %vm1544, %v3325, %v2702
      %v3358 = vsel %vm1544, %v3326, %v2704
      %v3359 = vsel %vm1544, %v3327, %v2706
      %v3360 = vsel %vm1544, %v3328, %v2708
      %v3361 = vsel %vm1544, %v3329, %v2710
      %v3362 = vsel %vm1544, %v3330, %v2712
      %v3363 = vsel %vm1544, %v3331, %v2714
      %v3364 = vsel %vm1544, %v3332, %v2716
      %v3365 = vsel %vm1544, %v3333, %v2718
      %v3366 = vsel %vm1544, %v3334, %v2720
      %v3367 = vsel %vm1544, %v3335, %v2722
      %v3368 = vsel %vm1544, %v3336, %v2724
      %v3369 = vsel %vm1544, %v3337, %v2726
      %v3370 = vsel %vm1544, %v3338, %v2728
      %v3371 = vsel %vm1544, %v3339, %v2730
      %v3372 = vsel %vm1544, %v3340, %v2732
      %v3373 = vsel %vm1577, %v3341, %v2798
      %v3374 = vsel %vm1577, %v3342, %v2800
      %v3375 = vsel %vm1577, %v3343, %v2802
      %v3376 = vsel %vm1577, %v3344, %v2804
      %v3377 = vsel %vm1577, %v3345, %v2806
      %v3378 = vsel %vm1577, %v3346, %v2808
      %v3379 = vsel %vm1577, %v3347, %v2810
      %v3380 = vsel %vm1577, %v3348, %v2812
      %v3381 = vsel %vm1577, %v3349, %v2814
      %v3382 = vsel %vm1577, %v3350, %v2816
      %v3383 = vsel %vm1577, %v3351, %v2818
      %v3384 = vsel %vm1577, %v3352, %v2820
      %v3385 = vsel %vm1577, %v3353, %v2822
      %v3386 = vsel %vm1577, %v3354, %v2824
      %v3387 = vsel %vm1577, %v3355, %v2826
      %v3388 = vsel %vm1577, %v3356, %v2828
      %v3389 = vsel %vm1577, %v3357, %v2830
      %v3390 = vsel %vm1577, %v3358, %v2832
      %v3391 = vsel %vm1577, %v3359, %v2834
      %v3392 = vsel %vm1577, %v3360, %v2836
      %v3393 = vsel %vm1577, %v3361, %v2838
      %v3394 = vsel %vm1577, %v3362, %v2840
      %v3395 = vsel %vm1577, %v3363, %v2842
      %v3396 = vsel %vm1577, %v3364, %v2844
      %v3397 = vsel %vm1577, %v3365, %v2846
      %v3398 = vsel %vm1577, %v3366, %v2848
      %v3399 = vsel %vm1577, %v3367, %v2850
      %v3400 = vsel %vm1577, %v3368, %v2852
      %v3401 = vsel %vm1577, %v3369, %v2854
      %v3402 = vsel %vm1577, %v3370, %v2856
      %v3403 = vsel %vm1577, %v3371, %v2858
      %v3404 = vsel %vm1577, %v3372, %v2860
      %v3405 = vsel %vm1610, %v3373, %v2926
      %v3406 = vsel %vm1610, %v3374, %v2928
      %v3407 = vsel %vm1610, %v3375, %v2930
      %v3408 = vsel %vm1610, %v3376, %v2932
      %v3409 = vsel %vm1610, %v3377, %v2934
      %v3410 = vsel %vm1610, %v3378, %v2936
      %v3411 = vsel %vm1610, %v3379, %v2938
      %v3412 = vsel %vm1610, %v3380, %v2940
      %v3413 = vsel %vm1610, %v3381, %v2942
      %v3414 = vsel %vm1610, %v3382, %v2944
      %v3415 = vsel %vm1610, %v3383, %v2946
      %v3416 = vsel %vm1610, %v3384, %v2948
      %v3417 = vsel %vm1610, %v3385, %v2950
      %v3418 = vsel %vm1610, %v3386, %v2952
      %v3419 = vsel %vm1610, %v3387, %v2954
      %v3420 = vsel %vm1610, %v3388, %v2956
      %v3421 = vsel %vm1610, %v3389, %v2958
      %v3422 = vsel %vm1610, %v3390, %v2960
      %v3423 = vsel %vm1610, %v3391, %v2962
      %v3424 = vsel %vm1610, %v3392, %v2964
      %v3425 = vsel %vm1610, %v3393, %v2966
      %v3426 = vsel %vm1610, %v3394, %v2968
      %v3427 = vsel %vm1610, %v3395, %v2970
      %v3428 = vsel %vm1610, %v3396, %v2972
      %v3429 = vsel %vm1610, %v3397, %v2974
      %v3430 = vsel %vm1610, %v3398, %v2976
      %v3431 = vsel %vm1610, %v3399, %v2978
      %v3432 = vsel %vm1610, %v3400, %v2980
      %v3433 = vsel %vm1610, %v3401, %v2982
      %v3434 = vsel %vm1610, %v3402, %v2984
      %v3435 = vsel %vm1610, %v3403, %v2986
      %v3436 = vsel %vm1610, %v3404, %v2988
      %v3437 = vsel %vm1643, %v3405, %v3054
      %v3438 = vsel %vm1643, %v3406, %v3056
      %v3439 = vsel %vm1643, %v3407, %v3058
      %v3440 = vsel %vm1643, %v3408, %v3060
      %v3441 = vsel %vm1643, %v3409, %v3062
      %v3442 = vsel %vm1643, %v3410, %v3064
      %v3443 = vsel %vm1643, %v3411, %v3066
      %v3444 = vsel %vm1643, %v3412, %v3068
      %v3445 = vsel %vm1643, %v3413, %v3070
      %v3446 = vsel %vm1643, %v3414, %v3072
      %v3447 = vsel %vm1643, %v3415, %v3074
      %v3448 = vsel %vm1643, %v3416, %v3076
      %v3449 = vsel %vm1643, %v3417, %v3078
      %v3450 = vsel %vm1643, %v3418, %v3080
      %v3451 = vsel %vm1643, %v3419, %v3082
      %v3452 = vsel %vm1643, %v3420, %v3084
      %v3453 = vsel %vm1643, %v3421, %v3086
      %v3454 = vsel %vm1643, %v3422, %v3088
      %v3455 = vsel %vm1643, %v3423, %v3090
      %v3456 = vsel %vm1643, %v3424, %v3092
      %v3457 = vsel %vm1643, %v3425, %v3094
      %v3458 = vsel %vm1643, %v3426, %v3096
      %v3459 = vsel %vm1643, %v3427, %v3098
      %v3460 = vsel %vm1643, %v3428, %v3100
      %v3461 = vsel %vm1643, %v3429, %v3102
      %v3462 = vsel %vm1643, %v3430, %v3104
      %v3463 = vsel %vm1643, %v3431, %v3106
      %v3464 = vsel %vm1643, %v3432, %v3108
      %v3465 = vsel %vm1643, %v3433, %v3110
      %v3466 = vsel %vm1643, %v3434, %v3112
      %v3467 = vsel %vm1643, %v3435, %v3114
      %v3468 = vsel %vm1643, %v3436, %v3116
      %v3469 = vsel %vm1676, %v3437, %v3182
      %v3470 = vsel %vm1676, %v3438, %v3184
      %v3471 = vsel %vm1676, %v3439, %v3186
      %v3472 = vsel %vm1676, %v3440, %v3188
      %v3473 = vsel %vm1676, %v3441, %v3190
      %v3474 = vsel %vm1676, %v3442, %v3192
      %v3475 = vsel %vm1676, %v3443, %v3194
      %v3476 = vsel %vm1676, %v3444, %v3196
      %v3477 = vsel %vm1676, %v3445, %v3198
      %v3478 = vsel %vm1676, %v3446, %v3200
      %v3479 = vsel %vm1676, %v3447, %v3202
      %v3480 = vsel %vm1676, %v3448, %v3204
      %v3481 = vsel %vm1676, %v3449, %v3206
      %v3482 = vsel %vm1676, %v3450, %v3208
      %v3483 = vsel %vm1676, %v3451, %v3210
      %v3484 = vsel %vm1676, %v3452, %v3212
      %v3485 = vsel %vm1676, %v3453, %v3214
      %v3486 = vsel %vm1676, %v3454, %v3216
      %v3487 = vsel %vm1676, %v3455, %v3218
      %v3488 = vsel %vm1676, %v3456, %v3220
      %v3489 = vsel %vm1676, %v3457, %v3222
      %v3490 = vsel %vm1676, %v3458, %v3224
      %v3491 = vsel %vm1676, %v3459, %v3226
      %v3492 = vsel %vm1676, %v3460, %v3228
      %v3493 = vsel %vm1676, %v3461, %v3230
      %v3494 = vsel %vm1676, %v3462, %v3232
      %v3495 = vsel %vm1676, %v3463, %v3234
      %v3496 = vsel %vm1676, %v3464, %v3236
      %v3497 = vsel %vm1676, %v3465, %v3238
      %v3498 = vsel %vm1676, %v3466, %v3240
      %v3499 = vsel %vm1676, %v3467, %v3242
      %v3500 = vsel %vm1676, %v3468, %v3244
      %v3501 = vpack.c.bf16 %v3470, %v3469
      %v3502 = vpack.c.bf16 %v2350, %v2349
      %v3503 = vpack.c.bf16 %v3472, %v3471
      %v3504 = vpack.c.bf16 %v2352, %v2351
      %v3505 = vpack.c.bf16 %v3474, %v3473
      %v3506 = vpack.c.bf16 %v2354, %v2353
      %v3507 = vpack.c.bf16 %v3476, %v3475
      %v3508 = vpack.c.bf16 %v2356, %v2355
      %v3509 = vpack.c.bf16 %v3478, %v3477
      %v3510 = vpack.c.bf16 %v2358, %v2357
      %v3511 = vpack.c.bf16 %v3480, %v3479
      %v3512 = vpack.c.bf16 %v2360, %v2359
      %v3513 = vpack.c.bf16 %v3482, %v3481
      %v3514 = vpack.c.bf16 %v2362, %v2361
      %v3515 = vpack.c.bf16 %v3484, %v3483
      %v3516 = vpack.c.bf16 %v2364, %v2363
      %v3517 = vpack.c.bf16 %v3486, %v3485
      %v3518 = vpack.c.bf16 %v2366, %v2365
      %v3519 = vpack.c.bf16 %v3488, %v3487
      %v3520 = vpack.c.bf16 %v2368, %v2367
      %v3521 = vpack.c.bf16 %v3490, %v3489
      %v3522 = vpack.c.bf16 %v2370, %v2369
      %v3523 = vpack.c.bf16 %v3492, %v3491
      %v3524 = vpack.c.bf16 %v2372, %v2371
      %v3525 = vpack.c.bf16 %v3494, %v3493
      %v3526 = vpack.c.bf16 %v2374, %v2373
      %v3527 = vpack.c.bf16 %v3496, %v3495
      %v3528 = vpack.c.bf16 %v2376, %v2375
      %v3529 = vpack.c.bf16 %v3498, %v3497
      %v3530 = vpack.c.bf16 %v2378, %v2377
      %v3531 = vpack.c.bf16 %v3500, %v3499
      %v3532 = vpack.c.bf16 %v2380, %v2379
      %s3533 = scalar_lea.vmem %s1, 72
      %v3534 = vld [vmem:[%s3533] sm:$0xf]
      %v3535 = vld [vmem:[%s3533 + $0x4] sm:$0xf]
      %v3536 = vld [vmem:[%s3533 + $0x8] sm:$0xf]
      %v3537 = vld [vmem:[%s3533 + $0xc] sm:$0xf]
      %v3538 = vld [vmem:[%s3533 + $0x10] sm:$0xf]
      %v3539 = vld [vmem:[%s3533 + $0x14] sm:$0xf]
      %v3540 = vld [vmem:[%s3533 + $0x18] sm:$0xf]
      %v3541 = vld [vmem:[%s3533 + $0x1c] sm:$0xf]
      %v3542 = vld [vmem:[%s3533 + $0x20] sm:$0xf]
      %v3543 = vld [vmem:[%s3533 + $0x24] sm:$0xf]
      %v3544 = vld [vmem:[%s3533 + $0x28] sm:$0xf]
      %v3545 = vld [vmem:[%s3533 + $0x2c] sm:$0xf]
      %v3546 = vld [vmem:[%s3533 + $0x30] sm:$0xf]
      %v3547 = vld [vmem:[%s3533 + $0x34] sm:$0xf]
      %v3548 = vld [vmem:[%s3533 + $0x38] sm:$0xf]
      %v3549 = vld [vmem:[%s3533 + $0x3c] sm:$0xf]
      %v3550 = vld [vmem:[%s3533 + $0x40] sm:$0xf]
      %v3551 = vld [vmem:[%s3533 + $0x44] sm:$0xf]
      %s3552 = scalar_lea.vmem %s2, 1
      %v3553 = vld [vmem:[%s3552] sm:$0x1]
      %v3555 = vlaneseq
      %v3556 = vshrl.u32 %v3555, 7
      %v3557 = vsub.s32 0, %v3556
      %v3558 = vrot.slane %v3553, %v3557
      %v3578 = vunpack.c.l.b16 %v3534
      %v3579 = vunpack.c.l.b16 %v3535
      %v3580 = vunpack.c.l.b16 %v3536
      %v3581 = vunpack.c.l.b16 %v3537
      %v3582 = vunpack.c.l.b16 %v3538
      %v3583 = vunpack.c.l.b16 %v3539
      %v3584 = vunpack.c.l.b16 %v3540
      %v3585 = vunpack.c.l.b16 %v3541
      %v3586 = vunpack.c.l.b16 %v3542
      %v3587 = vunpack.c.l.b16 %v3543
      %v3588 = vunpack.c.l.b16 %v3544
      %v3589 = vunpack.c.l.b16 %v3545
      %v3590 = vunpack.c.l.b16 %v3546
      %v3591 = vunpack.c.l.b16 %v3547
      %v3592 = vunpack.c.l.b16 %v3548
      %v3593 = vunpack.c.l.b16 %v3549
      %v3594 = vunpack.c.l.b16 %v3550
      %v3595 = vunpack.c.l.b16 %v3551
      %v3596 = vpack.c.b16 %v3579, %v3578
      %v3597 = vpack.c.b16 %v3581, %v3580
      %v3598 = vpack.c.b16 %v3583, %v3582
      %v3599 = vpack.c.b16 %v3585, %v3584
      %v3600 = vpack.c.b16 %v3587, %v3586
      %v3601 = vpack.c.b16 %v3589, %v3588
      %v3602 = vpack.c.b16 %v3591, %v3590
      %v3603 = vpack.c.b16 %v3593, %v3592
      %v3604 = vpack.c.b16 %v3595, %v3594
      %v3615 = vsel %vm172, %v3502, 0
      %v3618 = vsel %vm172, %v3504, 0
      %v3621 = vsel %vm172, %v3506, 0
      %v3624 = vsel %vm172, %v3508, 0
      %v3627 = vsel %vm172, %v3510, 0
      %v3630 = vsel %vm172, %v3512, 0
      %v3633 = vsel %vm172, %v3514, 0
      %v3636 = vsel %vm172, %v3516, 0
      %v3639 = vsel %vm172, %v3518, 0
      %v3642 = vsel %vm172, %v3520, 0
      %v3645 = vsel %vm172, %v3522, 0
      %v3648 = vsel %vm172, %v3524, 0
      %v3651 = vsel %vm172, %v3526, 0
      %v3654 = vsel %vm172, %v3528, 0
      %v3657 = vsel %vm172, %v3530, 0
      %v3660 = vsel %vm172, %v3532, 0
      %3662 = vmatprep.subr.bf16.mxu0 0
      %3663 = vmatpush1.bf16.msra.mxu0 %v3596
      %3664 = vmatprep.subr.bf16.mxu0 0
      %3665 = vmatpush1.bf16.msra.mxu0 %v3597
      %3666 = vmatprep.subr.bf16.mxu0 0
      %3667 = vmatpush1.bf16.msra.mxu0 %v3598
      %3668 = vmatprep.subr.bf16.mxu0 0
      %3669 = vmatpush1.bf16.msra.mxu0 %v3599
      %3670 = vmatprep.subr.bf16.mxu0 0
      %3671 = vmatpush1.bf16.msra.mxu0 %v3600
      %3672 = vmatprep.subr.bf16.mxu0 0
      %3673 = vmatpush1.bf16.msra.mxu0 %v3601
      %3674 = vmatprep.subr.bf16.mxu0 0
      %3675 = vmatpush1.bf16.msra.mxu0 %v3602
      %3676 = vmatprep.subr.bf16.mxu0 0
      %3677 = vmatpush1.bf16.msra.mxu0 %v3603
      %3678 = vmatprep.subr.bf16.mxu0 0
      %3679 = vmatpush1.bf16.msra.mxu0 %v3604
      %3680 = vmatprep.subr.bf16.mxu0 0
      %3681 = vmatpush1.bf16.msra.mxu0 0
      %3682 = vmatprep.subr.bf16.mxu0 0
      %3683 = vmatpush1.bf16.msra.mxu0 0
      %3684 = vmatprep.subr.bf16.mxu0 0
      %3685 = vmatpush1.bf16.msra.mxu0 0
      %3686 = vmatprep.subr.bf16.mxu0 0
      %3687 = vmatpush1.bf16.msra.mxu0 0
      %3688 = vmatprep.subr.bf16.mxu0 0
      %3689 = vmatpush1.bf16.msra.mxu0 0
      %3690 = vmatprep.subr.bf16.mxu0 0
      %3691 = vmatpush1.bf16.msra.mxu0 0
      %3692 = vmatprep.subr.bf16.mxu0 0
      %3693 = vmatpush1.bf16.msra.mxu0 0
      %3694 = vmatprep.mubr.bf16.mxu0 %v3615
      %3695 = vmatmul.mubr.bf16.gmra.mrb[0].mxu0 %v3501
      %v3696 = vpop.f32.mrb[0].mxu0
      %v3697 = vadd.f32 %v3558, %v3696
      %v3698 = vpop.f32.mrb[0].mxu0
      %v3699 = vpop.f32.mrb[0].mxu0
      %v3700 = vadd.f32 %v3558, %v3699
      %v3701 = vpop.f32.mrb[0].mxu0
      %3702 = vmatprep.mubr.bf16.mxu0 %v3618
      %3703 = vmatmul.mubr.bf16.gmra.mrb[0].mxu0 %v3503
      %v3704 = vpop.f32.mrb[0].mxu0
      %v3705 = vadd.f32 %v3558, %v3704
      %v3706 = vpop.f32.mrb[0].mxu0
      %v3707 = vpop.f32.mrb[0].mxu0
      %v3708 = vadd.f32 %v3558, %v3707
      %v3709 = vpop.f32.mrb[0].mxu0
      %3710 = vmatprep.mubr.bf16.mxu0 %v3621
      %3711 = vmatmul.mubr.bf16.gmra.mrb[0].mxu0 %v3505
      %v3712 = vpop.f32.mrb[0].mxu0
      %v3713 = vadd.f32 %v3558, %v3712
      %v3714 = vpop.f32.mrb[0].mxu0
      %v3715 = vpop.f32.mrb[0].mxu0
      %v3716 = vadd.f32 %v3558, %v3715
      %v3717 = vpop.f32.mrb[0].mxu0
      %3718 = vmatprep.mubr.bf16.mxu0 %v3624
      %3719 = vmatmul.mubr.bf16.gmra.mrb[0].mxu0 %v3507
      %v3720 = vpop.f32.mrb[0].mxu0
      %v3721 = vadd.f32 %v3558, %v3720
      %v3722 = vpop.f32.mrb[0].mxu0
      %v3723 = vpop.f32.mrb[0].mxu0
      %v3724 = vadd.f32 %v3558, %v3723
      %v3725 = vpop.f32.mrb[0].mxu0
      %3726 = vmatprep.mubr.bf16.mxu0 %v3627
      %3727 = vmatmul.mubr.bf16.gmra.mrb[0].mxu0 %v3509
      %v3728 = vpop.f32.mrb[0].mxu0
      %v3729 = vadd.f32 %v3558, %v3728
      %v3730 = vpop.f32.mrb[0].mxu0
      %v3731 = vpop.f32.mrb[0].mxu0
      %v3732 = vadd.f32 %v3558, %v3731
      %v3733 = vpop.f32.mrb[0].mxu0
      %3734 = vmatprep.mubr.bf16.mxu0 %v3630
      %3735 = vmatmul.mubr.bf16.gmra.mrb[0].mxu0 %v3511
      %v3736 = vpop.f32.mrb[0].mxu0
      %v3737 = vadd.f32 %v3558, %v3736
      %v3738 = vpop.f32.mrb[0].mxu0
      %v3739 = vpop.f32.mrb[0].mxu0
      %v3740 = vadd.f32 %v3558, %v3739
      %v3741 = vpop.f32.mrb[0].mxu0
      %3742 = vmatprep.mubr.bf16.mxu0 %v3633
      %3743 = vmatmul.mubr.bf16.gmra.mrb[0].mxu0 %v3513
      %v3744 = vpop.f32.mrb[0].mxu0
      %v3745 = vadd.f32 %v3558, %v3744
      %v3746 = vpop.f32.mrb[0].mxu0
      %v3747 = vpop.f32.mrb[0].mxu0
      %v3748 = vadd.f32 %v3558, %v3747
      %v3749 = vpop.f32.mrb[0].mxu0
      %3750 = vmatprep.mubr.bf16.mxu0 %v3636
      %3751 = vmatmul.mubr.bf16.gmra.mrb[0].mxu0 %v3515
      %v3752 = vpop.f32.mrb[0].mxu0
      %v3753 = vadd.f32 %v3558, %v3752
      %v3754 = vpop.f32.mrb[0].mxu0
      %v3755 = vpop.f32.mrb[0].mxu0
      %v3756 = vadd.f32 %v3558, %v3755
      %v3757 = vpop.f32.mrb[0].mxu0
      %3758 = vmatprep.mubr.bf16.mxu0 %v3639
      %3759 = vmatmul.mubr.bf16.gmra.mrb[0].mxu0 %v3517
      %v3760 = vpop.f32.mrb[0].mxu0
      %v3761 = vadd.f32 %v3558, %v3760
      %v3762 = vpop.f32.mrb[0].mxu0
      %v3763 = vpop.f32.mrb[0].mxu0
      %v3764 = vadd.f32 %v3558, %v3763
      %v3765 = vpop.f32.mrb[0].mxu0
      %3766 = vmatprep.mubr.bf16.mxu0 %v3642
      %3767 = vmatmul.mubr.bf16.gmra.mrb[0].mxu0 %v3519
      %v3768 = vpop.f32.mrb[0].mxu0
      %v3769 = vadd.f32 %v3558, %v3768
      %v3770 = vpop.f32.mrb[0].mxu0
      %v3771 = vpop.f32.mrb[0].mxu0
      %v3772 = vadd.f32 %v3558, %v3771
      %v3773 = vpop.f32.mrb[0].mxu0
      %3774 = vmatprep.mubr.bf16.mxu0 %v3645
      %3775 = vmatmul.mubr.bf16.gmra.mrb[0].mxu0 %v3521
      %v3776 = vpop.f32.mrb[0].mxu0
      %v3777 = vadd.f32 %v3558, %v3776
      %v3778 = vpop.f32.mrb[0].mxu0
      %v3779 = vpop.f32.mrb[0].mxu0
      %v3780 = vadd.f32 %v3558, %v3779
      %v3781 = vpop.f32.mrb[0].mxu0
      %3782 = vmatprep.mubr.bf16.mxu0 %v3648
      %3783 = vmatmul.mubr.bf16.gmra.mrb[0].mxu0 %v3523
      %v3784 = vpop.f32.mrb[0].mxu0
      %v3785 = vadd.f32 %v3558, %v3784
      %v3786 = vpop.f32.mrb[0].mxu0
      %v3787 = vpop.f32.mrb[0].mxu0
      %v3788 = vadd.f32 %v3558, %v3787
      %v3789 = vpop.f32.mrb[0].mxu0
      %3790 = vmatprep.mubr.bf16.mxu0 %v3651
      %3791 = vmatmul.mubr.bf16.gmra.mrb[0].mxu0 %v3525
      %v3792 = vpop.f32.mrb[0].mxu0
      %v3793 = vadd.f32 %v3558, %v3792
      %v3794 = vpop.f32.mrb[0].mxu0
      %v3795 = vpop.f32.mrb[0].mxu0
      %v3796 = vadd.f32 %v3558, %v3795
      %v3797 = vpop.f32.mrb[0].mxu0
      %3798 = vmatprep.mubr.bf16.mxu0 %v3654
      %3799 = vmatmul.mubr.bf16.gmra.mrb[0].mxu0 %v3527
      %v3800 = vpop.f32.mrb[0].mxu0
      %v3801 = vadd.f32 %v3558, %v3800
      %v3802 = vpop.f32.mrb[0].mxu0
      %v3803 = vpop.f32.mrb[0].mxu0
      %v3804 = vadd.f32 %v3558, %v3803
      %v3805 = vpop.f32.mrb[0].mxu0
      %3806 = vmatprep.mubr.bf16.mxu0 %v3657
      %3807 = vmatmul.mubr.bf16.gmra.mrb[0].mxu0 %v3529
      %v3808 = vpop.f32.mrb[0].mxu0
      %v3809 = vadd.f32 %v3558, %v3808
      %v3810 = vpop.f32.mrb[0].mxu0
      %v3811 = vpop.f32.mrb[0].mxu0
      %v3812 = vadd.f32 %v3558, %v3811
      %v3813 = vpop.f32.mrb[0].mxu0
      %3814 = vmatprep.mubr.bf16.mxu0 %v3660
      %3815 = vmatmul.mubr.bf16.gmra.mrb[0].mxu0 %v3531
      %v3816 = vpop.f32.mrb[0].mxu0
      %v3817 = vadd.f32 %v3558, %v3816
      %v3818 = vpop.f32.mrb[0].mxu0
      %v3819 = vpop.f32.mrb[0].mxu0
      %v3820 = vadd.f32 %v3558, %v3819
      %v3821 = vpop.f32.mrb[0].mxu0
      %3822 = vdwg.mxu0
      %v3823 = vmax.f32 %v3697, 0.0
      %v3824 = vmax.f32 %v3700, 0.0
      %v3825 = vmax.f32 %v3705, 0.0
      %v3826 = vmax.f32 %v3708, 0.0
      %v3827 = vmax.f32 %v3713, 0.0
      %v3828 = vmax.f32 %v3716, 0.0
      %v3829 = vmax.f32 %v3721, 0.0
      %v3830 = vmax.f32 %v3724, 0.0
      %v3831 = vmax.f32 %v3729, 0.0
      %v3832 = vmax.f32 %v3732, 0.0
      %v3833 = vmax.f32 %v3737, 0.0
      %v3834 = vmax.f32 %v3740, 0.0
      %v3835 = vmax.f32 %v3745, 0.0
      %v3836 = vmax.f32 %v3748, 0.0
      %v3837 = vmax.f32 %v3753, 0.0
      %v3838 = vmax.f32 %v3756, 0.0
      %v3839 = vmax.f32 %v3761, 0.0
      %v3840 = vmax.f32 %v3764, 0.0
      %v3841 = vmax.f32 %v3769, 0.0
      %v3842 = vmax.f32 %v3772, 0.0
      %v3843 = vmax.f32 %v3777, 0.0
      %v3844 = vmax.f32 %v3780, 0.0
      %v3845 = vmax.f32 %v3785, 0.0
      %v3846 = vmax.f32 %v3788, 0.0
      %v3847 = vmax.f32 %v3793, 0.0
      %v3848 = vmax.f32 %v3796, 0.0
      %v3849 = vmax.f32 %v3801, 0.0
      %v3850 = vmax.f32 %v3804, 0.0
      %v3851 = vmax.f32 %v3809, 0.0
      %v3852 = vmax.f32 %v3812, 0.0
      %v3853 = vmax.f32 %v3817, 0.0
      %v3854 = vmax.f32 %v3820, 0.0
      %3855 = vst.msk [vmem:[%s260 + $0x1] sm:$0xff] %vm172, %v3823
      %3856 = vst.msk [vmem:[%s260 + $0x9] sm:$0xff] %vm172, %v3824
      %3857 = vst.msk [vmem:[%s260 + $0x19] sm:$0xff] %vm172, %v3825
      %3858 = vst.msk [vmem:[%s260 + $0x21] sm:$0xff] %vm172, %v3826
      %3859 = vst.msk [vmem:[%s260 + $0x31] sm:$0xff] %vm172, %v3827
      %3860 = vst.msk [vmem:[%s260 + $0x39] sm:$0xff] %vm172, %v3828
      %3861 = vst.msk [vmem:[%s260 + $0x49] sm:$0xff] %vm172, %v3829
      %3862 = vst.msk [vmem:[%s260 + $0x51] sm:$0xff] %vm172, %v3830
      %3863 = vst.msk [vmem:[%s260 + $0x61] sm:$0xff] %vm172, %v3831
      %3864 = vst.msk [vmem:[%s260 + $0x69] sm:$0xff] %vm172, %v3832
      %3865 = vst.msk [vmem:[%s260 + $0x79] sm:$0xff] %vm172, %v3833
      %3866 = vst.msk [vmem:[%s260 + $0x81] sm:$0xff] %vm172, %v3834
      %3867 = vst.msk [vmem:[%s260 + $0x91] sm:$0xff] %vm172, %v3835
      %3868 = vst.msk [vmem:[%s260 + $0x99] sm:$0xff] %vm172, %v3836
      %3869 = vst.msk [vmem:[%s260 + $0xa9] sm:$0xff] %vm172, %v3837
      %3870 = vst.msk [vmem:[%s260 + $0xb1] sm:$0xff] %vm172, %v3838
      %3871 = vst.msk [vmem:[%s260 + $0xc1] sm:$0xff] %vm172, %v3839
      %3872 = vst.msk [vmem:[%s260 + $0xc9] sm:$0xff] %vm172, %v3840
      %3873 = vst.msk [vmem:[%s260 + $0xd9] sm:$0xff] %vm172, %v3841
      %3874 = vst.msk [vmem:[%s260 + $0xe1] sm:$0xff] %vm172, %v3842
      %3875 = vst.msk [vmem:[%s260 + $0xf1] sm:$0xff] %vm172, %v3843
      %3876 = vst.msk [vmem:[%s260 + $0xf9] sm:$0xff] %vm172, %v3844
      %3877 = vst.msk [vmem:[%s260 + $0x109] sm:$0xff] %vm172, %v3845
      %3878 = vst.msk [vmem:[%s260 + $0x111] sm:$0xff] %vm172, %v3846
      %3879 = vst.msk [vmem:[%s260 + $0x121] sm:$0xff] %vm172, %v3847
      %3880 = vst.msk [vmem:[%s260 + $0x129] sm:$0xff] %vm172, %v3848
      %3881 = vst.msk [vmem:[%s260 + $0x139] sm:$0xff] %vm172, %v3849
      %3882 = vst.msk [vmem:[%s260 + $0x141] sm:$0xff] %vm172, %v3850
      %3883 = vst.msk [vmem:[%s260 + $0x151] sm:$0xff] %vm172, %v3851
      %3884 = vst.msk [vmem:[%s260 + $0x159] sm:$0xff] %vm172, %v3852
      %3885 = vst.msk [vmem:[%s260 + $0x169] sm:$0xff] %vm172, %v3853
      %3886 = vst.msk [vmem:[%s260 + $0x171] sm:$0xff] %vm172, %v3854
      %v3887 = vld [vmem:[#allocation2] sm:$0xff]
      %v3888 = vld [vmem:[#allocation2 + $0x8] sm:$0xff]
      %v3889 = vld [vmem:[#allocation2 + $0x18] sm:$0xff]
      %v3890 = vld [vmem:[#allocation2 + $0x20] sm:$0xff]
      %v3891 = vld [vmem:[#allocation2 + $0x30] sm:$0xff]
      %v3892 = vld [vmem:[#allocation2 + $0x38] sm:$0xff]
      %v3893 = vld [vmem:[#allocation2 + $0x48] sm:$0xff]
      %v3894 = vld [vmem:[#allocation2 + $0x50] sm:$0xff]
      %v3895 = vld [vmem:[#allocation2 + $0x60] sm:$0xff]
      %v3896 = vld [vmem:[#allocation2 + $0x68] sm:$0xff]
      %v3897 = vld [vmem:[#allocation2 + $0x78] sm:$0xff]
      %v3898 = vld [vmem:[#allocation2 + $0x80] sm:$0xff]
      %v3899 = vld [vmem:[#allocation2 + $0x90] sm:$0xff]
      %v3900 = vld [vmem:[#allocation2 + $0x98] sm:$0xff]
      %v3901 = vld [vmem:[#allocation2 + $0xa8] sm:$0xff]
      %v3902 = vld [vmem:[#allocation2 + $0xb0] sm:$0xff]
      %v3903 = vld [vmem:[#allocation2 + $0xc0] sm:$0xff]
      %v3904 = vld [vmem:[#allocation2 + $0xc8] sm:$0xff]
      %v3905 = vld [vmem:[#allocation2 + $0xd8] sm:$0xff]
      %v3906 = vld [vmem:[#allocation2 + $0xe0] sm:$0xff]
      %v3907 = vld [vmem:[#allocation2 + $0xf0] sm:$0xff]
      %v3908 = vld [vmem:[#allocation2 + $0xf8] sm:$0xff]
      %v3909 = vld [vmem:[#allocation2 + $0x108] sm:$0xff]
      %v3910 = vld [vmem:[#allocation2 + $0x110] sm:$0xff]
      %v3911 = vld [vmem:[#allocation2 + $0x120] sm:$0xff]
      %v3912 = vld [vmem:[#allocation2 + $0x128] sm:$0xff]
      %v3913 = vld [vmem:[#allocation2 + $0x138] sm:$0xff]
      %v3914 = vld [vmem:[#allocation2 + $0x140] sm:$0xff]
      %v3915 = vld [vmem:[#allocation2 + $0x150] sm:$0xff]
      %v3916 = vld [vmem:[#allocation2 + $0x158] sm:$0xff]
      %v3917 = vld [vmem:[#allocation2 + $0x168] sm:$0xff]
      %v3918 = vld [vmem:[#allocation2 + $0x170] sm:$0xff]
      %v3919 = vld [vmem:[#allocation2 + $0x1] sm:$0xff]
      %v3920 = vld [vmem:[#allocation2 + $0x9] sm:$0xff]
      %v3921 = vld [vmem:[#allocation2 + $0x19] sm:$0xff]
      %v3922 = vld [vmem:[#allocation2 + $0x21] sm:$0xff]
      %v3923 = vld [vmem:[#allocation2 + $0x31] sm:$0xff]
      %v3924 = vld [vmem:[#allocation2 + $0x39] sm:$0xff]
      %v3925 = vld [vmem:[#allocation2 + $0x49] sm:$0xff]
      %v3926 = vld [vmem:[#allocation2 + $0x51] sm:$0xff]
      %v3927 = vld [vmem:[#allocation2 + $0x61] sm:$0xff]
      %v3928 = vld [vmem:[#allocation2 + $0x69] sm:$0xff]
      %v3929 = vld [vmem:[#allocation2 + $0x79] sm:$0xff]
      %v3930 = vld [vmem:[#allocation2 + $0x81] sm:$0xff]
      %v3931 = vld [vmem:[#allocation2 + $0x91] sm:$0xff]
      %v3932 = vld [vmem:[#allocation2 + $0x99] sm:$0xff]
      %v3933 = vld [vmem:[#allocation2 + $0xa9] sm:$0xff]
      %v3934 = vld [vmem:[#allocation2 + $0xb1] sm:$0xff]
      %v3935 = vld [vmem:[#allocation2 + $0xc1] sm:$0xff]
      %v3936 = vld [vmem:[#allocation2 + $0xc9] sm:$0xff]
      %v3937 = vld [vmem:[#allocation2 + $0xd9] sm:$0xff]
      %v3938 = vld [vmem:[#allocation2 + $0xe1] sm:$0xff]
      %v3939 = vld [vmem:[#allocation2 + $0xf1] sm:$0xff]
      %v3940 = vld [vmem:[#allocation2 + $0xf9] sm:$0xff]
      %v3941 = vld [vmem:[#allocation2 + $0x109] sm:$0xff]
      %v3942 = vld [vmem:[#allocation2 + $0x111] sm:$0xff]
      %v3943 = vld [vmem:[#allocation2 + $0x121] sm:$0xff]
      %v3944 = vld [vmem:[#allocation2 + $0x129] sm:$0xff]
      %v3945 = vld [vmem:[#allocation2 + $0x139] sm:$0xff]
      %v3946 = vld [vmem:[#allocation2 + $0x141] sm:$0xff]
      %v3947 = vld [vmem:[#allocation2 + $0x151] sm:$0xff]
      %v3948 = vld [vmem:[#allocation2 + $0x159] sm:$0xff]
      %v3949 = vld [vmem:[#allocation2 + $0x169] sm:$0xff]
      %v3950 = vld [vmem:[#allocation2 + $0x171] sm:$0xff]
      %v3951 = vld [vmem:[#allocation2 + $0x2] sm:$0xff]
      %v3952 = vld [vmem:[#allocation2 + $0xa] sm:$0xff]
      %v3953 = vld [vmem:[#allocation2 + $0x1a] sm:$0xff]
      %v3954 = vld [vmem:[#allocation2 + $0x22] sm:$0xff]
      %v3955 = vld [vmem:[#allocation2 + $0x32] sm:$0xff]
      %v3956 = vld [vmem:[#allocation2 + $0x3a] sm:$0xff]
      %v3957 = vld [vmem:[#allocation2 + $0x4a] sm:$0xff]
      %v3958 = vld [vmem:[#allocation2 + $0x52] sm:$0xff]
      %v3959 = vld [vmem:[#allocation2 + $0x62] sm:$0xff]
      %v3960 = vld [vmem:[#allocation2 + $0x6a] sm:$0xff]
      %v3961 = vld [vmem:[#allocation2 + $0x7a] sm:$0xff]
      %v3962 = vld [vmem:[#allocation2 + $0x82] sm:$0xff]
      %v3963 = vld [vmem:[#allocation2 + $0x92] sm:$0xff]
      %v3964 = vld [vmem:[#allocation2 + $0x9a] sm:$0xff]
      %v3965 = vld [vmem:[#allocation2 + $0xaa] sm:$0xff]
      %v3966 = vld [vmem:[#allocation2 + $0xb2] sm:$0xff]
      %v3967 = vld [vmem:[#allocation2 + $0xc2] sm:$0xff]
      %v3968 = vld [vmem:[#allocation2 + $0xca] sm:$0xff]
      %v3969 = vld [vmem:[#allocation2 + $0xda] sm:$0xff]
      %v3970 = vld [vmem:[#allocation2 + $0xe2] sm:$0xff]
      %v3971 = vld [vmem:[#allocation2 + $0xf2] sm:$0xff]
      %v3972 = vld [vmem:[#allocation2 + $0xfa] sm:$0xff]
      %v3973 = vld [vmem:[#allocation2 + $0x10a] sm:$0xff]
      %v3974 = vld [vmem:[#allocation2 + $0x112] sm:$0xff]
      %v3975 = vld [vmem:[#allocation2 + $0x122] sm:$0xff]
      %v3976 = vld [vmem:[#allocation2 + $0x12a] sm:$0xff]
      %v3977 = vld [vmem:[#allocation2 + $0x13a] sm:$0xff]
      %v3978 = vld [vmem:[#allocation2 + $0x142] sm:$0xff]
      %v3979 = vld [vmem:[#allocation2 + $0x152] sm:$0xff]
      %v3980 = vld [vmem:[#allocation2 + $0x15a] sm:$0xff]
      %v3981 = vld [vmem:[#allocation2 + $0x16a] sm:$0xff]
      %v3982 = vld [vmem:[#allocation2 + $0x172] sm:$0xff]
      %v3983 = vld [vmem:[%s260] sm:$0xff]
      %v3984 = vld [vmem:[%s260 + $0x8] sm:$0xff]
      %v3985 = vld [vmem:[%s260 + $0x18] sm:$0xff]
      %v3986 = vld [vmem:[%s260 + $0x20] sm:$0xff]
      %v3987 = vld [vmem:[%s260 + $0x30] sm:$0xff]
      %v3988 = vld [vmem:[%s260 + $0x38] sm:$0xff]
      %v3989 = vld [vmem:[%s260 + $0x48] sm:$0xff]
      %v3990 = vld [vmem:[%s260 + $0x50] sm:$0xff]
      %v3991 = vld [vmem:[%s260 + $0x60] sm:$0xff]
      %v3992 = vld [vmem:[%s260 + $0x68] sm:$0xff]
      %v3993 = vld [vmem:[%s260 + $0x78] sm:$0xff]
      %v3994 = vld [vmem:[%s260 + $0x80] sm:$0xff]
      %v3995 = vld [vmem:[%s260 + $0x90] sm:$0xff]
      %v3996 = vld [vmem:[%s260 + $0x98] sm:$0xff]
      %v3997 = vld [vmem:[%s260 + $0xa8] sm:$0xff]
      %v3998 = vld [vmem:[%s260 + $0xb0] sm:$0xff]
      %v3999 = vld [vmem:[%s260 + $0xc0] sm:$0xff]
      %v4000 = vld [vmem:[%s260 + $0xc8] sm:$0xff]
      %v4001 = vld [vmem:[%s260 + $0xd8] sm:$0xff]
      %v4002 = vld [vmem:[%s260 + $0xe0] sm:$0xff]
      %v4003 = vld [vmem:[%s260 + $0xf0] sm:$0xff]
      %v4004 = vld [vmem:[%s260 + $0xf8] sm:$0xff]
      %v4005 = vld [vmem:[%s260 + $0x108] sm:$0xff]
      %v4006 = vld [vmem:[%s260 + $0x110] sm:$0xff]
      %v4007 = vld [vmem:[%s260 + $0x120] sm:$0xff]
      %v4008 = vld [vmem:[%s260 + $0x128] sm:$0xff]
      %v4009 = vld [vmem:[%s260 + $0x138] sm:$0xff]
      %v4010 = vld [vmem:[%s260 + $0x140] sm:$0xff]
      %v4011 = vld [vmem:[%s260 + $0x150] sm:$0xff]
      %v4012 = vld [vmem:[%s260 + $0x158] sm:$0xff]
      %v4013 = vld [vmem:[%s260 + $0x168] sm:$0xff]
      %v4014 = vld [vmem:[%s260 + $0x170] sm:$0xff]
      %v4015 = vld [vmem:[%s260 + $0x1] sm:$0xff]
      %v4016 = vld [vmem:[%s260 + $0x9] sm:$0xff]
      %v4017 = vld [vmem:[%s260 + $0x19] sm:$0xff]
      %v4018 = vld [vmem:[%s260 + $0x21] sm:$0xff]
      %v4019 = vld [vmem:[%s260 + $0x31] sm:$0xff]
      %v4020 = vld [vmem:[%s260 + $0x39] sm:$0xff]
      %v4021 = vld [vmem:[%s260 + $0x49] sm:$0xff]
      %v4022 = vld [vmem:[%s260 + $0x51] sm:$0xff]
      %v4023 = vld [vmem:[%s260 + $0x61] sm:$0xff]
      %v4024 = vld [vmem:[%s260 + $0x69] sm:$0xff]
      %v4025 = vld [vmem:[%s260 + $0x79] sm:$0xff]
      %v4026 = vld [vmem:[%s260 + $0x81] sm:$0xff]
      %v4027 = vld [vmem:[%s260 + $0x91] sm:$0xff]
      %v4028 = vld [vmem:[%s260 + $0x99] sm:$0xff]
      %v4029 = vld [vmem:[%s260 + $0xa9] sm:$0xff]
      %v4030 = vld [vmem:[%s260 + $0xb1] sm:$0xff]
      %v4031 = vld [vmem:[%s260 + $0xc1] sm:$0xff]
      %v4032 = vld [vmem:[%s260 + $0xc9] sm:$0xff]
      %v4033 = vld [vmem:[%s260 + $0xd9] sm:$0xff]
      %v4034 = vld [vmem:[%s260 + $0xe1] sm:$0xff]
      %v4035 = vld [vmem:[%s260 + $0xf1] sm:$0xff]
      %v4036 = vld [vmem:[%s260 + $0xf9] sm:$0xff]
      %v4037 = vld [vmem:[%s260 + $0x109] sm:$0xff]
      %v4038 = vld [vmem:[%s260 + $0x111] sm:$0xff]
      %v4039 = vld [vmem:[%s260 + $0x121] sm:$0xff]
      %v4040 = vld [vmem:[%s260 + $0x129] sm:$0xff]
      %v4041 = vld [vmem:[%s260 + $0x139] sm:$0xff]
      %v4042 = vld [vmem:[%s260 + $0x141] sm:$0xff]
      %v4043 = vld [vmem:[%s260 + $0x151] sm:$0xff]
      %v4044 = vld [vmem:[%s260 + $0x159] sm:$0xff]
      %v4045 = vld [vmem:[%s260 + $0x169] sm:$0xff]
      %v4046 = vld [vmem:[%s260 + $0x171] sm:$0xff]
      %v4047 = vld [vmem:[%s260 + $0x2] sm:$0xff]
      %v4048 = vld [vmem:[%s260 + $0xa] sm:$0xff]
      %v4049 = vld [vmem:[%s260 + $0x1a] sm:$0xff]
      %v4050 = vld [vmem:[%s260 + $0x22] sm:$0xff]
      %v4051 = vld [vmem:[%s260 + $0x32] sm:$0xff]
      %v4052 = vld [vmem:[%s260 + $0x3a] sm:$0xff]
      %v4053 = vld [vmem:[%s260 + $0x4a] sm:$0xff]
      %v4054 = vld [vmem:[%s260 + $0x52] sm:$0xff]
      %v4055 = vld [vmem:[%s260 + $0x62] sm:$0xff]
      %v4056 = vld [vmem:[%s260 + $0x6a] sm:$0xff]
      %v4057 = vld [vmem:[%s260 + $0x7a] sm:$0xff]
      %v4058 = vld [vmem:[%s260 + $0x82] sm:$0xff]
      %v4059 = vld [vmem:[%s260 + $0x92] sm:$0xff]
      %v4060 = vld [vmem:[%s260 + $0x9a] sm:$0xff]
      %v4061 = vld [vmem:[%s260 + $0xaa] sm:$0xff]
      %v4062 = vld [vmem:[%s260 + $0xb2] sm:$0xff]
      %v4063 = vld [vmem:[%s260 + $0xc2] sm:$0xff]
      %v4064 = vld [vmem:[%s260 + $0xca] sm:$0xff]
      %v4065 = vld [vmem:[%s260 + $0xda] sm:$0xff]
      %v4066 = vld [vmem:[%s260 + $0xe2] sm:$0xff]
      %v4067 = vld [vmem:[%s260 + $0xf2] sm:$0xff]
      %v4068 = vld [vmem:[%s260 + $0xfa] sm:$0xff]
      %v4069 = vld [vmem:[%s260 + $0x10a] sm:$0xff]
      %v4070 = vld [vmem:[%s260 + $0x112] sm:$0xff]
      %v4071 = vld [vmem:[%s260 + $0x122] sm:$0xff]
      %v4072 = vld [vmem:[%s260 + $0x12a] sm:$0xff]
      %v4073 = vld [vmem:[%s260 + $0x13a] sm:$0xff]
      %v4074 = vld [vmem:[%s260 + $0x142] sm:$0xff]
      %v4075 = vld [vmem:[%s260 + $0x152] sm:$0xff]
      %v4076 = vld [vmem:[%s260 + $0x15a] sm:$0xff]
      %v4077 = vld [vmem:[%s260 + $0x16a] sm:$0xff]
      %v4078 = vld [vmem:[%s260 + $0x172] sm:$0xff]
      %v4079 = vld [vmem:[%s486] sm:$0xff]
      %v4080 = vld [vmem:[%s486 + $0x8] sm:$0xff]
      %v4081 = vld [vmem:[%s486 + $0x18] sm:$0xff]
      %v4082 = vld [vmem:[%s486 + $0x20] sm:$0xff]
      %v4083 = vld [vmem:[%s486 + $0x30] sm:$0xff]
      %v4084 = vld [vmem:[%s486 + $0x38] sm:$0xff]
      %v4085 = vld [vmem:[%s486 + $0x48] sm:$0xff]
      %v4086 = vld [vmem:[%s486 + $0x50] sm:$0xff]
      %v4087 = vld [vmem:[%s486 + $0x60] sm:$0xff]
      %v4088 = vld [vmem:[%s486 + $0x68] sm:$0xff]
      %v4089 = vld [vmem:[%s486 + $0x78] sm:$0xff]
      %v4090 = vld [vmem:[%s486 + $0x80] sm:$0xff]
      %v4091 = vld [vmem:[%s486 + $0x90] sm:$0xff]
      %v4092 = vld [vmem:[%s486 + $0x98] sm:$0xff]
      %v4093 = vld [vmem:[%s486 + $0xa8] sm:$0xff]
      %v4094 = vld [vmem:[%s486 + $0xb0] sm:$0xff]
      %v4095 = vld [vmem:[%s486 + $0xc0] sm:$0xff]
      %v4096 = vld [vmem:[%s486 + $0xc8] sm:$0xff]
      %v4097 = vld [vmem:[%s486 + $0xd8] sm:$0xff]
      %v4098 = vld [vmem:[%s486 + $0xe0] sm:$0xff]
      %v4099 = vld [vmem:[%s486 + $0xf0] sm:$0xff]
      %v4100 = vld [vmem:[%s486 + $0xf8] sm:$0xff]
      %v4101 = vld [vmem:[%s486 + $0x108] sm:$0xff]
      %v4102 = vld [vmem:[%s486 + $0x110] sm:$0xff]
      %v4103 = vld [vmem:[%s486 + $0x120] sm:$0xff]
      %v4104 = vld [vmem:[%s486 + $0x128] sm:$0xff]
      %v4105 = vld [vmem:[%s486 + $0x138] sm:$0xff]
      %v4106 = vld [vmem:[%s486 + $0x140] sm:$0xff]
      %v4107 = vld [vmem:[%s486 + $0x150] sm:$0xff]
      %v4108 = vld [vmem:[%s486 + $0x158] sm:$0xff]
      %v4109 = vld [vmem:[%s486 + $0x168] sm:$0xff]
      %v4110 = vld [vmem:[%s486 + $0x170] sm:$0xff]
      %v4111 = vld [vmem:[%s486 + $0x1] sm:$0xff]
      %v4112 = vld [vmem:[%s486 + $0x9] sm:$0xff]
      %v4113 = vld [vmem:[%s486 + $0x19] sm:$0xff]
      %v4114 = vld [vmem:[%s486 + $0x21] sm:$0xff]
      %v4115 = vld [vmem:[%s486 + $0x31] sm:$0xff]
      %v4116 = vld [vmem:[%s486 + $0x39] sm:$0xff]
      %v4117 = vld [vmem:[%s486 + $0x49] sm:$0xff]
      %v4118 = vld [vmem:[%s486 + $0x51] sm:$0xff]
      %v4119 = vld [vmem:[%s486 + $0x61] sm:$0xff]
      %v4120 = vld [vmem:[%s486 + $0x69] sm:$0xff]
      %v4121 = vld [vmem:[%s486 + $0x79] sm:$0xff]
      %v4122 = vld [vmem:[%s486 + $0x81] sm:$0xff]
      %v4123 = vld [vmem:[%s486 + $0x91] sm:$0xff]
      %v4124 = vld [vmem:[%s486 + $0x99] sm:$0xff]
      %v4125 = vld [vmem:[%s486 + $0xa9] sm:$0xff]
      %v4126 = vld [vmem:[%s486 + $0xb1] sm:$0xff]
      %v4127 = vld [vmem:[%s486 + $0xc1] sm:$0xff]
      %v4128 = vld [vmem:[%s486 + $0xc9] sm:$0xff]
      %v4129 = vld [vmem:[%s486 + $0xd9] sm:$0xff]
      %v4130 = vld [vmem:[%s486 + $0xe1] sm:$0xff]
      %v4131 = vld [vmem:[%s486 + $0xf1] sm:$0xff]
      %v4132 = vld [vmem:[%s486 + $0xf9] sm:$0xff]
      %v4133 = vld [vmem:[%s486 + $0x109] sm:$0xff]
      %v4134 = vld [vmem:[%s486 + $0x111] sm:$0xff]
      %v4135 = vld [vmem:[%s486 + $0x121] sm:$0xff]
      %v4136 = vld [vmem:[%s486 + $0x129] sm:$0xff]
      %v4137 = vld [vmem:[%s486 + $0x139] sm:$0xff]
      %v4138 = vld [vmem:[%s486 + $0x141] sm:$0xff]
      %v4139 = vld [vmem:[%s486 + $0x151] sm:$0xff]
      %v4140 = vld [vmem:[%s486 + $0x159] sm:$0xff]
      %v4141 = vld [vmem:[%s486 + $0x169] sm:$0xff]
      %v4142 = vld [vmem:[%s486 + $0x171] sm:$0xff]
      %v4143 = vld [vmem:[%s486 + $0x2] sm:$0xff]
      %v4144 = vld [vmem:[%s486 + $0xa] sm:$0xff]
      %v4145 = vld [vmem:[%s486 + $0x1a] sm:$0xff]
      %v4146 = vld [vmem:[%s486 + $0x22] sm:$0xff]
      %v4147 = vld [vmem:[%s486 + $0x32] sm:$0xff]
      %v4148 = vld [vmem:[%s486 + $0x3a] sm:$0xff]
      %v4149 = vld [vmem:[%s486 + $0x4a] sm:$0xff]
      %v4150 = vld [vmem:[%s486 + $0x52] sm:$0xff]
      %v4151 = vld [vmem:[%s486 + $0x62] sm:$0xff]
      %v4152 = vld [vmem:[%s486 + $0x6a] sm:$0xff]
      %v4153 = vld [vmem:[%s486 + $0x7a] sm:$0xff]
      %v4154 = vld [vmem:[%s486 + $0x82] sm:$0xff]
      %v4155 = vld [vmem:[%s486 + $0x92] sm:$0xff]
      %v4156 = vld [vmem:[%s486 + $0x9a] sm:$0xff]
      %v4157 = vld [vmem:[%s486 + $0xaa] sm:$0xff]
      %v4158 = vld [vmem:[%s486 + $0xb2] sm:$0xff]
      %v4159 = vld [vmem:[%s486 + $0xc2] sm:$0xff]
      %v4160 = vld [vmem:[%s486 + $0xca] sm:$0xff]
      %v4161 = vld [vmem:[%s486 + $0xda] sm:$0xff]
      %v4162 = vld [vmem:[%s486 + $0xe2] sm:$0xff]
      %v4163 = vld [vmem:[%s486 + $0xf2] sm:$0xff]
      %v4164 = vld [vmem:[%s486 + $0xfa] sm:$0xff]
      %v4165 = vld [vmem:[%s486 + $0x10a] sm:$0xff]
      %v4166 = vld [vmem:[%s486 + $0x112] sm:$0xff]
      %v4167 = vld [vmem:[%s486 + $0x122] sm:$0xff]
      %v4168 = vld [vmem:[%s486 + $0x12a] sm:$0xff]
      %v4169 = vld [vmem:[%s486 + $0x13a] sm:$0xff]
      %v4170 = vld [vmem:[%s486 + $0x142] sm:$0xff]
      %v4171 = vld [vmem:[%s486 + $0x152] sm:$0xff]
      %v4172 = vld [vmem:[%s486 + $0x15a] sm:$0xff]
      %v4173 = vld [vmem:[%s486 + $0x16a] sm:$0xff]
      %v4174 = vld [vmem:[%s486 + $0x172] sm:$0xff]
      %4207 = vrot.lane.b32.xlu0 %v3919, 16
      %v4208 = vpop.permute.xlu0 %4207
      %4209 = vrot.lane.b32.xlu0 %v3920, 16
      %v4210 = vpop.permute.xlu0 %4209
      %4211 = vrot.lane.b32.xlu0 %v3921, 16
      %v4212 = vpop.permute.xlu0 %4211
      %4213 = vrot.lane.b32.xlu0 %v3922, 16
      %v4214 = vpop.permute.xlu0 %4213
      %4215 = vrot.lane.b32.xlu0 %v3923, 16
      %v4216 = vpop.permute.xlu0 %4215
      %4217 = vrot.lane.b32.xlu0 %v3924, 16
      %v4218 = vpop.permute.xlu0 %4217
      %4219 = vrot.lane.b32.xlu0 %v3925, 16
      %v4220 = vpop.permute.xlu0 %4219
      %4221 = vrot.lane.b32.xlu0 %v3926, 16
      %v4222 = vpop.permute.xlu0 %4221
      %4223 = vrot.lane.b32.xlu0 %v3927, 16
      %v4224 = vpop.permute.xlu0 %4223
      %4225 = vrot.lane.b32.xlu0 %v3928, 16
      %v4226 = vpop.permute.xlu0 %4225
      %4227 = vrot.lane.b32.xlu0 %v3929, 16
      %v4228 = vpop.permute.xlu0 %4227
      %4229 = vrot.lane.b32.xlu0 %v3930, 16
      %v4230 = vpop.permute.xlu0 %4229
      %4231 = vrot.lane.b32.xlu0 %v3931, 16
      %v4232 = vpop.permute.xlu0 %4231
      %4233 = vrot.lane.b32.xlu0 %v3932, 16
      %v4234 = vpop.permute.xlu0 %4233
      %4235 = vrot.lane.b32.xlu0 %v3933, 16
      %v4236 = vpop.permute.xlu0 %4235
      %4237 = vrot.lane.b32.xlu0 %v3934, 16
      %v4238 = vpop.permute.xlu0 %4237
      %4239 = vrot.lane.b32.xlu0 %v3935, 16
      %v4240 = vpop.permute.xlu0 %4239
      %4241 = vrot.lane.b32.xlu0 %v3936, 16
      %v4242 = vpop.permute.xlu0 %4241
      %4243 = vrot.lane.b32.xlu0 %v3937, 16
      %v4244 = vpop.permute.xlu0 %4243
      %4245 = vrot.lane.b32.xlu0 %v3938, 16
      %v4246 = vpop.permute.xlu0 %4245
      %4247 = vrot.lane.b32.xlu0 %v3939, 16
      %v4248 = vpop.permute.xlu0 %4247
      %4249 = vrot.lane.b32.xlu0 %v3940, 16
      %v4250 = vpop.permute.xlu0 %4249
      %4251 = vrot.lane.b32.xlu0 %v3941, 16
      %v4252 = vpop.permute.xlu0 %4251
      %4253 = vrot.lane.b32.xlu0 %v3942, 16
      %v4254 = vpop.permute.xlu0 %4253
      %4255 = vrot.lane.b32.xlu0 %v3943, 16
      %v4256 = vpop.permute.xlu0 %4255
      %4257 = vrot.lane.b32.xlu0 %v3944, 16
      %v4258 = vpop.permute.xlu0 %4257
      %4259 = vrot.lane.b32.xlu0 %v3945, 16
      %v4260 = vpop.permute.xlu0 %4259
      %4261 = vrot.lane.b32.xlu0 %v3946, 16
      %v4262 = vpop.permute.xlu0 %4261
      %4263 = vrot.lane.b32.xlu0 %v3947, 16
      %v4264 = vpop.permute.xlu0 %4263
      %4265 = vrot.lane.b32.xlu0 %v3948, 16
      %v4266 = vpop.permute.xlu0 %4265
      %4267 = vrot.lane.b32.xlu0 %v3949, 16
      %v4268 = vpop.permute.xlu0 %4267
      %4269 = vrot.lane.b32.xlu0 %v3950, 16
      %v4270 = vpop.permute.xlu0 %4269
      %4335 = vrot.lane.b32.xlu0 %v3951, 32
      %v4336 = vpop.permute.xlu0 %4335
      %4337 = vrot.lane.b32.xlu0 %v3952, 32
      %v4338 = vpop.permute.xlu0 %4337
      %4339 = vrot.lane.b32.xlu0 %v3953, 32
      %v4340 = vpop.permute.xlu0 %4339
      %4341 = vrot.lane.b32.xlu0 %v3954, 32
      %v4342 = vpop.permute.xlu0 %4341
      %4343 = vrot.lane.b32.xlu0 %v3955, 32
      %v4344 = vpop.permute.xlu0 %4343
      %4345 = vrot.lane.b32.xlu0 %v3956, 32
      %v4346 = vpop.permute.xlu0 %4345
      %4347 = vrot.lane.b32.xlu0 %v3957, 32
      %v4348 = vpop.permute.xlu0 %4347
      %4349 = vrot.lane.b32.xlu0 %v3958, 32
      %v4350 = vpop.permute.xlu0 %4349
      %4351 = vrot.lane.b32.xlu0 %v3959, 32
      %v4352 = vpop.permute.xlu0 %4351
      %4353 = vrot.lane.b32.xlu0 %v3960, 32
      %v4354 = vpop.permute.xlu0 %4353
      %4355 = vrot.lane.b32.xlu0 %v3961, 32
      %v4356 = vpop.permute.xlu0 %4355
      %4357 = vrot.lane.b32.xlu0 %v3962, 32
      %v4358 = vpop.permute.xlu0 %4357
      %4359 = vrot.lane.b32.xlu0 %v3963, 32
      %v4360 = vpop.permute.xlu0 %4359
      %4361 = vrot.lane.b32.xlu0 %v3964, 32
      %v4362 = vpop.permute.xlu0 %4361
      %4363 = vrot.lane.b32.xlu0 %v3965, 32
      %v4364 = vpop.permute.xlu0 %4363
      %4365 = vrot.lane.b32.xlu0 %v3966, 32
      %v4366 = vpop.permute.xlu0 %4365
      %4367 = vrot.lane.b32.xlu0 %v3967, 32
      %v4368 = vpop.permute.xlu0 %4367
      %4369 = vrot.lane.b32.xlu0 %v3968, 32
      %v4370 = vpop.permute.xlu0 %4369
      %4371 = vrot.lane.b32.xlu0 %v3969, 32
      %v4372 = vpop.permute.xlu0 %4371
      %4373 = vrot.lane.b32.xlu0 %v3970, 32
      %v4374 = vpop.permute.xlu0 %4373
      %4375 = vrot.lane.b32.xlu0 %v3971, 32
      %v4376 = vpop.permute.xlu0 %4375
      %4377 = vrot.lane.b32.xlu0 %v3972, 32
      %v4378 = vpop.permute.xlu0 %4377
      %4379 = vrot.lane.b32.xlu0 %v3973, 32
      %v4380 = vpop.permute.xlu0 %4379
      %4381 = vrot.lane.b32.xlu0 %v3974, 32
      %v4382 = vpop.permute.xlu0 %4381
      %4383 = vrot.lane.b32.xlu0 %v3975, 32
      %v4384 = vpop.permute.xlu0 %4383
      %4385 = vrot.lane.b32.xlu0 %v3976, 32
      %v4386 = vpop.permute.xlu0 %4385
      %4387 = vrot.lane.b32.xlu0 %v3977, 32
      %v4388 = vpop.permute.xlu0 %4387
      %4389 = vrot.lane.b32.xlu0 %v3978, 32
      %v4390 = vpop.permute.xlu0 %4389
      %4391 = vrot.lane.b32.xlu0 %v3979, 32
      %v4392 = vpop.permute.xlu0 %4391
      %4393 = vrot.lane.b32.xlu0 %v3980, 32
      %v4394 = vpop.permute.xlu0 %4393
      %4395 = vrot.lane.b32.xlu0 %v3981, 32
      %v4396 = vpop.permute.xlu0 %4395
      %4397 = vrot.lane.b32.xlu0 %v3982, 32
      %v4398 = vpop.permute.xlu0 %4397
      %4463 = vrot.lane.b32.xlu0 %v3983, 48
      %v4464 = vpop.permute.xlu0 %4463
      %4465 = vrot.lane.b32.xlu0 %v3984, 48
      %v4466 = vpop.permute.xlu0 %4465
      %4467 = vrot.lane.b32.xlu0 %v3985, 48
      %v4468 = vpop.permute.xlu0 %4467
      %4469 = vrot.lane.b32.xlu0 %v3986, 48
      %v4470 = vpop.permute.xlu0 %4469
      %4471 = vrot.lane.b32.xlu0 %v3987, 48
      %v4472 = vpop.permute.xlu0 %4471
      %4473 = vrot.lane.b32.xlu0 %v3988, 48
      %v4474 = vpop.permute.xlu0 %4473
      %4475 = vrot.lane.b32.xlu0 %v3989, 48
      %v4476 = vpop.permute.xlu0 %4475
      %4477 = vrot.lane.b32.xlu0 %v3990, 48
      %v4478 = vpop.permute.xlu0 %4477
      %4479 = vrot.lane.b32.xlu0 %v3991, 48
      %v4480 = vpop.permute.xlu0 %4479
      %4481 = vrot.lane.b32.xlu0 %v3992, 48
      %v4482 = vpop.permute.xlu0 %4481
      %4483 = vrot.lane.b32.xlu0 %v3993, 48
      %v4484 = vpop.permute.xlu0 %4483
      %4485 = vrot.lane.b32.xlu0 %v3994, 48
      %v4486 = vpop.permute.xlu0 %4485
      %4487 = vrot.lane.b32.xlu0 %v3995, 48
      %v4488 = vpop.permute.xlu0 %4487
      %4489 = vrot.lane.b32.xlu0 %v3996, 48
      %v4490 = vpop.permute.xlu0 %4489
      %4491 = vrot.lane.b32.xlu0 %v3997, 48
      %v4492 = vpop.permute.xlu0 %4491
      %4493 = vrot.lane.b32.xlu0 %v3998, 48
      %v4494 = vpop.permute.xlu0 %4493
      %4495 = vrot.lane.b32.xlu0 %v3999, 48
      %v4496 = vpop.permute.xlu0 %4495
      %4497 = vrot.lane.b32.xlu0 %v4000, 48
      %v4498 = vpop.permute.xlu0 %4497
      %4499 = vrot.lane.b32.xlu0 %v4001, 48
      %v4500 = vpop.permute.xlu0 %4499
      %4501 = vrot.lane.b32.xlu0 %v4002, 48
      %v4502 = vpop.permute.xlu0 %4501
      %4503 = vrot.lane.b32.xlu0 %v4003, 48
      %v4504 = vpop.permute.xlu0 %4503
      %4505 = vrot.lane.b32.xlu0 %v4004, 48
      %v4506 = vpop.permute.xlu0 %4505
      %4507 = vrot.lane.b32.xlu0 %v4005, 48
      %v4508 = vpop.permute.xlu0 %4507
      %4509 = vrot.lane.b32.xlu0 %v4006, 48
      %v4510 = vpop.permute.xlu0 %4509
      %4511 = vrot.lane.b32.xlu0 %v4007, 48
      %v4512 = vpop.permute.xlu0 %4511
      %4513 = vrot.lane.b32.xlu0 %v4008, 48
      %v4514 = vpop.permute.xlu0 %4513
      %4515 = vrot.lane.b32.xlu0 %v4009, 48
      %v4516 = vpop.permute.xlu0 %4515
      %4517 = vrot.lane.b32.xlu0 %v4010, 48
      %v4518 = vpop.permute.xlu0 %4517
      %4519 = vrot.lane.b32.xlu0 %v4011, 48
      %v4520 = vpop.permute.xlu0 %4519
      %4521 = vrot.lane.b32.xlu0 %v4012, 48
      %v4522 = vpop.permute.xlu0 %4521
      %4523 = vrot.lane.b32.xlu0 %v4013, 48
      %v4524 = vpop.permute.xlu0 %4523
      %4525 = vrot.lane.b32.xlu0 %v4014, 48
      %v4526 = vpop.permute.xlu0 %4525
      %4591 = vrot.lane.b32.xlu0 %v4015, 64
      %v4592 = vpop.permute.xlu0 %4591
      %4593 = vrot.lane.b32.xlu0 %v4016, 64
      %v4594 = vpop.permute.xlu0 %4593
      %4595 = vrot.lane.b32.xlu0 %v4017, 64
      %v4596 = vpop.permute.xlu0 %4595
      %4597 = vrot.lane.b32.xlu0 %v4018, 64
      %v4598 = vpop.permute.xlu0 %4597
      %4599 = vrot.lane.b32.xlu0 %v4019, 64
      %v4600 = vpop.permute.xlu0 %4599
      %4601 = vrot.lane.b32.xlu0 %v4020, 64
      %v4602 = vpop.permute.xlu0 %4601
      %4603 = vrot.lane.b32.xlu0 %v4021, 64
      %v4604 = vpop.permute.xlu0 %4603
      %4605 = vrot.lane.b32.xlu0 %v4022, 64
      %v4606 = vpop.permute.xlu0 %4605
      %4607 = vrot.lane.b32.xlu0 %v4023, 64
      %v4608 = vpop.permute.xlu0 %4607
      %4609 = vrot.lane.b32.xlu0 %v4024, 64
      %v4610 = vpop.permute.xlu0 %4609
      %4611 = vrot.lane.b32.xlu0 %v4025, 64
      %v4612 = vpop.permute.xlu0 %4611
      %4613 = vrot.lane.b32.xlu0 %v4026, 64
      %v4614 = vpop.permute.xlu0 %4613
      %4615 = vrot.lane.b32.xlu0 %v4027, 64
      %v4616 = vpop.permute.xlu0 %4615
      %4617 = vrot.lane.b32.xlu0 %v4028, 64
      %v4618 = vpop.permute.xlu0 %4617
      %4619 = vrot.lane.b32.xlu0 %v4029, 64
      %v4620 = vpop.permute.xlu0 %4619
      %4621 = vrot.lane.b32.xlu0 %v4030, 64
      %v4622 = vpop.permute.xlu0 %4621
      %4623 = vrot.lane.b32.xlu0 %v4031, 64
      %v4624 = vpop.permute.xlu0 %4623
      %4625 = vrot.lane.b32.xlu0 %v4032, 64
      %v4626 = vpop.permute.xlu0 %4625
      %4627 = vrot.lane.b32.xlu0 %v4033, 64
      %v4628 = vpop.permute.xlu0 %4627
      %4629 = vrot.lane.b32.xlu0 %v4034, 64
      %v4630 = vpop.permute.xlu0 %4629
      %4631 = vrot.lane.b32.xlu0 %v4035, 64
      %v4632 = vpop.permute.xlu0 %4631
      %4633 = vrot.lane.b32.xlu0 %v4036, 64
      %v4634 = vpop.permute.xlu0 %4633
      %4635 = vrot.lane.b32.xlu0 %v4037, 64
      %v4636 = vpop.permute.xlu0 %4635
      %4637 = vrot.lane.b32.xlu0 %v4038, 64
      %v4638 = vpop.permute.xlu0 %4637
      %4639 = vrot.lane.b32.xlu0 %v4039, 64
      %v4640 = vpop.permute.xlu0 %4639
      %4641 = vrot.lane.b32.xlu0 %v4040, 64
      %v4642 = vpop.permute.xlu0 %4641
      %4643 = vrot.lane.b32.xlu0 %v4041, 64
      %v4644 = vpop.permute.xlu0 %4643
      %4645 = vrot.lane.b32.xlu0 %v4042, 64
      %v4646 = vpop.permute.xlu0 %4645
      %4647 = vrot.lane.b32.xlu0 %v4043, 64
      %v4648 = vpop.permute.xlu0 %4647
      %4649 = vrot.lane.b32.xlu0 %v4044, 64
      %v4650 = vpop.permute.xlu0 %4649
      %4651 = vrot.lane.b32.xlu0 %v4045, 64
      %v4652 = vpop.permute.xlu0 %4651
      %4653 = vrot.lane.b32.xlu0 %v4046, 64
      %v4654 = vpop.permute.xlu0 %4653
      %4719 = vrot.lane.b32.xlu0 %v4047, 80
      %v4720 = vpop.permute.xlu0 %4719
      %4721 = vrot.lane.b32.xlu0 %v4048, 80
      %v4722 = vpop.permute.xlu0 %4721
      %4723 = vrot.lane.b32.xlu0 %v4049, 80
      %v4724 = vpop.permute.xlu0 %4723
      %4725 = vrot.lane.b32.xlu0 %v4050, 80
      %v4726 = vpop.permute.xlu0 %4725
      %4727 = vrot.lane.b32.xlu0 %v4051, 80
      %v4728 = vpop.permute.xlu0 %4727
      %4729 = vrot.lane.b32.xlu0 %v4052, 80
      %v4730 = vpop.permute.xlu0 %4729
      %4731 = vrot.lane.b32.xlu0 %v4053, 80
      %v4732 = vpop.permute.xlu0 %4731
      %4733 = vrot.lane.b32.xlu0 %v4054, 80
      %v4734 = vpop.permute.xlu0 %4733
      %4735 = vrot.lane.b32.xlu0 %v4055, 80
      %v4736 = vpop.permute.xlu0 %4735
      %4737 = vrot.lane.b32.xlu0 %v4056, 80
      %v4738 = vpop.permute.xlu0 %4737
      %4739 = vrot.lane.b32.xlu0 %v4057, 80
      %v4740 = vpop.permute.xlu0 %4739
      %4741 = vrot.lane.b32.xlu0 %v4058, 80
      %v4742 = vpop.permute.xlu0 %4741
      %4743 = vrot.lane.b32.xlu0 %v4059, 80
      %v4744 = vpop.permute.xlu0 %4743
      %4745 = vrot.lane.b32.xlu0 %v4060, 80
      %v4746 = vpop.permute.xlu0 %4745
      %4747 = vrot.lane.b32.xlu0 %v4061, 80
      %v4748 = vpop.permute.xlu0 %4747
      %4749 = vrot.lane.b32.xlu0 %v4062, 80
      %v4750 = vpop.permute.xlu0 %4749
      %4751 = vrot.lane.b32.xlu0 %v4063, 80
      %v4752 = vpop.permute.xlu0 %4751
      %4753 = vrot.lane.b32.xlu0 %v4064, 80
      %v4754 = vpop.permute.xlu0 %4753
      %4755 = vrot.lane.b32.xlu0 %v4065, 80
      %v4756 = vpop.permute.xlu0 %4755
      %4757 = vrot.lane.b32.xlu0 %v4066, 80
      %v4758 = vpop.permute.xlu0 %4757
      %4759 = vrot.lane.b32.xlu0 %v4067, 80
      %v4760 = vpop.permute.xlu0 %4759
      %4761 = vrot.lane.b32.xlu0 %v4068, 80
      %v4762 = vpop.permute.xlu0 %4761
      %4763 = vrot.lane.b32.xlu0 %v4069, 80
      %v4764 = vpop.permute.xlu0 %4763
      %4765 = vrot.lane.b32.xlu0 %v4070, 80
      %v4766 = vpop.permute.xlu0 %4765
      %4767 = vrot.lane.b32.xlu0 %v4071, 80
      %v4768 = vpop.permute.xlu0 %4767
      %4769 = vrot.lane.b32.xlu0 %v4072, 80
      %v4770 = vpop.permute.xlu0 %4769
      %4771 = vrot.lane.b32.xlu0 %v4073, 80
      %v4772 = vpop.permute.xlu0 %4771
      %4773 = vrot.lane.b32.xlu0 %v4074, 80
      %v4774 = vpop.permute.xlu0 %4773
      %4775 = vrot.lane.b32.xlu0 %v4075, 80
      %v4776 = vpop.permute.xlu0 %4775
      %4777 = vrot.lane.b32.xlu0 %v4076, 80
      %v4778 = vpop.permute.xlu0 %4777
      %4779 = vrot.lane.b32.xlu0 %v4077, 80
      %v4780 = vpop.permute.xlu0 %4779
      %4781 = vrot.lane.b32.xlu0 %v4078, 80
      %v4782 = vpop.permute.xlu0 %4781
      %4847 = vrot.lane.b32.xlu0 %v4079, 96
      %v4848 = vpop.permute.xlu0 %4847
      %4849 = vrot.lane.b32.xlu0 %v4080, 96
      %v4850 = vpop.permute.xlu0 %4849
      %4851 = vrot.lane.b32.xlu0 %v4081, 96
      %v4852 = vpop.permute.xlu0 %4851
      %4853 = vrot.lane.b32.xlu0 %v4082, 96
      %v4854 = vpop.permute.xlu0 %4853
      %4855 = vrot.lane.b32.xlu0 %v4083, 96
      %v4856 = vpop.permute.xlu0 %4855
      %4857 = vrot.lane.b32.xlu0 %v4084, 96
      %v4858 = vpop.permute.xlu0 %4857
      %4859 = vrot.lane.b32.xlu0 %v4085, 96
      %v4860 = vpop.permute.xlu0 %4859
      %4861 = vrot.lane.b32.xlu0 %v4086, 96
      %v4862 = vpop.permute.xlu0 %4861
      %4863 = vrot.lane.b32.xlu0 %v4087, 96
      %v4864 = vpop.permute.xlu0 %4863
      %4865 = vrot.lane.b32.xlu0 %v4088, 96
      %v4866 = vpop.permute.xlu0 %4865
      %4867 = vrot.lane.b32.xlu0 %v4089, 96
      %v4868 = vpop.permute.xlu0 %4867
      %4869 = vrot.lane.b32.xlu0 %v4090, 96
      %v4870 = vpop.permute.xlu0 %4869
      %4871 = vrot.lane.b32.xlu0 %v4091, 96
      %v4872 = vpop.permute.xlu0 %4871
      %4873 = vrot.lane.b32.xlu0 %v4092, 96
      %v4874 = vpop.permute.xlu0 %4873
      %4875 = vrot.lane.b32.xlu0 %v4093, 96
      %v4876 = vpop.permute.xlu0 %4875
      %4877 = vrot.lane.b32.xlu0 %v4094, 96
      %v4878 = vpop.permute.xlu0 %4877
      %4879 = vrot.lane.b32.xlu0 %v4095, 96
      %v4880 = vpop.permute.xlu0 %4879
      %4881 = vrot.lane.b32.xlu0 %v4096, 96
      %v4882 = vpop.permute.xlu0 %4881
      %4883 = vrot.lane.b32.xlu0 %v4097, 96
      %v4884 = vpop.permute.xlu0 %4883
      %4885 = vrot.lane.b32.xlu0 %v4098, 96
      %v4886 = vpop.permute.xlu0 %4885
      %4887 = vrot.lane.b32.xlu0 %v4099, 96
      %v4888 = vpop.permute.xlu0 %4887
      %4889 = vrot.lane.b32.xlu0 %v4100, 96
      %v4890 = vpop.permute.xlu0 %4889
      %4891 = vrot.lane.b32.xlu0 %v4101, 96
      %v4892 = vpop.permute.xlu0 %4891
      %4893 = vrot.lane.b32.xlu0 %v4102, 96
      %v4894 = vpop.permute.xlu0 %4893
      %4895 = vrot.lane.b32.xlu0 %v4103, 96
      %v4896 = vpop.permute.xlu0 %4895
      %4897 = vrot.lane.b32.xlu0 %v4104, 96
      %v4898 = vpop.permute.xlu0 %4897
      %4899 = vrot.lane.b32.xlu0 %v4105, 96
      %v4900 = vpop.permute.xlu0 %4899
      %4901 = vrot.lane.b32.xlu0 %v4106, 96
      %v4902 = vpop.permute.xlu0 %4901
      %4903 = vrot.lane.b32.xlu0 %v4107, 96
      %v4904 = vpop.permute.xlu0 %4903
      %4905 = vrot.lane.b32.xlu0 %v4108, 96
      %v4906 = vpop.permute.xlu0 %4905
      %4907 = vrot.lane.b32.xlu0 %v4109, 96
      %v4908 = vpop.permute.xlu0 %4907
      %4909 = vrot.lane.b32.xlu0 %v4110, 96
      %v4910 = vpop.permute.xlu0 %4909
      %4975 = vrot.lane.b32.xlu0 %v4111, 112
      %v4976 = vpop.permute.xlu0 %4975
      %4977 = vrot.lane.b32.xlu0 %v4112, 112
      %v4978 = vpop.permute.xlu0 %4977
      %4979 = vrot.lane.b32.xlu0 %v4113, 112
      %v4980 = vpop.permute.xlu0 %4979
      %4981 = vrot.lane.b32.xlu0 %v4114, 112
      %v4982 = vpop.permute.xlu0 %4981
      %4983 = vrot.lane.b32.xlu0 %v4115, 112
      %v4984 = vpop.permute.xlu0 %4983
      %4985 = vrot.lane.b32.xlu0 %v4116, 112
      %v4986 = vpop.permute.xlu0 %4985
      %4987 = vrot.lane.b32.xlu0 %v4117, 112
      %v4988 = vpop.permute.xlu0 %4987
      %4989 = vrot.lane.b32.xlu0 %v4118, 112
      %v4990 = vpop.permute.xlu0 %4989
      %4991 = vrot.lane.b32.xlu0 %v4119, 112
      %v4992 = vpop.permute.xlu0 %4991
      %4993 = vrot.lane.b32.xlu0 %v4120, 112
      %v4994 = vpop.permute.xlu0 %4993
      %4995 = vrot.lane.b32.xlu0 %v4121, 112
      %v4996 = vpop.permute.xlu0 %4995
      %4997 = vrot.lane.b32.xlu0 %v4122, 112
      %v4998 = vpop.permute.xlu0 %4997
      %4999 = vrot.lane.b32.xlu0 %v4123, 112
      %v5000 = vpop.permute.xlu0 %4999
      %5001 = vrot.lane.b32.xlu0 %v4124, 112
      %v5002 = vpop.permute.xlu0 %5001
      %5003 = vrot.lane.b32.xlu0 %v4125, 112
      %v5004 = vpop.permute.xlu0 %5003
      %5005 = vrot.lane.b32.xlu0 %v4126, 112
      %v5006 = vpop.permute.xlu0 %5005
      %5007 = vrot.lane.b32.xlu0 %v4127, 112
      %v5008 = vpop.permute.xlu0 %5007
      %5009 = vrot.lane.b32.xlu0 %v4128, 112
      %v5010 = vpop.permute.xlu0 %5009
      %5011 = vrot.lane.b32.xlu0 %v4129, 112
      %v5012 = vpop.permute.xlu0 %5011
      %5013 = vrot.lane.b32.xlu0 %v4130, 112
      %v5014 = vpop.permute.xlu0 %5013
      %5015 = vrot.lane.b32.xlu0 %v4131, 112
      %v5016 = vpop.permute.xlu0 %5015
      %5017 = vrot.lane.b32.xlu0 %v4132, 112
      %v5018 = vpop.permute.xlu0 %5017
      %5019 = vrot.lane.b32.xlu0 %v4133, 112
      %v5020 = vpop.permute.xlu0 %5019
      %5021 = vrot.lane.b32.xlu0 %v4134, 112
      %v5022 = vpop.permute.xlu0 %5021
      %5023 = vrot.lane.b32.xlu0 %v4135, 112
      %v5024 = vpop.permute.xlu0 %5023
      %5025 = vrot.lane.b32.xlu0 %v4136, 112
      %v5026 = vpop.permute.xlu0 %5025
      %5027 = vrot.lane.b32.xlu0 %v4137, 112
      %v5028 = vpop.permute.xlu0 %5027
      %5029 = vrot.lane.b32.xlu0 %v4138, 112
      %v5030 = vpop.permute.xlu0 %5029
      %5031 = vrot.lane.b32.xlu0 %v4139, 112
      %v5032 = vpop.permute.xlu0 %5031
      %5033 = vrot.lane.b32.xlu0 %v4140, 112
      %v5034 = vpop.permute.xlu0 %5033
      %5035 = vrot.lane.b32.xlu0 %v4141, 112
      %v5036 = vpop.permute.xlu0 %5035
      %5037 = vrot.lane.b32.xlu0 %v4142, 112
      %v5038 = vpop.permute.xlu0 %5037
      %v5071 = vsel %vm172, %v3887, %v4208
      %v5072 = vsel %vm172, %v3888, %v4210
      %v5073 = vsel %vm172, %v3889, %v4212
      %v5074 = vsel %vm172, %v3890, %v4214
      %v5075 = vsel %vm172, %v3891, %v4216
      %v5076 = vsel %vm172, %v3892, %v4218
      %v5077 = vsel %vm172, %v3893, %v4220
      %v5078 = vsel %vm172, %v3894, %v4222
      %v5079 = vsel %vm172, %v3895, %v4224
      %v5080 = vsel %vm172, %v3896, %v4226
      %v5081 = vsel %vm172, %v3897, %v4228
      %v5082 = vsel %vm172, %v3898, %v4230
      %v5083 = vsel %vm172, %v3899, %v4232
      %v5084 = vsel %vm172, %v3900, %v4234
      %v5085 = vsel %vm172, %v3901, %v4236
      %v5086 = vsel %vm172, %v3902, %v4238
      %v5087 = vsel %vm172, %v3903, %v4240
      %v5088 = vsel %vm172, %v3904, %v4242
      %v5089 = vsel %vm172, %v3905, %v4244
      %v5090 = vsel %vm172, %v3906, %v4246
      %v5091 = vsel %vm172, %v3907, %v4248
      %v5092 = vsel %vm172, %v3908, %v4250
      %v5093 = vsel %vm172, %v3909, %v4252
      %v5094 = vsel %vm172, %v3910, %v4254
      %v5095 = vsel %vm172, %v3911, %v4256
      %v5096 = vsel %vm172, %v3912, %v4258
      %v5097 = vsel %vm172, %v3913, %v4260
      %v5098 = vsel %vm172, %v3914, %v4262
      %v5099 = vsel %vm172, %v3915, %v4264
      %v5100 = vsel %vm172, %v3916, %v4266
      %v5101 = vsel %vm172, %v3917, %v4268
      %v5102 = vsel %vm172, %v3918, %v4270
      %v5103 = vsel %vm1511, %v5071, %v4336
      %v5104 = vsel %vm1511, %v5072, %v4338
      %v5105 = vsel %vm1511, %v5073, %v4340
      %v5106 = vsel %vm1511, %v5074, %v4342
      %v5107 = vsel %vm1511, %v5075, %v4344
      %v5108 = vsel %vm1511, %v5076, %v4346
      %v5109 = vsel %vm1511, %v5077, %v4348
      %v5110 = vsel %vm1511, %v5078, %v4350
      %v5111 = vsel %vm1511, %v5079, %v4352
      %v5112 = vsel %vm1511, %v5080, %v4354
      %v5113 = vsel %vm1511, %v5081, %v4356
      %v5114 = vsel %vm1511, %v5082, %v4358
      %v5115 = vsel %vm1511, %v5083, %v4360
      %v5116 = vsel %vm1511, %v5084, %v4362
      %v5117 = vsel %vm1511, %v5085, %v4364
      %v5118 = vsel %vm1511, %v5086, %v4366
      %v5119 = vsel %vm1511, %v5087, %v4368
      %v5120 = vsel %vm1511, %v5088, %v4370
      %v5121 = vsel %vm1511, %v5089, %v4372
      %v5122 = vsel %vm1511, %v5090, %v4374
      %v5123 = vsel %vm1511, %v5091, %v4376
      %v5124 = vsel %vm1511, %v5092, %v4378
      %v5125 = vsel %vm1511, %v5093, %v4380
      %v5126 = vsel %vm1511, %v5094, %v4382
      %v5127 = vsel %vm1511, %v5095, %v4384
      %v5128 = vsel %vm1511, %v5096, %v4386
      %v5129 = vsel %vm1511, %v5097, %v4388
      %v5130 = vsel %vm1511, %v5098, %v4390
      %v5131 = vsel %vm1511, %v5099, %v4392
      %v5132 = vsel %vm1511, %v5100, %v4394
      %v5133 = vsel %vm1511, %v5101, %v4396
      %v5134 = vsel %vm1511, %v5102, %v4398
      %v5135 = vsel %vm1544, %v5103, %v4464
      %v5136 = vsel %vm1544, %v5104, %v4466
      %v5137 = vsel %vm1544, %v5105, %v4468
      %v5138 = vsel %vm1544, %v5106, %v4470
      %v5139 = vsel %vm1544, %v5107, %v4472
      %v5140 = vsel %vm1544, %v5108, %v4474
      %v5141 = vsel %vm1544, %v5109, %v4476
      %v5142 = vsel %vm1544, %v5110, %v4478
      %v5143 = vsel %vm1544, %v5111, %v4480
      %v5144 = vsel %vm1544, %v5112, %v4482
      %v5145 = vsel %vm1544, %v5113, %v4484
      %v5146 = vsel %vm1544, %v5114, %v4486
      %v5147 = vsel %vm1544, %v5115, %v4488
      %v5148 = vsel %vm1544, %v5116, %v4490
      %v5149 = vsel %vm1544, %v5117, %v4492
      %v5150 = vsel %vm1544, %v5118, %v4494
      %v5151 = vsel %vm1544, %v5119, %v4496
      %v5152 = vsel %vm1544, %v5120, %v4498
      %v5153 = vsel %vm1544, %v5121, %v4500
      %v5154 = vsel %vm1544, %v5122, %v4502
      %v5155 = vsel %vm1544, %v5123, %v4504
      %v5156 = vsel %vm1544, %v5124, %v4506
      %v5157 = vsel %vm1544, %v5125, %v4508
      %v5158 = vsel %vm1544, %v5126, %v4510
      %v5159 = vsel %vm1544, %v5127, %v4512
      %v5160 = vsel %vm1544, %v5128, %v4514
      %v5161 = vsel %vm1544, %v5129, %v4516
      %v5162 = vsel %vm1544, %v5130, %v4518
      %v5163 = vsel %vm1544, %v5131, %v4520
      %v5164 = vsel %vm1544, %v5132, %v4522
      %v5165 = vsel %vm1544, %v5133, %v4524
      %v5166 = vsel %vm1544, %v5134, %v4526
      %v5167 = vsel %vm1577, %v5135, %v4592
      %v5168 = vsel %vm1577, %v5136, %v4594
      %v5169 = vsel %vm1577, %v5137, %v4596
      %v5170 = vsel %vm1577, %v5138, %v4598
      %v5171 = vsel %vm1577, %v5139, %v4600
      %v5172 = vsel %vm1577, %v5140, %v4602
      %v5173 = vsel %vm1577, %v5141, %v4604
      %v5174 = vsel %vm1577, %v5142, %v4606
      %v5175 = vsel %vm1577, %v5143, %v4608
      %v5176 = vsel %vm1577, %v5144, %v4610
      %v5177 = vsel %vm1577, %v5145, %v4612
      %v5178 = vsel %vm1577, %v5146, %v4614
      %v5179 = vsel %vm1577, %v5147, %v4616
      %v5180 = vsel %vm1577, %v5148, %v4618
      %v5181 = vsel %vm1577, %v5149, %v4620
      %v5182 = vsel %vm1577, %v5150, %v4622
      %v5183 = vsel %vm1577, %v5151, %v4624
      %v5184 = vsel %vm1577, %v5152, %v4626
      %v5185 = vsel %vm1577, %v5153, %v4628
      %v5186 = vsel %vm1577, %v5154, %v4630
      %v5187 = vsel %vm1577, %v5155, %v4632
      %v5188 = vsel %vm1577, %v5156, %v4634
      %v5189 = vsel %vm1577, %v5157, %v4636
      %v5190 = vsel %vm1577, %v5158, %v4638
      %v5191 = vsel %vm1577, %v5159, %v4640
      %v5192 = vsel %vm1577, %v5160, %v4642
      %v5193 = vsel %vm1577, %v5161, %v4644
      %v5194 = vsel %vm1577, %v5162, %v4646
      %v5195 = vsel %vm1577, %v5163, %v4648
      %v5196 = vsel %vm1577, %v5164, %v4650
      %v5197 = vsel %vm1577, %v5165, %v4652
      %v5198 = vsel %vm1577, %v5166, %v4654
      %v5199 = vsel %vm1610, %v5167, %v4720
      %v5200 = vsel %vm1610, %v5168, %v4722
      %v5201 = vsel %vm1610, %v5169, %v4724
      %v5202 = vsel %vm1610, %v5170, %v4726
      %v5203 = vsel %vm1610, %v5171, %v4728
      %v5204 = vsel %vm1610, %v5172, %v4730
      %v5205 = vsel %vm1610, %v5173, %v4732
      %v5206 = vsel %vm1610, %v5174, %v4734
      %v5207 = vsel %vm1610, %v5175, %v4736
      %v5208 = vsel %vm1610, %v5176, %v4738
      %v5209 = vsel %vm1610, %v5177, %v4740
      %v5210 = vsel %vm1610, %v5178, %v4742
      %v5211 = vsel %vm1610, %v5179, %v4744
      %v5212 = vsel %vm1610, %v5180, %v4746
      %v5213 = vsel %vm1610, %v5181, %v4748
      %v5214 = vsel %vm1610, %v5182, %v4750
      %v5215 = vsel %vm1610, %v5183, %v4752
      %v5216 = vsel %vm1610, %v5184, %v4754
      %v5217 = vsel %vm1610, %v5185, %v4756
      %v5218 = vsel %vm1610, %v5186, %v4758
      %v5219 = vsel %vm1610, %v5187, %v4760
      %v5220 = vsel %vm1610, %v5188, %v4762
      %v5221 = vsel %vm1610, %v5189, %v4764
      %v5222 = vsel %vm1610, %v5190, %v4766
      %v5223 = vsel %vm1610, %v5191, %v4768
      %v5224 = vsel %vm1610, %v5192, %v4770
      %v5225 = vsel %vm1610, %v5193, %v4772
      %v5226 = vsel %vm1610, %v5194, %v4774
      %v5227 = vsel %vm1610, %v5195, %v4776
      %v5228 = vsel %vm1610, %v5196, %v4778
      %v5229 = vsel %vm1610, %v5197, %v4780
      %v5230 = vsel %vm1610, %v5198, %v4782
      %v5231 = vsel %vm1643, %v5199, %v4848
      %v5232 = vsel %vm1643, %v5200, %v4850
      %v5233 = vsel %vm1643, %v5201, %v4852
      %v5234 = vsel %vm1643, %v5202, %v4854
      %v5235 = vsel %vm1643, %v5203, %v4856
      %v5236 = vsel %vm1643, %v5204, %v4858
      %v5237 = vsel %vm1643, %v5205, %v4860
      %v5238 = vsel %vm1643, %v5206, %v4862
      %v5239 = vsel %vm1643, %v5207, %v4864
      %v5240 = vsel %vm1643, %v5208, %v4866
      %v5241 = vsel %vm1643, %v5209, %v4868
      %v5242 = vsel %vm1643, %v5210, %v4870
      %v5243 = vsel %vm1643, %v5211, %v4872
      %v5244 = vsel %vm1643, %v5212, %v4874
      %v5245 = vsel %vm1643, %v5213, %v4876
      %v5246 = vsel %vm1643, %v5214, %v4878
      %v5247 = vsel %vm1643, %v5215, %v4880
      %v5248 = vsel %vm1643, %v5216, %v4882
      %v5249 = vsel %vm1643, %v5217, %v4884
      %v5250 = vsel %vm1643, %v5218, %v4886
      %v5251 = vsel %vm1643, %v5219, %v4888
      %v5252 = vsel %vm1643, %v5220, %v4890
      %v5253 = vsel %vm1643, %v5221, %v4892
      %v5254 = vsel %vm1643, %v5222, %v4894
      %v5255 = vsel %vm1643, %v5223, %v4896
      %v5256 = vsel %vm1643, %v5224, %v4898
      %v5257 = vsel %vm1643, %v5225, %v4900
      %v5258 = vsel %vm1643, %v5226, %v4902
      %v5259 = vsel %vm1643, %v5227, %v4904
      %v5260 = vsel %vm1643, %v5228, %v4906
      %v5261 = vsel %vm1643, %v5229, %v4908
      %v5262 = vsel %vm1643, %v5230, %v4910
      %v5263 = vsel %vm1676, %v5231, %v4976
      %v5264 = vsel %vm1676, %v5232, %v4978
      %v5265 = vsel %vm1676, %v5233, %v4980
      %v5266 = vsel %vm1676, %v5234, %v4982
      %v5267 = vsel %vm1676, %v5235, %v4984
      %v5268 = vsel %vm1676, %v5236, %v4986
      %v5269 = vsel %vm1676, %v5237, %v4988
      %v5270 = vsel %vm1676, %v5238, %v4990
      %v5271 = vsel %vm1676, %v5239, %v4992
      %v5272 = vsel %vm1676, %v5240, %v4994
      %v5273 = vsel %vm1676, %v5241, %v4996
      %v5274 = vsel %vm1676, %v5242, %v4998
      %v5275 = vsel %vm1676, %v5243, %v5000
      %v5276 = vsel %vm1676, %v5244, %v5002
      %v5277 = vsel %vm1676, %v5245, %v5004
      %v5278 = vsel %vm1676, %v5246, %v5006
      %v5279 = vsel %vm1676, %v5247, %v5008
      %v5280 = vsel %vm1676, %v5248, %v5010
      %v5281 = vsel %vm1676, %v5249, %v5012
      %v5282 = vsel %vm1676, %v5250, %v5014
      %v5283 = vsel %vm1676, %v5251, %v5016
      %v5284 = vsel %vm1676, %v5252, %v5018
      %v5285 = vsel %vm1676, %v5253, %v5020
      %v5286 = vsel %vm1676, %v5254, %v5022
      %v5287 = vsel %vm1676, %v5255, %v5024
      %v5288 = vsel %vm1676, %v5256, %v5026
      %v5289 = vsel %vm1676, %v5257, %v5028
      %v5290 = vsel %vm1676, %v5258, %v5030
      %v5291 = vsel %vm1676, %v5259, %v5032
      %v5292 = vsel %vm1676, %v5260, %v5034
      %v5293 = vsel %vm1676, %v5261, %v5036
      %v5294 = vsel %vm1676, %v5262, %v5038
      %v5295 = vpack.c.bf16 %v5264, %v5263
      %v5296 = vpack.c.bf16 %v4144, %v4143
      %v5297 = vpack.c.bf16 %v5266, %v5265
      %v5298 = vpack.c.bf16 %v4146, %v4145
      %v5299 = vpack.c.bf16 %v5268, %v5267
      %v5300 = vpack.c.bf16 %v4148, %v4147
      %v5301 = vpack.c.bf16 %v5270, %v5269
      %v5302 = vpack.c.bf16 %v4150, %v4149
      %v5303 = vpack.c.bf16 %v5272, %v5271
      %v5304 = vpack.c.bf16 %v4152, %v4151
      %v5305 = vpack.c.bf16 %v5274, %v5273
      %v5306 = vpack.c.bf16 %v4154, %v4153
      %v5307 = vpack.c.bf16 %v5276, %v5275
      %v5308 = vpack.c.bf16 %v4156, %v4155
      %v5309 = vpack.c.bf16 %v5278, %v5277
      %v5310 = vpack.c.bf16 %v4158, %v4157
      %v5311 = vpack.c.bf16 %v5280, %v5279
      %v5312 = vpack.c.bf16 %v4160, %v4159
      %v5313 = vpack.c.bf16 %v5282, %v5281
      %v5314 = vpack.c.bf16 %v4162, %v4161
      %v5315 = vpack.c.bf16 %v5284, %v5283
      %v5316 = vpack.c.bf16 %v4164, %v4163
      %v5317 = vpack.c.bf16 %v5286, %v5285
      %v5318 = vpack.c.bf16 %v4166, %v4165
      %v5319 = vpack.c.bf16 %v5288, %v5287
      %v5320 = vpack.c.bf16 %v4168, %v4167
      %v5321 = vpack.c.bf16 %v5290, %v5289
      %v5322 = vpack.c.bf16 %v4170, %v4169
      %v5323 = vpack.c.bf16 %v5292, %v5291
      %v5324 = vpack.c.bf16 %v4172, %v4171
      %v5325 = vpack.c.bf16 %v5294, %v5293
      %v5326 = vpack.c.bf16 %v4174, %v4173
      %s5327 = scalar_lea.vmem %s1, 144
      %v5328 = vld [vmem:[%s5327] sm:$0xf]
      %v5329 = vld [vmem:[%s5327 + $0x4] sm:$0xf]
      %v5330 = vld [vmem:[%s5327 + $0x8] sm:$0xf]
      %v5331 = vld [vmem:[%s5327 + $0xc] sm:$0xf]
      %v5332 = vld [vmem:[%s5327 + $0x10] sm:$0xf]
      %v5333 = vld [vmem:[%s5327 + $0x14] sm:$0xf]
      %v5334 = vld [vmem:[%s5327 + $0x18] sm:$0xf]
      %v5335 = vld [vmem:[%s5327 + $0x1c] sm:$0xf]
      %v5336 = vld [vmem:[%s5327 + $0x20] sm:$0xf]
      %v5337 = vld [vmem:[%s5327 + $0x24] sm:$0xf]
      %v5338 = vld [vmem:[%s5327 + $0x28] sm:$0xf]
      %v5339 = vld [vmem:[%s5327 + $0x2c] sm:$0xf]
      %v5340 = vld [vmem:[%s5327 + $0x30] sm:$0xf]
      %v5341 = vld [vmem:[%s5327 + $0x34] sm:$0xf]
      %v5342 = vld [vmem:[%s5327 + $0x38] sm:$0xf]
      %v5343 = vld [vmem:[%s5327 + $0x3c] sm:$0xf]
      %v5344 = vld [vmem:[%s5327 + $0x40] sm:$0xf]
      %v5345 = vld [vmem:[%s5327 + $0x44] sm:$0xf]
      %s5346 = scalar_lea.vmem %s2, 2
      %v5347 = vld [vmem:[%s5346] sm:$0x1]
      %v5349 = vlaneseq
      %v5350 = vshrl.u32 %v5349, 7
      %v5351 = vsub.s32 0, %v5350
      %v5352 = vrot.slane %v5347, %v5351
      %v5372 = vunpack.c.l.b16 %v5328
      %v5373 = vunpack.c.l.b16 %v5329
      %v5374 = vunpack.c.l.b16 %v5330
      %v5375 = vunpack.c.l.b16 %v5331
      %v5376 = vunpack.c.l.b16 %v5332
      %v5377 = vunpack.c.l.b16 %v5333
      %v5378 = vunpack.c.l.b16 %v5334
      %v5379 = vunpack.c.l.b16 %v5335
      %v5380 = vunpack.c.l.b16 %v5336
      %v5381 = vunpack.c.l.b16 %v5337
      %v5382 = vunpack.c.l.b16 %v5338
      %v5383 = vunpack.c.l.b16 %v5339
      %v5384 = vunpack.c.l.b16 %v5340
      %v5385 = vunpack.c.l.b16 %v5341
      %v5386 = vunpack.c.l.b16 %v5342
      %v5387 = vunpack.c.l.b16 %v5343
      %v5388 = vunpack.c.l.b16 %v5344
      %v5389 = vunpack.c.l.b16 %v5345
      %v5390 = vpack.c.b16 %v5373, %v5372
      %v5391 = vpack.c.b16 %v5375, %v5374
      %v5392 = vpack.c.b16 %v5377, %v5376
      %v5393 = vpack.c.b16 %v5379, %v5378
      %v5394 = vpack.c.b16 %v5381, %v5380
      %v5395 = vpack.c.b16 %v5383, %v5382
      %v5396 = vpack.c.b16 %v5385, %v5384
      %v5397 = vpack.c.b16 %v5387, %v5386
      %v5398 = vpack.c.b16 %v5389, %v5388
      %v5409 = vsel %vm172, %v5296, 0
      %v5412 = vsel %vm172, %v5298, 0
      %v5415 = vsel %vm172, %v5300, 0
      %v5418 = vsel %vm172, %v5302, 0
      %v5421 = vsel %vm172, %v5304, 0
      %v5424 = vsel %vm172, %v5306, 0
      %v5427 = vsel %vm172, %v5308, 0
      %v5430 = vsel %vm172, %v5310, 0
      %v5433 = vsel %vm172, %v5312, 0
      %v5436 = vsel %vm172, %v5314, 0
      %v5439 = vsel %vm172, %v5316, 0
      %v5442 = vsel %vm172, %v5318, 0
      %v5445 = vsel %vm172, %v5320, 0
      %v5448 = vsel %vm172, %v5322, 0
      %v5451 = vsel %vm172, %v5324, 0
      %v5454 = vsel %vm172, %v5326, 0
      %5456 = vmatprep.subr.bf16.mxu0 0
      %5457 = vmatpush1.bf16.msra.mxu0 %v5390
      %5458 = vmatprep.subr.bf16.mxu0 0
      %5459 = vmatpush1.bf16.msra.mxu0 %v5391
      %5460 = vmatprep.subr.bf16.mxu0 0
      %5461 = vmatpush1.bf16.msra.mxu0 %v5392
      %5462 = vmatprep.subr.bf16.mxu0 0
      %5463 = vmatpush1.bf16.msra.mxu0 %v5393
      %5464 = vmatprep.subr.bf16.mxu0 0
      %5465 = vmatpush1.bf16.msra.mxu0 %v5394
      %5466 = vmatprep.subr.bf16.mxu0 0
      %5467 = vmatpush1.bf16.msra.mxu0 %v5395
      %5468 = vmatprep.subr.bf16.mxu0 0
      %5469 = vmatpush1.bf16.msra.mxu0 %v5396
      %5470 = vmatprep.subr.bf16.mxu0 0
      %5471 = vmatpush1.bf16.msra.mxu0 %v5397
      %5472 = vmatprep.subr.bf16.mxu0 0
      %5473 = vmatpush1.bf16.msra.mxu0 %v5398
      %5474 = vmatprep.subr.bf16.mxu0 0
      %5475 = vmatpush1.bf16.msra.mxu0 0
      %5476 = vmatprep.subr.bf16.mxu0 0
      %5477 = vmatpush1.bf16.msra.mxu0 0
      %5478 = vmatprep.subr.bf16.mxu0 0
      %5479 = vmatpush1.bf16.msra.mxu0 0
      %5480 = vmatprep.subr.bf16.mxu0 0
      %5481 = vmatpush1.bf16.msra.mxu0 0
      %5482 = vmatprep.subr.bf16.mxu0 0
      %5483 = vmatpush1.bf16.msra.mxu0 0
      %5484 = vmatprep.subr.bf16.mxu0 0
      %5485 = vmatpush1.bf16.msra.mxu0 0
      %5486 = vmatprep.subr.bf16.mxu0 0
      %5487 = vmatpush1.bf16.msra.mxu0 0
      %5488 = vmatprep.mubr.bf16.mxu0 %v5409
      %5489 = vmatmul.mubr.bf16.gmra.mrb[0].mxu0 %v5295
      %v5490 = vpop.f32.mrb[0].mxu0
      %v5491 = vadd.f32 %v5352, %v5490
      %v5492 = vpop.f32.mrb[0].mxu0
      %v5493 = vpop.f32.mrb[0].mxu0
      %v5494 = vadd.f32 %v5352, %v5493
      %v5495 = vpop.f32.mrb[0].mxu0
      %5496 = vmatprep.mubr.bf16.mxu0 %v5412
      %5497 = vmatmul.mubr.bf16.gmra.mrb[0].mxu0 %v5297
      %v5498 = vpop.f32.mrb[0].mxu0
      %v5499 = vadd.f32 %v5352, %v5498
      %v5500 = vpop.f32.mrb[0].mxu0
      %v5501 = vpop.f32.mrb[0].mxu0
      %v5502 = vadd.f32 %v5352, %v5501
      %v5503 = vpop.f32.mrb[0].mxu0
      %5504 = vmatprep.mubr.bf16.mxu0 %v5415
      %5505 = vmatmul.mubr.bf16.gmra.mrb[0].mxu0 %v5299
      %v5506 = vpop.f32.mrb[0].mxu0
      %v5507 = vadd.f32 %v5352, %v5506
      %v5508 = vpop.f32.mrb[0].mxu0
      %v5509 = vpop.f32.mrb[0].mxu0
      %v5510 = vadd.f32 %v5352, %v5509
      %v5511 = vpop.f32.mrb[0].mxu0
      %5512 = vmatprep.mubr.bf16.mxu0 %v5418
      %5513 = vmatmul.mubr.bf16.gmra.mrb[0].mxu0 %v5301
      %v5514 = vpop.f32.mrb[0].mxu0
      %v5515 = vadd.f32 %v5352, %v5514
      %v5516 = vpop.f32.mrb[0].mxu0
      %v5517 = vpop.f32.mrb[0].mxu0
      %v5518 = vadd.f32 %v5352, %v5517
      %v5519 = vpop.f32.mrb[0].mxu0
      %5520 = vmatprep.mubr.bf16.mxu0 %v5421
      %5521 = vmatmul.mubr.bf16.gmra.mrb[0].mxu0 %v5303
      %v5522 = vpop.f32.mrb[0].mxu0
      %v5523 = vadd.f32 %v5352, %v5522
      %v5524 = vpop.f32.mrb[0].mxu0
      %v5525 = vpop.f32.mrb[0].mxu0
      %v5526 = vadd.f32 %v5352, %v5525
      %v5527 = vpop.f32.mrb[0].mxu0
      %5528 = vmatprep.mubr.bf16.mxu0 %v5424
      %5529 = vmatmul.mubr.bf16.gmra.mrb[0].mxu0 %v5305
      %v5530 = vpop.f32.mrb[0].mxu0
      %v5531 = vadd.f32 %v5352, %v5530
      %v5532 = vpop.f32.mrb[0].mxu0
      %v5533 = vpop.f32.mrb[0].mxu0
      %v5534 = vadd.f32 %v5352, %v5533
      %v5535 = vpop.f32.mrb[0].mxu0
      %5536 = vmatprep.mubr.bf16.mxu0 %v5427
      %5537 = vmatmul.mubr.bf16.gmra.mrb[0].mxu0 %v5307
      %v5538 = vpop.f32.mrb[0].mxu0
      %v5539 = vadd.f32 %v5352, %v5538
      %v5540 = vpop.f32.mrb[0].mxu0
      %v5541 = vpop.f32.mrb[0].mxu0
      %v5542 = vadd.f32 %v5352, %v5541
      %v5543 = vpop.f32.mrb[0].mxu0
      %5544 = vmatprep.mubr.bf16.mxu0 %v5430
      %5545 = vmatmul.mubr.bf16.gmra.mrb[0].mxu0 %v5309
      %v5546 = vpop.f32.mrb[0].mxu0
      %v5547 = vadd.f32 %v5352, %v5546
      %v5548 = vpop.f32.mrb[0].mxu0
      %v5549 = vpop.f32.mrb[0].mxu0
      %v5550 = vadd.f32 %v5352, %v5549
      %v5551 = vpop.f32.mrb[0].mxu0
      %5552 = vmatprep.mubr.bf16.mxu0 %v5433
      %5553 = vmatmul.mubr.bf16.gmra.mrb[0].mxu0 %v5311
      %v5554 = vpop.f32.mrb[0].mxu0
      %v5555 = vadd.f32 %v5352, %v5554
      %v5556 = vpop.f32.mrb[0].mxu0
      %v5557 = vpop.f32.mrb[0].mxu0
      %v5558 = vadd.f32 %v5352, %v5557
      %v5559 = vpop.f32.mrb[0].mxu0
      %5560 = vmatprep.mubr.bf16.mxu0 %v5436
      %5561 = vmatmul.mubr.bf16.gmra.mrb[0].mxu0 %v5313
      %v5562 = vpop.f32.mrb[0].mxu0
      %v5563 = vadd.f32 %v5352, %v5562
      %v5564 = vpop.f32.mrb[0].mxu0
      %v5565 = vpop.f32.mrb[0].mxu0
      %v5566 = vadd.f32 %v5352, %v5565
      %v5567 = vpop.f32.mrb[0].mxu0
      %5568 = vmatprep.mubr.bf16.mxu0 %v5439
      %5569 = vmatmul.mubr.bf16.gmra.mrb[0].mxu0 %v5315
      %v5570 = vpop.f32.mrb[0].mxu0
      %v5571 = vadd.f32 %v5352, %v5570
      %v5572 = vpop.f32.mrb[0].mxu0
      %v5573 = vpop.f32.mrb[0].mxu0
      %v5574 = vadd.f32 %v5352, %v5573
      %v5575 = vpop.f32.mrb[0].mxu0
      %5576 = vmatprep.mubr.bf16.mxu0 %v5442
      %5577 = vmatmul.mubr.bf16.gmra.mrb[0].mxu0 %v5317
      %v5578 = vpop.f32.mrb[0].mxu0
      %v5579 = vadd.f32 %v5352, %v5578
      %v5580 = vpop.f32.mrb[0].mxu0
      %v5581 = vpop.f32.mrb[0].mxu0
      %v5582 = vadd.f32 %v5352, %v5581
      %v5583 = vpop.f32.mrb[0].mxu0
      %5584 = vmatprep.mubr.bf16.mxu0 %v5445
      %5585 = vmatmul.mubr.bf16.gmra.mrb[0].mxu0 %v5319
      %v5586 = vpop.f32.mrb[0].mxu0
      %v5587 = vadd.f32 %v5352, %v5586
      %v5588 = vpop.f32.mrb[0].mxu0
      %v5589 = vpop.f32.mrb[0].mxu0
      %v5590 = vadd.f32 %v5352, %v5589
      %v5591 = vpop.f32.mrb[0].mxu0
      %5592 = vmatprep.mubr.bf16.mxu0 %v5448
      %5593 = vmatmul.mubr.bf16.gmra.mrb[0].mxu0 %v5321
      %v5594 = vpop.f32.mrb[0].mxu0
      %v5595 = vadd.f32 %v5352, %v5594
      %v5596 = vpop.f32.mrb[0].mxu0
      %v5597 = vpop.f32.mrb[0].mxu0
      %v5598 = vadd.f32 %v5352, %v5597
      %v5599 = vpop.f32.mrb[0].mxu0
      %5600 = vmatprep.mubr.bf16.mxu0 %v5451
      %5601 = vmatmul.mubr.bf16.gmra.mrb[0].mxu0 %v5323
      %v5602 = vpop.f32.mrb[0].mxu0
      %v5603 = vadd.f32 %v5352, %v5602
      %v5604 = vpop.f32.mrb[0].mxu0
      %v5605 = vpop.f32.mrb[0].mxu0
      %v5606 = vadd.f32 %v5352, %v5605
      %v5607 = vpop.f32.mrb[0].mxu0
      %5608 = vmatprep.mubr.bf16.mxu0 %v5454
      %5609 = vmatmul.mubr.bf16.gmra.mrb[0].mxu0 %v5325
      %v5610 = vpop.f32.mrb[0].mxu0
      %v5611 = vadd.f32 %v5352, %v5610
      %v5612 = vpop.f32.mrb[0].mxu0
      %v5613 = vpop.f32.mrb[0].mxu0
      %v5614 = vadd.f32 %v5352, %v5613
      %v5615 = vpop.f32.mrb[0].mxu0
      %5616 = vdwg.mxu0
      %v5617 = vld [vmem:[#allocation3] sm:$0xff]
      %v5618 = vld [vmem:[#allocation3 + $0x8] sm:$0xff]
      %v5619 = vld [vmem:[#allocation3 + $0x10] sm:$0xff]
      %v5620 = vld [vmem:[#allocation3 + $0x18] sm:$0xff]
      %v5621 = vld [vmem:[#allocation3 + $0x20] sm:$0xff]
      %v5622 = vld [vmem:[#allocation3 + $0x28] sm:$0xff]
      %v5623 = vld [vmem:[#allocation3 + $0x30] sm:$0xff]
      %v5624 = vld [vmem:[#allocation3 + $0x38] sm:$0xff]
      %v5625 = vld [vmem:[#allocation3 + $0x40] sm:$0xff]
      %v5626 = vld [vmem:[#allocation3 + $0x48] sm:$0xff]
      %v5627 = vld [vmem:[#allocation3 + $0x50] sm:$0xff]
      %v5628 = vld [vmem:[#allocation3 + $0x58] sm:$0xff]
      %v5629 = vld [vmem:[#allocation3 + $0x60] sm:$0xff]
      %v5630 = vld [vmem:[#allocation3 + $0x68] sm:$0xff]
      %v5631 = vld [vmem:[#allocation3 + $0x70] sm:$0xff]
      %v5632 = vld [vmem:[#allocation3 + $0x78] sm:$0xff]
      %v5633 = vld [vmem:[#allocation3 + $0x80] sm:$0xff]
      %v5634 = vld [vmem:[#allocation3 + $0x88] sm:$0xff]
      %v5635 = vld [vmem:[#allocation3 + $0x90] sm:$0xff]
      %v5636 = vld [vmem:[#allocation3 + $0x98] sm:$0xff]
      %v5637 = vld [vmem:[#allocation3 + $0xa0] sm:$0xff]
      %v5638 = vld [vmem:[#allocation3 + $0xa8] sm:$0xff]
      %v5639 = vld [vmem:[#allocation3 + $0xb0] sm:$0xff]
      %v5640 = vld [vmem:[#allocation3 + $0xb8] sm:$0xff]
      %v5641 = vld [vmem:[#allocation3 + $0xc0] sm:$0xff]
      %v5642 = vld [vmem:[#allocation3 + $0xc8] sm:$0xff]
      %v5643 = vld [vmem:[#allocation3 + $0xd0] sm:$0xff]
      %v5644 = vld [vmem:[#allocation3 + $0xd8] sm:$0xff]
      %v5645 = vld [vmem:[#allocation3 + $0xe0] sm:$0xff]
      %v5646 = vld [vmem:[#allocation3 + $0xe8] sm:$0xff]
      %v5647 = vld [vmem:[#allocation3 + $0xf0] sm:$0xff]
      %v5648 = vld [vmem:[#allocation3 + $0xf8] sm:$0xff]
      %v5649 = vadd.f32 %v5617, %v5491
      %v5650 = vadd.f32 %v5618, %v5494
      %v5651 = vadd.f32 %v5619, %v5499
      %v5652 = vadd.f32 %v5620, %v5502
      %v5653 = vadd.f32 %v5621, %v5507
      %v5654 = vadd.f32 %v5622, %v5510
      %v5655 = vadd.f32 %v5623, %v5515
      %v5656 = vadd.f32 %v5624, %v5518
      %v5657 = vadd.f32 %v5625, %v5523
      %v5658 = vadd.f32 %v5626, %v5526
      %v5659 = vadd.f32 %v5627, %v5531
      %v5660 = vadd.f32 %v5628, %v5534
      %v5661 = vadd.f32 %v5629, %v5539
      %v5662 = vadd.f32 %v5630, %v5542
      %v5663 = vadd.f32 %v5631, %v5547
      %v5664 = vadd.f32 %v5632, %v5550
      %v5665 = vadd.f32 %v5633, %v5555
      %v5666 = vadd.f32 %v5634, %v5558
      %v5667 = vadd.f32 %v5635, %v5563
      %v5668 = vadd.f32 %v5636, %v5566
      %v5669 = vadd.f32 %v5637, %v5571
      %v5670 = vadd.f32 %v5638, %v5574
      %v5671 = vadd.f32 %v5639, %v5579
      %v5672 = vadd.f32 %v5640, %v5582
      %v5673 = vadd.f32 %v5641, %v5587
      %v5674 = vadd.f32 %v5642, %v5590
      %v5675 = vadd.f32 %v5643, %v5595
      %v5676 = vadd.f32 %v5644, %v5598
      %v5677 = vadd.f32 %v5645, %v5603
      %v5678 = vadd.f32 %v5646, %v5606
      %v5679 = vadd.f32 %v5647, %v5611
      %v5680 = vadd.f32 %v5648, %v5614
      %5681 = vst.msk [vmem:[#allocation3] sm:$0xff] %vm172, %v5649
      %5682 = vst.msk [vmem:[#allocation3 + $0x8] sm:$0xff] %vm172, %v5650
      %5683 = vst.msk [vmem:[#allocation3 + $0x10] sm:$0xff] %vm172, %v5651
      %5684 = vst.msk [vmem:[#allocation3 + $0x18] sm:$0xff] %vm172, %v5652
      %5685 = vst.msk [vmem:[#allocation3 + $0x20] sm:$0xff] %vm172, %v5653
      %5686 = vst.msk [vmem:[#allocation3 + $0x28] sm:$0xff] %vm172, %v5654
      %5687 = vst.msk [vmem:[#allocation3 + $0x30] sm:$0xff] %vm172, %v5655
      %5688 = vst.msk [vmem:[#allocation3 + $0x38] sm:$0xff] %vm172, %v5656
      %5689 = vst.msk [vmem:[#allocation3 + $0x40] sm:$0xff] %vm172, %v5657
      %5690 = vst.msk [vmem:[#allocation3 + $0x48] sm:$0xff] %vm172, %v5658
      %5691 = vst.msk [vmem:[#allocation3 + $0x50] sm:$0xff] %vm172, %v5659
      %5692 = vst.msk [vmem:[#allocation3 + $0x58] sm:$0xff] %vm172, %v5660
      %5693 = vst.msk [vmem:[#allocation3 + $0x60] sm:$0xff] %vm172, %v5661
      %5694 = vst.msk [vmem:[#allocation3 + $0x68] sm:$0xff] %vm172, %v5662
      %5695 = vst.msk [vmem:[#allocation3 + $0x70] sm:$0xff] %vm172, %v5663
      %5696 = vst.msk [vmem:[#allocation3 + $0x78] sm:$0xff] %vm172, %v5664
      %5697 = vst.msk [vmem:[#allocation3 + $0x80] sm:$0xff] %vm172, %v5665
      %5698 = vst.msk [vmem:[#allocation3 + $0x88] sm:$0xff] %vm172, %v5666
      %5699 = vst.msk [vmem:[#allocation3 + $0x90] sm:$0xff] %vm172, %v5667
      %5700 = vst.msk [vmem:[#allocation3 + $0x98] sm:$0xff] %vm172, %v5668
      %5701 = vst.msk [vmem:[#allocation3 + $0xa0] sm:$0xff] %vm172, %v5669
      %5702 = vst.msk [vmem:[#allocation3 + $0xa8] sm:$0xff] %vm172, %v5670
      %5703 = vst.msk [vmem:[#allocation3 + $0xb0] sm:$0xff] %vm172, %v5671
      %5704 = vst.msk [vmem:[#allocation3 + $0xb8] sm:$0xff] %vm172, %v5672
      %5705 = vst.msk [vmem:[#allocation3 + $0xc0] sm:$0xff] %vm172, %v5673
      %5706 = vst.msk [vmem:[#allocation3 + $0xc8] sm:$0xff] %vm172, %v5674
      %5707 = vst.msk [vmem:[#allocation3 + $0xd0] sm:$0xff] %vm172, %v5675
      %5708 = vst.msk [vmem:[#allocation3 + $0xd8] sm:$0xff] %vm172, %v5676
      %5709 = vst.msk [vmem:[#allocation3 + $0xe0] sm:$0xff] %vm172, %v5677
      %5710 = vst.msk [vmem:[#allocation3 + $0xe8] sm:$0xff] %vm172, %v5678
      %5711 = vst.msk [vmem:[#allocation3 + $0xf0] sm:$0xff] %vm172, %v5679
      %5712 = vst.msk [vmem:[#allocation3 + $0xf8] sm:$0xff] %vm172, %v5680
      %5713 = vst.msk [vmem:[%s260 + $0x1] sm:$0xff] %vm172, %v5649
      %5714 = vst.msk [vmem:[%s260 + $0x9] sm:$0xff] %vm172, %v5650
      %5715 = vst.msk [vmem:[%s260 + $0x19] sm:$0xff] %vm172, %v5651
      %5716 = vst.msk [vmem:[%s260 + $0x21] sm:$0xff] %vm172, %v5652
      %5717 = vst.msk [vmem:[%s260 + $0x31] sm:$0xff] %vm172, %v5653
      %5718 = vst.msk [vmem:[%s260 + $0x39] sm:$0xff] %vm172, %v5654
      %5719 = vst.msk [vmem:[%s260 + $0x49] sm:$0xff] %vm172, %v5655
      %5720 = vst.msk [vmem:[%s260 + $0x51] sm:$0xff] %vm172, %v5656
      %5721 = vst.msk [vmem:[%s260 + $0x61] sm:$0xff] %vm172, %v5657
      %5722 = vst.msk [vmem:[%s260 + $0x69] sm:$0xff] %vm172, %v5658
      %5723 = vst.msk [vmem:[%s260 + $0x79] sm:$0xff] %vm172, %v5659
      %5724 = vst.msk [vmem:[%s260 + $0x81] sm:$0xff] %vm172, %v5660
      %5725 = vst.msk [vmem:[%s260 + $0x91] sm:$0xff] %vm172, %v5661
      %5726 = vst.msk [vmem:[%s260 + $0x99] sm:$0xff] %vm172, %v5662
      %5727 = vst.msk [vmem:[%s260 + $0xa9] sm:$0xff] %vm172, %v5663
      %5728 = vst.msk [vmem:[%s260 + $0xb1] sm:$0xff] %vm172, %v5664
      %5729 = vst.msk [vmem:[%s260 + $0xc1] sm:$0xff] %vm172, %v5665
      %5730 = vst.msk [vmem:[%s260 + $0xc9] sm:$0xff] %vm172, %v5666
      %5731 = vst.msk [vmem:[%s260 + $0xd9] sm:$0xff] %vm172, %v5667
      %5732 = vst.msk [vmem:[%s260 + $0xe1] sm:$0xff] %vm172, %v5668
      %5733 = vst.msk [vmem:[%s260 + $0xf1] sm:$0xff] %vm172, %v5669
      %5734 = vst.msk [vmem:[%s260 + $0xf9] sm:$0xff] %vm172, %v5670
      %5735 = vst.msk [vmem:[%s260 + $0x109] sm:$0xff] %vm172, %v5671
      %5736 = vst.msk [vmem:[%s260 + $0x111] sm:$0xff] %vm172, %v5672
      %5737 = vst.msk [vmem:[%s260 + $0x121] sm:$0xff] %vm172, %v5673
      %5738 = vst.msk [vmem:[%s260 + $0x129] sm:$0xff] %vm172, %v5674
      %5739 = vst.msk [vmem:[%s260 + $0x139] sm:$0xff] %vm172, %v5675
      %5740 = vst.msk [vmem:[%s260 + $0x141] sm:$0xff] %vm172, %v5676
      %5741 = vst.msk [vmem:[%s260 + $0x151] sm:$0xff] %vm172, %v5677
      %5742 = vst.msk [vmem:[%s260 + $0x159] sm:$0xff] %vm172, %v5678
      %5743 = vst.msk [vmem:[%s260 + $0x169] sm:$0xff] %vm172, %v5679
      %5744 = vst.msk [vmem:[%s260 + $0x171] sm:$0xff] %vm172, %v5680
      %v5745 = vld [vmem:[#allocation2] sm:$0xff]
      %v5746 = vld [vmem:[#allocation2 + $0x8] sm:$0xff]
      %v5747 = vld [vmem:[#allocation2 + $0x18] sm:$0xff]
      %v5748 = vld [vmem:[#allocation2 + $0x20] sm:$0xff]
      %v5749 = vld [vmem:[#allocation2 + $0x30] sm:$0xff]
      %v5750 = vld [vmem:[#allocation2 + $0x38] sm:$0xff]
      %v5751 = vld [vmem:[#allocation2 + $0x48] sm:$0xff]
      %v5752 = vld [vmem:[#allocation2 + $0x50] sm:$0xff]
      %v5753 = vld [vmem:[#allocation2 + $0x60] sm:$0xff]
      %v5754 = vld [vmem:[#allocation2 + $0x68] sm:$0xff]
      %v5755 = vld [vmem:[#allocation2 + $0x78] sm:$0xff]
      %v5756 = vld [vmem:[#allocation2 + $0x80] sm:$0xff]
      %v5757 = vld [vmem:[#allocation2 + $0x90] sm:$0xff]
      %v5758 = vld [vmem:[#allocation2 + $0x98] sm:$0xff]
      %v5759 = vld [vmem:[#allocation2 + $0xa8] sm:$0xff]
      %v5760 = vld [vmem:[#allocation2 + $0xb0] sm:$0xff]
      %v5761 = vld [vmem:[#allocation2 + $0xc0] sm:$0xff]
      %v5762 = vld [vmem:[#allocation2 + $0xc8] sm:$0xff]
      %v5763 = vld [vmem:[#allocation2 + $0xd8] sm:$0xff]
      %v5764 = vld [vmem:[#allocation2 + $0xe0] sm:$0xff]
      %v5765 = vld [vmem:[#allocation2 + $0xf0] sm:$0xff]
      %v5766 = vld [vmem:[#allocation2 + $0xf8] sm:$0xff]
      %v5767 = vld [vmem:[#allocation2 + $0x108] sm:$0xff]
      %v5768 = vld [vmem:[#allocation2 + $0x110] sm:$0xff]
      %v5769 = vld [vmem:[#allocation2 + $0x120] sm:$0xff]
      %v5770 = vld [vmem:[#allocation2 + $0x128] sm:$0xff]
      %v5771 = vld [vmem:[#allocation2 + $0x138] sm:$0xff]
      %v5772 = vld [vmem:[#allocation2 + $0x140] sm:$0xff]
      %v5773 = vld [vmem:[#allocation2 + $0x150] sm:$0xff]
      %v5774 = vld [vmem:[#allocation2 + $0x158] sm:$0xff]
      %v5775 = vld [vmem:[#allocation2 + $0x168] sm:$0xff]
      %v5776 = vld [vmem:[#allocation2 + $0x170] sm:$0xff]
      %v5777 = vld [vmem:[#allocation2 + $0x1] sm:$0xff]
      %v5778 = vld [vmem:[#allocation2 + $0x9] sm:$0xff]
      %v5779 = vld [vmem:[#allocation2 + $0x19] sm:$0xff]
      %v5780 = vld [vmem:[#allocation2 + $0x21] sm:$0xff]
      %v5781 = vld [vmem:[#allocation2 + $0x31] sm:$0xff]
      %v5782 = vld [vmem:[#allocation2 + $0x39] sm:$0xff]
      %v5783 = vld [vmem:[#allocation2 + $0x49] sm:$0xff]
      %v5784 = vld [vmem:[#allocation2 + $0x51] sm:$0xff]
      %v5785 = vld [vmem:[#allocation2 + $0x61] sm:$0xff]
      %v5786 = vld [vmem:[#allocation2 + $0x69] sm:$0xff]
      %v5787 = vld [vmem:[#allocation2 + $0x79] sm:$0xff]
      %v5788 = vld [vmem:[#allocation2 + $0x81] sm:$0xff]
      %v5789 = vld [vmem:[#allocation2 + $0x91] sm:$0xff]
      %v5790 = vld [vmem:[#allocation2 + $0x99] sm:$0xff]
      %v5791 = vld [vmem:[#allocation2 + $0xa9] sm:$0xff]
      %v5792 = vld [vmem:[#allocation2 + $0xb1] sm:$0xff]
      %v5793 = vld [vmem:[#allocation2 + $0xc1] sm:$0xff]
      %v5794 = vld [vmem:[#allocation2 + $0xc9] sm:$0xff]
      %v5795 = vld [vmem:[#allocation2 + $0xd9] sm:$0xff]
      %v5796 = vld [vmem:[#allocation2 + $0xe1] sm:$0xff]
      %v5797 = vld [vmem:[#allocation2 + $0xf1] sm:$0xff]
      %v5798 = vld [vmem:[#allocation2 + $0xf9] sm:$0xff]
      %v5799 = vld [vmem:[#allocation2 + $0x109] sm:$0xff]
      %v5800 = vld [vmem:[#allocation2 + $0x111] sm:$0xff]
      %v5801 = vld [vmem:[#allocation2 + $0x121] sm:$0xff]
      %v5802 = vld [vmem:[#allocation2 + $0x129] sm:$0xff]
      %v5803 = vld [vmem:[#allocation2 + $0x139] sm:$0xff]
      %v5804 = vld [vmem:[#allocation2 + $0x141] sm:$0xff]
      %v5805 = vld [vmem:[#allocation2 + $0x151] sm:$0xff]
      %v5806 = vld [vmem:[#allocation2 + $0x159] sm:$0xff]
      %v5807 = vld [vmem:[#allocation2 + $0x169] sm:$0xff]
      %v5808 = vld [vmem:[#allocation2 + $0x171] sm:$0xff]
      %v5809 = vld [vmem:[#allocation2 + $0x2] sm:$0xff]
      %v5810 = vld [vmem:[#allocation2 + $0xa] sm:$0xff]
      %v5811 = vld [vmem:[#allocation2 + $0x1a] sm:$0xff]
      %v5812 = vld [vmem:[#allocation2 + $0x22] sm:$0xff]
      %v5813 = vld [vmem:[#allocation2 + $0x32] sm:$0xff]
      %v5814 = vld [vmem:[#allocation2 + $0x3a] sm:$0xff]
      %v5815 = vld [vmem:[#allocation2 + $0x4a] sm:$0xff]
      %v5816 = vld [vmem:[#allocation2 + $0x52] sm:$0xff]
      %v5817 = vld [vmem:[#allocation2 + $0x62] sm:$0xff]
      %v5818 = vld [vmem:[#allocation2 + $0x6a] sm:$0xff]
      %v5819 = vld [vmem:[#allocation2 + $0x7a] sm:$0xff]
      %v5820 = vld [vmem:[#allocation2 + $0x82] sm:$0xff]
      %v5821 = vld [vmem:[#allocation2 + $0x92] sm:$0xff]
      %v5822 = vld [vmem:[#allocation2 + $0x9a] sm:$0xff]
      %v5823 = vld [vmem:[#allocation2 + $0xaa] sm:$0xff]
      %v5824 = vld [vmem:[#allocation2 + $0xb2] sm:$0xff]
      %v5825 = vld [vmem:[#allocation2 + $0xc2] sm:$0xff]
      %v5826 = vld [vmem:[#allocation2 + $0xca] sm:$0xff]
      %v5827 = vld [vmem:[#allocation2 + $0xda] sm:$0xff]
      %v5828 = vld [vmem:[#allocation2 + $0xe2] sm:$0xff]
      %v5829 = vld [vmem:[#allocation2 + $0xf2] sm:$0xff]
      %v5830 = vld [vmem:[#allocation2 + $0xfa] sm:$0xff]
      %v5831 = vld [vmem:[#allocation2 + $0x10a] sm:$0xff]
      %v5832 = vld [vmem:[#allocation2 + $0x112] sm:$0xff]
      %v5833 = vld [vmem:[#allocation2 + $0x122] sm:$0xff]
      %v5834 = vld [vmem:[#allocation2 + $0x12a] sm:$0xff]
      %v5835 = vld [vmem:[#allocation2 + $0x13a] sm:$0xff]
      %v5836 = vld [vmem:[#allocation2 + $0x142] sm:$0xff]
      %v5837 = vld [vmem:[#allocation2 + $0x152] sm:$0xff]
      %v5838 = vld [vmem:[#allocation2 + $0x15a] sm:$0xff]
      %v5839 = vld [vmem:[#allocation2 + $0x16a] sm:$0xff]
      %v5840 = vld [vmem:[#allocation2 + $0x172] sm:$0xff]
      %v5841 = vld [vmem:[%s260] sm:$0xff]
      %v5842 = vld [vmem:[%s260 + $0x8] sm:$0xff]
      %v5843 = vld [vmem:[%s260 + $0x18] sm:$0xff]
      %v5844 = vld [vmem:[%s260 + $0x20] sm:$0xff]
      %v5845 = vld [vmem:[%s260 + $0x30] sm:$0xff]
      %v5846 = vld [vmem:[%s260 + $0x38] sm:$0xff]
      %v5847 = vld [vmem:[%s260 + $0x48] sm:$0xff]
      %v5848 = vld [vmem:[%s260 + $0x50] sm:$0xff]
      %v5849 = vld [vmem:[%s260 + $0x60] sm:$0xff]
      %v5850 = vld [vmem:[%s260 + $0x68] sm:$0xff]
      %v5851 = vld [vmem:[%s260 + $0x78] sm:$0xff]
      %v5852 = vld [vmem:[%s260 + $0x80] sm:$0xff]
      %v5853 = vld [vmem:[%s260 + $0x90] sm:$0xff]
      %v5854 = vld [vmem:[%s260 + $0x98] sm:$0xff]
      %v5855 = vld [vmem:[%s260 + $0xa8] sm:$0xff]
      %v5856 = vld [vmem:[%s260 + $0xb0] sm:$0xff]
      %v5857 = vld [vmem:[%s260 + $0xc0] sm:$0xff]
      %v5858 = vld [vmem:[%s260 + $0xc8] sm:$0xff]
      %v5859 = vld [vmem:[%s260 + $0xd8] sm:$0xff]
      %v5860 = vld [vmem:[%s260 + $0xe0] sm:$0xff]
      %v5861 = vld [vmem:[%s260 + $0xf0] sm:$0xff]
      %v5862 = vld [vmem:[%s260 + $0xf8] sm:$0xff]
      %v5863 = vld [vmem:[%s260 + $0x108] sm:$0xff]
      %v5864 = vld [vmem:[%s260 + $0x110] sm:$0xff]
      %v5865 = vld [vmem:[%s260 + $0x120] sm:$0xff]
      %v5866 = vld [vmem:[%s260 + $0x128] sm:$0xff]
      %v5867 = vld [vmem:[%s260 + $0x138] sm:$0xff]
      %v5868 = vld [vmem:[%s260 + $0x140] sm:$0xff]
      %v5869 = vld [vmem:[%s260 + $0x150] sm:$0xff]
      %v5870 = vld [vmem:[%s260 + $0x158] sm:$0xff]
      %v5871 = vld [vmem:[%s260 + $0x168] sm:$0xff]
      %v5872 = vld [vmem:[%s260 + $0x170] sm:$0xff]
      %v5873 = vld [vmem:[%s260 + $0x1] sm:$0xff]
      %v5874 = vld [vmem:[%s260 + $0x9] sm:$0xff]
      %v5875 = vld [vmem:[%s260 + $0x19] sm:$0xff]
      %v5876 = vld [vmem:[%s260 + $0x21] sm:$0xff]
      %v5877 = vld [vmem:[%s260 + $0x31] sm:$0xff]
      %v5878 = vld [vmem:[%s260 + $0x39] sm:$0xff]
      %v5879 = vld [vmem:[%s260 + $0x49] sm:$0xff]
      %v5880 = vld [vmem:[%s260 + $0x51] sm:$0xff]
      %v5881 = vld [vmem:[%s260 + $0x61] sm:$0xff]
      %v5882 = vld [vmem:[%s260 + $0x69] sm:$0xff]
      %v5883 = vld [vmem:[%s260 + $0x79] sm:$0xff]
      %v5884 = vld [vmem:[%s260 + $0x81] sm:$0xff]
      %v5885 = vld [vmem:[%s260 + $0x91] sm:$0xff]
      %v5886 = vld [vmem:[%s260 + $0x99] sm:$0xff]
      %v5887 = vld [vmem:[%s260 + $0xa9] sm:$0xff]
      %v5888 = vld [vmem:[%s260 + $0xb1] sm:$0xff]
      %v5889 = vld [vmem:[%s260 + $0xc1] sm:$0xff]
      %v5890 = vld [vmem:[%s260 + $0xc9] sm:$0xff]
      %v5891 = vld [vmem:[%s260 + $0xd9] sm:$0xff]
      %v5892 = vld [vmem:[%s260 + $0xe1] sm:$0xff]
      %v5893 = vld [vmem:[%s260 + $0xf1] sm:$0xff]
      %v5894 = vld [vmem:[%s260 + $0xf9] sm:$0xff]
      %v5895 = vld [vmem:[%s260 + $0x109] sm:$0xff]
      %v5896 = vld [vmem:[%s260 + $0x111] sm:$0xff]
      %v5897 = vld [vmem:[%s260 + $0x121] sm:$0xff]
      %v5898 = vld [vmem:[%s260 + $0x129] sm:$0xff]
      %v5899 = vld [vmem:[%s260 + $0x139] sm:$0xff]
      %v5900 = vld [vmem:[%s260 + $0x141] sm:$0xff]
      %v5901 = vld [vmem:[%s260 + $0x151] sm:$0xff]
      %v5902 = vld [vmem:[%s260 + $0x159] sm:$0xff]
      %v5903 = vld [vmem:[%s260 + $0x169] sm:$0xff]
      %v5904 = vld [vmem:[%s260 + $0x171] sm:$0xff]
      %v5905 = vld [vmem:[%s260 + $0x2] sm:$0xff]
      %v5906 = vld [vmem:[%s260 + $0xa] sm:$0xff]
      %v5907 = vld [vmem:[%s260 + $0x1a] sm:$0xff]
      %v5908 = vld [vmem:[%s260 + $0x22] sm:$0xff]
      %v5909 = vld [vmem:[%s260 + $0x32] sm:$0xff]
      %v5910 = vld [vmem:[%s260 + $0x3a] sm:$0xff]
      %v5911 = vld [vmem:[%s260 + $0x4a] sm:$0xff]
      %v5912 = vld [vmem:[%s260 + $0x52] sm:$0xff]
      %v5913 = vld [vmem:[%s260 + $0x62] sm:$0xff]
      %v5914 = vld [vmem:[%s260 + $0x6a] sm:$0xff]
      %v5915 = vld [vmem:[%s260 + $0x7a] sm:$0xff]
      %v5916 = vld [vmem:[%s260 + $0x82] sm:$0xff]
      %v5917 = vld [vmem:[%s260 + $0x92] sm:$0xff]
      %v5918 = vld [vmem:[%s260 + $0x9a] sm:$0xff]
      %v5919 = vld [vmem:[%s260 + $0xaa] sm:$0xff]
      %v5920 = vld [vmem:[%s260 + $0xb2] sm:$0xff]
      %v5921 = vld [vmem:[%s260 + $0xc2] sm:$0xff]
      %v5922 = vld [vmem:[%s260 + $0xca] sm:$0xff]
      %v5923 = vld [vmem:[%s260 + $0xda] sm:$0xff]
      %v5924 = vld [vmem:[%s260 + $0xe2] sm:$0xff]
      %v5925 = vld [vmem:[%s260 + $0xf2] sm:$0xff]
      %v5926 = vld [vmem:[%s260 + $0xfa] sm:$0xff]
      %v5927 = vld [vmem:[%s260 + $0x10a] sm:$0xff]
      %v5928 = vld [vmem:[%s260 + $0x112] sm:$0xff]
      %v5929 = vld [vmem:[%s260 + $0x122] sm:$0xff]
      %v5930 = vld [vmem:[%s260 + $0x12a] sm:$0xff]
      %v5931 = vld [vmem:[%s260 + $0x13a] sm:$0xff]
      %v5932 = vld [vmem:[%s260 + $0x142] sm:$0xff]
      %v5933 = vld [vmem:[%s260 + $0x152] sm:$0xff]
      %v5934 = vld [vmem:[%s260 + $0x15a] sm:$0xff]
      %v5935 = vld [vmem:[%s260 + $0x16a] sm:$0xff]
      %v5936 = vld [vmem:[%s260 + $0x172] sm:$0xff]
      %v5937 = vld [vmem:[%s486] sm:$0xff]
      %v5938 = vld [vmem:[%s486 + $0x8] sm:$0xff]
      %v5939 = vld [vmem:[%s486 + $0x18] sm:$0xff]
      %v5940 = vld [vmem:[%s486 + $0x20] sm:$0xff]
      %v5941 = vld [vmem:[%s486 + $0x30] sm:$0xff]
      %v5942 = vld [vmem:[%s486 + $0x38] sm:$0xff]
      %v5943 = vld [vmem:[%s486 + $0x48] sm:$0xff]
      %v5944 = vld [vmem:[%s486 + $0x50] sm:$0xff]
      %v5945 = vld [vmem:[%s486 + $0x60] sm:$0xff]
      %v5946 = vld [vmem:[%s486 + $0x68] sm:$0xff]
      %v5947 = vld [vmem:[%s486 + $0x78] sm:$0xff]
      %v5948 = vld [vmem:[%s486 + $0x80] sm:$0xff]
      %v5949 = vld [vmem:[%s486 + $0x90] sm:$0xff]
      %v5950 = vld [vmem:[%s486 + $0x98] sm:$0xff]
      %v5951 = vld [vmem:[%s486 + $0xa8] sm:$0xff]
      %v5952 = vld [vmem:[%s486 + $0xb0] sm:$0xff]
      %v5953 = vld [vmem:[%s486 + $0xc0] sm:$0xff]
      %v5954 = vld [vmem:[%s486 + $0xc8] sm:$0xff]
      %v5955 = vld [vmem:[%s486 + $0xd8] sm:$0xff]
      %v5956 = vld [vmem:[%s486 + $0xe0] sm:$0xff]
      %v5957 = vld [vmem:[%s486 + $0xf0] sm:$0xff]
      %v5958 = vld [vmem:[%s486 + $0xf8] sm:$0xff]
      %v5959 = vld [vmem:[%s486 + $0x108] sm:$0xff]
      %v5960 = vld [vmem:[%s486 + $0x110] sm:$0xff]
      %v5961 = vld [vmem:[%s486 + $0x120] sm:$0xff]
      %v5962 = vld [vmem:[%s486 + $0x128] sm:$0xff]
      %v5963 = vld [vmem:[%s486 + $0x138] sm:$0xff]
      %v5964 = vld [vmem:[%s486 + $0x140] sm:$0xff]
      %v5965 = vld [vmem:[%s486 + $0x150] sm:$0xff]
      %v5966 = vld [vmem:[%s486 + $0x158] sm:$0xff]
      %v5967 = vld [vmem:[%s486 + $0x168] sm:$0xff]
      %v5968 = vld [vmem:[%s486 + $0x170] sm:$0xff]
      %v5969 = vld [vmem:[%s486 + $0x1] sm:$0xff]
      %v5970 = vld [vmem:[%s486 + $0x9] sm:$0xff]
      %v5971 = vld [vmem:[%s486 + $0x19] sm:$0xff]
      %v5972 = vld [vmem:[%s486 + $0x21] sm:$0xff]
      %v5973 = vld [vmem:[%s486 + $0x31] sm:$0xff]
      %v5974 = vld [vmem:[%s486 + $0x39] sm:$0xff]
      %v5975 = vld [vmem:[%s486 + $0x49] sm:$0xff]
      %v5976 = vld [vmem:[%s486 + $0x51] sm:$0xff]
      %v5977 = vld [vmem:[%s486 + $0x61] sm:$0xff]
      %v5978 = vld [vmem:[%s486 + $0x69] sm:$0xff]
      %v5979 = vld [vmem:[%s486 + $0x79] sm:$0xff]
      %v5980 = vld [vmem:[%s486 + $0x81] sm:$0xff]
      %v5981 = vld [vmem:[%s486 + $0x91] sm:$0xff]
      %v5982 = vld [vmem:[%s486 + $0x99] sm:$0xff]
      %v5983 = vld [vmem:[%s486 + $0xa9] sm:$0xff]
      %v5984 = vld [vmem:[%s486 + $0xb1] sm:$0xff]
      %v5985 = vld [vmem:[%s486 + $0xc1] sm:$0xff]
      %v5986 = vld [vmem:[%s486 + $0xc9] sm:$0xff]
      %v5987 = vld [vmem:[%s486 + $0xd9] sm:$0xff]
      %v5988 = vld [vmem:[%s486 + $0xe1] sm:$0xff]
      %v5989 = vld [vmem:[%s486 + $0xf1] sm:$0xff]
      %v5990 = vld [vmem:[%s486 + $0xf9] sm:$0xff]
      %v5991 = vld [vmem:[%s486 + $0x109] sm:$0xff]
      %v5992 = vld [vmem:[%s486 + $0x111] sm:$0xff]
      %v5993 = vld [vmem:[%s486 + $0x121] sm:$0xff]
      %v5994 = vld [vmem:[%s486 + $0x129] sm:$0xff]
      %v5995 = vld [vmem:[%s486 + $0x139] sm:$0xff]
      %v5996 = vld [vmem:[%s486 + $0x141] sm:$0xff]
      %v5997 = vld [vmem:[%s486 + $0x151] sm:$0xff]
      %v5998 = vld [vmem:[%s486 + $0x159] sm:$0xff]
      %v5999 = vld [vmem:[%s486 + $0x169] sm:$0xff]
      %v6000 = vld [vmem:[%s486 + $0x171] sm:$0xff]
      %v6001 = vld [vmem:[%s486 + $0x2] sm:$0xff]
      %v6002 = vld [vmem:[%s486 + $0xa] sm:$0xff]
      %v6003 = vld [vmem:[%s486 + $0x1a] sm:$0xff]
      %v6004 = vld [vmem:[%s486 + $0x22] sm:$0xff]
      %v6005 = vld [vmem:[%s486 + $0x32] sm:$0xff]
      %v6006 = vld [vmem:[%s486 + $0x3a] sm:$0xff]
      %v6007 = vld [vmem:[%s486 + $0x4a] sm:$0xff]
      %v6008 = vld [vmem:[%s486 + $0x52] sm:$0xff]
      %v6009 = vld [vmem:[%s486 + $0x62] sm:$0xff]
      %v6010 = vld [vmem:[%s486 + $0x6a] sm:$0xff]
      %v6011 = vld [vmem:[%s486 + $0x7a] sm:$0xff]
      %v6012 = vld [vmem:[%s486 + $0x82] sm:$0xff]
      %v6013 = vld [vmem:[%s486 + $0x92] sm:$0xff]
      %v6014 = vld [vmem:[%s486 + $0x9a] sm:$0xff]
      %v6015 = vld [vmem:[%s486 + $0xaa] sm:$0xff]
      %v6016 = vld [vmem:[%s486 + $0xb2] sm:$0xff]
      %v6017 = vld [vmem:[%s486 + $0xc2] sm:$0xff]
      %v6018 = vld [vmem:[%s486 + $0xca] sm:$0xff]
      %v6019 = vld [vmem:[%s486 + $0xda] sm:$0xff]
      %v6020 = vld [vmem:[%s486 + $0xe2] sm:$0xff]
      %v6021 = vld [vmem:[%s486 + $0xf2] sm:$0xff]
      %v6022 = vld [vmem:[%s486 + $0xfa] sm:$0xff]
      %v6023 = vld [vmem:[%s486 + $0x10a] sm:$0xff]
      %v6024 = vld [vmem:[%s486 + $0x112] sm:$0xff]
      %v6025 = vld [vmem:[%s486 + $0x122] sm:$0xff]
      %v6026 = vld [vmem:[%s486 + $0x12a] sm:$0xff]
      %v6027 = vld [vmem:[%s486 + $0x13a] sm:$0xff]
      %v6028 = vld [vmem:[%s486 + $0x142] sm:$0xff]
      %v6029 = vld [vmem:[%s486 + $0x152] sm:$0xff]
      %v6030 = vld [vmem:[%s486 + $0x15a] sm:$0xff]
      %v6031 = vld [vmem:[%s486 + $0x16a] sm:$0xff]
      %v6032 = vld [vmem:[%s486 + $0x172] sm:$0xff]
      %6065 = vrot.lane.b32.xlu0 %v5777, 16
      %v6066 = vpop.permute.xlu0 %6065
      %6067 = vrot.lane.b32.xlu0 %v5778, 16
      %v6068 = vpop.permute.xlu0 %6067
      %6069 = vrot.lane.b32.xlu0 %v5779, 16
      %v6070 = vpop.permute.xlu0 %6069
      %6071 = vrot.lane.b32.xlu0 %v5780, 16
      %v6072 = vpop.permute.xlu0 %6071
      %6073 = vrot.lane.b32.xlu0 %v5781, 16
      %v6074 = vpop.permute.xlu0 %6073
      %6075 = vrot.lane.b32.xlu0 %v5782, 16
      %v6076 = vpop.permute.xlu0 %6075
      %6077 = vrot.lane.b32.xlu0 %v5783, 16
      %v6078 = vpop.permute.xlu0 %6077
      %6079 = vrot.lane.b32.xlu0 %v5784, 16
      %v6080 = vpop.permute.xlu0 %6079
      %6081 = vrot.lane.b32.xlu0 %v5785, 16
      %v6082 = vpop.permute.xlu0 %6081
      %6083 = vrot.lane.b32.xlu0 %v5786, 16
      %v6084 = vpop.permute.xlu0 %6083
      %6085 = vrot.lane.b32.xlu0 %v5787, 16
      %v6086 = vpop.permute.xlu0 %6085
      %6087 = vrot.lane.b32.xlu0 %v5788, 16
      %v6088 = vpop.permute.xlu0 %6087
      %6089 = vrot.lane.b32.xlu0 %v5789, 16
      %v6090 = vpop.permute.xlu0 %6089
      %6091 = vrot.lane.b32.xlu0 %v5790, 16
      %v6092 = vpop.permute.xlu0 %6091
      %6093 = vrot.lane.b32.xlu0 %v5791, 16
      %v6094 = vpop.permute.xlu0 %6093
      %6095 = vrot.lane.b32.xlu0 %v5792, 16
      %v6096 = vpop.permute.xlu0 %6095
      %6097 = vrot.lane.b32.xlu0 %v5793, 16
      %v6098 = vpop.permute.xlu0 %6097
      %6099 = vrot.lane.b32.xlu0 %v5794, 16
      %v6100 = vpop.permute.xlu0 %6099
      %6101 = vrot.lane.b32.xlu0 %v5795, 16
      %v6102 = vpop.permute.xlu0 %6101
      %6103 = vrot.lane.b32.xlu0 %v5796, 16
      %v6104 = vpop.permute.xlu0 %6103
      %6105 = vrot.lane.b32.xlu0 %v5797, 16
      %v6106 = vpop.permute.xlu0 %6105
      %6107 = vrot.lane.b32.xlu0 %v5798, 16
      %v6108 = vpop.permute.xlu0 %6107
      %6109 = vrot.lane.b32.xlu0 %v5799, 16
      %v6110 = vpop.permute.xlu0 %6109
      %6111 = vrot.lane.b32.xlu0 %v5800, 16
      %v6112 = vpop.permute.xlu0 %6111
      %6113 = vrot.lane.b32.xlu0 %v5801, 16
      %v6114 = vpop.permute.xlu0 %6113
      %6115 = vrot.lane.b32.xlu0 %v5802, 16
      %v6116 = vpop.permute.xlu0 %6115
      %6117 = vrot.lane.b32.xlu0 %v5803, 16
      %v6118 = vpop.permute.xlu0 %6117
      %6119 = vrot.lane.b32.xlu0 %v5804, 16
      %v6120 = vpop.permute.xlu0 %6119
      %6121 = vrot.lane.b32.xlu0 %v5805, 16
      %v6122 = vpop.permute.xlu0 %6121
      %6123 = vrot.lane.b32.xlu0 %v5806, 16
      %v6124 = vpop.permute.xlu0 %6123
      %6125 = vrot.lane.b32.xlu0 %v5807, 16
      %v6126 = vpop.permute.xlu0 %6125
      %6127 = vrot.lane.b32.xlu0 %v5808, 16
      %v6128 = vpop.permute.xlu0 %6127
      %6193 = vrot.lane.b32.xlu0 %v5809, 32
      %v6194 = vpop.permute.xlu0 %6193
      %6195 = vrot.lane.b32.xlu0 %v5810, 32
      %v6196 = vpop.permute.xlu0 %6195
      %6197 = vrot.lane.b32.xlu0 %v5811, 32
      %v6198 = vpop.permute.xlu0 %6197
      %6199 = vrot.lane.b32.xlu0 %v5812, 32
      %v6200 = vpop.permute.xlu0 %6199
      %6201 = vrot.lane.b32.xlu0 %v5813, 32
      %v6202 = vpop.permute.xlu0 %6201
      %6203 = vrot.lane.b32.xlu0 %v5814, 32
      %v6204 = vpop.permute.xlu0 %6203
      %6205 = vrot.lane.b32.xlu0 %v5815, 32
      %v6206 = vpop.permute.xlu0 %6205
      %6207 = vrot.lane.b32.xlu0 %v5816, 32
      %v6208 = vpop.permute.xlu0 %6207
      %6209 = vrot.lane.b32.xlu0 %v5817, 32
      %v6210 = vpop.permute.xlu0 %6209
      %6211 = vrot.lane.b32.xlu0 %v5818, 32
      %v6212 = vpop.permute.xlu0 %6211
      %6213 = vrot.lane.b32.xlu0 %v5819, 32
      %v6214 = vpop.permute.xlu0 %6213
      %6215 = vrot.lane.b32.xlu0 %v5820, 32
      %v6216 = vpop.permute.xlu0 %6215
      %6217 = vrot.lane.b32.xlu0 %v5821, 32
      %v6218 = vpop.permute.xlu0 %6217
      %6219 = vrot.lane.b32.xlu0 %v5822, 32
      %v6220 = vpop.permute.xlu0 %6219
      %6221 = vrot.lane.b32.xlu0 %v5823, 32
      %v6222 = vpop.permute.xlu0 %6221
      %6223 = vrot.lane.b32.xlu0 %v5824, 32
      %v6224 = vpop.permute.xlu0 %6223
      %6225 = vrot.lane.b32.xlu0 %v5825, 32
      %v6226 = vpop.permute.xlu0 %6225
      %6227 = vrot.lane.b32.xlu0 %v5826, 32
      %v6228 = vpop.permute.xlu0 %6227
      %6229 = vrot.lane.b32.xlu0 %v5827, 32
      %v6230 = vpop.permute.xlu0 %6229
      %6231 = vrot.lane.b32.xlu0 %v5828, 32
      %v6232 = vpop.permute.xlu0 %6231
      %6233 = vrot.lane.b32.xlu0 %v5829, 32
      %v6234 = vpop.permute.xlu0 %6233
      %6235 = vrot.lane.b32.xlu0 %v5830, 32
      %v6236 = vpop.permute.xlu0 %6235
      %6237 = vrot.lane.b32.xlu0 %v5831, 32
      %v6238 = vpop.permute.xlu0 %6237
      %6239 = vrot.lane.b32.xlu0 %v5832, 32
      %v6240 = vpop.permute.xlu0 %6239
      %6241 = vrot.lane.b32.xlu0 %v5833, 32
      %v6242 = vpop.permute.xlu0 %6241
      %6243 = vrot.lane.b32.xlu0 %v5834, 32
      %v6244 = vpop.permute.xlu0 %6243
      %6245 = vrot.lane.b32.xlu0 %v5835, 32
      %v6246 = vpop.permute.xlu0 %6245
      %6247 = vrot.lane.b32.xlu0 %v5836, 32
      %v6248 = vpop.permute.xlu0 %6247
      %6249 = vrot.lane.b32.xlu0 %v5837, 32
      %v6250 = vpop.permute.xlu0 %6249
      %6251 = vrot.lane.b32.xlu0 %v5838, 32
      %v6252 = vpop.permute.xlu0 %6251
      %6253 = vrot.lane.b32.xlu0 %v5839, 32
      %v6254 = vpop.permute.xlu0 %6253
      %6255 = vrot.lane.b32.xlu0 %v5840, 32
      %v6256 = vpop.permute.xlu0 %6255
      %6321 = vrot.lane.b32.xlu0 %v5841, 48
      %v6322 = vpop.permute.xlu0 %6321
      %6323 = vrot.lane.b32.xlu0 %v5842, 48
      %v6324 = vpop.permute.xlu0 %6323
      %6325 = vrot.lane.b32.xlu0 %v5843, 48
      %v6326 = vpop.permute.xlu0 %6325
      %6327 = vrot.lane.b32.xlu0 %v5844, 48
      %v6328 = vpop.permute.xlu0 %6327
      %6329 = vrot.lane.b32.xlu0 %v5845, 48
      %v6330 = vpop.permute.xlu0 %6329
      %6331 = vrot.lane.b32.xlu0 %v5846, 48
      %v6332 = vpop.permute.xlu0 %6331
      %6333 = vrot.lane.b32.xlu0 %v5847, 48
      %v6334 = vpop.permute.xlu0 %6333
      %6335 = vrot.lane.b32.xlu0 %v5848, 48
      %v6336 = vpop.permute.xlu0 %6335
      %6337 = vrot.lane.b32.xlu0 %v5849, 48
      %v6338 = vpop.permute.xlu0 %6337
      %6339 = vrot.lane.b32.xlu0 %v5850, 48
      %v6340 = vpop.permute.xlu0 %6339
      %6341 = vrot.lane.b32.xlu0 %v5851, 48
      %v6342 = vpop.permute.xlu0 %6341
      %6343 = vrot.lane.b32.xlu0 %v5852, 48
      %v6344 = vpop.permute.xlu0 %6343
      %6345 = vrot.lane.b32.xlu0 %v5853, 48
      %v6346 = vpop.permute.xlu0 %6345
      %6347 = vrot.lane.b32.xlu0 %v5854, 48
      %v6348 = vpop.permute.xlu0 %6347
      %6349 = vrot.lane.b32.xlu0 %v5855, 48
      %v6350 = vpop.permute.xlu0 %6349
      %6351 = vrot.lane.b32.xlu0 %v5856, 48
      %v6352 = vpop.permute.xlu0 %6351
      %6353 = vrot.lane.b32.xlu0 %v5857, 48
      %v6354 = vpop.permute.xlu0 %6353
      %6355 = vrot.lane.b32.xlu0 %v5858, 48
      %v6356 = vpop.permute.xlu0 %6355
      %6357 = vrot.lane.b32.xlu0 %v5859, 48
      %v6358 = vpop.permute.xlu0 %6357
      %6359 = vrot.lane.b32.xlu0 %v5860, 48
      %v6360 = vpop.permute.xlu0 %6359
      %6361 = vrot.lane.b32.xlu0 %v5861, 48
      %v6362 = vpop.permute.xlu0 %6361
      %6363 = vrot.lane.b32.xlu0 %v5862, 48
      %v6364 = vpop.permute.xlu0 %6363
      %6365 = vrot.lane.b32.xlu0 %v5863, 48
      %v6366 = vpop.permute.xlu0 %6365
      %6367 = vrot.lane.b32.xlu0 %v5864, 48
      %v6368 = vpop.permute.xlu0 %6367
      %6369 = vrot.lane.b32.xlu0 %v5865, 48
      %v6370 = vpop.permute.xlu0 %6369
      %6371 = vrot.lane.b32.xlu0 %v5866, 48
      %v6372 = vpop.permute.xlu0 %6371
      %6373 = vrot.lane.b32.xlu0 %v5867, 48
      %v6374 = vpop.permute.xlu0 %6373
      %6375 = vrot.lane.b32.xlu0 %v5868, 48
      %v6376 = vpop.permute.xlu0 %6375
      %6377 = vrot.lane.b32.xlu0 %v5869, 48
      %v6378 = vpop.permute.xlu0 %6377
      %6379 = vrot.lane.b32.xlu0 %v5870, 48
      %v6380 = vpop.permute.xlu0 %6379
      %6381 = vrot.lane.b32.xlu0 %v5871, 48
      %v6382 = vpop.permute.xlu0 %6381
      %6383 = vrot.lane.b32.xlu0 %v5872, 48
      %v6384 = vpop.permute.xlu0 %6383
      %6449 = vrot.lane.b32.xlu0 %v5873, 64
      %v6450 = vpop.permute.xlu0 %6449
      %6451 = vrot.lane.b32.xlu0 %v5874, 64
      %v6452 = vpop.permute.xlu0 %6451
      %6453 = vrot.lane.b32.xlu0 %v5875, 64
      %v6454 = vpop.permute.xlu0 %6453
      %6455 = vrot.lane.b32.xlu0 %v5876, 64
      %v6456 = vpop.permute.xlu0 %6455
      %6457 = vrot.lane.b32.xlu0 %v5877, 64
      %v6458 = vpop.permute.xlu0 %6457
      %6459 = vrot.lane.b32.xlu0 %v5878, 64
      %v6460 = vpop.permute.xlu0 %6459
      %6461 = vrot.lane.b32.xlu0 %v5879, 64
      %v6462 = vpop.permute.xlu0 %6461
      %6463 = vrot.lane.b32.xlu0 %v5880, 64
      %v6464 = vpop.permute.xlu0 %6463
      %6465 = vrot.lane.b32.xlu0 %v5881, 64
      %v6466 = vpop.permute.xlu0 %6465
      %6467 = vrot.lane.b32.xlu0 %v5882, 64
      %v6468 = vpop.permute.xlu0 %6467
      %6469 = vrot.lane.b32.xlu0 %v5883, 64
      %v6470 = vpop.permute.xlu0 %6469
      %6471 = vrot.lane.b32.xlu0 %v5884, 64
      %v6472 = vpop.permute.xlu0 %6471
      %6473 = vrot.lane.b32.xlu0 %v5885, 64
      %v6474 = vpop.permute.xlu0 %6473
      %6475 = vrot.lane.b32.xlu0 %v5886, 64
      %v6476 = vpop.permute.xlu0 %6475
      %6477 = vrot.lane.b32.xlu0 %v5887, 64
      %v6478 = vpop.permute.xlu0 %6477
      %6479 = vrot.lane.b32.xlu0 %v5888, 64
      %v6480 = vpop.permute.xlu0 %6479
      %6481 = vrot.lane.b32.xlu0 %v5889, 64
      %v6482 = vpop.permute.xlu0 %6481
      %6483 = vrot.lane.b32.xlu0 %v5890, 64
      %v6484 = vpop.permute.xlu0 %6483
      %6485 = vrot.lane.b32.xlu0 %v5891, 64
      %v6486 = vpop.permute.xlu0 %6485
      %6487 = vrot.lane.b32.xlu0 %v5892, 64
      %v6488 = vpop.permute.xlu0 %6487
      %6489 = vrot.lane.b32.xlu0 %v5893, 64
      %v6490 = vpop.permute.xlu0 %6489
      %6491 = vrot.lane.b32.xlu0 %v5894, 64
      %v6492 = vpop.permute.xlu0 %6491
      %6493 = vrot.lane.b32.xlu0 %v5895, 64
      %v6494 = vpop.permute.xlu0 %6493
      %6495 = vrot.lane.b32.xlu0 %v5896, 64
      %v6496 = vpop.permute.xlu0 %6495
      %6497 = vrot.lane.b32.xlu0 %v5897, 64
      %v6498 = vpop.permute.xlu0 %6497
      %6499 = vrot.lane.b32.xlu0 %v5898, 64
      %v6500 = vpop.permute.xlu0 %6499
      %6501 = vrot.lane.b32.xlu0 %v5899, 64
      %v6502 = vpop.permute.xlu0 %6501
      %6503 = vrot.lane.b32.xlu0 %v5900, 64
      %v6504 = vpop.permute.xlu0 %6503
      %6505 = vrot.lane.b32.xlu0 %v5901, 64
      %v6506 = vpop.permute.xlu0 %6505
      %6507 = vrot.lane.b32.xlu0 %v5902, 64
      %v6508 = vpop.permute.xlu0 %6507
      %6509 = vrot.lane.b32.xlu0 %v5903, 64
      %v6510 = vpop.permute.xlu0 %6509
      %6511 = vrot.lane.b32.xlu0 %v5904, 64
      %v6512 = vpop.permute.xlu0 %6511
      %6577 = vrot.lane.b32.xlu0 %v5905, 80
      %v6578 = vpop.permute.xlu0 %6577
      %6579 = vrot.lane.b32.xlu0 %v5906, 80
      %v6580 = vpop.permute.xlu0 %6579
      %6581 = vrot.lane.b32.xlu0 %v5907, 80
      %v6582 = vpop.permute.xlu0 %6581
      %6583 = vrot.lane.b32.xlu0 %v5908, 80
      %v6584 = vpop.permute.xlu0 %6583
      %6585 = vrot.lane.b32.xlu0 %v5909, 80
      %v6586 = vpop.permute.xlu0 %6585
      %6587 = vrot.lane.b32.xlu0 %v5910, 80
      %v6588 = vpop.permute.xlu0 %6587
      %6589 = vrot.lane.b32.xlu0 %v5911, 80
      %v6590 = vpop.permute.xlu0 %6589
      %6591 = vrot.lane.b32.xlu0 %v5912, 80
      %v6592 = vpop.permute.xlu0 %6591
      %6593 = vrot.lane.b32.xlu0 %v5913, 80
      %v6594 = vpop.permute.xlu0 %6593
      %6595 = vrot.lane.b32.xlu0 %v5914, 80
      %v6596 = vpop.permute.xlu0 %6595
      %6597 = vrot.lane.b32.xlu0 %v5915, 80
      %v6598 = vpop.permute.xlu0 %6597
      %6599 = vrot.lane.b32.xlu0 %v5916, 80
      %v6600 = vpop.permute.xlu0 %6599
      %6601 = vrot.lane.b32.xlu0 %v5917, 80
      %v6602 = vpop.permute.xlu0 %6601
      %6603 = vrot.lane.b32.xlu0 %v5918, 80
      %v6604 = vpop.permute.xlu0 %6603
      %6605 = vrot.lane.b32.xlu0 %v5919, 80
      %v6606 = vpop.permute.xlu0 %6605
      %6607 = vrot.lane.b32.xlu0 %v5920, 80
      %v6608 = vpop.permute.xlu0 %6607
      %6609 = vrot.lane.b32.xlu0 %v5921, 80
      %v6610 = vpop.permute.xlu0 %6609
      %6611 = vrot.lane.b32.xlu0 %v5922, 80
      %v6612 = vpop.permute.xlu0 %6611
      %6613 = vrot.lane.b32.xlu0 %v5923, 80
      %v6614 = vpop.permute.xlu0 %6613
      %6615 = vrot.lane.b32.xlu0 %v5924, 80
      %v6616 = vpop.permute.xlu0 %6615
      %6617 = vrot.lane.b32.xlu0 %v5925, 80
      %v6618 = vpop.permute.xlu0 %6617
      %6619 = vrot.lane.b32.xlu0 %v5926, 80
      %v6620 = vpop.permute.xlu0 %6619
      %6621 = vrot.lane.b32.xlu0 %v5927, 80
      %v6622 = vpop.permute.xlu0 %6621
      %6623 = vrot.lane.b32.xlu0 %v5928, 80
      %v6624 = vpop.permute.xlu0 %6623
      %6625 = vrot.lane.b32.xlu0 %v5929, 80
      %v6626 = vpop.permute.xlu0 %6625
      %6627 = vrot.lane.b32.xlu0 %v5930, 80
      %v6628 = vpop.permute.xlu0 %6627
      %6629 = vrot.lane.b32.xlu0 %v5931, 80
      %v6630 = vpop.permute.xlu0 %6629
      %6631 = vrot.lane.b32.xlu0 %v5932, 80
      %v6632 = vpop.permute.xlu0 %6631
      %6633 = vrot.lane.b32.xlu0 %v5933, 80
      %v6634 = vpop.permute.xlu0 %6633
      %6635 = vrot.lane.b32.xlu0 %v5934, 80
      %v6636 = vpop.permute.xlu0 %6635
      %6637 = vrot.lane.b32.xlu0 %v5935, 80
      %v6638 = vpop.permute.xlu0 %6637
      %6639 = vrot.lane.b32.xlu0 %v5936, 80
      %v6640 = vpop.permute.xlu0 %6639
      %6705 = vrot.lane.b32.xlu0 %v5937, 96
      %v6706 = vpop.permute.xlu0 %6705
      %6707 = vrot.lane.b32.xlu0 %v5938, 96
      %v6708 = vpop.permute.xlu0 %6707
      %6709 = vrot.lane.b32.xlu0 %v5939, 96
      %v6710 = vpop.permute.xlu0 %6709
      %6711 = vrot.lane.b32.xlu0 %v5940, 96
      %v6712 = vpop.permute.xlu0 %6711
      %6713 = vrot.lane.b32.xlu0 %v5941, 96
      %v6714 = vpop.permute.xlu0 %6713
      %6715 = vrot.lane.b32.xlu0 %v5942, 96
      %v6716 = vpop.permute.xlu0 %6715
      %6717 = vrot.lane.b32.xlu0 %v5943, 96
      %v6718 = vpop.permute.xlu0 %6717
      %6719 = vrot.lane.b32.xlu0 %v5944, 96
      %v6720 = vpop.permute.xlu0 %6719
      %6721 = vrot.lane.b32.xlu0 %v5945, 96
      %v6722 = vpop.permute.xlu0 %6721
      %6723 = vrot.lane.b32.xlu0 %v5946, 96
      %v6724 = vpop.permute.xlu0 %6723
      %6725 = vrot.lane.b32.xlu0 %v5947, 96
      %v6726 = vpop.permute.xlu0 %6725
      %6727 = vrot.lane.b32.xlu0 %v5948, 96
      %v6728 = vpop.permute.xlu0 %6727
      %6729 = vrot.lane.b32.xlu0 %v5949, 96
      %v6730 = vpop.permute.xlu0 %6729
      %6731 = vrot.lane.b32.xlu0 %v5950, 96
      %v6732 = vpop.permute.xlu0 %6731
      %6733 = vrot.lane.b32.xlu0 %v5951, 96
      %v6734 = vpop.permute.xlu0 %6733
      %6735 = vrot.lane.b32.xlu0 %v5952, 96
      %v6736 = vpop.permute.xlu0 %6735
      %6737 = vrot.lane.b32.xlu0 %v5953, 96
      %v6738 = vpop.permute.xlu0 %6737
      %6739 = vrot.lane.b32.xlu0 %v5954, 96
      %v6740 = vpop.permute.xlu0 %6739
      %6741 = vrot.lane.b32.xlu0 %v5955, 96
      %v6742 = vpop.permute.xlu0 %6741
      %6743 = vrot.lane.b32.xlu0 %v5956, 96
      %v6744 = vpop.permute.xlu0 %6743
      %6745 = vrot.lane.b32.xlu0 %v5957, 96
      %v6746 = vpop.permute.xlu0 %6745
      %6747 = vrot.lane.b32.xlu0 %v5958, 96
      %v6748 = vpop.permute.xlu0 %6747
      %6749 = vrot.lane.b32.xlu0 %v5959, 96
      %v6750 = vpop.permute.xlu0 %6749
      %6751 = vrot.lane.b32.xlu0 %v5960, 96
      %v6752 = vpop.permute.xlu0 %6751
      %6753 = vrot.lane.b32.xlu0 %v5961, 96
      %v6754 = vpop.permute.xlu0 %6753
      %6755 = vrot.lane.b32.xlu0 %v5962, 96
      %v6756 = vpop.permute.xlu0 %6755
      %6757 = vrot.lane.b32.xlu0 %v5963, 96
      %v6758 = vpop.permute.xlu0 %6757
      %6759 = vrot.lane.b32.xlu0 %v5964, 96
      %v6760 = vpop.permute.xlu0 %6759
      %6761 = vrot.lane.b32.xlu0 %v5965, 96
      %v6762 = vpop.permute.xlu0 %6761
      %6763 = vrot.lane.b32.xlu0 %v5966, 96
      %v6764 = vpop.permute.xlu0 %6763
      %6765 = vrot.lane.b32.xlu0 %v5967, 96
      %v6766 = vpop.permute.xlu0 %6765
      %6767 = vrot.lane.b32.xlu0 %v5968, 96
      %v6768 = vpop.permute.xlu0 %6767
      %6833 = vrot.lane.b32.xlu0 %v5969, 112
      %v6834 = vpop.permute.xlu0 %6833
      %6835 = vrot.lane.b32.xlu0 %v5970, 112
      %v6836 = vpop.permute.xlu0 %6835
      %6837 = vrot.lane.b32.xlu0 %v5971, 112
      %v6838 = vpop.permute.xlu0 %6837
      %6839 = vrot.lane.b32.xlu0 %v5972, 112
      %v6840 = vpop.permute.xlu0 %6839
      %6841 = vrot.lane.b32.xlu0 %v5973, 112
      %v6842 = vpop.permute.xlu0 %6841
      %6843 = vrot.lane.b32.xlu0 %v5974, 112
      %v6844 = vpop.permute.xlu0 %6843
      %6845 = vrot.lane.b32.xlu0 %v5975, 112
      %v6846 = vpop.permute.xlu0 %6845
      %6847 = vrot.lane.b32.xlu0 %v5976, 112
      %v6848 = vpop.permute.xlu0 %6847
      %6849 = vrot.lane.b32.xlu0 %v5977, 112
      %v6850 = vpop.permute.xlu0 %6849
      %6851 = vrot.lane.b32.xlu0 %v5978, 112
      %v6852 = vpop.permute.xlu0 %6851
      %6853 = vrot.lane.b32.xlu0 %v5979, 112
      %v6854 = vpop.permute.xlu0 %6853
      %6855 = vrot.lane.b32.xlu0 %v5980, 112
      %v6856 = vpop.permute.xlu0 %6855
      %6857 = vrot.lane.b32.xlu0 %v5981, 112
      %v6858 = vpop.permute.xlu0 %6857
      %6859 = vrot.lane.b32.xlu0 %v5982, 112
      %v6860 = vpop.permute.xlu0 %6859
      %6861 = vrot.lane.b32.xlu0 %v5983, 112
      %v6862 = vpop.permute.xlu0 %6861
      %6863 = vrot.lane.b32.xlu0 %v5984, 112
      %v6864 = vpop.permute.xlu0 %6863
      %6865 = vrot.lane.b32.xlu0 %v5985, 112
      %v6866 = vpop.permute.xlu0 %6865
      %6867 = vrot.lane.b32.xlu0 %v5986, 112
      %v6868 = vpop.permute.xlu0 %6867
      %6869 = vrot.lane.b32.xlu0 %v5987, 112
      %v6870 = vpop.permute.xlu0 %6869
      %6871 = vrot.lane.b32.xlu0 %v5988, 112
      %v6872 = vpop.permute.xlu0 %6871
      %6873 = vrot.lane.b32.xlu0 %v5989, 112
      %v6874 = vpop.permute.xlu0 %6873
      %6875 = vrot.lane.b32.xlu0 %v5990, 112
      %v6876 = vpop.permute.xlu0 %6875
      %6877 = vrot.lane.b32.xlu0 %v5991, 112
      %v6878 = vpop.permute.xlu0 %6877
      %6879 = vrot.lane.b32.xlu0 %v5992, 112
      %v6880 = vpop.permute.xlu0 %6879
      %6881 = vrot.lane.b32.xlu0 %v5993, 112
      %v6882 = vpop.permute.xlu0 %6881
      %6883 = vrot.lane.b32.xlu0 %v5994, 112
      %v6884 = vpop.permute.xlu0 %6883
      %6885 = vrot.lane.b32.xlu0 %v5995, 112
      %v6886 = vpop.permute.xlu0 %6885
      %6887 = vrot.lane.b32.xlu0 %v5996, 112
      %v6888 = vpop.permute.xlu0 %6887
      %6889 = vrot.lane.b32.xlu0 %v5997, 112
      %v6890 = vpop.permute.xlu0 %6889
      %6891 = vrot.lane.b32.xlu0 %v5998, 112
      %v6892 = vpop.permute.xlu0 %6891
      %6893 = vrot.lane.b32.xlu0 %v5999, 112
      %v6894 = vpop.permute.xlu0 %6893
      %6895 = vrot.lane.b32.xlu0 %v6000, 112
      %v6896 = vpop.permute.xlu0 %6895
      %v6929 = vsel %vm172, %v5745, %v6066
      %v6930 = vsel %vm172, %v5746, %v6068
      %v6931 = vsel %vm172, %v5747, %v6070
      %v6932 = vsel %vm172, %v5748, %v6072
      %v6933 = vsel %vm172, %v5749, %v6074
      %v6934 = vsel %vm172, %v5750, %v6076
      %v6935 = vsel %vm172, %v5751, %v6078
      %v6936 = vsel %vm172, %v5752, %v6080
      %v6937 = vsel %vm172, %v5753, %v6082
      %v6938 = vsel %vm172, %v5754, %v6084
      %v6939 = vsel %vm172, %v5755, %v6086
      %v6940 = vsel %vm172, %v5756, %v6088
      %v6941 = vsel %vm172, %v5757, %v6090
      %v6942 = vsel %vm172, %v5758, %v6092
      %v6943 = vsel %vm172, %v5759, %v6094
      %v6944 = vsel %vm172, %v5760, %v6096
      %v6945 = vsel %vm172, %v5761, %v6098
      %v6946 = vsel %vm172, %v5762, %v6100
      %v6947 = vsel %vm172, %v5763, %v6102
      %v6948 = vsel %vm172, %v5764, %v6104
      %v6949 = vsel %vm172, %v5765, %v6106
      %v6950 = vsel %vm172, %v5766, %v6108
      %v6951 = vsel %vm172, %v5767, %v6110
      %v6952 = vsel %vm172, %v5768, %v6112
      %v6953 = vsel %vm172, %v5769, %v6114
      %v6954 = vsel %vm172, %v5770, %v6116
      %v6955 = vsel %vm172, %v5771, %v6118
      %v6956 = vsel %vm172, %v5772, %v6120
      %v6957 = vsel %vm172, %v5773, %v6122
      %v6958 = vsel %vm172, %v5774, %v6124
      %v6959 = vsel %vm172, %v5775, %v6126
      %v6960 = vsel %vm172, %v5776, %v6128
      %v6961 = vsel %vm1511, %v6929, %v6194
      %v6962 = vsel %vm1511, %v6930, %v6196
      %v6963 = vsel %vm1511, %v6931, %v6198
      %v6964 = vsel %vm1511, %v6932, %v6200
      %v6965 = vsel %vm1511, %v6933, %v6202
      %v6966 = vsel %vm1511, %v6934, %v6204
      %v6967 = vsel %vm1511, %v6935, %v6206
      %v6968 = vsel %vm1511, %v6936, %v6208
      %v6969 = vsel %vm1511, %v6937, %v6210
      %v6970 = vsel %vm1511, %v6938, %v6212
      %v6971 = vsel %vm1511, %v6939, %v6214
      %v6972 = vsel %vm1511, %v6940, %v6216
      %v6973 = vsel %vm1511, %v6941, %v6218
      %v6974 = vsel %vm1511, %v6942, %v6220
      %v6975 = vsel %vm1511, %v6943, %v6222
      %v6976 = vsel %vm1511, %v6944, %v6224
      %v6977 = vsel %vm1511, %v6945, %v6226
      %v6978 = vsel %vm1511, %v6946, %v6228
      %v6979 = vsel %vm1511, %v6947, %v6230
      %v6980 = vsel %vm1511, %v6948, %v6232
      %v6981 = vsel %vm1511, %v6949, %v6234
      %v6982 = vsel %vm1511, %v6950, %v6236
      %v6983 = vsel %vm1511, %v6951, %v6238
      %v6984 = vsel %vm1511, %v6952, %v6240
      %v6985 = vsel %vm1511, %v6953, %v6242
      %v6986 = vsel %vm1511, %v6954, %v6244
      %v6987 = vsel %vm1511, %v6955, %v6246
      %v6988 = vsel %vm1511, %v6956, %v6248
      %v6989 = vsel %vm1511, %v6957, %v6250
      %v6990 = vsel %vm1511, %v6958, %v6252
      %v6991 = vsel %vm1511, %v6959, %v6254
      %v6992 = vsel %vm1511, %v6960, %v6256
      %v6993 = vsel %vm1544, %v6961, %v6322
      %v6994 = vsel %vm1544, %v6962, %v6324
      %v6995 = vsel %vm1544, %v6963, %v6326
      %v6996 = vsel %vm1544, %v6964, %v6328
      %v6997 = vsel %vm1544, %v6965, %v6330
      %v6998 = vsel %vm1544, %v6966, %v6332
      %v6999 = vsel %vm1544, %v6967, %v6334
      %v7000 = vsel %vm1544, %v6968, %v6336
      %v7001 = vsel %vm1544, %v6969, %v6338
      %v7002 = vsel %vm1544, %v6970, %v6340
      %v7003 = vsel %vm1544, %v6971, %v6342
      %v7004 = vsel %vm1544, %v6972, %v6344
      %v7005 = vsel %vm1544, %v6973, %v6346
      %v7006 = vsel %vm1544, %v6974, %v6348
      %v7007 = vsel %vm1544, %v6975, %v6350
      %v7008 = vsel %vm1544, %v6976, %v6352
      %v7009 = vsel %vm1544, %v6977, %v6354
      %v7010 = vsel %vm1544, %v6978, %v6356
      %v7011 = vsel %vm1544, %v6979, %v6358
      %v7012 = vsel %vm1544, %v6980, %v6360
      %v7013 = vsel %vm1544, %v6981, %v6362
      %v7014 = vsel %vm1544, %v6982, %v6364
      %v7015 = vsel %vm1544, %v6983, %v6366
      %v7016 = vsel %vm1544, %v6984, %v6368
      %v7017 = vsel %vm1544, %v6985, %v6370
      %v7018 = vsel %vm1544, %v6986, %v6372
      %v7019 = vsel %vm1544, %v6987, %v6374
      %v7020 = vsel %vm1544, %v6988, %v6376
      %v7021 = vsel %vm1544, %v6989, %v6378
      %v7022 = vsel %vm1544, %v6990, %v6380
      %v7023 = vsel %vm1544, %v6991, %v6382
      %v7024 = vsel %vm1544, %v6992, %v6384
      %v7025 = vsel %vm1577, %v6993, %v6450
      %v7026 = vsel %vm1577, %v6994, %v6452
      %v7027 = vsel %vm1577, %v6995, %v6454
      %v7028 = vsel %vm1577, %v6996, %v6456
      %v7029 = vsel %vm1577, %v6997, %v6458
      %v7030 = vsel %vm1577, %v6998, %v6460
      %v7031 = vsel %vm1577, %v6999, %v6462
      %v7032 = vsel %vm1577, %v7000, %v6464
      %v7033 = vsel %vm1577, %v7001, %v6466
      %v7034 = vsel %vm1577, %v7002, %v6468
      %v7035 = vsel %vm1577, %v7003, %v6470
      %v7036 = vsel %vm1577, %v7004, %v6472
      %v7037 = vsel %vm1577, %v7005, %v6474
      %v7038 = vsel %vm1577, %v7006, %v6476
      %v7039 = vsel %vm1577, %v7007, %v6478
      %v7040 = vsel %vm1577, %v7008, %v6480
      %v7041 = vsel %vm1577, %v7009, %v6482
      %v7042 = vsel %vm1577, %v7010, %v6484
      %v7043 = vsel %vm1577, %v7011, %v6486
      %v7044 = vsel %vm1577, %v7012, %v6488
      %v7045 = vsel %vm1577, %v7013, %v6490
      %v7046 = vsel %vm1577, %v7014, %v6492
      %v7047 = vsel %vm1577, %v7015, %v6494
      %v7048 = vsel %vm1577, %v7016, %v6496
      %v7049 = vsel %vm1577, %v7017, %v6498
      %v7050 = vsel %vm1577, %v7018, %v6500
      %v7051 = vsel %vm1577, %v7019, %v6502
      %v7052 = vsel %vm1577, %v7020, %v6504
      %v7053 = vsel %vm1577, %v7021, %v6506
      %v7054 = vsel %vm1577, %v7022, %v6508
      %v7055 = vsel %vm1577, %v7023, %v6510
      %v7056 = vsel %vm1577, %v7024, %v6512
      %v7057 = vsel %vm1610, %v7025, %v6578
      %v7058 = vsel %vm1610, %v7026, %v6580
      %v7059 = vsel %vm1610, %v7027, %v6582
      %v7060 = vsel %vm1610, %v7028, %v6584
      %v7061 = vsel %vm1610, %v7029, %v6586
      %v7062 = vsel %vm1610, %v7030, %v6588
      %v7063 = vsel %vm1610, %v7031, %v6590
      %v7064 = vsel %vm1610, %v7032, %v6592
      %v7065 = vsel %vm1610, %v7033, %v6594
      %v7066 = vsel %vm1610, %v7034, %v6596
      %v7067 = vsel %vm1610, %v7035, %v6598
      %v7068 = vsel %vm1610, %v7036, %v6600
      %v7069 = vsel %vm1610, %v7037, %v6602
      %v7070 = vsel %vm1610, %v7038, %v6604
      %v7071 = vsel %vm1610, %v7039, %v6606
      %v7072 = vsel %vm1610, %v7040, %v6608
      %v7073 = vsel %vm1610, %v7041, %v6610
      %v7074 = vsel %vm1610, %v7042, %v6612
      %v7075 = vsel %vm1610, %v7043, %v6614
      %v7076 = vsel %vm1610, %v7044, %v6616
      %v7077 = vsel %vm1610, %v7045, %v6618
      %v7078 = vsel %vm1610, %v7046, %v6620
      %v7079 = vsel %vm1610, %v7047, %v6622
      %v7080 = vsel %vm1610, %v7048, %v6624
      %v7081 = vsel %vm1610, %v7049, %v6626
      %v7082 = vsel %vm1610, %v7050, %v6628
      %v7083 = vsel %vm1610, %v7051, %v6630
      %v7084 = vsel %vm1610, %v7052, %v6632
      %v7085 = vsel %vm1610, %v7053, %v6634
      %v7086 = vsel %vm1610, %v7054, %v6636
      %v7087 = vsel %vm1610, %v7055, %v6638
      %v7088 = vsel %vm1610, %v7056, %v6640
      %v7089 = vsel %vm1643, %v7057, %v6706
      %v7090 = vsel %vm1643, %v7058, %v6708
      %v7091 = vsel %vm1643, %v7059, %v6710
      %v7092 = vsel %vm1643, %v7060, %v6712
      %v7093 = vsel %vm1643, %v7061, %v6714
      %v7094 = vsel %vm1643, %v7062, %v6716
      %v7095 = vsel %vm1643, %v7063, %v6718
      %v7096 = vsel %vm1643, %v7064, %v6720
      %v7097 = vsel %vm1643, %v7065, %v6722
      %v7098 = vsel %vm1643, %v7066, %v6724
      %v7099 = vsel %vm1643, %v7067, %v6726
      %v7100 = vsel %vm1643, %v7068, %v6728
      %v7101 = vsel %vm1643, %v7069, %v6730
      %v7102 = vsel %vm1643, %v7070, %v6732
      %v7103 = vsel %vm1643, %v7071, %v6734
      %v7104 = vsel %vm1643, %v7072, %v6736
      %v7105 = vsel %vm1643, %v7073, %v6738
      %v7106 = vsel %vm1643, %v7074, %v6740
      %v7107 = vsel %vm1643, %v7075, %v6742
      %v7108 = vsel %vm1643, %v7076, %v6744
      %v7109 = vsel %vm1643, %v7077, %v6746
      %v7110 = vsel %vm1643, %v7078, %v6748
      %v7111 = vsel %vm1643, %v7079, %v6750
      %v7112 = vsel %vm1643, %v7080, %v6752
      %v7113 = vsel %vm1643, %v7081, %v6754
      %v7114 = vsel %vm1643, %v7082, %v6756
      %v7115 = vsel %vm1643, %v7083, %v6758
      %v7116 = vsel %vm1643, %v7084, %v6760
      %v7117 = vsel %vm1643, %v7085, %v6762
      %v7118 = vsel %vm1643, %v7086, %v6764
      %v7119 = vsel %vm1643, %v7087, %v6766
      %v7120 = vsel %vm1643, %v7088, %v6768
      %v7121 = vsel %vm1676, %v7089, %v6834
      %v7122 = vsel %vm1676, %v7090, %v6836
      %v7123 = vsel %vm1676, %v7091, %v6838
      %v7124 = vsel %vm1676, %v7092, %v6840
      %v7125 = vsel %vm1676, %v7093, %v6842
      %v7126 = vsel %vm1676, %v7094, %v6844
      %v7127 = vsel %vm1676, %v7095, %v6846
      %v7128 = vsel %vm1676, %v7096, %v6848
      %v7129 = vsel %vm1676, %v7097, %v6850
      %v7130 = vsel %vm1676, %v7098, %v6852
      %v7131 = vsel %vm1676, %v7099, %v6854
      %v7132 = vsel %vm1676, %v7100, %v6856
      %v7133 = vsel %vm1676, %v7101, %v6858
      %v7134 = vsel %vm1676, %v7102, %v6860
      %v7135 = vsel %vm1676, %v7103, %v6862
      %v7136 = vsel %vm1676, %v7104, %v6864
      %v7137 = vsel %vm1676, %v7105, %v6866
      %v7138 = vsel %vm1676, %v7106, %v6868
      %v7139 = vsel %vm1676, %v7107, %v6870
      %v7140 = vsel %vm1676, %v7108, %v6872
      %v7141 = vsel %vm1676, %v7109, %v6874
      %v7142 = vsel %vm1676, %v7110, %v6876
      %v7143 = vsel %vm1676, %v7111, %v6878
      %v7144 = vsel %vm1676, %v7112, %v6880
      %v7145 = vsel %vm1676, %v7113, %v6882
      %v7146 = vsel %vm1676, %v7114, %v6884
      %v7147 = vsel %vm1676, %v7115, %v6886
      %v7148 = vsel %vm1676, %v7116, %v6888
      %v7149 = vsel %vm1676, %v7117, %v6890
      %v7150 = vsel %vm1676, %v7118, %v6892
      %v7151 = vsel %vm1676, %v7119, %v6894
      %v7152 = vsel %vm1676, %v7120, %v6896
      %v7153 = vpack.c.bf16 %v7122, %v7121
      %v7154 = vpack.c.bf16 %v6002, %v6001
      %v7155 = vpack.c.bf16 %v7124, %v7123
      %v7156 = vpack.c.bf16 %v6004, %v6003
      %v7157 = vpack.c.bf16 %v7126, %v7125
      %v7158 = vpack.c.bf16 %v6006, %v6005
      %v7159 = vpack.c.bf16 %v7128, %v7127
      %v7160 = vpack.c.bf16 %v6008, %v6007
      %v7161 = vpack.c.bf16 %v7130, %v7129
      %v7162 = vpack.c.bf16 %v6010, %v6009
      %v7163 = vpack.c.bf16 %v7132, %v7131
      %v7164 = vpack.c.bf16 %v6012, %v6011
      %v7165 = vpack.c.bf16 %v7134, %v7133
      %v7166 = vpack.c.bf16 %v6014, %v6013
      %v7167 = vpack.c.bf16 %v7136, %v7135
      %v7168 = vpack.c.bf16 %v6016, %v6015
      %v7169 = vpack.c.bf16 %v7138, %v7137
      %v7170 = vpack.c.bf16 %v6018, %v6017
      %v7171 = vpack.c.bf16 %v7140, %v7139
      %v7172 = vpack.c.bf16 %v6020, %v6019
      %v7173 = vpack.c.bf16 %v7142, %v7141
      %v7174 = vpack.c.bf16 %v6022, %v6021
      %v7175 = vpack.c.bf16 %v7144, %v7143
      %v7176 = vpack.c.bf16 %v6024, %v6023
      %v7177 = vpack.c.bf16 %v7146, %v7145
      %v7178 = vpack.c.bf16 %v6026, %v6025
      %v7179 = vpack.c.bf16 %v7148, %v7147
      %v7180 = vpack.c.bf16 %v6028, %v6027
      %v7181 = vpack.c.bf16 %v7150, %v7149
      %v7182 = vpack.c.bf16 %v6030, %v6029
      %v7183 = vpack.c.bf16 %v7152, %v7151
      %v7184 = vpack.c.bf16 %v6032, %v6031
      %s7185 = scalar_lea.vmem %s1, 216
      %v7186 = vld [vmem:[%s7185] sm:$0xf]
      %v7187 = vld [vmem:[%s7185 + $0x4] sm:$0xf]
      %v7188 = vld [vmem:[%s7185 + $0x8] sm:$0xf]
      %v7189 = vld [vmem:[%s7185 + $0xc] sm:$0xf]
      %v7190 = vld [vmem:[%s7185 + $0x10] sm:$0xf]
      %v7191 = vld [vmem:[%s7185 + $0x14] sm:$0xf]
      %v7192 = vld [vmem:[%s7185 + $0x18] sm:$0xf]
      %v7193 = vld [vmem:[%s7185 + $0x1c] sm:$0xf]
      %v7194 = vld [vmem:[%s7185 + $0x20] sm:$0xf]
      %v7195 = vld [vmem:[%s7185 + $0x24] sm:$0xf]
      %v7196 = vld [vmem:[%s7185 + $0x28] sm:$0xf]
      %v7197 = vld [vmem:[%s7185 + $0x2c] sm:$0xf]
      %v7198 = vld [vmem:[%s7185 + $0x30] sm:$0xf]
      %v7199 = vld [vmem:[%s7185 + $0x34] sm:$0xf]
      %v7200 = vld [vmem:[%s7185 + $0x38] sm:$0xf]
      %v7201 = vld [vmem:[%s7185 + $0x3c] sm:$0xf]
      %v7202 = vld [vmem:[%s7185 + $0x40] sm:$0xf]
      %v7203 = vld [vmem:[%s7185 + $0x44] sm:$0xf]
      %s7204 = scalar_lea.vmem %s2, 3
      %v7205 = vld [vmem:[%s7204] sm:$0x1]
      %v7207 = vlaneseq
      %v7208 = vshrl.u32 %v7207, 7
      %v7209 = vsub.s32 0, %v7208
      %v7210 = vrot.slane %v7205, %v7209
      %v7230 = vunpack.c.l.b16 %v7186
      %v7231 = vunpack.c.l.b16 %v7187
      %v7232 = vunpack.c.l.b16 %v7188
      %v7233 = vunpack.c.l.b16 %v7189
      %v7234 = vunpack.c.l.b16 %v7190
      %v7235 = vunpack.c.l.b16 %v7191
      %v7236 = vunpack.c.l.b16 %v7192
      %v7237 = vunpack.c.l.b16 %v7193
      %v7238 = vunpack.c.l.b16 %v7194
      %v7239 = vunpack.c.l.b16 %v7195
      %v7240 = vunpack.c.l.b16 %v7196
      %v7241 = vunpack.c.l.b16 %v7197
      %v7242 = vunpack.c.l.b16 %v7198
      %v7243 = vunpack.c.l.b16 %v7199
      %v7244 = vunpack.c.l.b16 %v7200
      %v7245 = vunpack.c.l.b16 %v7201
      %v7246 = vunpack.c.l.b16 %v7202
      %v7247 = vunpack.c.l.b16 %v7203
      %v7248 = vpack.c.b16 %v7231, %v7230
      %v7249 = vpack.c.b16 %v7233, %v7232
      %v7250 = vpack.c.b16 %v7235, %v7234
      %v7251 = vpack.c.b16 %v7237, %v7236
      %v7252 = vpack.c.b16 %v7239, %v7238
      %v7253 = vpack.c.b16 %v7241, %v7240
      %v7254 = vpack.c.b16 %v7243, %v7242
      %v7255 = vpack.c.b16 %v7245, %v7244
      %v7256 = vpack.c.b16 %v7247, %v7246
      %v7267 = vsel %vm172, %v7154, 0
      %v7270 = vsel %vm172, %v7156, 0
      %v7273 = vsel %vm172, %v7158, 0
      %v7276 = vsel %vm172, %v7160, 0
      %v7279 = vsel %vm172, %v7162, 0
      %v7282 = vsel %vm172, %v7164, 0
      %v7285 = vsel %vm172, %v7166, 0
      %v7288 = vsel %vm172, %v7168, 0
      %v7291 = vsel %vm172, %v7170, 0
      %v7294 = vsel %vm172, %v7172, 0
      %v7297 = vsel %vm172, %v7174, 0
      %v7300 = vsel %vm172, %v7176, 0
      %v7303 = vsel %vm172, %v7178, 0
      %v7306 = vsel %vm172, %v7180, 0
      %v7309 = vsel %vm172, %v7182, 0
      %v7312 = vsel %vm172, %v7184, 0
      %7314 = vmatprep.subr.bf16.mxu0 0
      %7315 = vmatpush1.bf16.msra.mxu0 %v7248
      %7316 = vmatprep.subr.bf16.mxu0 0
      %7317 = vmatpush1.bf16.msra.mxu0 %v7249
      %7318 = vmatprep.subr.bf16.mxu0 0
      %7319 = vmatpush1.bf16.msra.mxu0 %v7250
      %7320 = vmatprep.subr.bf16.mxu0 0
      %7321 = vmatpush1.bf16.msra.mxu0 %v7251
      %7322 = vmatprep.subr.bf16.mxu0 0
      %7323 = vmatpush1.bf16.msra.mxu0 %v7252
      %7324 = vmatprep.subr.bf16.mxu0 0
      %7325 = vmatpush1.bf16.msra.mxu0 %v7253
      %7326 = vmatprep.subr.bf16.mxu0 0
      %7327 = vmatpush1.bf16.msra.mxu0 %v7254
      %7328 = vmatprep.subr.bf16.mxu0 0
      %7329 = vmatpush1.bf16.msra.mxu0 %v7255
      %7330 = vmatprep.subr.bf16.mxu0 0
      %7331 = vmatpush1.bf16.msra.mxu0 %v7256
      %7332 = vmatprep.subr.bf16.mxu0 0
      %7333 = vmatpush1.bf16.msra.mxu0 0
      %7334 = vmatprep.subr.bf16.mxu0 0
      %7335 = vmatpush1.bf16.msra.mxu0 0
      %7336 = vmatprep.subr.bf16.mxu0 0
      %7337 = vmatpush1.bf16.msra.mxu0 0
      %7338 = vmatprep.subr.bf16.mxu0 0
      %7339 = vmatpush1.bf16.msra.mxu0 0
      %7340 = vmatprep.subr.bf16.mxu0 0
      %7341 = vmatpush1.bf16.msra.mxu0 0
      %7342 = vmatprep.subr.bf16.mxu0 0
      %7343 = vmatpush1.bf16.msra.mxu0 0
      %7344 = vmatprep.subr.bf16.mxu0 0
      %7345 = vmatpush1.bf16.msra.mxu0 0
      %7346 = vmatprep.mubr.bf16.mxu0 %v7267
      %7347 = vmatmul.mubr.bf16.gmra.mrb[0].mxu0 %v7153
      %v7348 = vpop.f32.mrb[0].mxu0
      %v7349 = vadd.f32 %v7210, %v7348
      %v7350 = vpop.f32.mrb[0].mxu0
      %v7351 = vpop.f32.mrb[0].mxu0
      %v7352 = vadd.f32 %v7210, %v7351
      %v7353 = vpop.f32.mrb[0].mxu0
      %7354 = vmatprep.mubr.bf16.mxu0 %v7270
      %7355 = vmatmul.mubr.bf16.gmra.mrb[0].mxu0 %v7155
      %v7356 = vpop.f32.mrb[0].mxu0
      %v7357 = vadd.f32 %v7210, %v7356
      %v7358 = vpop.f32.mrb[0].mxu0
      %v7359 = vpop.f32.mrb[0].mxu0
      %v7360 = vadd.f32 %v7210, %v7359
      %v7361 = vpop.f32.mrb[0].mxu0
      %7362 = vmatprep.mubr.bf16.mxu0 %v7273
      %7363 = vmatmul.mubr.bf16.gmra.mrb[0].mxu0 %v7157
      %v7364 = vpop.f32.mrb[0].mxu0
      %v7365 = vadd.f32 %v7210, %v7364
      %v7366 = vpop.f32.mrb[0].mxu0
      %v7367 = vpop.f32.mrb[0].mxu0
      %v7368 = vadd.f32 %v7210, %v7367
      %v7369 = vpop.f32.mrb[0].mxu0
      %7370 = vmatprep.mubr.bf16.mxu0 %v7276
      %7371 = vmatmul.mubr.bf16.gmra.mrb[0].mxu0 %v7159
      %v7372 = vpop.f32.mrb[0].mxu0
      %v7373 = vadd.f32 %v7210, %v7372
      %v7374 = vpop.f32.mrb[0].mxu0
      %v7375 = vpop.f32.mrb[0].mxu0
      %v7376 = vadd.f32 %v7210, %v7375
      %v7377 = vpop.f32.mrb[0].mxu0
      %7378 = vmatprep.mubr.bf16.mxu0 %v7279
      %7379 = vmatmul.mubr.bf16.gmra.mrb[0].mxu0 %v7161
      %v7380 = vpop.f32.mrb[0].mxu0
      %v7381 = vadd.f32 %v7210, %v7380
      %v7382 = vpop.f32.mrb[0].mxu0
      %v7383 = vpop.f32.mrb[0].mxu0
      %v7384 = vadd.f32 %v7210, %v7383
      %v7385 = vpop.f32.mrb[0].mxu0
      %7386 = vmatprep.mubr.bf16.mxu0 %v7282
      %7387 = vmatmul.mubr.bf16.gmra.mrb[0].mxu0 %v7163
      %v7388 = vpop.f32.mrb[0].mxu0
      %v7389 = vadd.f32 %v7210, %v7388
      %v7390 = vpop.f32.mrb[0].mxu0
      %v7391 = vpop.f32.mrb[0].mxu0
      %v7392 = vadd.f32 %v7210, %v7391
      %v7393 = vpop.f32.mrb[0].mxu0
      %7394 = vmatprep.mubr.bf16.mxu0 %v7285
      %7395 = vmatmul.mubr.bf16.gmra.mrb[0].mxu0 %v7165
      %v7396 = vpop.f32.mrb[0].mxu0
      %v7397 = vadd.f32 %v7210, %v7396
      %v7398 = vpop.f32.mrb[0].mxu0
      %v7399 = vpop.f32.mrb[0].mxu0
      %v7400 = vadd.f32 %v7210, %v7399
      %v7401 = vpop.f32.mrb[0].mxu0
      %7402 = vmatprep.mubr.bf16.mxu0 %v7288
      %7403 = vmatmul.mubr.bf16.gmra.mrb[0].mxu0 %v7167
      %v7404 = vpop.f32.mrb[0].mxu0
      %v7405 = vadd.f32 %v7210, %v7404
      %v7406 = vpop.f32.mrb[0].mxu0
      %v7407 = vpop.f32.mrb[0].mxu0
      %v7408 = vadd.f32 %v7210, %v7407
      %v7409 = vpop.f32.mrb[0].mxu0
      %7410 = vmatprep.mubr.bf16.mxu0 %v7291
      %7411 = vmatmul.mubr.bf16.gmra.mrb[0].mxu0 %v7169
      %v7412 = vpop.f32.mrb[0].mxu0
      %v7413 = vadd.f32 %v7210, %v7412
      %v7414 = vpop.f32.mrb[0].mxu0
      %v7415 = vpop.f32.mrb[0].mxu0
      %v7416 = vadd.f32 %v7210, %v7415
      %v7417 = vpop.f32.mrb[0].mxu0
      %7418 = vmatprep.mubr.bf16.mxu0 %v7294
      %7419 = vmatmul.mubr.bf16.gmra.mrb[0].mxu0 %v7171
      %v7420 = vpop.f32.mrb[0].mxu0
      %v7421 = vadd.f32 %v7210, %v7420
      %v7422 = vpop.f32.mrb[0].mxu0
      %v7423 = vpop.f32.mrb[0].mxu0
      %v7424 = vadd.f32 %v7210, %v7423
      %v7425 = vpop.f32.mrb[0].mxu0
      %7426 = vmatprep.mubr.bf16.mxu0 %v7297
      %7427 = vmatmul.mubr.bf16.gmra.mrb[0].mxu0 %v7173
      %v7428 = vpop.f32.mrb[0].mxu0
      %v7429 = vadd.f32 %v7210, %v7428
      %v7430 = vpop.f32.mrb[0].mxu0
      %v7431 = vpop.f32.mrb[0].mxu0
      %v7432 = vadd.f32 %v7210, %v7431
      %v7433 = vpop.f32.mrb[0].mxu0
      %7434 = vmatprep.mubr.bf16.mxu0 %v7300
      %7435 = vmatmul.mubr.bf16.gmra.mrb[0].mxu0 %v7175
      %v7436 = vpop.f32.mrb[0].mxu0
      %v7437 = vadd.f32 %v7210, %v7436
      %v7438 = vpop.f32.mrb[0].mxu0
      %v7439 = vpop.f32.mrb[0].mxu0
      %v7440 = vadd.f32 %v7210, %v7439
      %v7441 = vpop.f32.mrb[0].mxu0
      %7442 = vmatprep.mubr.bf16.mxu0 %v7303
      %7443 = vmatmul.mubr.bf16.gmra.mrb[0].mxu0 %v7177
      %v7444 = vpop.f32.mrb[0].mxu0
      %v7445 = vadd.f32 %v7210, %v7444
      %v7446 = vpop.f32.mrb[0].mxu0
      %v7447 = vpop.f32.mrb[0].mxu0
      %v7448 = vadd.f32 %v7210, %v7447
      %v7449 = vpop.f32.mrb[0].mxu0
      %7450 = vmatprep.mubr.bf16.mxu0 %v7306
      %7451 = vmatmul.mubr.bf16.gmra.mrb[0].mxu0 %v7179
      %v7452 = vpop.f32.mrb[0].mxu0
      %v7453 = vadd.f32 %v7210, %v7452
      %v7454 = vpop.f32.mrb[0].mxu0
      %v7455 = vpop.f32.mrb[0].mxu0
      %v7456 = vadd.f32 %v7210, %v7455
      %v7457 = vpop.f32.mrb[0].mxu0
      %7458 = vmatprep.mubr.bf16.mxu0 %v7309
      %7459 = vmatmul.mubr.bf16.gmra.mrb[0].mxu0 %v7181
      %v7460 = vpop.f32.mrb[0].mxu0
      %v7461 = vadd.f32 %v7210, %v7460
      %v7462 = vpop.f32.mrb[0].mxu0
      %v7463 = vpop.f32.mrb[0].mxu0
      %v7464 = vadd.f32 %v7210, %v7463
      %v7465 = vpop.f32.mrb[0].mxu0
      %7466 = vmatprep.mubr.bf16.mxu0 %v7312
      %7467 = vmatmul.mubr.bf16.gmra.mrb[0].mxu0 %v7183
      %v7468 = vpop.f32.mrb[0].mxu0
      %v7469 = vadd.f32 %v7210, %v7468
      %v7470 = vpop.f32.mrb[0].mxu0
      %v7471 = vpop.f32.mrb[0].mxu0
      %v7472 = vadd.f32 %v7210, %v7471
      %v7473 = vpop.f32.mrb[0].mxu0
      %7474 = vdwg.mxu0
      %v7475 = vmax.f32 %v7349, 0.0
      %v7476 = vmax.f32 %v7352, 0.0
      %v7477 = vmax.f32 %v7357, 0.0
      %v7478 = vmax.f32 %v7360, 0.0
      %v7479 = vmax.f32 %v7365, 0.0
      %v7480 = vmax.f32 %v7368, 0.0
      %v7481 = vmax.f32 %v7373, 0.0
      %v7482 = vmax.f32 %v7376, 0.0
      %v7483 = vmax.f32 %v7381, 0.0
      %v7484 = vmax.f32 %v7384, 0.0
      %v7485 = vmax.f32 %v7389, 0.0
      %v7486 = vmax.f32 %v7392, 0.0
      %v7487 = vmax.f32 %v7397, 0.0
      %v7488 = vmax.f32 %v7400, 0.0
      %v7489 = vmax.f32 %v7405, 0.0
      %v7490 = vmax.f32 %v7408, 0.0
      %v7491 = vmax.f32 %v7413, 0.0
      %v7492 = vmax.f32 %v7416, 0.0
      %v7493 = vmax.f32 %v7421, 0.0
      %v7494 = vmax.f32 %v7424, 0.0
      %v7495 = vmax.f32 %v7429, 0.0
      %v7496 = vmax.f32 %v7432, 0.0
      %v7497 = vmax.f32 %v7437, 0.0
      %v7498 = vmax.f32 %v7440, 0.0
      %v7499 = vmax.f32 %v7445, 0.0
      %v7500 = vmax.f32 %v7448, 0.0
      %v7501 = vmax.f32 %v7453, 0.0
      %v7502 = vmax.f32 %v7456, 0.0
      %v7503 = vmax.f32 %v7461, 0.0
      %v7504 = vmax.f32 %v7464, 0.0
      %v7505 = vmax.f32 %v7469, 0.0
      %v7506 = vmax.f32 %v7472, 0.0
      %7507 = vst.msk [vmem:[%s260 + $0x1] sm:$0xff] %vm172, %v7475
      %7508 = vst.msk [vmem:[%s260 + $0x9] sm:$0xff] %vm172, %v7476
      %7509 = vst.msk [vmem:[%s260 + $0x19] sm:$0xff] %vm172, %v7477
      %7510 = vst.msk [vmem:[%s260 + $0x21] sm:$0xff] %vm172, %v7478
      %7511 = vst.msk [vmem:[%s260 + $0x31] sm:$0xff] %vm172, %v7479
      %7512 = vst.msk [vmem:[%s260 + $0x39] sm:$0xff] %vm172, %v7480
      %7513 = vst.msk [vmem:[%s260 + $0x49] sm:$0xff] %vm172, %v7481
      %7514 = vst.msk [vmem:[%s260 + $0x51] sm:$0xff] %vm172, %v7482
      %7515 = vst.msk [vmem:[%s260 + $0x61] sm:$0xff] %vm172, %v7483
      %7516 = vst.msk [vmem:[%s260 + $0x69] sm:$0xff] %vm172, %v7484
      %7517 = vst.msk [vmem:[%s260 + $0x79] sm:$0xff] %vm172, %v7485
      %7518 = vst.msk [vmem:[%s260 + $0x81] sm:$0xff] %vm172, %v7486
      %7519 = vst.msk [vmem:[%s260 + $0x91] sm:$0xff] %vm172, %v7487
      %7520 = vst.msk [vmem:[%s260 + $0x99] sm:$0xff] %vm172, %v7488
      %7521 = vst.msk [vmem:[%s260 + $0xa9] sm:$0xff] %vm172, %v7489
      %7522 = vst.msk [vmem:[%s260 + $0xb1] sm:$0xff] %vm172, %v7490
      %7523 = vst.msk [vmem:[%s260 + $0xc1] sm:$0xff] %vm172, %v7491
      %7524 = vst.msk [vmem:[%s260 + $0xc9] sm:$0xff] %vm172, %v7492
      %7525 = vst.msk [vmem:[%s260 + $0xd9] sm:$0xff] %vm172, %v7493
      %7526 = vst.msk [vmem:[%s260 + $0xe1] sm:$0xff] %vm172, %v7494
      %7527 = vst.msk [vmem:[%s260 + $0xf1] sm:$0xff] %vm172, %v7495
      %7528 = vst.msk [vmem:[%s260 + $0xf9] sm:$0xff] %vm172, %v7496
      %7529 = vst.msk [vmem:[%s260 + $0x109] sm:$0xff] %vm172, %v7497
      %7530 = vst.msk [vmem:[%s260 + $0x111] sm:$0xff] %vm172, %v7498
      %7531 = vst.msk [vmem:[%s260 + $0x121] sm:$0xff] %vm172, %v7499
      %7532 = vst.msk [vmem:[%s260 + $0x129] sm:$0xff] %vm172, %v7500
      %7533 = vst.msk [vmem:[%s260 + $0x139] sm:$0xff] %vm172, %v7501
      %7534 = vst.msk [vmem:[%s260 + $0x141] sm:$0xff] %vm172, %v7502
      %7535 = vst.msk [vmem:[%s260 + $0x151] sm:$0xff] %vm172, %v7503
      %7536 = vst.msk [vmem:[%s260 + $0x159] sm:$0xff] %vm172, %v7504
      %7537 = vst.msk [vmem:[%s260 + $0x169] sm:$0xff] %vm172, %v7505
      %7538 = vst.msk [vmem:[%s260 + $0x171] sm:$0xff] %vm172, %v7506
      %v7539 = vld [vmem:[#allocation2] sm:$0xff]
      %v7540 = vld [vmem:[#allocation2 + $0x8] sm:$0xff]
      %v7541 = vld [vmem:[#allocation2 + $0x18] sm:$0xff]
      %v7542 = vld [vmem:[#allocation2 + $0x20] sm:$0xff]
      %v7543 = vld [vmem:[#allocation2 + $0x30] sm:$0xff]
      %v7544 = vld [vmem:[#allocation2 + $0x38] sm:$0xff]
      %v7545 = vld [vmem:[#allocation2 + $0x48] sm:$0xff]
      %v7546 = vld [vmem:[#allocation2 + $0x50] sm:$0xff]
      %v7547 = vld [vmem:[#allocation2 + $0x60] sm:$0xff]
      %v7548 = vld [vmem:[#allocation2 + $0x68] sm:$0xff]
      %v7549 = vld [vmem:[#allocation2 + $0x78] sm:$0xff]
      %v7550 = vld [vmem:[#allocation2 + $0x80] sm:$0xff]
      %v7551 = vld [vmem:[#allocation2 + $0x90] sm:$0xff]
      %v7552 = vld [vmem:[#allocation2 + $0x98] sm:$0xff]
      %v7553 = vld [vmem:[#allocation2 + $0xa8] sm:$0xff]
      %v7554 = vld [vmem:[#allocation2 + $0xb0] sm:$0xff]
      %v7555 = vld [vmem:[#allocation2 + $0xc0] sm:$0xff]
      %v7556 = vld [vmem:[#allocation2 + $0xc8] sm:$0xff]
      %v7557 = vld [vmem:[#allocation2 + $0xd8] sm:$0xff]
      %v7558 = vld [vmem:[#allocation2 + $0xe0] sm:$0xff]
      %v7559 = vld [vmem:[#allocation2 + $0xf0] sm:$0xff]
      %v7560 = vld [vmem:[#allocation2 + $0xf8] sm:$0xff]
      %v7561 = vld [vmem:[#allocation2 + $0x108] sm:$0xff]
      %v7562 = vld [vmem:[#allocation2 + $0x110] sm:$0xff]
      %v7563 = vld [vmem:[#allocation2 + $0x120] sm:$0xff]
      %v7564 = vld [vmem:[#allocation2 + $0x128] sm:$0xff]
      %v7565 = vld [vmem:[#allocation2 + $0x138] sm:$0xff]
      %v7566 = vld [vmem:[#allocation2 + $0x140] sm:$0xff]
      %v7567 = vld [vmem:[#allocation2 + $0x150] sm:$0xff]
      %v7568 = vld [vmem:[#allocation2 + $0x158] sm:$0xff]
      %v7569 = vld [vmem:[#allocation2 + $0x168] sm:$0xff]
      %v7570 = vld [vmem:[#allocation2 + $0x170] sm:$0xff]
      %v7571 = vld [vmem:[#allocation2 + $0x1] sm:$0xff]
      %v7572 = vld [vmem:[#allocation2 + $0x9] sm:$0xff]
      %v7573 = vld [vmem:[#allocation2 + $0x19] sm:$0xff]
      %v7574 = vld [vmem:[#allocation2 + $0x21] sm:$0xff]
      %v7575 = vld [vmem:[#allocation2 + $0x31] sm:$0xff]
      %v7576 = vld [vmem:[#allocation2 + $0x39] sm:$0xff]
      %v7577 = vld [vmem:[#allocation2 + $0x49] sm:$0xff]
      %v7578 = vld [vmem:[#allocation2 + $0x51] sm:$0xff]
      %v7579 = vld [vmem:[#allocation2 + $0x61] sm:$0xff]
      %v7580 = vld [vmem:[#allocation2 + $0x69] sm:$0xff]
      %v7581 = vld [vmem:[#allocation2 + $0x79] sm:$0xff]
      %v7582 = vld [vmem:[#allocation2 + $0x81] sm:$0xff]
      %v7583 = vld [vmem:[#allocation2 + $0x91] sm:$0xff]
      %v7584 = vld [vmem:[#allocation2 + $0x99] sm:$0xff]
      %v7585 = vld [vmem:[#allocation2 + $0xa9] sm:$0xff]
      %v7586 = vld [vmem:[#allocation2 + $0xb1] sm:$0xff]
      %v7587 = vld [vmem:[#allocation2 + $0xc1] sm:$0xff]
      %v7588 = vld [vmem:[#allocation2 + $0xc9] sm:$0xff]
      %v7589 = vld [vmem:[#allocation2 + $0xd9] sm:$0xff]
      %v7590 = vld [vmem:[#allocation2 + $0xe1] sm:$0xff]
      %v7591 = vld [vmem:[#allocation2 + $0xf1] sm:$0xff]
      %v7592 = vld [vmem:[#allocation2 + $0xf9] sm:$0xff]
      %v7593 = vld [vmem:[#allocation2 + $0x109] sm:$0xff]
      %v7594 = vld [vmem:[#allocation2 + $0x111] sm:$0xff]
      %v7595 = vld [vmem:[#allocation2 + $0x121] sm:$0xff]
      %v7596 = vld [vmem:[#allocation2 + $0x129] sm:$0xff]
      %v7597 = vld [vmem:[#allocation2 + $0x139] sm:$0xff]
      %v7598 = vld [vmem:[#allocation2 + $0x141] sm:$0xff]
      %v7599 = vld [vmem:[#allocation2 + $0x151] sm:$0xff]
      %v7600 = vld [vmem:[#allocation2 + $0x159] sm:$0xff]
      %v7601 = vld [vmem:[#allocation2 + $0x169] sm:$0xff]
      %v7602 = vld [vmem:[#allocation2 + $0x171] sm:$0xff]
      %v7603 = vld [vmem:[#allocation2 + $0x2] sm:$0xff]
      %v7604 = vld [vmem:[#allocation2 + $0xa] sm:$0xff]
      %v7605 = vld [vmem:[#allocation2 + $0x1a] sm:$0xff]
      %v7606 = vld [vmem:[#allocation2 + $0x22] sm:$0xff]
      %v7607 = vld [vmem:[#allocation2 + $0x32] sm:$0xff]
      %v7608 = vld [vmem:[#allocation2 + $0x3a] sm:$0xff]
      %v7609 = vld [vmem:[#allocation2 + $0x4a] sm:$0xff]
      %v7610 = vld [vmem:[#allocation2 + $0x52] sm:$0xff]
      %v7611 = vld [vmem:[#allocation2 + $0x62] sm:$0xff]
      %v7612 = vld [vmem:[#allocation2 + $0x6a] sm:$0xff]
      %v7613 = vld [vmem:[#allocation2 + $0x7a] sm:$0xff]
      %v7614 = vld [vmem:[#allocation2 + $0x82] sm:$0xff]
      %v7615 = vld [vmem:[#allocation2 + $0x92] sm:$0xff]
      %v7616 = vld [vmem:[#allocation2 + $0x9a] sm:$0xff]
      %v7617 = vld [vmem:[#allocation2 + $0xaa] sm:$0xff]
      %v7618 = vld [vmem:[#allocation2 + $0xb2] sm:$0xff]
      %v7619 = vld [vmem:[#allocation2 + $0xc2] sm:$0xff]
      %v7620 = vld [vmem:[#allocation2 + $0xca] sm:$0xff]
      %v7621 = vld [vmem:[#allocation2 + $0xda] sm:$0xff]
      %v7622 = vld [vmem:[#allocation2 + $0xe2] sm:$0xff]
      %v7623 = vld [vmem:[#allocation2 + $0xf2] sm:$0xff]
      %v7624 = vld [vmem:[#allocation2 + $0xfa] sm:$0xff]
      %v7625 = vld [vmem:[#allocation2 + $0x10a] sm:$0xff]
      %v7626 = vld [vmem:[#allocation2 + $0x112] sm:$0xff]
      %v7627 = vld [vmem:[#allocation2 + $0x122] sm:$0xff]
      %v7628 = vld [vmem:[#allocation2 + $0x12a] sm:$0xff]
      %v7629 = vld [vmem:[#allocation2 + $0x13a] sm:$0xff]
      %v7630 = vld [vmem:[#allocation2 + $0x142] sm:$0xff]
      %v7631 = vld [vmem:[#allocation2 + $0x152] sm:$0xff]
      %v7632 = vld [vmem:[#allocation2 + $0x15a] sm:$0xff]
      %v7633 = vld [vmem:[#allocation2 + $0x16a] sm:$0xff]
      %v7634 = vld [vmem:[#allocation2 + $0x172] sm:$0xff]
      %v7635 = vld [vmem:[%s260] sm:$0xff]
      %v7636 = vld [vmem:[%s260 + $0x8] sm:$0xff]
      %v7637 = vld [vmem:[%s260 + $0x18] sm:$0xff]
      %v7638 = vld [vmem:[%s260 + $0x20] sm:$0xff]
      %v7639 = vld [vmem:[%s260 + $0x30] sm:$0xff]
      %v7640 = vld [vmem:[%s260 + $0x38] sm:$0xff]
      %v7641 = vld [vmem:[%s260 + $0x48] sm:$0xff]
      %v7642 = vld [vmem:[%s260 + $0x50] sm:$0xff]
      %v7643 = vld [vmem:[%s260 + $0x60] sm:$0xff]
      %v7644 = vld [vmem:[%s260 + $0x68] sm:$0xff]
      %v7645 = vld [vmem:[%s260 + $0x78] sm:$0xff]
      %v7646 = vld [vmem:[%s260 + $0x80] sm:$0xff]
      %v7647 = vld [vmem:[%s260 + $0x90] sm:$0xff]
      %v7648 = vld [vmem:[%s260 + $0x98] sm:$0xff]
      %v7649 = vld [vmem:[%s260 + $0xa8] sm:$0xff]
      %v7650 = vld [vmem:[%s260 + $0xb0] sm:$0xff]
      %v7651 = vld [vmem:[%s260 + $0xc0] sm:$0xff]
      %v7652 = vld [vmem:[%s260 + $0xc8] sm:$0xff]
      %v7653 = vld [vmem:[%s260 + $0xd8] sm:$0xff]
      %v7654 = vld [vmem:[%s260 + $0xe0] sm:$0xff]
      %v7655 = vld [vmem:[%s260 + $0xf0] sm:$0xff]
      %v7656 = vld [vmem:[%s260 + $0xf8] sm:$0xff]
      %v7657 = vld [vmem:[%s260 + $0x108] sm:$0xff]
      %v7658 = vld [vmem:[%s260 + $0x110] sm:$0xff]
      %v7659 = vld [vmem:[%s260 + $0x120] sm:$0xff]
      %v7660 = vld [vmem:[%s260 + $0x128] sm:$0xff]
      %v7661 = vld [vmem:[%s260 + $0x138] sm:$0xff]
      %v7662 = vld [vmem:[%s260 + $0x140] sm:$0xff]
      %v7663 = vld [vmem:[%s260 + $0x150] sm:$0xff]
      %v7664 = vld [vmem:[%s260 + $0x158] sm:$0xff]
      %v7665 = vld [vmem:[%s260 + $0x168] sm:$0xff]
      %v7666 = vld [vmem:[%s260 + $0x170] sm:$0xff]
      %v7667 = vld [vmem:[%s260 + $0x1] sm:$0xff]
      %v7668 = vld [vmem:[%s260 + $0x9] sm:$0xff]
      %v7669 = vld [vmem:[%s260 + $0x19] sm:$0xff]
      %v7670 = vld [vmem:[%s260 + $0x21] sm:$0xff]
      %v7671 = vld [vmem:[%s260 + $0x31] sm:$0xff]
      %v7672 = vld [vmem:[%s260 + $0x39] sm:$0xff]
      %v7673 = vld [vmem:[%s260 + $0x49] sm:$0xff]
      %v7674 = vld [vmem:[%s260 + $0x51] sm:$0xff]
      %v7675 = vld [vmem:[%s260 + $0x61] sm:$0xff]
      %v7676 = vld [vmem:[%s260 + $0x69] sm:$0xff]
      %v7677 = vld [vmem:[%s260 + $0x79] sm:$0xff]
      %v7678 = vld [vmem:[%s260 + $0x81] sm:$0xff]
      %v7679 = vld [vmem:[%s260 + $0x91] sm:$0xff]
      %v7680 = vld [vmem:[%s260 + $0x99] sm:$0xff]
      %v7681 = vld [vmem:[%s260 + $0xa9] sm:$0xff]
      %v7682 = vld [vmem:[%s260 + $0xb1] sm:$0xff]
      %v7683 = vld [vmem:[%s260 + $0xc1] sm:$0xff]
      %v7684 = vld [vmem:[%s260 + $0xc9] sm:$0xff]
      %v7685 = vld [vmem:[%s260 + $0xd9] sm:$0xff]
      %v7686 = vld [vmem:[%s260 + $0xe1] sm:$0xff]
      %v7687 = vld [vmem:[%s260 + $0xf1] sm:$0xff]
      %v7688 = vld [vmem:[%s260 + $0xf9] sm:$0xff]
      %v7689 = vld [vmem:[%s260 + $0x109] sm:$0xff]
      %v7690 = vld [vmem:[%s260 + $0x111] sm:$0xff]
      %v7691 = vld [vmem:[%s260 + $0x121] sm:$0xff]
      %v7692 = vld [vmem:[%s260 + $0x129] sm:$0xff]
      %v7693 = vld [vmem:[%s260 + $0x139] sm:$0xff]
      %v7694 = vld [vmem:[%s260 + $0x141] sm:$0xff]
      %v7695 = vld [vmem:[%s260 + $0x151] sm:$0xff]
      %v7696 = vld [vmem:[%s260 + $0x159] sm:$0xff]
      %v7697 = vld [vmem:[%s260 + $0x169] sm:$0xff]
      %v7698 = vld [vmem:[%s260 + $0x171] sm:$0xff]
      %v7699 = vld [vmem:[%s260 + $0x2] sm:$0xff]
      %v7700 = vld [vmem:[%s260 + $0xa] sm:$0xff]
      %v7701 = vld [vmem:[%s260 + $0x1a] sm:$0xff]
      %v7702 = vld [vmem:[%s260 + $0x22] sm:$0xff]
      %v7703 = vld [vmem:[%s260 + $0x32] sm:$0xff]
      %v7704 = vld [vmem:[%s260 + $0x3a] sm:$0xff]
      %v7705 = vld [vmem:[%s260 + $0x4a] sm:$0xff]
      %v7706 = vld [vmem:[%s260 + $0x52] sm:$0xff]
      %v7707 = vld [vmem:[%s260 + $0x62] sm:$0xff]
      %v7708 = vld [vmem:[%s260 + $0x6a] sm:$0xff]
      %v7709 = vld [vmem:[%s260 + $0x7a] sm:$0xff]
      %v7710 = vld [vmem:[%s260 + $0x82] sm:$0xff]
      %v7711 = vld [vmem:[%s260 + $0x92] sm:$0xff]
      %v7712 = vld [vmem:[%s260 + $0x9a] sm:$0xff]
      %v7713 = vld [vmem:[%s260 + $0xaa] sm:$0xff]
      %v7714 = vld [vmem:[%s260 + $0xb2] sm:$0xff]
      %v7715 = vld [vmem:[%s260 + $0xc2] sm:$0xff]
      %v7716 = vld [vmem:[%s260 + $0xca] sm:$0xff]
      %v7717 = vld [vmem:[%s260 + $0xda] sm:$0xff]
      %v7718 = vld [vmem:[%s260 + $0xe2] sm:$0xff]
      %v7719 = vld [vmem:[%s260 + $0xf2] sm:$0xff]
      %v7720 = vld [vmem:[%s260 + $0xfa] sm:$0xff]
      %v7721 = vld [vmem:[%s260 + $0x10a] sm:$0xff]
      %v7722 = vld [vmem:[%s260 + $0x112] sm:$0xff]
      %v7723 = vld [vmem:[%s260 + $0x122] sm:$0xff]
      %v7724 = vld [vmem:[%s260 + $0x12a] sm:$0xff]
      %v7725 = vld [vmem:[%s260 + $0x13a] sm:$0xff]
      %v7726 = vld [vmem:[%s260 + $0x142] sm:$0xff]
      %v7727 = vld [vmem:[%s260 + $0x152] sm:$0xff]
      %v7728 = vld [vmem:[%s260 + $0x15a] sm:$0xff]
      %v7729 = vld [vmem:[%s260 + $0x16a] sm:$0xff]
      %v7730 = vld [vmem:[%s260 + $0x172] sm:$0xff]
      %v7731 = vld [vmem:[%s486] sm:$0xff]
      %v7732 = vld [vmem:[%s486 + $0x8] sm:$0xff]
      %v7733 = vld [vmem:[%s486 + $0x18] sm:$0xff]
      %v7734 = vld [vmem:[%s486 + $0x20] sm:$0xff]
      %v7735 = vld [vmem:[%s486 + $0x30] sm:$0xff]
      %v7736 = vld [vmem:[%s486 + $0x38] sm:$0xff]
      %v7737 = vld [vmem:[%s486 + $0x48] sm:$0xff]
      %v7738 = vld [vmem:[%s486 + $0x50] sm:$0xff]
      %v7739 = vld [vmem:[%s486 + $0x60] sm:$0xff]
      %v7740 = vld [vmem:[%s486 + $0x68] sm:$0xff]
      %v7741 = vld [vmem:[%s486 + $0x78] sm:$0xff]
      %v7742 = vld [vmem:[%s486 + $0x80] sm:$0xff]
      %v7743 = vld [vmem:[%s486 + $0x90] sm:$0xff]
      %v7744 = vld [vmem:[%s486 + $0x98] sm:$0xff]
      %v7745 = vld [vmem:[%s486 + $0xa8] sm:$0xff]
      %v7746 = vld [vmem:[%s486 + $0xb0] sm:$0xff]
      %v7747 = vld [vmem:[%s486 + $0xc0] sm:$0xff]
      %v7748 = vld [vmem:[%s486 + $0xc8] sm:$0xff]
      %v7749 = vld [vmem:[%s486 + $0xd8] sm:$0xff]
      %v7750 = vld [vmem:[%s486 + $0xe0] sm:$0xff]
      %v7751 = vld [vmem:[%s486 + $0xf0] sm:$0xff]
      %v7752 = vld [vmem:[%s486 + $0xf8] sm:$0xff]
      %v7753 = vld [vmem:[%s486 + $0x108] sm:$0xff]
      %v7754 = vld [vmem:[%s486 + $0x110] sm:$0xff]
      %v7755 = vld [vmem:[%s486 + $0x120] sm:$0xff]
      %v7756 = vld [vmem:[%s486 + $0x128] sm:$0xff]
      %v7757 = vld [vmem:[%s486 + $0x138] sm:$0xff]
      %v7758 = vld [vmem:[%s486 + $0x140] sm:$0xff]
      %v7759 = vld [vmem:[%s486 + $0x150] sm:$0xff]
      %v7760 = vld [vmem:[%s486 + $0x158] sm:$0xff]
      %v7761 = vld [vmem:[%s486 + $0x168] sm:$0xff]
      %v7762 = vld [vmem:[%s486 + $0x170] sm:$0xff]
      %v7763 = vld [vmem:[%s486 + $0x1] sm:$0xff]
      %v7764 = vld [vmem:[%s486 + $0x9] sm:$0xff]
      %v7765 = vld [vmem:[%s486 + $0x19] sm:$0xff]
      %v7766 = vld [vmem:[%s486 + $0x21] sm:$0xff]
      %v7767 = vld [vmem:[%s486 + $0x31] sm:$0xff]
      %v7768 = vld [vmem:[%s486 + $0x39] sm:$0xff]
      %v7769 = vld [vmem:[%s486 + $0x49] sm:$0xff]
      %v7770 = vld [vmem:[%s486 + $0x51] sm:$0xff]
      %v7771 = vld [vmem:[%s486 + $0x61] sm:$0xff]
      %v7772 = vld [vmem:[%s486 + $0x69] sm:$0xff]
      %v7773 = vld [vmem:[%s486 + $0x79] sm:$0xff]
      %v7774 = vld [vmem:[%s486 + $0x81] sm:$0xff]
      %v7775 = vld [vmem:[%s486 + $0x91] sm:$0xff]
      %v7776 = vld [vmem:[%s486 + $0x99] sm:$0xff]
      %v7777 = vld [vmem:[%s486 + $0xa9] sm:$0xff]
      %v7778 = vld [vmem:[%s486 + $0xb1] sm:$0xff]
      %v7779 = vld [vmem:[%s486 + $0xc1] sm:$0xff]
      %v7780 = vld [vmem:[%s486 + $0xc9] sm:$0xff]
      %v7781 = vld [vmem:[%s486 + $0xd9] sm:$0xff]
      %v7782 = vld [vmem:[%s486 + $0xe1] sm:$0xff]
      %v7783 = vld [vmem:[%s486 + $0xf1] sm:$0xff]
      %v7784 = vld [vmem:[%s486 + $0xf9] sm:$0xff]
      %v7785 = vld [vmem:[%s486 + $0x109] sm:$0xff]
      %v7786 = vld [vmem:[%s486 + $0x111] sm:$0xff]
      %v7787 = vld [vmem:[%s486 + $0x121] sm:$0xff]
      %v7788 = vld [vmem:[%s486 + $0x129] sm:$0xff]
      %v7789 = vld [vmem:[%s486 + $0x139] sm:$0xff]
      %v7790 = vld [vmem:[%s486 + $0x141] sm:$0xff]
      %v7791 = vld [vmem:[%s486 + $0x151] sm:$0xff]
      %v7792 = vld [vmem:[%s486 + $0x159] sm:$0xff]
      %v7793 = vld [vmem:[%s486 + $0x169] sm:$0xff]
      %v7794 = vld [vmem:[%s486 + $0x171] sm:$0xff]
      %v7795 = vld [vmem:[%s486 + $0x2] sm:$0xff]
      %v7796 = vld [vmem:[%s486 + $0xa] sm:$0xff]
      %v7797 = vld [vmem:[%s486 + $0x1a] sm:$0xff]
      %v7798 = vld [vmem:[%s486 + $0x22] sm:$0xff]
      %v7799 = vld [vmem:[%s486 + $0x32] sm:$0xff]
      %v7800 = vld [vmem:[%s486 + $0x3a] sm:$0xff]
      %v7801 = vld [vmem:[%s486 + $0x4a] sm:$0xff]
      %v7802 = vld [vmem:[%s486 + $0x52] sm:$0xff]
      %v7803 = vld [vmem:[%s486 + $0x62] sm:$0xff]
      %v7804 = vld [vmem:[%s486 + $0x6a] sm:$0xff]
      %v7805 = vld [vmem:[%s486 + $0x7a] sm:$0xff]
      %v7806 = vld [vmem:[%s486 + $0x82] sm:$0xff]
      %v7807 = vld [vmem:[%s486 + $0x92] sm:$0xff]
      %v7808 = vld [vmem:[%s486 + $0x9a] sm:$0xff]
      %v7809 = vld [vmem:[%s486 + $0xaa] sm:$0xff]
      %v7810 = vld [vmem:[%s486 + $0xb2] sm:$0xff]
      %v7811 = vld [vmem:[%s486 + $0xc2] sm:$0xff]
      %v7812 = vld [vmem:[%s486 + $0xca] sm:$0xff]
      %v7813 = vld [vmem:[%s486 + $0xda] sm:$0xff]
      %v7814 = vld [vmem:[%s486 + $0xe2] sm:$0xff]
      %v7815 = vld [vmem:[%s486 + $0xf2] sm:$0xff]
      %v7816 = vld [vmem:[%s486 + $0xfa] sm:$0xff]
      %v7817 = vld [vmem:[%s486 + $0x10a] sm:$0xff]
      %v7818 = vld [vmem:[%s486 + $0x112] sm:$0xff]
      %v7819 = vld [vmem:[%s486 + $0x122] sm:$0xff]
      %v7820 = vld [vmem:[%s486 + $0x12a] sm:$0xff]
      %v7821 = vld [vmem:[%s486 + $0x13a] sm:$0xff]
      %v7822 = vld [vmem:[%s486 + $0x142] sm:$0xff]
      %v7823 = vld [vmem:[%s486 + $0x152] sm:$0xff]
      %v7824 = vld [vmem:[%s486 + $0x15a] sm:$0xff]
      %v7825 = vld [vmem:[%s486 + $0x16a] sm:$0xff]
      %v7826 = vld [vmem:[%s486 + $0x172] sm:$0xff]
      %7859 = vrot.lane.b32.xlu0 %v7571, 16
      %v7860 = vpop.permute.xlu0 %7859
      %7861 = vrot.lane.b32.xlu0 %v7572, 16
      %v7862 = vpop.permute.xlu0 %7861
      %7863 = vrot.lane.b32.xlu0 %v7573, 16
      %v7864 = vpop.permute.xlu0 %7863
      %7865 = vrot.lane.b32.xlu0 %v7574, 16
      %v7866 = vpop.permute.xlu0 %7865
      %7867 = vrot.lane.b32.xlu0 %v7575, 16
      %v7868 = vpop.permute.xlu0 %7867
      %7869 = vrot.lane.b32.xlu0 %v7576, 16
      %v7870 = vpop.permute.xlu0 %7869
      %7871 = vrot.lane.b32.xlu0 %v7577, 16
      %v7872 = vpop.permute.xlu0 %7871
      %7873 = vrot.lane.b32.xlu0 %v7578, 16
      %v7874 = vpop.permute.xlu0 %7873
      %7875 = vrot.lane.b32.xlu0 %v7579, 16
      %v7876 = vpop.permute.xlu0 %7875
      %7877 = vrot.lane.b32.xlu0 %v7580, 16
      %v7878 = vpop.permute.xlu0 %7877
      %7879 = vrot.lane.b32.xlu0 %v7581, 16
      %v7880 = vpop.permute.xlu0 %7879
      %7881 = vrot.lane.b32.xlu0 %v7582, 16
      %v7882 = vpop.permute.xlu0 %7881
      %7883 = vrot.lane.b32.xlu0 %v7583, 16
      %v7884 = vpop.permute.xlu0 %7883
      %7885 = vrot.lane.b32.xlu0 %v7584, 16
      %v7886 = vpop.permute.xlu0 %7885
      %7887 = vrot.lane.b32.xlu0 %v7585, 16
      %v7888 = vpop.permute.xlu0 %7887
      %7889 = vrot.lane.b32.xlu0 %v7586, 16
      %v7890 = vpop.permute.xlu0 %7889
      %7891 = vrot.lane.b32.xlu0 %v7587, 16
      %v7892 = vpop.permute.xlu0 %7891
      %7893 = vrot.lane.b32.xlu0 %v7588, 16
      %v7894 = vpop.permute.xlu0 %7893
      %7895 = vrot.lane.b32.xlu0 %v7589, 16
      %v7896 = vpop.permute.xlu0 %7895
      %7897 = vrot.lane.b32.xlu0 %v7590, 16
      %v7898 = vpop.permute.xlu0 %7897
      %7899 = vrot.lane.b32.xlu0 %v7591, 16
      %v7900 = vpop.permute.xlu0 %7899
      %7901 = vrot.lane.b32.xlu0 %v7592, 16
      %v7902 = vpop.permute.xlu0 %7901
      %7903 = vrot.lane.b32.xlu0 %v7593, 16
      %v7904 = vpop.permute.xlu0 %7903
      %7905 = vrot.lane.b32.xlu0 %v7594, 16
      %v7906 = vpop.permute.xlu0 %7905
      %7907 = vrot.lane.b32.xlu0 %v7595, 16
      %v7908 = vpop.permute.xlu0 %7907
      %7909 = vrot.lane.b32.xlu0 %v7596, 16
      %v7910 = vpop.permute.xlu0 %7909
      %7911 = vrot.lane.b32.xlu0 %v7597, 16
      %v7912 = vpop.permute.xlu0 %7911
      %7913 = vrot.lane.b32.xlu0 %v7598, 16
      %v7914 = vpop.permute.xlu0 %7913
      %7915 = vrot.lane.b32.xlu0 %v7599, 16
      %v7916 = vpop.permute.xlu0 %7915
      %7917 = vrot.lane.b32.xlu0 %v7600, 16
      %v7918 = vpop.permute.xlu0 %7917
      %7919 = vrot.lane.b32.xlu0 %v7601, 16
      %v7920 = vpop.permute.xlu0 %7919
      %7921 = vrot.lane.b32.xlu0 %v7602, 16
      %v7922 = vpop.permute.xlu0 %7921
      %7987 = vrot.lane.b32.xlu0 %v7603, 32
      %v7988 = vpop.permute.xlu0 %7987
      %7989 = vrot.lane.b32.xlu0 %v7604, 32
      %v7990 = vpop.permute.xlu0 %7989
      %7991 = vrot.lane.b32.xlu0 %v7605, 32
      %v7992 = vpop.permute.xlu0 %7991
      %7993 = vrot.lane.b32.xlu0 %v7606, 32
      %v7994 = vpop.permute.xlu0 %7993
      %7995 = vrot.lane.b32.xlu0 %v7607, 32
      %v7996 = vpop.permute.xlu0 %7995
      %7997 = vrot.lane.b32.xlu0 %v7608, 32
      %v7998 = vpop.permute.xlu0 %7997
      %7999 = vrot.lane.b32.xlu0 %v7609, 32
      %v8000 = vpop.permute.xlu0 %7999
      %8001 = vrot.lane.b32.xlu0 %v7610, 32
      %v8002 = vpop.permute.xlu0 %8001
      %8003 = vrot.lane.b32.xlu0 %v7611, 32
      %v8004 = vpop.permute.xlu0 %8003
      %8005 = vrot.lane.b32.xlu0 %v7612, 32
      %v8006 = vpop.permute.xlu0 %8005
      %8007 = vrot.lane.b32.xlu0 %v7613, 32
      %v8008 = vpop.permute.xlu0 %8007
      %8009 = vrot.lane.b32.xlu0 %v7614, 32
      %v8010 = vpop.permute.xlu0 %8009
      %8011 = vrot.lane.b32.xlu0 %v7615, 32
      %v8012 = vpop.permute.xlu0 %8011
      %8013 = vrot.lane.b32.xlu0 %v7616, 32
      %v8014 = vpop.permute.xlu0 %8013
      %8015 = vrot.lane.b32.xlu0 %v7617, 32
      %v8016 = vpop.permute.xlu0 %8015
      %8017 = vrot.lane.b32.xlu0 %v7618, 32
      %v8018 = vpop.permute.xlu0 %8017
      %8019 = vrot.lane.b32.xlu0 %v7619, 32
      %v8020 = vpop.permute.xlu0 %8019
      %8021 = vrot.lane.b32.xlu0 %v7620, 32
      %v8022 = vpop.permute.xlu0 %8021
      %8023 = vrot.lane.b32.xlu0 %v7621, 32
      %v8024 = vpop.permute.xlu0 %8023
      %8025 = vrot.lane.b32.xlu0 %v7622, 32
      %v8026 = vpop.permute.xlu0 %8025
      %8027 = vrot.lane.b32.xlu0 %v7623, 32
      %v8028 = vpop.permute.xlu0 %8027
      %8029 = vrot.lane.b32.xlu0 %v7624, 32
      %v8030 = vpop.permute.xlu0 %8029
      %8031 = vrot.lane.b32.xlu0 %v7625, 32
      %v8032 = vpop.permute.xlu0 %8031
      %8033 = vrot.lane.b32.xlu0 %v7626, 32
      %v8034 = vpop.permute.xlu0 %8033
      %8035 = vrot.lane.b32.xlu0 %v7627, 32
      %v8036 = vpop.permute.xlu0 %8035
      %8037 = vrot.lane.b32.xlu0 %v7628, 32
      %v8038 = vpop.permute.xlu0 %8037
      %8039 = vrot.lane.b32.xlu0 %v7629, 32
      %v8040 = vpop.permute.xlu0 %8039
      %8041 = vrot.lane.b32.xlu0 %v7630, 32
      %v8042 = vpop.permute.xlu0 %8041
      %8043 = vrot.lane.b32.xlu0 %v7631, 32
      %v8044 = vpop.permute.xlu0 %8043
      %8045 = vrot.lane.b32.xlu0 %v7632, 32
      %v8046 = vpop.permute.xlu0 %8045
      %8047 = vrot.lane.b32.xlu0 %v7633, 32
      %v8048 = vpop.permute.xlu0 %8047
      %8049 = vrot.lane.b32.xlu0 %v7634, 32
      %v8050 = vpop.permute.xlu0 %8049
      %8115 = vrot.lane.b32.xlu0 %v7635, 48
      %v8116 = vpop.permute.xlu0 %8115
      %8117 = vrot.lane.b32.xlu0 %v7636, 48
      %v8118 = vpop.permute.xlu0 %8117
      %8119 = vrot.lane.b32.xlu0 %v7637, 48
      %v8120 = vpop.permute.xlu0 %8119
      %8121 = vrot.lane.b32.xlu0 %v7638, 48
      %v8122 = vpop.permute.xlu0 %8121
      %8123 = vrot.lane.b32.xlu0 %v7639, 48
      %v8124 = vpop.permute.xlu0 %8123
      %8125 = vrot.lane.b32.xlu0 %v7640, 48
      %v8126 = vpop.permute.xlu0 %8125
      %8127 = vrot.lane.b32.xlu0 %v7641, 48
      %v8128 = vpop.permute.xlu0 %8127
      %8129 = vrot.lane.b32.xlu0 %v7642, 48
      %v8130 = vpop.permute.xlu0 %8129
      %8131 = vrot.lane.b32.xlu0 %v7643, 48
      %v8132 = vpop.permute.xlu0 %8131
      %8133 = vrot.lane.b32.xlu0 %v7644, 48
      %v8134 = vpop.permute.xlu0 %8133
      %8135 = vrot.lane.b32.xlu0 %v7645, 48
      %v8136 = vpop.permute.xlu0 %8135
      %8137 = vrot.lane.b32.xlu0 %v7646, 48
      %v8138 = vpop.permute.xlu0 %8137
      %8139 = vrot.lane.b32.xlu0 %v7647, 48
      %v8140 = vpop.permute.xlu0 %8139
      %8141 = vrot.lane.b32.xlu0 %v7648, 48
      %v8142 = vpop.permute.xlu0 %8141
      %8143 = vrot.lane.b32.xlu0 %v7649, 48
      %v8144 = vpop.permute.xlu0 %8143
      %8145 = vrot.lane.b32.xlu0 %v7650, 48
      %v8146 = vpop.permute.xlu0 %8145
      %8147 = vrot.lane.b32.xlu0 %v7651, 48
      %v8148 = vpop.permute.xlu0 %8147
      %8149 = vrot.lane.b32.xlu0 %v7652, 48
      %v8150 = vpop.permute.xlu0 %8149
      %8151 = vrot.lane.b32.xlu0 %v7653, 48
      %v8152 = vpop.permute.xlu0 %8151
      %8153 = vrot.lane.b32.xlu0 %v7654, 48
      %v8154 = vpop.permute.xlu0 %8153
      %8155 = vrot.lane.b32.xlu0 %v7655, 48
      %v8156 = vpop.permute.xlu0 %8155
      %8157 = vrot.lane.b32.xlu0 %v7656, 48
      %v8158 = vpop.permute.xlu0 %8157
      %8159 = vrot.lane.b32.xlu0 %v7657, 48
      %v8160 = vpop.permute.xlu0 %8159
      %8161 = vrot.lane.b32.xlu0 %v7658, 48
      %v8162 = vpop.permute.xlu0 %8161
      %8163 = vrot.lane.b32.xlu0 %v7659, 48
      %v8164 = vpop.permute.xlu0 %8163
      %8165 = vrot.lane.b32.xlu0 %v7660, 48
      %v8166 = vpop.permute.xlu0 %8165
      %8167 = vrot.lane.b32.xlu0 %v7661, 48
      %v8168 = vpop.permute.xlu0 %8167
      %8169 = vrot.lane.b32.xlu0 %v7662, 48
      %v8170 = vpop.permute.xlu0 %8169
      %8171 = vrot.lane.b32.xlu0 %v7663, 48
      %v8172 = vpop.permute.xlu0 %8171
      %8173 = vrot.lane.b32.xlu0 %v7664, 48
      %v8174 = vpop.permute.xlu0 %8173
      %8175 = vrot.lane.b32.xlu0 %v7665, 48
      %v8176 = vpop.permute.xlu0 %8175
      %8177 = vrot.lane.b32.xlu0 %v7666, 48
      %v8178 = vpop.permute.xlu0 %8177
      %8243 = vrot.lane.b32.xlu0 %v7667, 64
      %v8244 = vpop.permute.xlu0 %8243
      %8245 = vrot.lane.b32.xlu0 %v7668, 64
      %v8246 = vpop.permute.xlu0 %8245
      %8247 = vrot.lane.b32.xlu0 %v7669, 64
      %v8248 = vpop.permute.xlu0 %8247
      %8249 = vrot.lane.b32.xlu0 %v7670, 64
      %v8250 = vpop.permute.xlu0 %8249
      %8251 = vrot.lane.b32.xlu0 %v7671, 64
      %v8252 = vpop.permute.xlu0 %8251
      %8253 = vrot.lane.b32.xlu0 %v7672, 64
      %v8254 = vpop.permute.xlu0 %8253
      %8255 = vrot.lane.b32.xlu0 %v7673, 64
      %v8256 = vpop.permute.xlu0 %8255
      %8257 = vrot.lane.b32.xlu0 %v7674, 64
      %v8258 = vpop.permute.xlu0 %8257
      %8259 = vrot.lane.b32.xlu0 %v7675, 64
      %v8260 = vpop.permute.xlu0 %8259
      %8261 = vrot.lane.b32.xlu0 %v7676, 64
      %v8262 = vpop.permute.xlu0 %8261
      %8263 = vrot.lane.b32.xlu0 %v7677, 64
      %v8264 = vpop.permute.xlu0 %8263
      %8265 = vrot.lane.b32.xlu0 %v7678, 64
      %v8266 = vpop.permute.xlu0 %8265
      %8267 = vrot.lane.b32.xlu0 %v7679, 64
      %v8268 = vpop.permute.xlu0 %8267
      %8269 = vrot.lane.b32.xlu0 %v7680, 64
      %v8270 = vpop.permute.xlu0 %8269
      %8271 = vrot.lane.b32.xlu0 %v7681, 64
      %v8272 = vpop.permute.xlu0 %8271
      %8273 = vrot.lane.b32.xlu0 %v7682, 64
      %v8274 = vpop.permute.xlu0 %8273
      %8275 = vrot.lane.b32.xlu0 %v7683, 64
      %v8276 = vpop.permute.xlu0 %8275
      %8277 = vrot.lane.b32.xlu0 %v7684, 64
      %v8278 = vpop.permute.xlu0 %8277
      %8279 = vrot.lane.b32.xlu0 %v7685, 64
      %v8280 = vpop.permute.xlu0 %8279
      %8281 = vrot.lane.b32.xlu0 %v7686, 64
      %v8282 = vpop.permute.xlu0 %8281
      %8283 = vrot.lane.b32.xlu0 %v7687, 64
      %v8284 = vpop.permute.xlu0 %8283
      %8285 = vrot.lane.b32.xlu0 %v7688, 64
      %v8286 = vpop.permute.xlu0 %8285
      %8287 = vrot.lane.b32.xlu0 %v7689, 64
      %v8288 = vpop.permute.xlu0 %8287
      %8289 = vrot.lane.b32.xlu0 %v7690, 64
      %v8290 = vpop.permute.xlu0 %8289
      %8291 = vrot.lane.b32.xlu0 %v7691, 64
      %v8292 = vpop.permute.xlu0 %8291
      %8293 = vrot.lane.b32.xlu0 %v7692, 64
      %v8294 = vpop.permute.xlu0 %8293
      %8295 = vrot.lane.b32.xlu0 %v7693, 64
      %v8296 = vpop.permute.xlu0 %8295
      %8297 = vrot.lane.b32.xlu0 %v7694, 64
      %v8298 = vpop.permute.xlu0 %8297
      %8299 = vrot.lane.b32.xlu0 %v7695, 64
      %v8300 = vpop.permute.xlu0 %8299
      %8301 = vrot.lane.b32.xlu0 %v7696, 64
      %v8302 = vpop.permute.xlu0 %8301
      %8303 = vrot.lane.b32.xlu0 %v7697, 64
      %v8304 = vpop.permute.xlu0 %8303
      %8305 = vrot.lane.b32.xlu0 %v7698, 64
      %v8306 = vpop.permute.xlu0 %8305
      %8371 = vrot.lane.b32.xlu0 %v7699, 80
      %v8372 = vpop.permute.xlu0 %8371
      %8373 = vrot.lane.b32.xlu0 %v7700, 80
      %v8374 = vpop.permute.xlu0 %8373
      %8375 = vrot.lane.b32.xlu0 %v7701, 80
      %v8376 = vpop.permute.xlu0 %8375
      %8377 = vrot.lane.b32.xlu0 %v7702, 80
      %v8378 = vpop.permute.xlu0 %8377
      %8379 = vrot.lane.b32.xlu0 %v7703, 80
      %v8380 = vpop.permute.xlu0 %8379
      %8381 = vrot.lane.b32.xlu0 %v7704, 80
      %v8382 = vpop.permute.xlu0 %8381
      %8383 = vrot.lane.b32.xlu0 %v7705, 80
      %v8384 = vpop.permute.xlu0 %8383
      %8385 = vrot.lane.b32.xlu0 %v7706, 80
      %v8386 = vpop.permute.xlu0 %8385
      %8387 = vrot.lane.b32.xlu0 %v7707, 80
      %v8388 = vpop.permute.xlu0 %8387
      %8389 = vrot.lane.b32.xlu0 %v7708, 80
      %v8390 = vpop.permute.xlu0 %8389
      %8391 = vrot.lane.b32.xlu0 %v7709, 80
      %v8392 = vpop.permute.xlu0 %8391
      %8393 = vrot.lane.b32.xlu0 %v7710, 80
      %v8394 = vpop.permute.xlu0 %8393
      %8395 = vrot.lane.b32.xlu0 %v7711, 80
      %v8396 = vpop.permute.xlu0 %8395
      %8397 = vrot.lane.b32.xlu0 %v7712, 80
      %v8398 = vpop.permute.xlu0 %8397
      %8399 = vrot.lane.b32.xlu0 %v7713, 80
      %v8400 = vpop.permute.xlu0 %8399
      %8401 = vrot.lane.b32.xlu0 %v7714, 80
      %v8402 = vpop.permute.xlu0 %8401
      %8403 = vrot.lane.b32.xlu0 %v7715, 80
      %v8404 = vpop.permute.xlu0 %8403
      %8405 = vrot.lane.b32.xlu0 %v7716, 80
      %v8406 = vpop.permute.xlu0 %8405
      %8407 = vrot.lane.b32.xlu0 %v7717, 80
      %v8408 = vpop.permute.xlu0 %8407
      %8409 = vrot.lane.b32.xlu0 %v7718, 80
      %v8410 = vpop.permute.xlu0 %8409
      %8411 = vrot.lane.b32.xlu0 %v7719, 80
      %v8412 = vpop.permute.xlu0 %8411
      %8413 = vrot.lane.b32.xlu0 %v7720, 80
      %v8414 = vpop.permute.xlu0 %8413
      %8415 = vrot.lane.b32.xlu0 %v7721, 80
      %v8416 = vpop.permute.xlu0 %8415
      %8417 = vrot.lane.b32.xlu0 %v7722, 80
      %v8418 = vpop.permute.xlu0 %8417
      %8419 = vrot.lane.b32.xlu0 %v7723, 80
      %v8420 = vpop.permute.xlu0 %8419
      %8421 = vrot.lane.b32.xlu0 %v7724, 80
      %v8422 = vpop.permute.xlu0 %8421
      %8423 = vrot.lane.b32.xlu0 %v7725, 80
      %v8424 = vpop.permute.xlu0 %8423
      %8425 = vrot.lane.b32.xlu0 %v7726, 80
      %v8426 = vpop.permute.xlu0 %8425
      %8427 = vrot.lane.b32.xlu0 %v7727, 80
      %v8428 = vpop.permute.xlu0 %8427
      %8429 = vrot.lane.b32.xlu0 %v7728, 80
      %v8430 = vpop.permute.xlu0 %8429
      %8431 = vrot.lane.b32.xlu0 %v7729, 80
      %v8432 = vpop.permute.xlu0 %8431
      %8433 = vrot.lane.b32.xlu0 %v7730, 80
      %v8434 = vpop.permute.xlu0 %8433
      %8499 = vrot.lane.b32.xlu0 %v7731, 96
      %v8500 = vpop.permute.xlu0 %8499
      %8501 = vrot.lane.b32.xlu0 %v7732, 96
      %v8502 = vpop.permute.xlu0 %8501
      %8503 = vrot.lane.b32.xlu0 %v7733, 96
      %v8504 = vpop.permute.xlu0 %8503
      %8505 = vrot.lane.b32.xlu0 %v7734, 96
      %v8506 = vpop.permute.xlu0 %8505
      %8507 = vrot.lane.b32.xlu0 %v7735, 96
      %v8508 = vpop.permute.xlu0 %8507
      %8509 = vrot.lane.b32.xlu0 %v7736, 96
      %v8510 = vpop.permute.xlu0 %8509
      %8511 = vrot.lane.b32.xlu0 %v7737, 96
      %v8512 = vpop.permute.xlu0 %8511
      %8513 = vrot.lane.b32.xlu0 %v7738, 96
      %v8514 = vpop.permute.xlu0 %8513
      %8515 = vrot.lane.b32.xlu0 %v7739, 96
      %v8516 = vpop.permute.xlu0 %8515
      %8517 = vrot.lane.b32.xlu0 %v7740, 96
      %v8518 = vpop.permute.xlu0 %8517
      %8519 = vrot.lane.b32.xlu0 %v7741, 96
      %v8520 = vpop.permute.xlu0 %8519
      %8521 = vrot.lane.b32.xlu0 %v7742, 96
      %v8522 = vpop.permute.xlu0 %8521
      %8523 = vrot.lane.b32.xlu0 %v7743, 96
      %v8524 = vpop.permute.xlu0 %8523
      %8525 = vrot.lane.b32.xlu0 %v7744, 96
      %v8526 = vpop.permute.xlu0 %8525
      %8527 = vrot.lane.b32.xlu0 %v7745, 96
      %v8528 = vpop.permute.xlu0 %8527
      %8529 = vrot.lane.b32.xlu0 %v7746, 96
      %v8530 = vpop.permute.xlu0 %8529
      %8531 = vrot.lane.b32.xlu0 %v7747, 96
      %v8532 = vpop.permute.xlu0 %8531
      %8533 = vrot.lane.b32.xlu0 %v7748, 96
      %v8534 = vpop.permute.xlu0 %8533
      %8535 = vrot.lane.b32.xlu0 %v7749, 96
      %v8536 = vpop.permute.xlu0 %8535
      %8537 = vrot.lane.b32.xlu0 %v7750, 96
      %v8538 = vpop.permute.xlu0 %8537
      %8539 = vrot.lane.b32.xlu0 %v7751, 96
      %v8540 = vpop.permute.xlu0 %8539
      %8541 = vrot.lane.b32.xlu0 %v7752, 96
      %v8542 = vpop.permute.xlu0 %8541
      %8543 = vrot.lane.b32.xlu0 %v7753, 96
      %v8544 = vpop.permute.xlu0 %8543
      %8545 = vrot.lane.b32.xlu0 %v7754, 96
      %v8546 = vpop.permute.xlu0 %8545
      %8547 = vrot.lane.b32.xlu0 %v7755, 96
      %v8548 = vpop.permute.xlu0 %8547
      %8549 = vrot.lane.b32.xlu0 %v7756, 96
      %v8550 = vpop.permute.xlu0 %8549
      %8551 = vrot.lane.b32.xlu0 %v7757, 96
      %v8552 = vpop.permute.xlu0 %8551
      %8553 = vrot.lane.b32.xlu0 %v7758, 96
      %v8554 = vpop.permute.xlu0 %8553
      %8555 = vrot.lane.b32.xlu0 %v7759, 96
      %v8556 = vpop.permute.xlu0 %8555
      %8557 = vrot.lane.b32.xlu0 %v7760, 96
      %v8558 = vpop.permute.xlu0 %8557
      %8559 = vrot.lane.b32.xlu0 %v7761, 96
      %v8560 = vpop.permute.xlu0 %8559
      %8561 = vrot.lane.b32.xlu0 %v7762, 96
      %v8562 = vpop.permute.xlu0 %8561
      %8627 = vrot.lane.b32.xlu0 %v7763, 112
      %v8628 = vpop.permute.xlu0 %8627
      %8629 = vrot.lane.b32.xlu0 %v7764, 112
      %v8630 = vpop.permute.xlu0 %8629
      %8631 = vrot.lane.b32.xlu0 %v7765, 112
      %v8632 = vpop.permute.xlu0 %8631
      %8633 = vrot.lane.b32.xlu0 %v7766, 112
      %v8634 = vpop.permute.xlu0 %8633
      %8635 = vrot.lane.b32.xlu0 %v7767, 112
      %v8636 = vpop.permute.xlu0 %8635
      %8637 = vrot.lane.b32.xlu0 %v7768, 112
      %v8638 = vpop.permute.xlu0 %8637
      %8639 = vrot.lane.b32.xlu0 %v7769, 112
      %v8640 = vpop.permute.xlu0 %8639
      %8641 = vrot.lane.b32.xlu0 %v7770, 112
      %v8642 = vpop.permute.xlu0 %8641
      %8643 = vrot.lane.b32.xlu0 %v7771, 112
      %v8644 = vpop.permute.xlu0 %8643
      %8645 = vrot.lane.b32.xlu0 %v7772, 112
      %v8646 = vpop.permute.xlu0 %8645
      %8647 = vrot.lane.b32.xlu0 %v7773, 112
      %v8648 = vpop.permute.xlu0 %8647
      %8649 = vrot.lane.b32.xlu0 %v7774, 112
      %v8650 = vpop.permute.xlu0 %8649
      %8651 = vrot.lane.b32.xlu0 %v7775, 112
      %v8652 = vpop.permute.xlu0 %8651
      %8653 = vrot.lane.b32.xlu0 %v7776, 112
      %v8654 = vpop.permute.xlu0 %8653
      %8655 = vrot.lane.b32.xlu0 %v7777, 112
      %v8656 = vpop.permute.xlu0 %8655
      %8657 = vrot.lane.b32.xlu0 %v7778, 112
      %v8658 = vpop.permute.xlu0 %8657
      %8659 = vrot.lane.b32.xlu0 %v7779, 112
      %v8660 = vpop.permute.xlu0 %8659
      %8661 = vrot.lane.b32.xlu0 %v7780, 112
      %v8662 = vpop.permute.xlu0 %8661
      %8663 = vrot.lane.b32.xlu0 %v7781, 112
      %v8664 = vpop.permute.xlu0 %8663
      %8665 = vrot.lane.b32.xlu0 %v7782, 112
      %v8666 = vpop.permute.xlu0 %8665
      %8667 = vrot.lane.b32.xlu0 %v7783, 112
      %v8668 = vpop.permute.xlu0 %8667
      %8669 = vrot.lane.b32.xlu0 %v7784, 112
      %v8670 = vpop.permute.xlu0 %8669
      %8671 = vrot.lane.b32.xlu0 %v7785, 112
      %v8672 = vpop.permute.xlu0 %8671
      %8673 = vrot.lane.b32.xlu0 %v7786, 112
      %v8674 = vpop.permute.xlu0 %8673
      %8675 = vrot.lane.b32.xlu0 %v7787, 112
      %v8676 = vpop.permute.xlu0 %8675
      %8677 = vrot.lane.b32.xlu0 %v7788, 112
      %v8678 = vpop.permute.xlu0 %8677
      %8679 = vrot.lane.b32.xlu0 %v7789, 112
      %v8680 = vpop.permute.xlu0 %8679
      %8681 = vrot.lane.b32.xlu0 %v7790, 112
      %v8682 = vpop.permute.xlu0 %8681
      %8683 = vrot.lane.b32.xlu0 %v7791, 112
      %v8684 = vpop.permute.xlu0 %8683
      %8685 = vrot.lane.b32.xlu0 %v7792, 112
      %v8686 = vpop.permute.xlu0 %8685
      %8687 = vrot.lane.b32.xlu0 %v7793, 112
      %v8688 = vpop.permute.xlu0 %8687
      %8689 = vrot.lane.b32.xlu0 %v7794, 112
      %v8690 = vpop.permute.xlu0 %8689
      %v8723 = vsel %vm172, %v7539, %v7860
      %v8724 = vsel %vm172, %v7540, %v7862
      %v8725 = vsel %vm172, %v7541, %v7864
      %v8726 = vsel %vm172, %v7542, %v7866
      %v8727 = vsel %vm172, %v7543, %v7868
      %v8728 = vsel %vm172, %v7544, %v7870
      %v8729 = vsel %vm172, %v7545, %v7872
      %v8730 = vsel %vm172, %v7546, %v7874
      %v8731 = vsel %vm172, %v7547, %v7876
      %v8732 = vsel %vm172, %v7548, %v7878
      %v8733 = vsel %vm172, %v7549, %v7880
      %v8734 = vsel %vm172, %v7550, %v7882
      %v8735 = vsel %vm172, %v7551, %v7884
      %v8736 = vsel %vm172, %v7552, %v7886
      %v8737 = vsel %vm172, %v7553, %v7888
      %v8738 = vsel %vm172, %v7554, %v7890
      %v8739 = vsel %vm172, %v7555, %v7892
      %v8740 = vsel %vm172, %v7556, %v7894
      %v8741 = vsel %vm172, %v7557, %v7896
      %v8742 = vsel %vm172, %v7558, %v7898
      %v8743 = vsel %vm172, %v7559, %v7900
      %v8744 = vsel %vm172, %v7560, %v7902
      %v8745 = vsel %vm172, %v7561, %v7904
      %v8746 = vsel %vm172, %v7562, %v7906
      %v8747 = vsel %vm172, %v7563, %v7908
      %v8748 = vsel %vm172, %v7564, %v7910
      %v8749 = vsel %vm172, %v7565, %v7912
      %v8750 = vsel %vm172, %v7566, %v7914
      %v8751 = vsel %vm172, %v7567, %v7916
      %v8752 = vsel %vm172, %v7568, %v7918
      %v8753 = vsel %vm172, %v7569, %v7920
      %v8754 = vsel %vm172, %v7570, %v7922
      %v8755 = vsel %vm1511, %v8723, %v7988
      %v8756 = vsel %vm1511, %v8724, %v7990
      %v8757 = vsel %vm1511, %v8725, %v7992
      %v8758 = vsel %vm1511, %v8726, %v7994
      %v8759 = vsel %vm1511, %v8727, %v7996
      %v8760 = vsel %vm1511, %v8728, %v7998
      %v8761 = vsel %vm1511, %v8729, %v8000
      %v8762 = vsel %vm1511, %v8730, %v8002
      %v8763 = vsel %vm1511, %v8731, %v8004
      %v8764 = vsel %vm1511, %v8732, %v8006
      %v8765 = vsel %vm1511, %v8733, %v8008
      %v8766 = vsel %vm1511, %v8734, %v8010
      %v8767 = vsel %vm1511, %v8735, %v8012
      %v8768 = vsel %vm1511, %v8736, %v8014
      %v8769 = vsel %vm1511, %v8737, %v8016
      %v8770 = vsel %vm1511, %v8738, %v8018
      %v8771 = vsel %vm1511, %v8739, %v8020
      %v8772 = vsel %vm1511, %v8740, %v8022
      %v8773 = vsel %vm1511, %v8741, %v8024
      %v8774 = vsel %vm1511, %v8742, %v8026
      %v8775 = vsel %vm1511, %v8743, %v8028
      %v8776 = vsel %vm1511, %v8744, %v8030
      %v8777 = vsel %vm1511, %v8745, %v8032
      %v8778 = vsel %vm1511, %v8746, %v8034
      %v8779 = vsel %vm1511, %v8747, %v8036
      %v8780 = vsel %vm1511, %v8748, %v8038
      %v8781 = vsel %vm1511, %v8749, %v8040
      %v8782 = vsel %vm1511, %v8750, %v8042
      %v8783 = vsel %vm1511, %v8751, %v8044
      %v8784 = vsel %vm1511, %v8752, %v8046
      %v8785 = vsel %vm1511, %v8753, %v8048
      %v8786 = vsel %vm1511, %v8754, %v8050
      %v8787 = vsel %vm1544, %v8755, %v8116
      %v8788 = vsel %vm1544, %v8756, %v8118
      %v8789 = vsel %vm1544, %v8757, %v8120
      %v8790 = vsel %vm1544, %v8758, %v8122
      %v8791 = vsel %vm1544, %v8759, %v8124
      %v8792 = vsel %vm1544, %v8760, %v8126
      %v8793 = vsel %vm1544, %v8761, %v8128
      %v8794 = vsel %vm1544, %v8762, %v8130
      %v8795 = vsel %vm1544, %v8763, %v8132
      %v8796 = vsel %vm1544, %v8764, %v8134
      %v8797 = vsel %vm1544, %v8765, %v8136
      %v8798 = vsel %vm1544, %v8766, %v8138
      %v8799 = vsel %vm1544, %v8767, %v8140
      %v8800 = vsel %vm1544, %v8768, %v8142
      %v8801 = vsel %vm1544, %v8769, %v8144
      %v8802 = vsel %vm1544, %v8770, %v8146
      %v8803 = vsel %vm1544, %v8771, %v8148
      %v8804 = vsel %vm1544, %v8772, %v8150
      %v8805 = vsel %vm1544, %v8773, %v8152
      %v8806 = vsel %vm1544, %v8774, %v8154
      %v8807 = vsel %vm1544, %v8775, %v8156
      %v8808 = vsel %vm1544, %v8776, %v8158
      %v8809 = vsel %vm1544, %v8777, %v8160
      %v8810 = vsel %vm1544, %v8778, %v8162
      %v8811 = vsel %vm1544, %v8779, %v8164
      %v8812 = vsel %vm1544, %v8780, %v8166
      %v8813 = vsel %vm1544, %v8781, %v8168
      %v8814 = vsel %vm1544, %v8782, %v8170
      %v8815 = vsel %vm1544, %v8783, %v8172
      %v8816 = vsel %vm1544, %v8784, %v8174
      %v8817 = vsel %vm1544, %v8785, %v8176
      %v8818 = vsel %vm1544, %v8786, %v8178
      %v8819 = vsel %vm1577, %v8787, %v8244
      %v8820 = vsel %vm1577, %v8788, %v8246
      %v8821 = vsel %vm1577, %v8789, %v8248
      %v8822 = vsel %vm1577, %v8790, %v8250
      %v8823 = vsel %vm1577, %v8791, %v8252
      %v8824 = vsel %vm1577, %v8792, %v8254
      %v8825 = vsel %vm1577, %v8793, %v8256
      %v8826 = vsel %vm1577, %v8794, %v8258
      %v8827 = vsel %vm1577, %v8795, %v8260
      %v8828 = vsel %vm1577, %v8796, %v8262
      %v8829 = vsel %vm1577, %v8797, %v8264
      %v8830 = vsel %vm1577, %v8798, %v8266
      %v8831 = vsel %vm1577, %v8799, %v8268
      %v8832 = vsel %vm1577, %v8800, %v8270
      %v8833 = vsel %vm1577, %v8801, %v8272
      %v8834 = vsel %vm1577, %v8802, %v8274
      %v8835 = vsel %vm1577, %v8803, %v8276
      %v8836 = vsel %vm1577, %v8804, %v8278
      %v8837 = vsel %vm1577, %v8805, %v8280
      %v8838 = vsel %vm1577, %v8806, %v8282
      %v8839 = vsel %vm1577, %v8807, %v8284
      %v8840 = vsel %vm1577, %v8808, %v8286
      %v8841 = vsel %vm1577, %v8809, %v8288
      %v8842 = vsel %vm1577, %v8810, %v8290
      %v8843 = vsel %vm1577, %v8811, %v8292
      %v8844 = vsel %vm1577, %v8812, %v8294
      %v8845 = vsel %vm1577, %v8813, %v8296
      %v8846 = vsel %vm1577, %v8814, %v8298
      %v8847 = vsel %vm1577, %v8815, %v8300
      %v8848 = vsel %vm1577, %v8816, %v8302
      %v8849 = vsel %vm1577, %v8817, %v8304
      %v8850 = vsel %vm1577, %v8818, %v8306
      %v8851 = vsel %vm1610, %v8819, %v8372
      %v8852 = vsel %vm1610, %v8820, %v8374
      %v8853 = vsel %vm1610, %v8821, %v8376
      %v8854 = vsel %vm1610, %v8822, %v8378
      %v8855 = vsel %vm1610, %v8823, %v8380
      %v8856 = vsel %vm1610, %v8824, %v8382
      %v8857 = vsel %vm1610, %v8825, %v8384
      %v8858 = vsel %vm1610, %v8826, %v8386
      %v8859 = vsel %vm1610, %v8827, %v8388
      %v8860 = vsel %vm1610, %v8828, %v8390
      %v8861 = vsel %vm1610, %v8829, %v8392
      %v8862 = vsel %vm1610, %v8830, %v8394
      %v8863 = vsel %vm1610, %v8831, %v8396
      %v8864 = vsel %vm1610, %v8832, %v8398
      %v8865 = vsel %vm1610, %v8833, %v8400
      %v8866 = vsel %vm1610, %v8834, %v8402
      %v8867 = vsel %vm1610, %v8835, %v8404
      %v8868 = vsel %vm1610, %v8836, %v8406
      %v8869 = vsel %vm1610, %v8837, %v8408
      %v8870 = vsel %vm1610, %v8838, %v8410
      %v8871 = vsel %vm1610, %v8839, %v8412
      %v8872 = vsel %vm1610, %v8840, %v8414
      %v8873 = vsel %vm1610, %v8841, %v8416
      %v8874 = vsel %vm1610, %v8842, %v8418
      %v8875 = vsel %vm1610, %v8843, %v8420
      %v8876 = vsel %vm1610, %v8844, %v8422
      %v8877 = vsel %vm1610, %v8845, %v8424
      %v8878 = vsel %vm1610, %v8846, %v8426
      %v8879 = vsel %vm1610, %v8847, %v8428
      %v8880 = vsel %vm1610, %v8848, %v8430
      %v8881 = vsel %vm1610, %v8849, %v8432
      %v8882 = vsel %vm1610, %v8850, %v8434
      %v8883 = vsel %vm1643, %v8851, %v8500
      %v8884 = vsel %vm1643, %v8852, %v8502
      %v8885 = vsel %vm1643, %v8853, %v8504
      %v8886 = vsel %vm1643, %v8854, %v8506
      %v8887 = vsel %vm1643, %v8855, %v8508
      %v8888 = vsel %vm1643, %v8856, %v8510
      %v8889 = vsel %vm1643, %v8857, %v8512
      %v8890 = vsel %vm1643, %v8858, %v8514
      %v8891 = vsel %vm1643, %v8859, %v8516
      %v8892 = vsel %vm1643, %v8860, %v8518
      %v8893 = vsel %vm1643, %v8861, %v8520
      %v8894 = vsel %vm1643, %v8862, %v8522
      %v8895 = vsel %vm1643, %v8863, %v8524
      %v8896 = vsel %vm1643, %v8864, %v8526
      %v8897 = vsel %vm1643, %v8865, %v8528
      %v8898 = vsel %vm1643, %v8866, %v8530
      %v8899 = vsel %vm1643, %v8867, %v8532
      %v8900 = vsel %vm1643, %v8868, %v8534
      %v8901 = vsel %vm1643, %v8869, %v8536
      %v8902 = vsel %vm1643, %v8870, %v8538
      %v8903 = vsel %vm1643, %v8871, %v8540
      %v8904 = vsel %vm1643, %v8872, %v8542
      %v8905 = vsel %vm1643, %v8873, %v8544
      %v8906 = vsel %vm1643, %v8874, %v8546
      %v8907 = vsel %vm1643, %v8875, %v8548
      %v8908 = vsel %vm1643, %v8876, %v8550
      %v8909 = vsel %vm1643, %v8877, %v8552
      %v8910 = vsel %vm1643, %v8878, %v8554
      %v8911 = vsel %vm1643, %v8879, %v8556
      %v8912 = vsel %vm1643, %v8880, %v8558
      %v8913 = vsel %vm1643, %v8881, %v8560
      %v8914 = vsel %vm1643, %v8882, %v8562
      %v8915 = vsel %vm1676, %v8883, %v8628
      %v8916 = vsel %vm1676, %v8884, %v8630
      %v8917 = vsel %vm1676, %v8885, %v8632
      %v8918 = vsel %vm1676, %v8886, %v8634
      %v8919 = vsel %vm1676, %v8887, %v8636
      %v8920 = vsel %vm1676, %v8888, %v8638
      %v8921 = vsel %vm1676, %v8889, %v8640
      %v8922 = vsel %vm1676, %v8890, %v8642
      %v8923 = vsel %vm1676, %v8891, %v8644
      %v8924 = vsel %vm1676, %v8892, %v8646
      %v8925 = vsel %vm1676, %v8893, %v8648
      %v8926 = vsel %vm1676, %v8894, %v8650
      %v8927 = vsel %vm1676, %v8895, %v8652
      %v8928 = vsel %vm1676, %v8896, %v8654
      %v8929 = vsel %vm1676, %v8897, %v8656
      %v8930 = vsel %vm1676, %v8898, %v8658
      %v8931 = vsel %vm1676, %v8899, %v8660
      %v8932 = vsel %vm1676, %v8900, %v8662
      %v8933 = vsel %vm1676, %v8901, %v8664
      %v8934 = vsel %vm1676, %v8902, %v8666
      %v8935 = vsel %vm1676, %v8903, %v8668
      %v8936 = vsel %vm1676, %v8904, %v8670
      %v8937 = vsel %vm1676, %v8905, %v8672
      %v8938 = vsel %vm1676, %v8906, %v8674
      %v8939 = vsel %vm1676, %v8907, %v8676
      %v8940 = vsel %vm1676, %v8908, %v8678
      %v8941 = vsel %vm1676, %v8909, %v8680
      %v8942 = vsel %vm1676, %v8910, %v8682
      %v8943 = vsel %vm1676, %v8911, %v8684
      %v8944 = vsel %vm1676, %v8912, %v8686
      %v8945 = vsel %vm1676, %v8913, %v8688
      %v8946 = vsel %vm1676, %v8914, %v8690
      %v8947 = vpack.c.bf16 %v8916, %v8915
      %v8948 = vpack.c.bf16 %v7796, %v7795
      %v8949 = vpack.c.bf16 %v8918, %v8917
      %v8950 = vpack.c.bf16 %v7798, %v7797
      %v8951 = vpack.c.bf16 %v8920, %v8919
      %v8952 = vpack.c.bf16 %v7800, %v7799
      %v8953 = vpack.c.bf16 %v8922, %v8921
      %v8954 = vpack.c.bf16 %v7802, %v7801
      %v8955 = vpack.c.bf16 %v8924, %v8923
      %v8956 = vpack.c.bf16 %v7804, %v7803
      %v8957 = vpack.c.bf16 %v8926, %v8925
      %v8958 = vpack.c.bf16 %v7806, %v7805
      %v8959 = vpack.c.bf16 %v8928, %v8927
      %v8960 = vpack.c.bf16 %v7808, %v7807
      %v8961 = vpack.c.bf16 %v8930, %v8929
      %v8962 = vpack.c.bf16 %v7810, %v7809
      %v8963 = vpack.c.bf16 %v8932, %v8931
      %v8964 = vpack.c.bf16 %v7812, %v7811
      %v8965 = vpack.c.bf16 %v8934, %v8933
      %v8966 = vpack.c.bf16 %v7814, %v7813
      %v8967 = vpack.c.bf16 %v8936, %v8935
      %v8968 = vpack.c.bf16 %v7816, %v7815
      %v8969 = vpack.c.bf16 %v8938, %v8937
      %v8970 = vpack.c.bf16 %v7818, %v7817
      %v8971 = vpack.c.bf16 %v8940, %v8939
      %v8972 = vpack.c.bf16 %v7820, %v7819
      %v8973 = vpack.c.bf16 %v8942, %v8941
      %v8974 = vpack.c.bf16 %v7822, %v7821
      %v8975 = vpack.c.bf16 %v8944, %v8943
      %v8976 = vpack.c.bf16 %v7824, %v7823
      %v8977 = vpack.c.bf16 %v8946, %v8945
      %v8978 = vpack.c.bf16 %v7826, %v7825
      %s8979 = scalar_lea.vmem %s1, 288
      %v8980 = vld [vmem:[%s8979] sm:$0xf]
      %v8981 = vld [vmem:[%s8979 + $0x4] sm:$0xf]
      %v8982 = vld [vmem:[%s8979 + $0x8] sm:$0xf]
      %v8983 = vld [vmem:[%s8979 + $0xc] sm:$0xf]
      %v8984 = vld [vmem:[%s8979 + $0x10] sm:$0xf]
      %v8985 = vld [vmem:[%s8979 + $0x14] sm:$0xf]
      %v8986 = vld [vmem:[%s8979 + $0x18] sm:$0xf]
      %v8987 = vld [vmem:[%s8979 + $0x1c] sm:$0xf]
      %v8988 = vld [vmem:[%s8979 + $0x20] sm:$0xf]
      %v8989 = vld [vmem:[%s8979 + $0x24] sm:$0xf]
      %v8990 = vld [vmem:[%s8979 + $0x28] sm:$0xf]
      %v8991 = vld [vmem:[%s8979 + $0x2c] sm:$0xf]
      %v8992 = vld [vmem:[%s8979 + $0x30] sm:$0xf]
      %v8993 = vld [vmem:[%s8979 + $0x34] sm:$0xf]
      %v8994 = vld [vmem:[%s8979 + $0x38] sm:$0xf]
      %v8995 = vld [vmem:[%s8979 + $0x3c] sm:$0xf]
      %v8996 = vld [vmem:[%s8979 + $0x40] sm:$0xf]
      %v8997 = vld [vmem:[%s8979 + $0x44] sm:$0xf]
      %s8998 = scalar_lea.vmem %s2, 4
      %v8999 = vld [vmem:[%s8998] sm:$0x1]
      %v9001 = vlaneseq
      %v9002 = vshrl.u32 %v9001, 7
      %v9003 = vsub.s32 0, %v9002
      %v9004 = vrot.slane %v8999, %v9003
      %v9024 = vunpack.c.l.b16 %v8980
      %v9025 = vunpack.c.l.b16 %v8981
      %v9026 = vunpack.c.l.b16 %v8982
      %v9027 = vunpack.c.l.b16 %v8983
      %v9028 = vunpack.c.l.b16 %v8984
      %v9029 = vunpack.c.l.b16 %v8985
      %v9030 = vunpack.c.l.b16 %v8986
      %v9031 = vunpack.c.l.b16 %v8987
      %v9032 = vunpack.c.l.b16 %v8988
      %v9033 = vunpack.c.l.b16 %v8989
      %v9034 = vunpack.c.l.b16 %v8990
      %v9035 = vunpack.c.l.b16 %v8991
      %v9036 = vunpack.c.l.b16 %v8992
      %v9037 = vunpack.c.l.b16 %v8993
      %v9038 = vunpack.c.l.b16 %v8994
      %v9039 = vunpack.c.l.b16 %v8995
      %v9040 = vunpack.c.l.b16 %v8996
      %v9041 = vunpack.c.l.b16 %v8997
      %v9042 = vpack.c.b16 %v9025, %v9024
      %v9043 = vpack.c.b16 %v9027, %v9026
      %v9044 = vpack.c.b16 %v9029, %v9028
      %v9045 = vpack.c.b16 %v9031, %v9030
      %v9046 = vpack.c.b16 %v9033, %v9032
      %v9047 = vpack.c.b16 %v9035, %v9034
      %v9048 = vpack.c.b16 %v9037, %v9036
      %v9049 = vpack.c.b16 %v9039, %v9038
      %v9050 = vpack.c.b16 %v9041, %v9040
      %v9061 = vsel %vm172, %v8948, 0
      %v9064 = vsel %vm172, %v8950, 0
      %v9067 = vsel %vm172, %v8952, 0
      %v9070 = vsel %vm172, %v8954, 0
      %v9073 = vsel %vm172, %v8956, 0
      %v9076 = vsel %vm172, %v8958, 0
      %v9079 = vsel %vm172, %v8960, 0
      %v9082 = vsel %vm172, %v8962, 0
      %v9085 = vsel %vm172, %v8964, 0
      %v9088 = vsel %vm172, %v8966, 0
      %v9091 = vsel %vm172, %v8968, 0
      %v9094 = vsel %vm172, %v8970, 0
      %v9097 = vsel %vm172, %v8972, 0
      %v9100 = vsel %vm172, %v8974, 0
      %v9103 = vsel %vm172, %v8976, 0
      %v9106 = vsel %vm172, %v8978, 0
      %9108 = vmatprep.subr.bf16.mxu0 0
      %9109 = vmatpush1.bf16.msra.mxu0 %v9042
      %9110 = vmatprep.subr.bf16.mxu0 0
      %9111 = vmatpush1.bf16.msra.mxu0 %v9043
      %9112 = vmatprep.subr.bf16.mxu0 0
      %9113 = vmatpush1.bf16.msra.mxu0 %v9044
      %9114 = vmatprep.subr.bf16.mxu0 0
      %9115 = vmatpush1.bf16.msra.mxu0 %v9045
      %9116 = vmatprep.subr.bf16.mxu0 0
      %9117 = vmatpush1.bf16.msra.mxu0 %v9046
      %9118 = vmatprep.subr.bf16.mxu0 0
      %9119 = vmatpush1.bf16.msra.mxu0 %v9047
      %9120 = vmatprep.subr.bf16.mxu0 0
      %9121 = vmatpush1.bf16.msra.mxu0 %v9048
      %9122 = vmatprep.subr.bf16.mxu0 0
      %9123 = vmatpush1.bf16.msra.mxu0 %v9049
      %9124 = vmatprep.subr.bf16.mxu0 0
      %9125 = vmatpush1.bf16.msra.mxu0 %v9050
      %9126 = vmatprep.subr.bf16.mxu0 0
      %9127 = vmatpush1.bf16.msra.mxu0 0
      %9128 = vmatprep.subr.bf16.mxu0 0
      %9129 = vmatpush1.bf16.msra.mxu0 0
      %9130 = vmatprep.subr.bf16.mxu0 0
      %9131 = vmatpush1.bf16.msra.mxu0 0
      %9132 = vmatprep.subr.bf16.mxu0 0
      %9133 = vmatpush1.bf16.msra.mxu0 0
      %9134 = vmatprep.subr.bf16.mxu0 0
      %9135 = vmatpush1.bf16.msra.mxu0 0
      %9136 = vmatprep.subr.bf16.mxu0 0
      %9137 = vmatpush1.bf16.msra.mxu0 0
      %9138 = vmatprep.subr.bf16.mxu0 0
      %9139 = vmatpush1.bf16.msra.mxu0 0
      %9140 = vmatprep.mubr.bf16.mxu0 %v9061
      %9141 = vmatmul.mubr.bf16.gmra.mrb[0].mxu0 %v8947
      %v9142 = vpop.f32.mrb[0].mxu0
      %v9143 = vadd.f32 %v9004, %v9142
      %v9144 = vpop.f32.mrb[0].mxu0
      %v9145 = vpop.f32.mrb[0].mxu0
      %v9146 = vadd.f32 %v9004, %v9145
      %v9147 = vpop.f32.mrb[0].mxu0
      %9148 = vmatprep.mubr.bf16.mxu0 %v9064
      %9149 = vmatmul.mubr.bf16.gmra.mrb[0].mxu0 %v8949
      %v9150 = vpop.f32.mrb[0].mxu0
      %v9151 = vadd.f32 %v9004, %v9150
      %v9152 = vpop.f32.mrb[0].mxu0
      %v9153 = vpop.f32.mrb[0].mxu0
      %v9154 = vadd.f32 %v9004, %v9153
      %v9155 = vpop.f32.mrb[0].mxu0
      %9156 = vmatprep.mubr.bf16.mxu0 %v9067
      %9157 = vmatmul.mubr.bf16.gmra.mrb[0].mxu0 %v8951
      %v9158 = vpop.f32.mrb[0].mxu0
      %v9159 = vadd.f32 %v9004, %v9158
      %v9160 = vpop.f32.mrb[0].mxu0
      %v9161 = vpop.f32.mrb[0].mxu0
      %v9162 = vadd.f32 %v9004, %v9161
      %v9163 = vpop.f32.mrb[0].mxu0
      %9164 = vmatprep.mubr.bf16.mxu0 %v9070
      %9165 = vmatmul.mubr.bf16.gmra.mrb[0].mxu0 %v8953
      %v9166 = vpop.f32.mrb[0].mxu0
      %v9167 = vadd.f32 %v9004, %v9166
      %v9168 = vpop.f32.mrb[0].mxu0
      %v9169 = vpop.f32.mrb[0].mxu0
      %v9170 = vadd.f32 %v9004, %v9169
      %v9171 = vpop.f32.mrb[0].mxu0
      %9172 = vmatprep.mubr.bf16.mxu0 %v9073
      %9173 = vmatmul.mubr.bf16.gmra.mrb[0].mxu0 %v8955
      %v9174 = vpop.f32.mrb[0].mxu0
      %v9175 = vadd.f32 %v9004, %v9174
      %v9176 = vpop.f32.mrb[0].mxu0
      %v9177 = vpop.f32.mrb[0].mxu0
      %v9178 = vadd.f32 %v9004, %v9177
      %v9179 = vpop.f32.mrb[0].mxu0
      %9180 = vmatprep.mubr.bf16.mxu0 %v9076
      %9181 = vmatmul.mubr.bf16.gmra.mrb[0].mxu0 %v8957
      %v9182 = vpop.f32.mrb[0].mxu0
      %v9183 = vadd.f32 %v9004, %v9182
      %v9184 = vpop.f32.mrb[0].mxu0
      %v9185 = vpop.f32.mrb[0].mxu0
      %v9186 = vadd.f32 %v9004, %v9185
      %v9187 = vpop.f32.mrb[0].mxu0
      %9188 = vmatprep.mubr.bf16.mxu0 %v9079
      %9189 = vmatmul.mubr.bf16.gmra.mrb[0].mxu0 %v8959
      %v9190 = vpop.f32.mrb[0].mxu0
      %v9191 = vadd.f32 %v9004, %v9190
      %v9192 = vpop.f32.mrb[0].mxu0
      %v9193 = vpop.f32.mrb[0].mxu0
      %v9194 = vadd.f32 %v9004, %v9193
      %v9195 = vpop.f32.mrb[0].mxu0
      %9196 = vmatprep.mubr.bf16.mxu0 %v9082
      %9197 = vmatmul.mubr.bf16.gmra.mrb[0].mxu0 %v8961
      %v9198 = vpop.f32.mrb[0].mxu0
      %v9199 = vadd.f32 %v9004, %v9198
      %v9200 = vpop.f32.mrb[0].mxu0
      %v9201 = vpop.f32.mrb[0].mxu0
      %v9202 = vadd.f32 %v9004, %v9201
      %v9203 = vpop.f32.mrb[0].mxu0
      %9204 = vmatprep.mubr.bf16.mxu0 %v9085
      %9205 = vmatmul.mubr.bf16.gmra.mrb[0].mxu0 %v8963
      %v9206 = vpop.f32.mrb[0].mxu0
      %v9207 = vadd.f32 %v9004, %v9206
      %v9208 = vpop.f32.mrb[0].mxu0
      %v9209 = vpop.f32.mrb[0].mxu0
      %v9210 = vadd.f32 %v9004, %v9209
      %v9211 = vpop.f32.mrb[0].mxu0
      %9212 = vmatprep.mubr.bf16.mxu0 %v9088
      %9213 = vmatmul.mubr.bf16.gmra.mrb[0].mxu0 %v8965
      %v9214 = vpop.f32.mrb[0].mxu0
      %v9215 = vadd.f32 %v9004, %v9214
      %v9216 = vpop.f32.mrb[0].mxu0
      %v9217 = vpop.f32.mrb[0].mxu0
      %v9218 = vadd.f32 %v9004, %v9217
      %v9219 = vpop.f32.mrb[0].mxu0
      %9220 = vmatprep.mubr.bf16.mxu0 %v9091
      %9221 = vmatmul.mubr.bf16.gmra.mrb[0].mxu0 %v8967
      %v9222 = vpop.f32.mrb[0].mxu0
      %v9223 = vadd.f32 %v9004, %v9222
      %v9224 = vpop.f32.mrb[0].mxu0
      %v9225 = vpop.f32.mrb[0].mxu0
      %v9226 = vadd.f32 %v9004, %v9225
      %v9227 = vpop.f32.mrb[0].mxu0
      %9228 = vmatprep.mubr.bf16.mxu0 %v9094
      %9229 = vmatmul.mubr.bf16.gmra.mrb[0].mxu0 %v8969
      %v9230 = vpop.f32.mrb[0].mxu0
      %v9231 = vadd.f32 %v9004, %v9230
      %v9232 = vpop.f32.mrb[0].mxu0
      %v9233 = vpop.f32.mrb[0].mxu0
      %v9234 = vadd.f32 %v9004, %v9233
      %v9235 = vpop.f32.mrb[0].mxu0
      %9236 = vmatprep.mubr.bf16.mxu0 %v9097
      %9237 = vmatmul.mubr.bf16.gmra.mrb[0].mxu0 %v8971
      %v9238 = vpop.f32.mrb[0].mxu0
      %v9239 = vadd.f32 %v9004, %v9238
      %v9240 = vpop.f32.mrb[0].mxu0
      %v9241 = vpop.f32.mrb[0].mxu0
      %v9242 = vadd.f32 %v9004, %v9241
      %v9243 = vpop.f32.mrb[0].mxu0
      %9244 = vmatprep.mubr.bf16.mxu0 %v9100
      %9245 = vmatmul.mubr.bf16.gmra.mrb[0].mxu0 %v8973
      %v9246 = vpop.f32.mrb[0].mxu0
      %v9247 = vadd.f32 %v9004, %v9246
      %v9248 = vpop.f32.mrb[0].mxu0
      %v9249 = vpop.f32.mrb[0].mxu0
      %v9250 = vadd.f32 %v9004, %v9249
      %v9251 = vpop.f32.mrb[0].mxu0
      %9252 = vmatprep.mubr.bf16.mxu0 %v9103
      %9253 = vmatmul.mubr.bf16.gmra.mrb[0].mxu0 %v8975
      %v9254 = vpop.f32.mrb[0].mxu0
      %v9255 = vadd.f32 %v9004, %v9254
      %v9256 = vpop.f32.mrb[0].mxu0
      %v9257 = vpop.f32.mrb[0].mxu0
      %v9258 = vadd.f32 %v9004, %v9257
      %v9259 = vpop.f32.mrb[0].mxu0
      %9260 = vmatprep.mubr.bf16.mxu0 %v9106
      %9261 = vmatmul.mubr.bf16.gmra.mrb[0].mxu0 %v8977
      %v9262 = vpop.f32.mrb[0].mxu0
      %v9263 = vadd.f32 %v9004, %v9262
      %v9264 = vpop.f32.mrb[0].mxu0
      %v9265 = vpop.f32.mrb[0].mxu0
      %v9266 = vadd.f32 %v9004, %v9265
      %v9267 = vpop.f32.mrb[0].mxu0
      %9268 = vdwg.mxu0
      %v9269 = vld [vmem:[#allocation3] sm:$0xff]
      %v9270 = vld [vmem:[#allocation3 + $0x8] sm:$0xff]
      %v9271 = vld [vmem:[#allocation3 + $0x10] sm:$0xff]
      %v9272 = vld [vmem:[#allocation3 + $0x18] sm:$0xff]
      %v9273 = vld [vmem:[#allocation3 + $0x20] sm:$0xff]
      %v9274 = vld [vmem:[#allocation3 + $0x28] sm:$0xff]
      %v9275 = vld [vmem:[#allocation3 + $0x30] sm:$0xff]
      %v9276 = vld [vmem:[#allocation3 + $0x38] sm:$0xff]
      %v9277 = vld [vmem:[#allocation3 + $0x40] sm:$0xff]
      %v9278 = vld [vmem:[#allocation3 + $0x48] sm:$0xff]
      %v9279 = vld [vmem:[#allocation3 + $0x50] sm:$0xff]
      %v9280 = vld [vmem:[#allocation3 + $0x58] sm:$0xff]
      %v9281 = vld [vmem:[#allocation3 + $0x60] sm:$0xff]
      %v9282 = vld [vmem:[#allocation3 + $0x68] sm:$0xff]
      %v9283 = vld [vmem:[#allocation3 + $0x70] sm:$0xff]
      %v9284 = vld [vmem:[#allocation3 + $0x78] sm:$0xff]
      %v9285 = vld [vmem:[#allocation3 + $0x80] sm:$0xff]
      %v9286 = vld [vmem:[#allocation3 + $0x88] sm:$0xff]
      %v9287 = vld [vmem:[#allocation3 + $0x90] sm:$0xff]
      %v9288 = vld [vmem:[#allocation3 + $0x98] sm:$0xff]
      %v9289 = vld [vmem:[#allocation3 + $0xa0] sm:$0xff]
      %v9290 = vld [vmem:[#allocation3 + $0xa8] sm:$0xff]
      %v9291 = vld [vmem:[#allocation3 + $0xb0] sm:$0xff]
      %v9292 = vld [vmem:[#allocation3 + $0xb8] sm:$0xff]
      %v9293 = vld [vmem:[#allocation3 + $0xc0] sm:$0xff]
      %v9294 = vld [vmem:[#allocation3 + $0xc8] sm:$0xff]
      %v9295 = vld [vmem:[#allocation3 + $0xd0] sm:$0xff]
      %v9296 = vld [vmem:[#allocation3 + $0xd8] sm:$0xff]
      %v9297 = vld [vmem:[#allocation3 + $0xe0] sm:$0xff]
      %v9298 = vld [vmem:[#allocation3 + $0xe8] sm:$0xff]
      %v9299 = vld [vmem:[#allocation3 + $0xf0] sm:$0xff]
      %v9300 = vld [vmem:[#allocation3 + $0xf8] sm:$0xff]
      %v9301 = vadd.f32 %v9269, %v9143
      %v9302 = vadd.f32 %v9270, %v9146
      %v9303 = vadd.f32 %v9271, %v9151
      %v9304 = vadd.f32 %v9272, %v9154
      %v9305 = vadd.f32 %v9273, %v9159
      %v9306 = vadd.f32 %v9274, %v9162
      %v9307 = vadd.f32 %v9275, %v9167
      %v9308 = vadd.f32 %v9276, %v9170
      %v9309 = vadd.f32 %v9277, %v9175
      %v9310 = vadd.f32 %v9278, %v9178
      %v9311 = vadd.f32 %v9279, %v9183
      %v9312 = vadd.f32 %v9280, %v9186
      %v9313 = vadd.f32 %v9281, %v9191
      %v9314 = vadd.f32 %v9282, %v9194
      %v9315 = vadd.f32 %v9283, %v9199
      %v9316 = vadd.f32 %v9284, %v9202
      %v9317 = vadd.f32 %v9285, %v9207
      %v9318 = vadd.f32 %v9286, %v9210
      %v9319 = vadd.f32 %v9287, %v9215
      %v9320 = vadd.f32 %v9288, %v9218
      %v9321 = vadd.f32 %v9289, %v9223
      %v9322 = vadd.f32 %v9290, %v9226
      %v9323 = vadd.f32 %v9291, %v9231
      %v9324 = vadd.f32 %v9292, %v9234
      %v9325 = vadd.f32 %v9293, %v9239
      %v9326 = vadd.f32 %v9294, %v9242
      %v9327 = vadd.f32 %v9295, %v9247
      %v9328 = vadd.f32 %v9296, %v9250
      %v9329 = vadd.f32 %v9297, %v9255
      %v9330 = vadd.f32 %v9298, %v9258
      %v9331 = vadd.f32 %v9299, %v9263
      %v9332 = vadd.f32 %v9300, %v9266
      %9333 = vst.msk [vmem:[#allocation3] sm:$0xff] %vm172, %v9301
      %9334 = vst.msk [vmem:[#allocation3 + $0x8] sm:$0xff] %vm172, %v9302
      %9335 = vst.msk [vmem:[#allocation3 + $0x10] sm:$0xff] %vm172, %v9303
      %9336 = vst.msk [vmem:[#allocation3 + $0x18] sm:$0xff] %vm172, %v9304
      %9337 = vst.msk [vmem:[#allocation3 + $0x20] sm:$0xff] %vm172, %v9305
      %9338 = vst.msk [vmem:[#allocation3 + $0x28] sm:$0xff] %vm172, %v9306
      %9339 = vst.msk [vmem:[#allocation3 + $0x30] sm:$0xff] %vm172, %v9307
      %9340 = vst.msk [vmem:[#allocation3 + $0x38] sm:$0xff] %vm172, %v9308
      %9341 = vst.msk [vmem:[#allocation3 + $0x40] sm:$0xff] %vm172, %v9309
      %9342 = vst.msk [vmem:[#allocation3 + $0x48] sm:$0xff] %vm172, %v9310
      %9343 = vst.msk [vmem:[#allocation3 + $0x50] sm:$0xff] %vm172, %v9311
      %9344 = vst.msk [vmem:[#allocation3 + $0x58] sm:$0xff] %vm172, %v9312
      %9345 = vst.msk [vmem:[#allocation3 + $0x60] sm:$0xff] %vm172, %v9313
      %9346 = vst.msk [vmem:[#allocation3 + $0x68] sm:$0xff] %vm172, %v9314
      %9347 = vst.msk [vmem:[#allocation3 + $0x70] sm:$0xff] %vm172, %v9315
      %9348 = vst.msk [vmem:[#allocation3 + $0x78] sm:$0xff] %vm172, %v9316
      %9349 = vst.msk [vmem:[#allocation3 + $0x80] sm:$0xff] %vm172, %v9317
      %9350 = vst.msk [vmem:[#allocation3 + $0x88] sm:$0xff] %vm172, %v9318
      %9351 = vst.msk [vmem:[#allocation3 + $0x90] sm:$0xff] %vm172, %v9319
      %9352 = vst.msk [vmem:[#allocation3 + $0x98] sm:$0xff] %vm172, %v9320
      %9353 = vst.msk [vmem:[#allocation3 + $0xa0] sm:$0xff] %vm172, %v9321
      %9354 = vst.msk [vmem:[#allocation3 + $0xa8] sm:$0xff] %vm172, %v9322
      %9355 = vst.msk [vmem:[#allocation3 + $0xb0] sm:$0xff] %vm172, %v9323
      %9356 = vst.msk [vmem:[#allocation3 + $0xb8] sm:$0xff] %vm172, %v9324
      %9357 = vst.msk [vmem:[#allocation3 + $0xc0] sm:$0xff] %vm172, %v9325
      %9358 = vst.msk [vmem:[#allocation3 + $0xc8] sm:$0xff] %vm172, %v9326
      %9359 = vst.msk [vmem:[#allocation3 + $0xd0] sm:$0xff] %vm172, %v9327
      %9360 = vst.msk [vmem:[#allocation3 + $0xd8] sm:$0xff] %vm172, %v9328
      %9361 = vst.msk [vmem:[#allocation3 + $0xe0] sm:$0xff] %vm172, %v9329
      %9362 = vst.msk [vmem:[#allocation3 + $0xe8] sm:$0xff] %vm172, %v9330
      %9363 = vst.msk [vmem:[#allocation3 + $0xf0] sm:$0xff] %vm172, %v9331
      %9364 = vst.msk [vmem:[#allocation3 + $0xf8] sm:$0xff] %vm172, %v9332
      %9365 = vst.msk [vmem:[%s260 + $0x1] sm:$0xff] %vm172, %v9301
      %9366 = vst.msk [vmem:[%s260 + $0x9] sm:$0xff] %vm172, %v9302
      %9367 = vst.msk [vmem:[%s260 + $0x19] sm:$0xff] %vm172, %v9303
      %9368 = vst.msk [vmem:[%s260 + $0x21] sm:$0xff] %vm172, %v9304
      %9369 = vst.msk [vmem:[%s260 + $0x31] sm:$0xff] %vm172, %v9305
      %9370 = vst.msk [vmem:[%s260 + $0x39] sm:$0xff] %vm172, %v9306
      %9371 = vst.msk [vmem:[%s260 + $0x49] sm:$0xff] %vm172, %v9307
      %9372 = vst.msk [vmem:[%s260 + $0x51] sm:$0xff] %vm172, %v9308
      %9373 = vst.msk [vmem:[%s260 + $0x61] sm:$0xff] %vm172, %v9309
      %9374 = vst.msk [vmem:[%s260 + $0x69] sm:$0xff] %vm172, %v9310
      %9375 = vst.msk [vmem:[%s260 + $0x79] sm:$0xff] %vm172, %v9311
      %9376 = vst.msk [vmem:[%s260 + $0x81] sm:$0xff] %vm172, %v9312
      %9377 = vst.msk [vmem:[%s260 + $0x91] sm:$0xff] %vm172, %v9313
      %9378 = vst.msk [vmem:[%s260 + $0x99] sm:$0xff] %vm172, %v9314
      %9379 = vst.msk [vmem:[%s260 + $0xa9] sm:$0xff] %vm172, %v9315
      %9380 = vst.msk [vmem:[%s260 + $0xb1] sm:$0xff] %vm172, %v9316
      %9381 = vst.msk [vmem:[%s260 + $0xc1] sm:$0xff] %vm172, %v9317
      %9382 = vst.msk [vmem:[%s260 + $0xc9] sm:$0xff] %vm172, %v9318
      %9383 = vst.msk [vmem:[%s260 + $0xd9] sm:$0xff] %vm172, %v9319
      %9384 = vst.msk [vmem:[%s260 + $0xe1] sm:$0xff] %vm172, %v9320
      %9385 = vst.msk [vmem:[%s260 + $0xf1] sm:$0xff] %vm172, %v9321
      %9386 = vst.msk [vmem:[%s260 + $0xf9] sm:$0xff] %vm172, %v9322
      %9387 = vst.msk [vmem:[%s260 + $0x109] sm:$0xff] %vm172, %v9323
      %9388 = vst.msk [vmem:[%s260 + $0x111] sm:$0xff] %vm172, %v9324
      %9389 = vst.msk [vmem:[%s260 + $0x121] sm:$0xff] %vm172, %v9325
      %9390 = vst.msk [vmem:[%s260 + $0x129] sm:$0xff] %vm172, %v9326
      %9391 = vst.msk [vmem:[%s260 + $0x139] sm:$0xff] %vm172, %v9327
      %9392 = vst.msk [vmem:[%s260 + $0x141] sm:$0xff] %vm172, %v9328
      %9393 = vst.msk [vmem:[%s260 + $0x151] sm:$0xff] %vm172, %v9329
      %9394 = vst.msk [vmem:[%s260 + $0x159] sm:$0xff] %vm172, %v9330
      %9395 = vst.msk [vmem:[%s260 + $0x169] sm:$0xff] %vm172, %v9331
      %9396 = vst.msk [vmem:[%s260 + $0x171] sm:$0xff] %vm172, %v9332
      %v9397 = vld [vmem:[#allocation2] sm:$0xff]
      %v9398 = vld [vmem:[#allocation2 + $0x8] sm:$0xff]
      %v9399 = vld [vmem:[#allocation2 + $0x18] sm:$0xff]
      %v9400 = vld [vmem:[#allocation2 + $0x20] sm:$0xff]
      %v9401 = vld [vmem:[#allocation2 + $0x30] sm:$0xff]
      %v9402 = vld [vmem:[#allocation2 + $0x38] sm:$0xff]
      %v9403 = vld [vmem:[#allocation2 + $0x48] sm:$0xff]
      %v9404 = vld [vmem:[#allocation2 + $0x50] sm:$0xff]
      %v9405 = vld [vmem:[#allocation2 + $0x60] sm:$0xff]
      %v9406 = vld [vmem:[#allocation2 + $0x68] sm:$0xff]
      %v9407 = vld [vmem:[#allocation2 + $0x78] sm:$0xff]
      %v9408 = vld [vmem:[#allocation2 + $0x80] sm:$0xff]
      %v9409 = vld [vmem:[#allocation2 + $0x90] sm:$0xff]
      %v9410 = vld [vmem:[#allocation2 + $0x98] sm:$0xff]
      %v9411 = vld [vmem:[#allocation2 + $0xa8] sm:$0xff]
      %v9412 = vld [vmem:[#allocation2 + $0xb0] sm:$0xff]
      %v9413 = vld [vmem:[#allocation2 + $0xc0] sm:$0xff]
      %v9414 = vld [vmem:[#allocation2 + $0xc8] sm:$0xff]
      %v9415 = vld [vmem:[#allocation2 + $0xd8] sm:$0xff]
      %v9416 = vld [vmem:[#allocation2 + $0xe0] sm:$0xff]
      %v9417 = vld [vmem:[#allocation2 + $0xf0] sm:$0xff]
      %v9418 = vld [vmem:[#allocation2 + $0xf8] sm:$0xff]
      %v9419 = vld [vmem:[#allocation2 + $0x108] sm:$0xff]
      %v9420 = vld [vmem:[#allocation2 + $0x110] sm:$0xff]
      %v9421 = vld [vmem:[#allocation2 + $0x120] sm:$0xff]
      %v9422 = vld [vmem:[#allocation2 + $0x128] sm:$0xff]
      %v9423 = vld [vmem:[#allocation2 + $0x138] sm:$0xff]
      %v9424 = vld [vmem:[#allocation2 + $0x140] sm:$0xff]
      %v9425 = vld [vmem:[#allocation2 + $0x150] sm:$0xff]
      %v9426 = vld [vmem:[#allocation2 + $0x158] sm:$0xff]
      %v9427 = vld [vmem:[#allocation2 + $0x168] sm:$0xff]
      %v9428 = vld [vmem:[#allocation2 + $0x170] sm:$0xff]
      %v9429 = vld [vmem:[#allocation2 + $0x1] sm:$0xff]
      %v9430 = vld [vmem:[#allocation2 + $0x9] sm:$0xff]
      %v9431 = vld [vmem:[#allocation2 + $0x19] sm:$0xff]
      %v9432 = vld [vmem:[#allocation2 + $0x21] sm:$0xff]
      %v9433 = vld [vmem:[#allocation2 + $0x31] sm:$0xff]
      %v9434 = vld [vmem:[#allocation2 + $0x39] sm:$0xff]
      %v9435 = vld [vmem:[#allocation2 + $0x49] sm:$0xff]
      %v9436 = vld [vmem:[#allocation2 + $0x51] sm:$0xff]
      %v9437 = vld [vmem:[#allocation2 + $0x61] sm:$0xff]
      %v9438 = vld [vmem:[#allocation2 + $0x69] sm:$0xff]
      %v9439 = vld [vmem:[#allocation2 + $0x79] sm:$0xff]
      %v9440 = vld [vmem:[#allocation2 + $0x81] sm:$0xff]
      %v9441 = vld [vmem:[#allocation2 + $0x91] sm:$0xff]
      %v9442 = vld [vmem:[#allocation2 + $0x99] sm:$0xff]
      %v9443 = vld [vmem:[#allocation2 + $0xa9] sm:$0xff]
      %v9444 = vld [vmem:[#allocation2 + $0xb1] sm:$0xff]
      %v9445 = vld [vmem:[#allocation2 + $0xc1] sm:$0xff]
      %v9446 = vld [vmem:[#allocation2 + $0xc9] sm:$0xff]
      %v9447 = vld [vmem:[#allocation2 + $0xd9] sm:$0xff]
      %v9448 = vld [vmem:[#allocation2 + $0xe1] sm:$0xff]
      %v9449 = vld [vmem:[#allocation2 + $0xf1] sm:$0xff]
      %v9450 = vld [vmem:[#allocation2 + $0xf9] sm:$0xff]
      %v9451 = vld [vmem:[#allocation2 + $0x109] sm:$0xff]
      %v9452 = vld [vmem:[#allocation2 + $0x111] sm:$0xff]
      %v9453 = vld [vmem:[#allocation2 + $0x121] sm:$0xff]
      %v9454 = vld [vmem:[#allocation2 + $0x129] sm:$0xff]
      %v9455 = vld [vmem:[#allocation2 + $0x139] sm:$0xff]
      %v9456 = vld [vmem:[#allocation2 + $0x141] sm:$0xff]
      %v9457 = vld [vmem:[#allocation2 + $0x151] sm:$0xff]
      %v9458 = vld [vmem:[#allocation2 + $0x159] sm:$0xff]
      %v9459 = vld [vmem:[#allocation2 + $0x169] sm:$0xff]
      %v9460 = vld [vmem:[#allocation2 + $0x171] sm:$0xff]
      %v9461 = vld [vmem:[#allocation2 + $0x2] sm:$0xff]
      %v9462 = vld [vmem:[#allocation2 + $0xa] sm:$0xff]
      %v9463 = vld [vmem:[#allocation2 + $0x1a] sm:$0xff]
      %v9464 = vld [vmem:[#allocation2 + $0x22] sm:$0xff]
      %v9465 = vld [vmem:[#allocation2 + $0x32] sm:$0xff]
      %v9466 = vld [vmem:[#allocation2 + $0x3a] sm:$0xff]
      %v9467 = vld [vmem:[#allocation2 + $0x4a] sm:$0xff]
      %v9468 = vld [vmem:[#allocation2 + $0x52] sm:$0xff]
      %v9469 = vld [vmem:[#allocation2 + $0x62] sm:$0xff]
      %v9470 = vld [vmem:[#allocation2 + $0x6a] sm:$0xff]
      %v9471 = vld [vmem:[#allocation2 + $0x7a] sm:$0xff]
      %v9472 = vld [vmem:[#allocation2 + $0x82] sm:$0xff]
      %v9473 = vld [vmem:[#allocation2 + $0x92] sm:$0xff]
      %v9474 = vld [vmem:[#allocation2 + $0x9a] sm:$0xff]
      %v9475 = vld [vmem:[#allocation2 + $0xaa] sm:$0xff]
      %v9476 = vld [vmem:[#allocation2 + $0xb2] sm:$0xff]
      %v9477 = vld [vmem:[#allocation2 + $0xc2] sm:$0xff]
      %v9478 = vld [vmem:[#allocation2 + $0xca] sm:$0xff]
      %v9479 = vld [vmem:[#allocation2 + $0xda] sm:$0xff]
      %v9480 = vld [vmem:[#allocation2 + $0xe2] sm:$0xff]
      %v9481 = vld [vmem:[#allocation2 + $0xf2] sm:$0xff]
      %v9482 = vld [vmem:[#allocation2 + $0xfa] sm:$0xff]
      %v9483 = vld [vmem:[#allocation2 + $0x10a] sm:$0xff]
      %v9484 = vld [vmem:[#allocation2 + $0x112] sm:$0xff]
      %v9485 = vld [vmem:[#allocation2 + $0x122] sm:$0xff]
      %v9486 = vld [vmem:[#allocation2 + $0x12a] sm:$0xff]
      %v9487 = vld [vmem:[#allocation2 + $0x13a] sm:$0xff]
      %v9488 = vld [vmem:[#allocation2 + $0x142] sm:$0xff]
      %v9489 = vld [vmem:[#allocation2 + $0x152] sm:$0xff]
      %v9490 = vld [vmem:[#allocation2 + $0x15a] sm:$0xff]
      %v9491 = vld [vmem:[#allocation2 + $0x16a] sm:$0xff]
      %v9492 = vld [vmem:[#allocation2 + $0x172] sm:$0xff]
      %v9493 = vld [vmem:[%s260] sm:$0xff]
      %v9494 = vld [vmem:[%s260 + $0x8] sm:$0xff]
      %v9495 = vld [vmem:[%s260 + $0x18] sm:$0xff]
      %v9496 = vld [vmem:[%s260 + $0x20] sm:$0xff]
      %v9497 = vld [vmem:[%s260 + $0x30] sm:$0xff]
      %v9498 = vld [vmem:[%s260 + $0x38] sm:$0xff]
      %v9499 = vld [vmem:[%s260 + $0x48] sm:$0xff]
      %v9500 = vld [vmem:[%s260 + $0x50] sm:$0xff]
      %v9501 = vld [vmem:[%s260 + $0x60] sm:$0xff]
      %v9502 = vld [vmem:[%s260 + $0x68] sm:$0xff]
      %v9503 = vld [vmem:[%s260 + $0x78] sm:$0xff]
      %v9504 = vld [vmem:[%s260 + $0x80] sm:$0xff]
      %v9505 = vld [vmem:[%s260 + $0x90] sm:$0xff]
      %v9506 = vld [vmem:[%s260 + $0x98] sm:$0xff]
      %v9507 = vld [vmem:[%s260 + $0xa8] sm:$0xff]
      %v9508 = vld [vmem:[%s260 + $0xb0] sm:$0xff]
      %v9509 = vld [vmem:[%s260 + $0xc0] sm:$0xff]
      %v9510 = vld [vmem:[%s260 + $0xc8] sm:$0xff]
      %v9511 = vld [vmem:[%s260 + $0xd8] sm:$0xff]
      %v9512 = vld [vmem:[%s260 + $0xe0] sm:$0xff]
      %v9513 = vld [vmem:[%s260 + $0xf0] sm:$0xff]
      %v9514 = vld [vmem:[%s260 + $0xf8] sm:$0xff]
      %v9515 = vld [vmem:[%s260 + $0x108] sm:$0xff]
      %v9516 = vld [vmem:[%s260 + $0x110] sm:$0xff]
      %v9517 = vld [vmem:[%s260 + $0x120] sm:$0xff]
      %v9518 = vld [vmem:[%s260 + $0x128] sm:$0xff]
      %v9519 = vld [vmem:[%s260 + $0x138] sm:$0xff]
      %v9520 = vld [vmem:[%s260 + $0x140] sm:$0xff]
      %v9521 = vld [vmem:[%s260 + $0x150] sm:$0xff]
      %v9522 = vld [vmem:[%s260 + $0x158] sm:$0xff]
      %v9523 = vld [vmem:[%s260 + $0x168] sm:$0xff]
      %v9524 = vld [vmem:[%s260 + $0x170] sm:$0xff]
      %v9525 = vld [vmem:[%s260 + $0x1] sm:$0xff]
      %v9526 = vld [vmem:[%s260 + $0x9] sm:$0xff]
      %v9527 = vld [vmem:[%s260 + $0x19] sm:$0xff]
      %v9528 = vld [vmem:[%s260 + $0x21] sm:$0xff]
      %v9529 = vld [vmem:[%s260 + $0x31] sm:$0xff]
      %v9530 = vld [vmem:[%s260 + $0x39] sm:$0xff]
      %v9531 = vld [vmem:[%s260 + $0x49] sm:$0xff]
      %v9532 = vld [vmem:[%s260 + $0x51] sm:$0xff]
      %v9533 = vld [vmem:[%s260 + $0x61] sm:$0xff]
      %v9534 = vld [vmem:[%s260 + $0x69] sm:$0xff]
      %v9535 = vld [vmem:[%s260 + $0x79] sm:$0xff]
      %v9536 = vld [vmem:[%s260 + $0x81] sm:$0xff]
      %v9537 = vld [vmem:[%s260 + $0x91] sm:$0xff]
      %v9538 = vld [vmem:[%s260 + $0x99] sm:$0xff]
      %v9539 = vld [vmem:[%s260 + $0xa9] sm:$0xff]
      %v9540 = vld [vmem:[%s260 + $0xb1] sm:$0xff]
      %v9541 = vld [vmem:[%s260 + $0xc1] sm:$0xff]
      %v9542 = vld [vmem:[%s260 + $0xc9] sm:$0xff]
      %v9543 = vld [vmem:[%s260 + $0xd9] sm:$0xff]
      %v9544 = vld [vmem:[%s260 + $0xe1] sm:$0xff]
      %v9545 = vld [vmem:[%s260 + $0xf1] sm:$0xff]
      %v9546 = vld [vmem:[%s260 + $0xf9] sm:$0xff]
      %v9547 = vld [vmem:[%s260 + $0x109] sm:$0xff]
      %v9548 = vld [vmem:[%s260 + $0x111] sm:$0xff]
      %v9549 = vld [vmem:[%s260 + $0x121] sm:$0xff]
      %v9550 = vld [vmem:[%s260 + $0x129] sm:$0xff]
      %v9551 = vld [vmem:[%s260 + $0x139] sm:$0xff]
      %v9552 = vld [vmem:[%s260 + $0x141] sm:$0xff]
      %v9553 = vld [vmem:[%s260 + $0x151] sm:$0xff]
      %v9554 = vld [vmem:[%s260 + $0x159] sm:$0xff]
      %v9555 = vld [vmem:[%s260 + $0x169] sm:$0xff]
      %v9556 = vld [vmem:[%s260 + $0x171] sm:$0xff]
      %v9557 = vld [vmem:[%s260 + $0x2] sm:$0xff]
      %v9558 = vld [vmem:[%s260 + $0xa] sm:$0xff]
      %v9559 = vld [vmem:[%s260 + $0x1a] sm:$0xff]
      %v9560 = vld [vmem:[%s260 + $0x22] sm:$0xff]
      %v9561 = vld [vmem:[%s260 + $0x32] sm:$0xff]
      %v9562 = vld [vmem:[%s260 + $0x3a] sm:$0xff]
      %v9563 = vld [vmem:[%s260 + $0x4a] sm:$0xff]
      %v9564 = vld [vmem:[%s260 + $0x52] sm:$0xff]
      %v9565 = vld [vmem:[%s260 + $0x62] sm:$0xff]
      %v9566 = vld [vmem:[%s260 + $0x6a] sm:$0xff]
      %v9567 = vld [vmem:[%s260 + $0x7a] sm:$0xff]
      %v9568 = vld [vmem:[%s260 + $0x82] sm:$0xff]
      %v9569 = vld [vmem:[%s260 + $0x92] sm:$0xff]
      %v9570 = vld [vmem:[%s260 + $0x9a] sm:$0xff]
      %v9571 = vld [vmem:[%s260 + $0xaa] sm:$0xff]
      %v9572 = vld [vmem:[%s260 + $0xb2] sm:$0xff]
      %v9573 = vld [vmem:[%s260 + $0xc2] sm:$0xff]
      %v9574 = vld [vmem:[%s260 + $0xca] sm:$0xff]
      %v9575 = vld [vmem:[%s260 + $0xda] sm:$0xff]
      %v9576 = vld [vmem:[%s260 + $0xe2] sm:$0xff]
      %v9577 = vld [vmem:[%s260 + $0xf2] sm:$0xff]
      %v9578 = vld [vmem:[%s260 + $0xfa] sm:$0xff]
      %v9579 = vld [vmem:[%s260 + $0x10a] sm:$0xff]
      %v9580 = vld [vmem:[%s260 + $0x112] sm:$0xff]
      %v9581 = vld [vmem:[%s260 + $0x122] sm:$0xff]
      %v9582 = vld [vmem:[%s260 + $0x12a] sm:$0xff]
      %v9583 = vld [vmem:[%s260 + $0x13a] sm:$0xff]
      %v9584 = vld [vmem:[%s260 + $0x142] sm:$0xff]
      %v9585 = vld [vmem:[%s260 + $0x152] sm:$0xff]
      %v9586 = vld [vmem:[%s260 + $0x15a] sm:$0xff]
      %v9587 = vld [vmem:[%s260 + $0x16a] sm:$0xff]
      %v9588 = vld [vmem:[%s260 + $0x172] sm:$0xff]
      %v9589 = vld [vmem:[%s486] sm:$0xff]
      %v9590 = vld [vmem:[%s486 + $0x8] sm:$0xff]
      %v9591 = vld [vmem:[%s486 + $0x18] sm:$0xff]
      %v9592 = vld [vmem:[%s486 + $0x20] sm:$0xff]
      %v9593 = vld [vmem:[%s486 + $0x30] sm:$0xff]
      %v9594 = vld [vmem:[%s486 + $0x38] sm:$0xff]
      %v9595 = vld [vmem:[%s486 + $0x48] sm:$0xff]
      %v9596 = vld [vmem:[%s486 + $0x50] sm:$0xff]
      %v9597 = vld [vmem:[%s486 + $0x60] sm:$0xff]
      %v9598 = vld [vmem:[%s486 + $0x68] sm:$0xff]
      %v9599 = vld [vmem:[%s486 + $0x78] sm:$0xff]
      %v9600 = vld [vmem:[%s486 + $0x80] sm:$0xff]
      %v9601 = vld [vmem:[%s486 + $0x90] sm:$0xff]
      %v9602 = vld [vmem:[%s486 + $0x98] sm:$0xff]
      %v9603 = vld [vmem:[%s486 + $0xa8] sm:$0xff]
      %v9604 = vld [vmem:[%s486 + $0xb0] sm:$0xff]
      %v9605 = vld [vmem:[%s486 + $0xc0] sm:$0xff]
      %v9606 = vld [vmem:[%s486 + $0xc8] sm:$0xff]
      %v9607 = vld [vmem:[%s486 + $0xd8] sm:$0xff]
      %v9608 = vld [vmem:[%s486 + $0xe0] sm:$0xff]
      %v9609 = vld [vmem:[%s486 + $0xf0] sm:$0xff]
      %v9610 = vld [vmem:[%s486 + $0xf8] sm:$0xff]
      %v9611 = vld [vmem:[%s486 + $0x108] sm:$0xff]
      %v9612 = vld [vmem:[%s486 + $0x110] sm:$0xff]
      %v9613 = vld [vmem:[%s486 + $0x120] sm:$0xff]
      %v9614 = vld [vmem:[%s486 + $0x128] sm:$0xff]
      %v9615 = vld [vmem:[%s486 + $0x138] sm:$0xff]
      %v9616 = vld [vmem:[%s486 + $0x140] sm:$0xff]
      %v9617 = vld [vmem:[%s486 + $0x150] sm:$0xff]
      %v9618 = vld [vmem:[%s486 + $0x158] sm:$0xff]
      %v9619 = vld [vmem:[%s486 + $0x168] sm:$0xff]
      %v9620 = vld [vmem:[%s486 + $0x170] sm:$0xff]
      %v9621 = vld [vmem:[%s486 + $0x1] sm:$0xff]
      %v9622 = vld [vmem:[%s486 + $0x9] sm:$0xff]
      %v9623 = vld [vmem:[%s486 + $0x19] sm:$0xff]
      %v9624 = vld [vmem:[%s486 + $0x21] sm:$0xff]
      %v9625 = vld [vmem:[%s486 + $0x31] sm:$0xff]
      %v9626 = vld [vmem:[%s486 + $0x39] sm:$0xff]
      %v9627 = vld [vmem:[%s486 + $0x49] sm:$0xff]
      %v9628 = vld [vmem:[%s486 + $0x51] sm:$0xff]
      %v9629 = vld [vmem:[%s486 + $0x61] sm:$0xff]
      %v9630 = vld [vmem:[%s486 + $0x69] sm:$0xff]
      %v9631 = vld [vmem:[%s486 + $0x79] sm:$0xff]
      %v9632 = vld [vmem:[%s486 + $0x81] sm:$0xff]
      %v9633 = vld [vmem:[%s486 + $0x91] sm:$0xff]
      %v9634 = vld [vmem:[%s486 + $0x99] sm:$0xff]
      %v9635 = vld [vmem:[%s486 + $0xa9] sm:$0xff]
      %v9636 = vld [vmem:[%s486 + $0xb1] sm:$0xff]
      %v9637 = vld [vmem:[%s486 + $0xc1] sm:$0xff]
      %v9638 = vld [vmem:[%s486 + $0xc9] sm:$0xff]
      %v9639 = vld [vmem:[%s486 + $0xd9] sm:$0xff]
      %v9640 = vld [vmem:[%s486 + $0xe1] sm:$0xff]
      %v9641 = vld [vmem:[%s486 + $0xf1] sm:$0xff]
      %v9642 = vld [vmem:[%s486 + $0xf9] sm:$0xff]
      %v9643 = vld [vmem:[%s486 + $0x109] sm:$0xff]
      %v9644 = vld [vmem:[%s486 + $0x111] sm:$0xff]
      %v9645 = vld [vmem:[%s486 + $0x121] sm:$0xff]
      %v9646 = vld [vmem:[%s486 + $0x129] sm:$0xff]
      %v9647 = vld [vmem:[%s486 + $0x139] sm:$0xff]
      %v9648 = vld [vmem:[%s486 + $0x141] sm:$0xff]
      %v9649 = vld [vmem:[%s486 + $0x151] sm:$0xff]
      %v9650 = vld [vmem:[%s486 + $0x159] sm:$0xff]
      %v9651 = vld [vmem:[%s486 + $0x169] sm:$0xff]
      %v9652 = vld [vmem:[%s486 + $0x171] sm:$0xff]
      %v9653 = vld [vmem:[%s486 + $0x2] sm:$0xff]
      %v9654 = vld [vmem:[%s486 + $0xa] sm:$0xff]
      %v9655 = vld [vmem:[%s486 + $0x1a] sm:$0xff]
      %v9656 = vld [vmem:[%s486 + $0x22] sm:$0xff]
      %v9657 = vld [vmem:[%s486 + $0x32] sm:$0xff]
      %v9658 = vld [vmem:[%s486 + $0x3a] sm:$0xff]
      %v9659 = vld [vmem:[%s486 + $0x4a] sm:$0xff]
      %v9660 = vld [vmem:[%s486 + $0x52] sm:$0xff]
      %v9661 = vld [vmem:[%s486 + $0x62] sm:$0xff]
      %v9662 = vld [vmem:[%s486 + $0x6a] sm:$0xff]
      %v9663 = vld [vmem:[%s486 + $0x7a] sm:$0xff]
      %v9664 = vld [vmem:[%s486 + $0x82] sm:$0xff]
      %v9665 = vld [vmem:[%s486 + $0x92] sm:$0xff]
      %v9666 = vld [vmem:[%s486 + $0x9a] sm:$0xff]
      %v9667 = vld [vmem:[%s486 + $0xaa] sm:$0xff]
      %v9668 = vld [vmem:[%s486 + $0xb2] sm:$0xff]
      %v9669 = vld [vmem:[%s486 + $0xc2] sm:$0xff]
      %v9670 = vld [vmem:[%s486 + $0xca] sm:$0xff]
      %v9671 = vld [vmem:[%s486 + $0xda] sm:$0xff]
      %v9672 = vld [vmem:[%s486 + $0xe2] sm:$0xff]
      %v9673 = vld [vmem:[%s486 + $0xf2] sm:$0xff]
      %v9674 = vld [vmem:[%s486 + $0xfa] sm:$0xff]
      %v9675 = vld [vmem:[%s486 + $0x10a] sm:$0xff]
      %v9676 = vld [vmem:[%s486 + $0x112] sm:$0xff]
      %v9677 = vld [vmem:[%s486 + $0x122] sm:$0xff]
      %v9678 = vld [vmem:[%s486 + $0x12a] sm:$0xff]
      %v9679 = vld [vmem:[%s486 + $0x13a] sm:$0xff]
      %v9680 = vld [vmem:[%s486 + $0x142] sm:$0xff]
      %v9681 = vld [vmem:[%s486 + $0x152] sm:$0xff]
      %v9682 = vld [vmem:[%s486 + $0x15a] sm:$0xff]
      %v9683 = vld [vmem:[%s486 + $0x16a] sm:$0xff]
      %v9684 = vld [vmem:[%s486 + $0x172] sm:$0xff]
      %9717 = vrot.lane.b32.xlu0 %v9429, 16
      %v9718 = vpop.permute.xlu0 %9717
      %9719 = vrot.lane.b32.xlu0 %v9430, 16
      %v9720 = vpop.permute.xlu0 %9719
      %9721 = vrot.lane.b32.xlu0 %v9431, 16
      %v9722 = vpop.permute.xlu0 %9721
      %9723 = vrot.lane.b32.xlu0 %v9432, 16
      %v9724 = vpop.permute.xlu0 %9723
      %9725 = vrot.lane.b32.xlu0 %v9433, 16
      %v9726 = vpop.permute.xlu0 %9725
      %9727 = vrot.lane.b32.xlu0 %v9434, 16
      %v9728 = vpop.permute.xlu0 %9727
      %9729 = vrot.lane.b32.xlu0 %v9435, 16
      %v9730 = vpop.permute.xlu0 %9729
      %9731 = vrot.lane.b32.xlu0 %v9436, 16
      %v9732 = vpop.permute.xlu0 %9731
      %9733 = vrot.lane.b32.xlu0 %v9437, 16
      %v9734 = vpop.permute.xlu0 %9733
      %9735 = vrot.lane.b32.xlu0 %v9438, 16
      %v9736 = vpop.permute.xlu0 %9735
      %9737 = vrot.lane.b32.xlu0 %v9439, 16
      %v9738 = vpop.permute.xlu0 %9737
      %9739 = vrot.lane.b32.xlu0 %v9440, 16
      %v9740 = vpop.permute.xlu0 %9739
      %9741 = vrot.lane.b32.xlu0 %v9441, 16
      %v9742 = vpop.permute.xlu0 %9741
      %9743 = vrot.lane.b32.xlu0 %v9442, 16
      %v9744 = vpop.permute.xlu0 %9743
      %9745 = vrot.lane.b32.xlu0 %v9443, 16
      %v9746 = vpop.permute.xlu0 %9745
      %9747 = vrot.lane.b32.xlu0 %v9444, 16
      %v9748 = vpop.permute.xlu0 %9747
      %9749 = vrot.lane.b32.xlu0 %v9445, 16
      %v9750 = vpop.permute.xlu0 %9749
      %9751 = vrot.lane.b32.xlu0 %v9446, 16
      %v9752 = vpop.permute.xlu0 %9751
      %9753 = vrot.lane.b32.xlu0 %v9447, 16
      %v9754 = vpop.permute.xlu0 %9753
      %9755 = vrot.lane.b32.xlu0 %v9448, 16
      %v9756 = vpop.permute.xlu0 %9755
      %9757 = vrot.lane.b32.xlu0 %v9449, 16
      %v9758 = vpop.permute.xlu0 %9757
      %9759 = vrot.lane.b32.xlu0 %v9450, 16
      %v9760 = vpop.permute.xlu0 %9759
      %9761 = vrot.lane.b32.xlu0 %v9451, 16
      %v9762 = vpop.permute.xlu0 %9761
      %9763 = vrot.lane.b32.xlu0 %v9452, 16
      %v9764 = vpop.permute.xlu0 %9763
      %9765 = vrot.lane.b32.xlu0 %v9453, 16
      %v9766 = vpop.permute.xlu0 %9765
      %9767 = vrot.lane.b32.xlu0 %v9454, 16
      %v9768 = vpop.permute.xlu0 %9767
      %9769 = vrot.lane.b32.xlu0 %v9455, 16
      %v9770 = vpop.permute.xlu0 %9769
      %9771 = vrot.lane.b32.xlu0 %v9456, 16
      %v9772 = vpop.permute.xlu0 %9771
      %9773 = vrot.lane.b32.xlu0 %v9457, 16
      %v9774 = vpop.permute.xlu0 %9773
      %9775 = vrot.lane.b32.xlu0 %v9458, 16
      %v9776 = vpop.permute.xlu0 %9775
      %9777 = vrot.lane.b32.xlu0 %v9459, 16
      %v9778 = vpop.permute.xlu0 %9777
      %9779 = vrot.lane.b32.xlu0 %v9460, 16
      %v9780 = vpop.permute.xlu0 %9779
      %9845 = vrot.lane.b32.xlu0 %v9461, 32
      %v9846 = vpop.permute.xlu0 %9845
      %9847 = vrot.lane.b32.xlu0 %v9462, 32
      %v9848 = vpop.permute.xlu0 %9847
      %9849 = vrot.lane.b32.xlu0 %v9463, 32
      %v9850 = vpop.permute.xlu0 %9849
      %9851 = vrot.lane.b32.xlu0 %v9464, 32
      %v9852 = vpop.permute.xlu0 %9851
      %9853 = vrot.lane.b32.xlu0 %v9465, 32
      %v9854 = vpop.permute.xlu0 %9853
      %9855 = vrot.lane.b32.xlu0 %v9466, 32
      %v9856 = vpop.permute.xlu0 %9855
      %9857 = vrot.lane.b32.xlu0 %v9467, 32
      %v9858 = vpop.permute.xlu0 %9857
      %9859 = vrot.lane.b32.xlu0 %v9468, 32
      %v9860 = vpop.permute.xlu0 %9859
      %9861 = vrot.lane.b32.xlu0 %v9469, 32
      %v9862 = vpop.permute.xlu0 %9861
      %9863 = vrot.lane.b32.xlu0 %v9470, 32
      %v9864 = vpop.permute.xlu0 %9863
      %9865 = vrot.lane.b32.xlu0 %v9471, 32
      %v9866 = vpop.permute.xlu0 %9865
      %9867 = vrot.lane.b32.xlu0 %v9472, 32
      %v9868 = vpop.permute.xlu0 %9867
      %9869 = vrot.lane.b32.xlu0 %v9473, 32
      %v9870 = vpop.permute.xlu0 %9869
      %9871 = vrot.lane.b32.xlu0 %v9474, 32
      %v9872 = vpop.permute.xlu0 %9871
      %9873 = vrot.lane.b32.xlu0 %v9475, 32
      %v9874 = vpop.permute.xlu0 %9873
      %9875 = vrot.lane.b32.xlu0 %v9476, 32
      %v9876 = vpop.permute.xlu0 %9875
      %9877 = vrot.lane.b32.xlu0 %v9477, 32
      %v9878 = vpop.permute.xlu0 %9877
      %9879 = vrot.lane.b32.xlu0 %v9478, 32
      %v9880 = vpop.permute.xlu0 %9879
      %9881 = vrot.lane.b32.xlu0 %v9479, 32
      %v9882 = vpop.permute.xlu0 %9881
      %9883 = vrot.lane.b32.xlu0 %v9480, 32
      %v9884 = vpop.permute.xlu0 %9883
      %9885 = vrot.lane.b32.xlu0 %v9481, 32
      %v9886 = vpop.permute.xlu0 %9885
      %9887 = vrot.lane.b32.xlu0 %v9482, 32
      %v9888 = vpop.permute.xlu0 %9887
      %9889 = vrot.lane.b32.xlu0 %v9483, 32
      %v9890 = vpop.permute.xlu0 %9889
      %9891 = vrot.lane.b32.xlu0 %v9484, 32
      %v9892 = vpop.permute.xlu0 %9891
      %9893 = vrot.lane.b32.xlu0 %v9485, 32
      %v9894 = vpop.permute.xlu0 %9893
      %9895 = vrot.lane.b32.xlu0 %v9486, 32
      %v9896 = vpop.permute.xlu0 %9895
      %9897 = vrot.lane.b32.xlu0 %v9487, 32
      %v9898 = vpop.permute.xlu0 %9897
      %9899 = vrot.lane.b32.xlu0 %v9488, 32
      %v9900 = vpop.permute.xlu0 %9899
      %9901 = vrot.lane.b32.xlu0 %v9489, 32
      %v9902 = vpop.permute.xlu0 %9901
      %9903 = vrot.lane.b32.xlu0 %v9490, 32
      %v9904 = vpop.permute.xlu0 %9903
      %9905 = vrot.lane.b32.xlu0 %v9491, 32
      %v9906 = vpop.permute.xlu0 %9905
      %9907 = vrot.lane.b32.xlu0 %v9492, 32
      %v9908 = vpop.permute.xlu0 %9907
      %9973 = vrot.lane.b32.xlu0 %v9493, 48
      %v9974 = vpop.permute.xlu0 %9973
      %9975 = vrot.lane.b32.xlu0 %v9494, 48
      %v9976 = vpop.permute.xlu0 %9975
      %9977 = vrot.lane.b32.xlu0 %v9495, 48
      %v9978 = vpop.permute.xlu0 %9977
      %9979 = vrot.lane.b32.xlu0 %v9496, 48
      %v9980 = vpop.permute.xlu0 %9979
      %9981 = vrot.lane.b32.xlu0 %v9497, 48
      %v9982 = vpop.permute.xlu0 %9981
      %9983 = vrot.lane.b32.xlu0 %v9498, 48
      %v9984 = vpop.permute.xlu0 %9983
      %9985 = vrot.lane.b32.xlu0 %v9499, 48
      %v9986 = vpop.permute.xlu0 %9985
      %9987 = vrot.lane.b32.xlu0 %v9500, 48
      %v9988 = vpop.permute.xlu0 %9987
      %9989 = vrot.lane.b32.xlu0 %v9501, 48
      %v9990 = vpop.permute.xlu0 %9989
      %9991 = vrot.lane.b32.xlu0 %v9502, 48
      %v9992 = vpop.permute.xlu0 %9991
      %9993 = vrot.lane.b32.xlu0 %v9503, 48
      %v9994 = vpop.permute.xlu0 %9993
      %9995 = vrot.lane.b32.xlu0 %v9504, 48
      %v9996 = vpop.permute.xlu0 %9995
      %9997 = vrot.lane.b32.xlu0 %v9505, 48
      %v9998 = vpop.permute.xlu0 %9997
      %9999 = vrot.lane.b32.xlu0 %v9506, 48
      %v10000 = vpop.permute.xlu0 %9999
      %10001 = vrot.lane.b32.xlu0 %v9507, 48
      %v10002 = vpop.permute.xlu0 %10001
      %10003 = vrot.lane.b32.xlu0 %v9508, 48
      %v10004 = vpop.permute.xlu0 %10003
      %10005 = vrot.lane.b32.xlu0 %v9509, 48
      %v10006 = vpop.permute.xlu0 %10005
      %10007 = vrot.lane.b32.xlu0 %v9510, 48
      %v10008 = vpop.permute.xlu0 %10007
      %10009 = vrot.lane.b32.xlu0 %v9511, 48
      %v10010 = vpop.permute.xlu0 %10009
      %10011 = vrot.lane.b32.xlu0 %v9512, 48
      %v10012 = vpop.permute.xlu0 %10011
      %10013 = vrot.lane.b32.xlu0 %v9513, 48
      %v10014 = vpop.permute.xlu0 %10013
      %10015 = vrot.lane.b32.xlu0 %v9514, 48
      %v10016 = vpop.permute.xlu0 %10015
      %10017 = vrot.lane.b32.xlu0 %v9515, 48
      %v10018 = vpop.permute.xlu0 %10017
      %10019 = vrot.lane.b32.xlu0 %v9516, 48
      %v10020 = vpop.permute.xlu0 %10019
      %10021 = vrot.lane.b32.xlu0 %v9517, 48
      %v10022 = vpop.permute.xlu0 %10021
      %10023 = vrot.lane.b32.xlu0 %v9518, 48
      %v10024 = vpop.permute.xlu0 %10023
      %10025 = vrot.lane.b32.xlu0 %v9519, 48
      %v10026 = vpop.permute.xlu0 %10025
      %10027 = vrot.lane.b32.xlu0 %v9520, 48
      %v10028 = vpop.permute.xlu0 %10027
      %10029 = vrot.lane.b32.xlu0 %v9521, 48
      %v10030 = vpop.permute.xlu0 %10029
      %10031 = vrot.lane.b32.xlu0 %v9522, 48
      %v10032 = vpop.permute.xlu0 %10031
      %10033 = vrot.lane.b32.xlu0 %v9523, 48
      %v10034 = vpop.permute.xlu0 %10033
      %10035 = vrot.lane.b32.xlu0 %v9524, 48
      %v10036 = vpop.permute.xlu0 %10035
      %10101 = vrot.lane.b32.xlu0 %v9525, 64
      %v10102 = vpop.permute.xlu0 %10101
      %10103 = vrot.lane.b32.xlu0 %v9526, 64
      %v10104 = vpop.permute.xlu0 %10103
      %10105 = vrot.lane.b32.xlu0 %v9527, 64
      %v10106 = vpop.permute.xlu0 %10105
      %10107 = vrot.lane.b32.xlu0 %v9528, 64
      %v10108 = vpop.permute.xlu0 %10107
      %10109 = vrot.lane.b32.xlu0 %v9529, 64
      %v10110 = vpop.permute.xlu0 %10109
      %10111 = vrot.lane.b32.xlu0 %v9530, 64
      %v10112 = vpop.permute.xlu0 %10111
      %10113 = vrot.lane.b32.xlu0 %v9531, 64
      %v10114 = vpop.permute.xlu0 %10113
      %10115 = vrot.lane.b32.xlu0 %v9532, 64
      %v10116 = vpop.permute.xlu0 %10115
      %10117 = vrot.lane.b32.xlu0 %v9533, 64
      %v10118 = vpop.permute.xlu0 %10117
      %10119 = vrot.lane.b32.xlu0 %v9534, 64
      %v10120 = vpop.permute.xlu0 %10119
      %10121 = vrot.lane.b32.xlu0 %v9535, 64
      %v10122 = vpop.permute.xlu0 %10121
      %10123 = vrot.lane.b32.xlu0 %v9536, 64
      %v10124 = vpop.permute.xlu0 %10123
      %10125 = vrot.lane.b32.xlu0 %v9537, 64
      %v10126 = vpop.permute.xlu0 %10125
      %10127 = vrot.lane.b32.xlu0 %v9538, 64
      %v10128 = vpop.permute.xlu0 %10127
      %10129 = vrot.lane.b32.xlu0 %v9539, 64
      %v10130 = vpop.permute.xlu0 %10129
      %10131 = vrot.lane.b32.xlu0 %v9540, 64
      %v10132 = vpop.permute.xlu0 %10131
      %10133 = vrot.lane.b32.xlu0 %v9541, 64
      %v10134 = vpop.permute.xlu0 %10133
      %10135 = vrot.lane.b32.xlu0 %v9542, 64
      %v10136 = vpop.permute.xlu0 %10135
      %10137 = vrot.lane.b32.xlu0 %v9543, 64
      %v10138 = vpop.permute.xlu0 %10137
      %10139 = vrot.lane.b32.xlu0 %v9544, 64
      %v10140 = vpop.permute.xlu0 %10139
      %10141 = vrot.lane.b32.xlu0 %v9545, 64
      %v10142 = vpop.permute.xlu0 %10141
      %10143 = vrot.lane.b32.xlu0 %v9546, 64
      %v10144 = vpop.permute.xlu0 %10143
      %10145 = vrot.lane.b32.xlu0 %v9547, 64
      %v10146 = vpop.permute.xlu0 %10145
      %10147 = vrot.lane.b32.xlu0 %v9548, 64
      %v10148 = vpop.permute.xlu0 %10147
      %10149 = vrot.lane.b32.xlu0 %v9549, 64
      %v10150 = vpop.permute.xlu0 %10149
      %10151 = vrot.lane.b32.xlu0 %v9550, 64
      %v10152 = vpop.permute.xlu0 %10151
      %10153 = vrot.lane.b32.xlu0 %v9551, 64
      %v10154 = vpop.permute.xlu0 %10153
      %10155 = vrot.lane.b32.xlu0 %v9552, 64
      %v10156 = vpop.permute.xlu0 %10155
      %10157 = vrot.lane.b32.xlu0 %v9553, 64
      %v10158 = vpop.permute.xlu0 %10157
      %10159 = vrot.lane.b32.xlu0 %v9554, 64
      %v10160 = vpop.permute.xlu0 %10159
      %10161 = vrot.lane.b32.xlu0 %v9555, 64
      %v10162 = vpop.permute.xlu0 %10161
      %10163 = vrot.lane.b32.xlu0 %v9556, 64
      %v10164 = vpop.permute.xlu0 %10163
      %10229 = vrot.lane.b32.xlu0 %v9557, 80
      %v10230 = vpop.permute.xlu0 %10229
      %10231 = vrot.lane.b32.xlu0 %v9558, 80
      %v10232 = vpop.permute.xlu0 %10231
      %10233 = vrot.lane.b32.xlu0 %v9559, 80
      %v10234 = vpop.permute.xlu0 %10233
      %10235 = vrot.lane.b32.xlu0 %v9560, 80
      %v10236 = vpop.permute.xlu0 %10235
      %10237 = vrot.lane.b32.xlu0 %v9561, 80
      %v10238 = vpop.permute.xlu0 %10237
      %10239 = vrot.lane.b32.xlu0 %v9562, 80
      %v10240 = vpop.permute.xlu0 %10239
      %10241 = vrot.lane.b32.xlu0 %v9563, 80
      %v10242 = vpop.permute.xlu0 %10241
      %10243 = vrot.lane.b32.xlu0 %v9564, 80
      %v10244 = vpop.permute.xlu0 %10243
      %10245 = vrot.lane.b32.xlu0 %v9565, 80
      %v10246 = vpop.permute.xlu0 %10245
      %10247 = vrot.lane.b32.xlu0 %v9566, 80
      %v10248 = vpop.permute.xlu0 %10247
      %10249 = vrot.lane.b32.xlu0 %v9567, 80
      %v10250 = vpop.permute.xlu0 %10249
      %10251 = vrot.lane.b32.xlu0 %v9568, 80
      %v10252 = vpop.permute.xlu0 %10251
      %10253 = vrot.lane.b32.xlu0 %v9569, 80
      %v10254 = vpop.permute.xlu0 %10253
      %10255 = vrot.lane.b32.xlu0 %v9570, 80
      %v10256 = vpop.permute.xlu0 %10255
      %10257 = vrot.lane.b32.xlu0 %v9571, 80
      %v10258 = vpop.permute.xlu0 %10257
      %10259 = vrot.lane.b32.xlu0 %v9572, 80
      %v10260 = vpop.permute.xlu0 %10259
      %10261 = vrot.lane.b32.xlu0 %v9573, 80
      %v10262 = vpop.permute.xlu0 %10261
      %10263 = vrot.lane.b32.xlu0 %v9574, 80
      %v10264 = vpop.permute.xlu0 %10263
      %10265 = vrot.lane.b32.xlu0 %v9575, 80
      %v10266 = vpop.permute.xlu0 %10265
      %10267 = vrot.lane.b32.xlu0 %v9576, 80
      %v10268 = vpop.permute.xlu0 %10267
      %10269 = vrot.lane.b32.xlu0 %v9577, 80
      %v10270 = vpop.permute.xlu0 %10269
      %10271 = vrot.lane.b32.xlu0 %v9578, 80
      %v10272 = vpop.permute.xlu0 %10271
      %10273 = vrot.lane.b32.xlu0 %v9579, 80
      %v10274 = vpop.permute.xlu0 %10273
      %10275 = vrot.lane.b32.xlu0 %v9580, 80
      %v10276 = vpop.permute.xlu0 %10275
      %10277 = vrot.lane.b32.xlu0 %v9581, 80
      %v10278 = vpop.permute.xlu0 %10277
      %10279 = vrot.lane.b32.xlu0 %v9582, 80
      %v10280 = vpop.permute.xlu0 %10279
      %10281 = vrot.lane.b32.xlu0 %v9583, 80
      %v10282 = vpop.permute.xlu0 %10281
      %10283 = vrot.lane.b32.xlu0 %v9584, 80
      %v10284 = vpop.permute.xlu0 %10283
      %10285 = vrot.lane.b32.xlu0 %v9585, 80
      %v10286 = vpop.permute.xlu0 %10285
      %10287 = vrot.lane.b32.xlu0 %v9586, 80
      %v10288 = vpop.permute.xlu0 %10287
      %10289 = vrot.lane.b32.xlu0 %v9587, 80
      %v10290 = vpop.permute.xlu0 %10289
      %10291 = vrot.lane.b32.xlu0 %v9588, 80
      %v10292 = vpop.permute.xlu0 %10291
      %10357 = vrot.lane.b32.xlu0 %v9589, 96
      %v10358 = vpop.permute.xlu0 %10357
      %10359 = vrot.lane.b32.xlu0 %v9590, 96
      %v10360 = vpop.permute.xlu0 %10359
      %10361 = vrot.lane.b32.xlu0 %v9591, 96
      %v10362 = vpop.permute.xlu0 %10361
      %10363 = vrot.lane.b32.xlu0 %v9592, 96
      %v10364 = vpop.permute.xlu0 %10363
      %10365 = vrot.lane.b32.xlu0 %v9593, 96
      %v10366 = vpop.permute.xlu0 %10365
      %10367 = vrot.lane.b32.xlu0 %v9594, 96
      %v10368 = vpop.permute.xlu0 %10367
      %10369 = vrot.lane.b32.xlu0 %v9595, 96
      %v10370 = vpop.permute.xlu0 %10369
      %10371 = vrot.lane.b32.xlu0 %v9596, 96
      %v10372 = vpop.permute.xlu0 %10371
      %10373 = vrot.lane.b32.xlu0 %v9597, 96
      %v10374 = vpop.permute.xlu0 %10373
      %10375 = vrot.lane.b32.xlu0 %v9598, 96
      %v10376 = vpop.permute.xlu0 %10375
      %10377 = vrot.lane.b32.xlu0 %v9599, 96
      %v10378 = vpop.permute.xlu0 %10377
      %10379 = vrot.lane.b32.xlu0 %v9600, 96
      %v10380 = vpop.permute.xlu0 %10379
      %10381 = vrot.lane.b32.xlu0 %v9601, 96
      %v10382 = vpop.permute.xlu0 %10381
      %10383 = vrot.lane.b32.xlu0 %v9602, 96
      %v10384 = vpop.permute.xlu0 %10383
      %10385 = vrot.lane.b32.xlu0 %v9603, 96
      %v10386 = vpop.permute.xlu0 %10385
      %10387 = vrot.lane.b32.xlu0 %v9604, 96
      %v10388 = vpop.permute.xlu0 %10387
      %10389 = vrot.lane.b32.xlu0 %v9605, 96
      %v10390 = vpop.permute.xlu0 %10389
      %10391 = vrot.lane.b32.xlu0 %v9606, 96
      %v10392 = vpop.permute.xlu0 %10391
      %10393 = vrot.lane.b32.xlu0 %v9607, 96
      %v10394 = vpop.permute.xlu0 %10393
      %10395 = vrot.lane.b32.xlu0 %v9608, 96
      %v10396 = vpop.permute.xlu0 %10395
      %10397 = vrot.lane.b32.xlu0 %v9609, 96
      %v10398 = vpop.permute.xlu0 %10397
      %10399 = vrot.lane.b32.xlu0 %v9610, 96
      %v10400 = vpop.permute.xlu0 %10399
      %10401 = vrot.lane.b32.xlu0 %v9611, 96
      %v10402 = vpop.permute.xlu0 %10401
      %10403 = vrot.lane.b32.xlu0 %v9612, 96
      %v10404 = vpop.permute.xlu0 %10403
      %10405 = vrot.lane.b32.xlu0 %v9613, 96
      %v10406 = vpop.permute.xlu0 %10405
      %10407 = vrot.lane.b32.xlu0 %v9614, 96
      %v10408 = vpop.permute.xlu0 %10407
      %10409 = vrot.lane.b32.xlu0 %v9615, 96
      %v10410 = vpop.permute.xlu0 %10409
      %10411 = vrot.lane.b32.xlu0 %v9616, 96
      %v10412 = vpop.permute.xlu0 %10411
      %10413 = vrot.lane.b32.xlu0 %v9617, 96
      %v10414 = vpop.permute.xlu0 %10413
      %10415 = vrot.lane.b32.xlu0 %v9618, 96
      %v10416 = vpop.permute.xlu0 %10415
      %10417 = vrot.lane.b32.xlu0 %v9619, 96
      %v10418 = vpop.permute.xlu0 %10417
      %10419 = vrot.lane.b32.xlu0 %v9620, 96
      %v10420 = vpop.permute.xlu0 %10419
      %10485 = vrot.lane.b32.xlu0 %v9621, 112
      %v10486 = vpop.permute.xlu0 %10485
      %10487 = vrot.lane.b32.xlu0 %v9622, 112
      %v10488 = vpop.permute.xlu0 %10487
      %10489 = vrot.lane.b32.xlu0 %v9623, 112
      %v10490 = vpop.permute.xlu0 %10489
      %10491 = vrot.lane.b32.xlu0 %v9624, 112
      %v10492 = vpop.permute.xlu0 %10491
      %10493 = vrot.lane.b32.xlu0 %v9625, 112
      %v10494 = vpop.permute.xlu0 %10493
      %10495 = vrot.lane.b32.xlu0 %v9626, 112
      %v10496 = vpop.permute.xlu0 %10495
      %10497 = vrot.lane.b32.xlu0 %v9627, 112
      %v10498 = vpop.permute.xlu0 %10497
      %10499 = vrot.lane.b32.xlu0 %v9628, 112
      %v10500 = vpop.permute.xlu0 %10499
      %10501 = vrot.lane.b32.xlu0 %v9629, 112
      %v10502 = vpop.permute.xlu0 %10501
      %10503 = vrot.lane.b32.xlu0 %v9630, 112
      %v10504 = vpop.permute.xlu0 %10503
      %10505 = vrot.lane.b32.xlu0 %v9631, 112
      %v10506 = vpop.permute.xlu0 %10505
      %10507 = vrot.lane.b32.xlu0 %v9632, 112
      %v10508 = vpop.permute.xlu0 %10507
      %10509 = vrot.lane.b32.xlu0 %v9633, 112
      %v10510 = vpop.permute.xlu0 %10509
      %10511 = vrot.lane.b32.xlu0 %v9634, 112
      %v10512 = vpop.permute.xlu0 %10511
      %10513 = vrot.lane.b32.xlu0 %v9635, 112
      %v10514 = vpop.permute.xlu0 %10513
      %10515 = vrot.lane.b32.xlu0 %v9636, 112
      %v10516 = vpop.permute.xlu0 %10515
      %10517 = vrot.lane.b32.xlu0 %v9637, 112
      %v10518 = vpop.permute.xlu0 %10517
      %10519 = vrot.lane.b32.xlu0 %v9638, 112
      %v10520 = vpop.permute.xlu0 %10519
      %10521 = vrot.lane.b32.xlu0 %v9639, 112
      %v10522 = vpop.permute.xlu0 %10521
      %10523 = vrot.lane.b32.xlu0 %v9640, 112
      %v10524 = vpop.permute.xlu0 %10523
      %10525 = vrot.lane.b32.xlu0 %v9641, 112
      %v10526 = vpop.permute.xlu0 %10525
      %10527 = vrot.lane.b32.xlu0 %v9642, 112
      %v10528 = vpop.permute.xlu0 %10527
      %10529 = vrot.lane.b32.xlu0 %v9643, 112
      %v10530 = vpop.permute.xlu0 %10529
      %10531 = vrot.lane.b32.xlu0 %v9644, 112
      %v10532 = vpop.permute.xlu0 %10531
      %10533 = vrot.lane.b32.xlu0 %v9645, 112
      %v10534 = vpop.permute.xlu0 %10533
      %10535 = vrot.lane.b32.xlu0 %v9646, 112
      %v10536 = vpop.permute.xlu0 %10535
      %10537 = vrot.lane.b32.xlu0 %v9647, 112
      %v10538 = vpop.permute.xlu0 %10537
      %10539 = vrot.lane.b32.xlu0 %v9648, 112
      %v10540 = vpop.permute.xlu0 %10539
      %10541 = vrot.lane.b32.xlu0 %v9649, 112
      %v10542 = vpop.permute.xlu0 %10541
      %10543 = vrot.lane.b32.xlu0 %v9650, 112
      %v10544 = vpop.permute.xlu0 %10543
      %10545 = vrot.lane.b32.xlu0 %v9651, 112
      %v10546 = vpop.permute.xlu0 %10545
      %10547 = vrot.lane.b32.xlu0 %v9652, 112
      %v10548 = vpop.permute.xlu0 %10547
      %v10581 = vsel %vm172, %v9397, %v9718
      %v10582 = vsel %vm172, %v9398, %v9720
      %v10583 = vsel %vm172, %v9399, %v9722
      %v10584 = vsel %vm172, %v9400, %v9724
      %v10585 = vsel %vm172, %v9401, %v9726
      %v10586 = vsel %vm172, %v9402, %v9728
      %v10587 = vsel %vm172, %v9403, %v9730
      %v10588 = vsel %vm172, %v9404, %v9732
      %v10589 = vsel %vm172, %v9405, %v9734
      %v10590 = vsel %vm172, %v9406, %v9736
      %v10591 = vsel %vm172, %v9407, %v9738
      %v10592 = vsel %vm172, %v9408, %v9740
      %v10593 = vsel %vm172, %v9409, %v9742
      %v10594 = vsel %vm172, %v9410, %v9744
      %v10595 = vsel %vm172, %v9411, %v9746
      %v10596 = vsel %vm172, %v9412, %v9748
      %v10597 = vsel %vm172, %v9413, %v9750
      %v10598 = vsel %vm172, %v9414, %v9752
      %v10599 = vsel %vm172, %v9415, %v9754
      %v10600 = vsel %vm172, %v9416, %v9756
      %v10601 = vsel %vm172, %v9417, %v9758
      %v10602 = vsel %vm172, %v9418, %v9760
      %v10603 = vsel %vm172, %v9419, %v9762
      %v10604 = vsel %vm172, %v9420, %v9764
      %v10605 = vsel %vm172, %v9421, %v9766
      %v10606 = vsel %vm172, %v9422, %v9768
      %v10607 = vsel %vm172, %v9423, %v9770
      %v10608 = vsel %vm172, %v9424, %v9772
      %v10609 = vsel %vm172, %v9425, %v9774
      %v10610 = vsel %vm172, %v9426, %v9776
      %v10611 = vsel %vm172, %v9427, %v9778
      %v10612 = vsel %vm172, %v9428, %v9780
      %v10613 = vsel %vm1511, %v10581, %v9846
      %v10614 = vsel %vm1511, %v10582, %v9848
      %v10615 = vsel %vm1511, %v10583, %v9850
      %v10616 = vsel %vm1511, %v10584, %v9852
      %v10617 = vsel %vm1511, %v10585, %v9854
      %v10618 = vsel %vm1511, %v10586, %v9856
      %v10619 = vsel %vm1511, %v10587, %v9858
      %v10620 = vsel %vm1511, %v10588, %v9860
      %v10621 = vsel %vm1511, %v10589, %v9862
      %v10622 = vsel %vm1511, %v10590, %v9864
      %v10623 = vsel %vm1511, %v10591, %v9866
      %v10624 = vsel %vm1511, %v10592, %v9868
      %v10625 = vsel %vm1511, %v10593, %v9870
      %v10626 = vsel %vm1511, %v10594, %v9872
      %v10627 = vsel %vm1511, %v10595, %v9874
      %v10628 = vsel %vm1511, %v10596, %v9876
      %v10629 = vsel %vm1511, %v10597, %v9878
      %v10630 = vsel %vm1511, %v10598, %v9880
      %v10631 = vsel %vm1511, %v10599, %v9882
      %v10632 = vsel %vm1511, %v10600, %v9884
      %v10633 = vsel %vm1511, %v10601, %v9886
      %v10634 = vsel %vm1511, %v10602, %v9888
      %v10635 = vsel %vm1511, %v10603, %v9890
      %v10636 = vsel %vm1511, %v10604, %v9892
      %v10637 = vsel %vm1511, %v10605, %v9894
      %v10638 = vsel %vm1511, %v10606, %v9896
      %v10639 = vsel %vm1511, %v10607, %v9898
      %v10640 = vsel %vm1511, %v10608, %v9900
      %v10641 = vsel %vm1511, %v10609, %v9902
      %v10642 = vsel %vm1511, %v10610, %v9904
      %v10643 = vsel %vm1511, %v10611, %v9906
      %v10644 = vsel %vm1511, %v10612, %v9908
      %v10645 = vsel %vm1544, %v10613, %v9974
      %v10646 = vsel %vm1544, %v10614, %v9976
      %v10647 = vsel %vm1544, %v10615, %v9978
      %v10648 = vsel %vm1544, %v10616, %v9980
      %v10649 = vsel %vm1544, %v10617, %v9982
      %v10650 = vsel %vm1544, %v10618, %v9984
      %v10651 = vsel %vm1544, %v10619, %v9986
      %v10652 = vsel %vm1544, %v10620, %v9988
      %v10653 = vsel %vm1544, %v10621, %v9990
      %v10654 = vsel %vm1544, %v10622, %v9992
      %v10655 = vsel %vm1544, %v10623, %v9994
      %v10656 = vsel %vm1544, %v10624, %v9996
      %v10657 = vsel %vm1544, %v10625, %v9998
      %v10658 = vsel %vm1544, %v10626, %v10000
      %v10659 = vsel %vm1544, %v10627, %v10002
      %v10660 = vsel %vm1544, %v10628, %v10004
      %v10661 = vsel %vm1544, %v10629, %v10006
      %v10662 = vsel %vm1544, %v10630, %v10008
      %v10663 = vsel %vm1544, %v10631, %v10010
      %v10664 = vsel %vm1544, %v10632, %v10012
      %v10665 = vsel %vm1544, %v10633, %v10014
      %v10666 = vsel %vm1544, %v10634, %v10016
      %v10667 = vsel %vm1544, %v10635, %v10018
      %v10668 = vsel %vm1544, %v10636, %v10020
      %v10669 = vsel %vm1544, %v10637, %v10022
      %v10670 = vsel %vm1544, %v10638, %v10024
      %v10671 = vsel %vm1544, %v10639, %v10026
      %v10672 = vsel %vm1544, %v10640, %v10028
      %v10673 = vsel %vm1544, %v10641, %v10030
      %v10674 = vsel %vm1544, %v10642, %v10032
      %v10675 = vsel %vm1544, %v10643, %v10034
      %v10676 = vsel %vm1544, %v10644, %v10036
      %v10677 = vsel %vm1577, %v10645, %v10102
      %v10678 = vsel %vm1577, %v10646, %v10104
      %v10679 = vsel %vm1577, %v10647, %v10106
      %v10680 = vsel %vm1577, %v10648, %v10108
      %v10681 = vsel %vm1577, %v10649, %v10110
      %v10682 = vsel %vm1577, %v10650, %v10112
      %v10683 = vsel %vm1577, %v10651, %v10114
      %v10684 = vsel %vm1577, %v10652, %v10116
      %v10685 = vsel %vm1577, %v10653, %v10118
      %v10686 = vsel %vm1577, %v10654, %v10120
      %v10687 = vsel %vm1577, %v10655, %v10122
      %v10688 = vsel %vm1577, %v10656, %v10124
      %v10689 = vsel %vm1577, %v10657, %v10126
      %v10690 = vsel %vm1577, %v10658, %v10128
      %v10691 = vsel %vm1577, %v10659, %v10130
      %v10692 = vsel %vm1577, %v10660, %v10132
      %v10693 = vsel %vm1577, %v10661, %v10134
      %v10694 = vsel %vm1577, %v10662, %v10136
      %v10695 = vsel %vm1577, %v10663, %v10138
      %v10696 = vsel %vm1577, %v10664, %v10140
      %v10697 = vsel %vm1577, %v10665, %v10142
      %v10698 = vsel %vm1577, %v10666, %v10144
      %v10699 = vsel %vm1577, %v10667, %v10146
      %v10700 = vsel %vm1577, %v10668, %v10148
      %v10701 = vsel %vm1577, %v10669, %v10150
      %v10702 = vsel %vm1577, %v10670, %v10152
      %v10703 = vsel %vm1577, %v10671, %v10154
      %v10704 = vsel %vm1577, %v10672, %v10156
      %v10705 = vsel %vm1577, %v10673, %v10158
      %v10706 = vsel %vm1577, %v10674, %v10160
      %v10707 = vsel %vm1577, %v10675, %v10162
      %v10708 = vsel %vm1577, %v10676, %v10164
      %v10709 = vsel %vm1610, %v10677, %v10230
      %v10710 = vsel %vm1610, %v10678, %v10232
      %v10711 = vsel %vm1610, %v10679, %v10234
      %v10712 = vsel %vm1610, %v10680, %v10236
      %v10713 = vsel %vm1610, %v10681, %v10238
      %v10714 = vsel %vm1610, %v10682, %v10240
      %v10715 = vsel %vm1610, %v10683, %v10242
      %v10716 = vsel %vm1610, %v10684, %v10244
      %v10717 = vsel %vm1610, %v10685, %v10246
      %v10718 = vsel %vm1610, %v10686, %v10248
      %v10719 = vsel %vm1610, %v10687, %v10250
      %v10720 = vsel %vm1610, %v10688, %v10252
      %v10721 = vsel %vm1610, %v10689, %v10254
      %v10722 = vsel %vm1610, %v10690, %v10256
      %v10723 = vsel %vm1610, %v10691, %v10258
      %v10724 = vsel %vm1610, %v10692, %v10260
      %v10725 = vsel %vm1610, %v10693, %v10262
      %v10726 = vsel %vm1610, %v10694, %v10264
      %v10727 = vsel %vm1610, %v10695, %v10266
      %v10728 = vsel %vm1610, %v10696, %v10268
      %v10729 = vsel %vm1610, %v10697, %v10270
      %v10730 = vsel %vm1610, %v10698, %v10272
      %v10731 = vsel %vm1610, %v10699, %v10274
      %v10732 = vsel %vm1610, %v10700, %v10276
      %v10733 = vsel %vm1610, %v10701, %v10278
      %v10734 = vsel %vm1610, %v10702, %v10280
      %v10735 = vsel %vm1610, %v10703, %v10282
      %v10736 = vsel %vm1610, %v10704, %v10284
      %v10737 = vsel %vm1610, %v10705, %v10286
      %v10738 = vsel %vm1610, %v10706, %v10288
      %v10739 = vsel %vm1610, %v10707, %v10290
      %v10740 = vsel %vm1610, %v10708, %v10292
      %v10741 = vsel %vm1643, %v10709, %v10358
      %v10742 = vsel %vm1643, %v10710, %v10360
      %v10743 = vsel %vm1643, %v10711, %v10362
      %v10744 = vsel %vm1643, %v10712, %v10364
      %v10745 = vsel %vm1643, %v10713, %v10366
      %v10746 = vsel %vm1643, %v10714, %v10368
      %v10747 = vsel %vm1643, %v10715, %v10370
      %v10748 = vsel %vm1643, %v10716, %v10372
      %v10749 = vsel %vm1643, %v10717, %v10374
      %v10750 = vsel %vm1643, %v10718, %v10376
      %v10751 = vsel %vm1643, %v10719, %v10378
      %v10752 = vsel %vm1643, %v10720, %v10380
      %v10753 = vsel %vm1643, %v10721, %v10382
      %v10754 = vsel %vm1643, %v10722, %v10384
      %v10755 = vsel %vm1643, %v10723, %v10386
      %v10756 = vsel %vm1643, %v10724, %v10388
      %v10757 = vsel %vm1643, %v10725, %v10390
      %v10758 = vsel %vm1643, %v10726, %v10392
      %v10759 = vsel %vm1643, %v10727, %v10394
      %v10760 = vsel %vm1643, %v10728, %v10396
      %v10761 = vsel %vm1643, %v10729, %v10398
      %v10762 = vsel %vm1643, %v10730, %v10400
      %v10763 = vsel %vm1643, %v10731, %v10402
      %v10764 = vsel %vm1643, %v10732, %v10404
      %v10765 = vsel %vm1643, %v10733, %v10406
      %v10766 = vsel %vm1643, %v10734, %v10408
      %v10767 = vsel %vm1643, %v10735, %v10410
      %v10768 = vsel %vm1643, %v10736, %v10412
      %v10769 = vsel %vm1643, %v10737, %v10414
      %v10770 = vsel %vm1643, %v10738, %v10416
      %v10771 = vsel %vm1643, %v10739, %v10418
      %v10772 = vsel %vm1643, %v10740, %v10420
      %v10773 = vsel %vm1676, %v10741, %v10486
      %v10774 = vsel %vm1676, %v10742, %v10488
      %v10775 = vsel %vm1676, %v10743, %v10490
      %v10776 = vsel %vm1676, %v10744, %v10492
      %v10777 = vsel %vm1676, %v10745, %v10494
      %v10778 = vsel %vm1676, %v10746, %v10496
      %v10779 = vsel %vm1676, %v10747, %v10498
      %v10780 = vsel %vm1676, %v10748, %v10500
      %v10781 = vsel %vm1676, %v10749, %v10502
      %v10782 = vsel %vm1676, %v10750, %v10504
      %v10783 = vsel %vm1676, %v10751, %v10506
      %v10784 = vsel %vm1676, %v10752, %v10508
      %v10785 = vsel %vm1676, %v10753, %v10510
      %v10786 = vsel %vm1676, %v10754, %v10512
      %v10787 = vsel %vm1676, %v10755, %v10514
      %v10788 = vsel %vm1676, %v10756, %v10516
      %v10789 = vsel %vm1676, %v10757, %v10518
      %v10790 = vsel %vm1676, %v10758, %v10520
      %v10791 = vsel %vm1676, %v10759, %v10522
      %v10792 = vsel %vm1676, %v10760, %v10524
      %v10793 = vsel %vm1676, %v10761, %v10526
      %v10794 = vsel %vm1676, %v10762, %v10528
      %v10795 = vsel %vm1676, %v10763, %v10530
      %v10796 = vsel %vm1676, %v10764, %v10532
      %v10797 = vsel %vm1676, %v10765, %v10534
      %v10798 = vsel %vm1676, %v10766, %v10536
      %v10799 = vsel %vm1676, %v10767, %v10538
      %v10800 = vsel %vm1676, %v10768, %v10540
      %v10801 = vsel %vm1676, %v10769, %v10542
      %v10802 = vsel %vm1676, %v10770, %v10544
      %v10803 = vsel %vm1676, %v10771, %v10546
      %v10804 = vsel %vm1676, %v10772, %v10548
      %v10805 = vpack.c.bf16 %v10774, %v10773
      %v10806 = vpack.c.bf16 %v9654, %v9653
      %v10807 = vpack.c.bf16 %v10776, %v10775
      %v10808 = vpack.c.bf16 %v9656, %v9655
      %v10809 = vpack.c.bf16 %v10778, %v10777
      %v10810 = vpack.c.bf16 %v9658, %v9657
      %v10811 = vpack.c.bf16 %v10780, %v10779
      %v10812 = vpack.c.bf16 %v9660, %v9659
      %v10813 = vpack.c.bf16 %v10782, %v10781
      %v10814 = vpack.c.bf16 %v9662, %v9661
      %v10815 = vpack.c.bf16 %v10784, %v10783
      %v10816 = vpack.c.bf16 %v9664, %v9663
      %v10817 = vpack.c.bf16 %v10786, %v10785
      %v10818 = vpack.c.bf16 %v9666, %v9665
      %v10819 = vpack.c.bf16 %v10788, %v10787
      %v10820 = vpack.c.bf16 %v9668, %v9667
      %v10821 = vpack.c.bf16 %v10790, %v10789
      %v10822 = vpack.c.bf16 %v9670, %v9669
      %v10823 = vpack.c.bf16 %v10792, %v10791
      %v10824 = vpack.c.bf16 %v9672, %v9671
      %v10825 = vpack.c.bf16 %v10794, %v10793
      %v10826 = vpack.c.bf16 %v9674, %v9673
      %v10827 = vpack.c.bf16 %v10796, %v10795
      %v10828 = vpack.c.bf16 %v9676, %v9675
      %v10829 = vpack.c.bf16 %v10798, %v10797
      %v10830 = vpack.c.bf16 %v9678, %v9677
      %v10831 = vpack.c.bf16 %v10800, %v10799
      %v10832 = vpack.c.bf16 %v9680, %v9679
      %v10833 = vpack.c.bf16 %v10802, %v10801
      %v10834 = vpack.c.bf16 %v9682, %v9681
      %v10835 = vpack.c.bf16 %v10804, %v10803
      %v10836 = vpack.c.bf16 %v9684, %v9683
      %s10837 = scalar_lea.vmem %s1, 360
      %v10838 = vld [vmem:[%s10837] sm:$0xf]
      %v10839 = vld [vmem:[%s10837 + $0x4] sm:$0xf]
      %v10840 = vld [vmem:[%s10837 + $0x8] sm:$0xf]
      %v10841 = vld [vmem:[%s10837 + $0xc] sm:$0xf]
      %v10842 = vld [vmem:[%s10837 + $0x10] sm:$0xf]
      %v10843 = vld [vmem:[%s10837 + $0x14] sm:$0xf]
      %v10844 = vld [vmem:[%s10837 + $0x18] sm:$0xf]
      %v10845 = vld [vmem:[%s10837 + $0x1c] sm:$0xf]
      %v10846 = vld [vmem:[%s10837 + $0x20] sm:$0xf]
      %v10847 = vld [vmem:[%s10837 + $0x24] sm:$0xf]
      %v10848 = vld [vmem:[%s10837 + $0x28] sm:$0xf]
      %v10849 = vld [vmem:[%s10837 + $0x2c] sm:$0xf]
      %v10850 = vld [vmem:[%s10837 + $0x30] sm:$0xf]
      %v10851 = vld [vmem:[%s10837 + $0x34] sm:$0xf]
      %v10852 = vld [vmem:[%s10837 + $0x38] sm:$0xf]
      %v10853 = vld [vmem:[%s10837 + $0x3c] sm:$0xf]
      %v10854 = vld [vmem:[%s10837 + $0x40] sm:$0xf]
      %v10855 = vld [vmem:[%s10837 + $0x44] sm:$0xf]
      %s10856 = scalar_lea.vmem %s2, 5
      %v10857 = vld [vmem:[%s10856] sm:$0x1]
      %v10859 = vlaneseq
      %v10860 = vshrl.u32 %v10859, 7
      %v10861 = vsub.s32 0, %v10860
      %v10862 = vrot.slane %v10857, %v10861
      %v10882 = vunpack.c.l.b16 %v10838
      %v10883 = vunpack.c.l.b16 %v10839
      %v10884 = vunpack.c.l.b16 %v10840
      %v10885 = vunpack.c.l.b16 %v10841
      %v10886 = vunpack.c.l.b16 %v10842
      %v10887 = vunpack.c.l.b16 %v10843
      %v10888 = vunpack.c.l.b16 %v10844
      %v10889 = vunpack.c.l.b16 %v10845
      %v10890 = vunpack.c.l.b16 %v10846
      %v10891 = vunpack.c.l.b16 %v10847
      %v10892 = vunpack.c.l.b16 %v10848
      %v10893 = vunpack.c.l.b16 %v10849
      %v10894 = vunpack.c.l.b16 %v10850
      %v10895 = vunpack.c.l.b16 %v10851
      %v10896 = vunpack.c.l.b16 %v10852
      %v10897 = vunpack.c.l.b16 %v10853
      %v10898 = vunpack.c.l.b16 %v10854
      %v10899 = vunpack.c.l.b16 %v10855
      %v10900 = vpack.c.b16 %v10883, %v10882
      %v10901 = vpack.c.b16 %v10885, %v10884
      %v10902 = vpack.c.b16 %v10887, %v10886
      %v10903 = vpack.c.b16 %v10889, %v10888
      %v10904 = vpack.c.b16 %v10891, %v10890
      %v10905 = vpack.c.b16 %v10893, %v10892
      %v10906 = vpack.c.b16 %v10895, %v10894
      %v10907 = vpack.c.b16 %v10897, %v10896
      %v10908 = vpack.c.b16 %v10899, %v10898
      %v10919 = vsel %vm172, %v10806, 0
      %v10922 = vsel %vm172, %v10808, 0
      %v10925 = vsel %vm172, %v10810, 0
      %v10928 = vsel %vm172, %v10812, 0
      %v10931 = vsel %vm172, %v10814, 0
      %v10934 = vsel %vm172, %v10816, 0
      %v10937 = vsel %vm172, %v10818, 0
      %v10940 = vsel %vm172, %v10820, 0
      %v10943 = vsel %vm172, %v10822, 0
      %v10946 = vsel %vm172, %v10824, 0
      %v10949 = vsel %vm172, %v10826, 0
      %v10952 = vsel %vm172, %v10828, 0
      %v10955 = vsel %vm172, %v10830, 0
      %v10958 = vsel %vm172, %v10832, 0
      %v10961 = vsel %vm172, %v10834, 0
      %v10964 = vsel %vm172, %v10836, 0
      %10966 = vmatprep.subr.bf16.mxu0 0
      %10967 = vmatpush1.bf16.msra.mxu0 %v10900
      %10968 = vmatprep.subr.bf16.mxu0 0
      %10969 = vmatpush1.bf16.msra.mxu0 %v10901
      %10970 = vmatprep.subr.bf16.mxu0 0
      %10971 = vmatpush1.bf16.msra.mxu0 %v10902
      %10972 = vmatprep.subr.bf16.mxu0 0
      %10973 = vmatpush1.bf16.msra.mxu0 %v10903
      %10974 = vmatprep.subr.bf16.mxu0 0
      %10975 = vmatpush1.bf16.msra.mxu0 %v10904
      %10976 = vmatprep.subr.bf16.mxu0 0
      %10977 = vmatpush1.bf16.msra.mxu0 %v10905
      %10978 = vmatprep.subr.bf16.mxu0 0
      %10979 = vmatpush1.bf16.msra.mxu0 %v10906
      %10980 = vmatprep.subr.bf16.mxu0 0
      %10981 = vmatpush1.bf16.msra.mxu0 %v10907
      %10982 = vmatprep.subr.bf16.mxu0 0
      %10983 = vmatpush1.bf16.msra.mxu0 %v10908
      %10984 = vmatprep.subr.bf16.mxu0 0
      %10985 = vmatpush1.bf16.msra.mxu0 0
      %10986 = vmatprep.subr.bf16.mxu0 0
      %10987 = vmatpush1.bf16.msra.mxu0 0
      %10988 = vmatprep.subr.bf16.mxu0 0
      %10989 = vmatpush1.bf16.msra.mxu0 0
      %10990 = vmatprep.subr.bf16.mxu0 0
      %10991 = vmatpush1.bf16.msra.mxu0 0
      %10992 = vmatprep.subr.bf16.mxu0 0
      %10993 = vmatpush1.bf16.msra.mxu0 0
      %10994 = vmatprep.subr.bf16.mxu0 0
      %10995 = vmatpush1.bf16.msra.mxu0 0
      %10996 = vmatprep.subr.bf16.mxu0 0
      %10997 = vmatpush1.bf16.msra.mxu0 0
      %10998 = vmatprep.mubr.bf16.mxu0 %v10919
      %10999 = vmatmul.mubr.bf16.gmra.mrb[0].mxu0 %v10805
      %v11000 = vpop.f32.mrb[0].mxu0
      %v11001 = vadd.f32 %v10862, %v11000
      %v11002 = vpop.f32.mrb[0].mxu0
      %v11003 = vpop.f32.mrb[0].mxu0
      %v11004 = vadd.f32 %v10862, %v11003
      %v11005 = vpop.f32.mrb[0].mxu0
      %11006 = vmatprep.mubr.bf16.mxu0 %v10922
      %11007 = vmatmul.mubr.bf16.gmra.mrb[0].mxu0 %v10807
      %v11008 = vpop.f32.mrb[0].mxu0
      %v11009 = vadd.f32 %v10862, %v11008
      %v11010 = vpop.f32.mrb[0].mxu0
      %v11011 = vpop.f32.mrb[0].mxu0
      %v11012 = vadd.f32 %v10862, %v11011
      %v11013 = vpop.f32.mrb[0].mxu0
      %11014 = vmatprep.mubr.bf16.mxu0 %v10925
      %11015 = vmatmul.mubr.bf16.gmra.mrb[0].mxu0 %v10809
      %v11016 = vpop.f32.mrb[0].mxu0
      %v11017 = vadd.f32 %v10862, %v11016
      %v11018 = vpop.f32.mrb[0].mxu0
      %v11019 = vpop.f32.mrb[0].mxu0
      %v11020 = vadd.f32 %v10862, %v11019
      %v11021 = vpop.f32.mrb[0].mxu0
      %11022 = vmatprep.mubr.bf16.mxu0 %v10928
      %11023 = vmatmul.mubr.bf16.gmra.mrb[0].mxu0 %v10811
      %v11024 = vpop.f32.mrb[0].mxu0
      %v11025 = vadd.f32 %v10862, %v11024
      %v11026 = vpop.f32.mrb[0].mxu0
      %v11027 = vpop.f32.mrb[0].mxu0
      %v11028 = vadd.f32 %v10862, %v11027
      %v11029 = vpop.f32.mrb[0].mxu0
      %11030 = vmatprep.mubr.bf16.mxu0 %v10931
      %11031 = vmatmul.mubr.bf16.gmra.mrb[0].mxu0 %v10813
      %v11032 = vpop.f32.mrb[0].mxu0
      %v11033 = vadd.f32 %v10862, %v11032
      %v11034 = vpop.f32.mrb[0].mxu0
      %v11035 = vpop.f32.mrb[0].mxu0
      %v11036 = vadd.f32 %v10862, %v11035
      %v11037 = vpop.f32.mrb[0].mxu0
      %11038 = vmatprep.mubr.bf16.mxu0 %v10934
      %11039 = vmatmul.mubr.bf16.gmra.mrb[0].mxu0 %v10815
      %v11040 = vpop.f32.mrb[0].mxu0
      %v11041 = vadd.f32 %v10862, %v11040
      %v11042 = vpop.f32.mrb[0].mxu0
      %v11043 = vpop.f32.mrb[0].mxu0
      %v11044 = vadd.f32 %v10862, %v11043
      %v11045 = vpop.f32.mrb[0].mxu0
      %11046 = vmatprep.mubr.bf16.mxu0 %v10937
      %11047 = vmatmul.mubr.bf16.gmra.mrb[0].mxu0 %v10817
      %v11048 = vpop.f32.mrb[0].mxu0
      %v11049 = vadd.f32 %v10862, %v11048
      %v11050 = vpop.f32.mrb[0].mxu0
      %v11051 = vpop.f32.mrb[0].mxu0
      %v11052 = vadd.f32 %v10862, %v11051
      %v11053 = vpop.f32.mrb[0].mxu0
      %11054 = vmatprep.mubr.bf16.mxu0 %v10940
      %11055 = vmatmul.mubr.bf16.gmra.mrb[0].mxu0 %v10819
      %v11056 = vpop.f32.mrb[0].mxu0
      %v11057 = vadd.f32 %v10862, %v11056
      %v11058 = vpop.f32.mrb[0].mxu0
      %v11059 = vpop.f32.mrb[0].mxu0
      %v11060 = vadd.f32 %v10862, %v11059
      %v11061 = vpop.f32.mrb[0].mxu0
      %11062 = vmatprep.mubr.bf16.mxu0 %v10943
      %11063 = vmatmul.mubr.bf16.gmra.mrb[0].mxu0 %v10821
      %v11064 = vpop.f32.mrb[0].mxu0
      %v11065 = vadd.f32 %v10862, %v11064
      %v11066 = vpop.f32.mrb[0].mxu0
      %v11067 = vpop.f32.mrb[0].mxu0
      %v11068 = vadd.f32 %v10862, %v11067
      %v11069 = vpop.f32.mrb[0].mxu0
      %11070 = vmatprep.mubr.bf16.mxu0 %v10946
      %11071 = vmatmul.mubr.bf16.gmra.mrb[0].mxu0 %v10823
      %v11072 = vpop.f32.mrb[0].mxu0
      %v11073 = vadd.f32 %v10862, %v11072
      %v11074 = vpop.f32.mrb[0].mxu0
      %v11075 = vpop.f32.mrb[0].mxu0
      %v11076 = vadd.f32 %v10862, %v11075
      %v11077 = vpop.f32.mrb[0].mxu0
      %11078 = vmatprep.mubr.bf16.mxu0 %v10949
      %11079 = vmatmul.mubr.bf16.gmra.mrb[0].mxu0 %v10825
      %v11080 = vpop.f32.mrb[0].mxu0
      %v11081 = vadd.f32 %v10862, %v11080
      %v11082 = vpop.f32.mrb[0].mxu0
      %v11083 = vpop.f32.mrb[0].mxu0
      %v11084 = vadd.f32 %v10862, %v11083
      %v11085 = vpop.f32.mrb[0].mxu0
      %11086 = vmatprep.mubr.bf16.mxu0 %v10952
      %11087 = vmatmul.mubr.bf16.gmra.mrb[0].mxu0 %v10827
      %v11088 = vpop.f32.mrb[0].mxu0
      %v11089 = vadd.f32 %v10862, %v11088
      %v11090 = vpop.f32.mrb[0].mxu0
      %v11091 = vpop.f32.mrb[0].mxu0
      %v11092 = vadd.f32 %v10862, %v11091
      %v11093 = vpop.f32.mrb[0].mxu0
      %11094 = vmatprep.mubr.bf16.mxu0 %v10955
      %11095 = vmatmul.mubr.bf16.gmra.mrb[0].mxu0 %v10829
      %v11096 = vpop.f32.mrb[0].mxu0
      %v11097 = vadd.f32 %v10862, %v11096
      %v11098 = vpop.f32.mrb[0].mxu0
      %v11099 = vpop.f32.mrb[0].mxu0
      %v11100 = vadd.f32 %v10862, %v11099
      %v11101 = vpop.f32.mrb[0].mxu0
      %11102 = vmatprep.mubr.bf16.mxu0 %v10958
      %11103 = vmatmul.mubr.bf16.gmra.mrb[0].mxu0 %v10831
      %v11104 = vpop.f32.mrb[0].mxu0
      %v11105 = vadd.f32 %v10862, %v11104
      %v11106 = vpop.f32.mrb[0].mxu0
      %v11107 = vpop.f32.mrb[0].mxu0
      %v11108 = vadd.f32 %v10862, %v11107
      %v11109 = vpop.f32.mrb[0].mxu0
      %11110 = vmatprep.mubr.bf16.mxu0 %v10961
      %11111 = vmatmul.mubr.bf16.gmra.mrb[0].mxu0 %v10833
      %v11112 = vpop.f32.mrb[0].mxu0
      %v11113 = vadd.f32 %v10862, %v11112
      %v11114 = vpop.f32.mrb[0].mxu0
      %v11115 = vpop.f32.mrb[0].mxu0
      %v11116 = vadd.f32 %v10862, %v11115
      %v11117 = vpop.f32.mrb[0].mxu0
      %11118 = vmatprep.mubr.bf16.mxu0 %v10964
      %11119 = vmatmul.mubr.bf16.gmra.mrb[0].mxu0 %v10835
      %v11120 = vpop.f32.mrb[0].mxu0
      %v11121 = vadd.f32 %v10862, %v11120
      %v11122 = vpop.f32.mrb[0].mxu0
      %v11123 = vpop.f32.mrb[0].mxu0
      %v11124 = vadd.f32 %v10862, %v11123
      %v11125 = vpop.f32.mrb[0].mxu0
      %11126 = vdwg.mxu0
      %vm11127 = vcmask 97280
      %11128 = vst.msk [vmem:[%s170] sm:$0xff] %vm11127, %v11001
      %11129 = vst.msk [vmem:[%s170 + $0x8] sm:$0xff] %vm11127, %v11004
      %11130 = vst.msk [vmem:[%s170 + $0x10] sm:$0xff] %vm11127, %v11009
      %11131 = vst.msk [vmem:[%s170 + $0x18] sm:$0xff] %vm11127, %v11012
      %11132 = vst.msk [vmem:[%s170 + $0x20] sm:$0xff] %vm11127, %v11017
      %11133 = vst.msk [vmem:[%s170 + $0x28] sm:$0xff] %vm11127, %v11020
      %11134 = vst.msk [vmem:[%s170 + $0x30] sm:$0xff] %vm11127, %v11025
      %11135 = vst.msk [vmem:[%s170 + $0x38] sm:$0xff] %vm11127, %v11028
      %11136 = vst.msk [vmem:[%s170 + $0x40] sm:$0xff] %vm11127, %v11033
      %11137 = vst.msk [vmem:[%s170 + $0x48] sm:$0xff] %vm11127, %v11036
      %11138 = vst.msk [vmem:[%s170 + $0x50] sm:$0xff] %vm11127, %v11041
      %11139 = vst.msk [vmem:[%s170 + $0x58] sm:$0xff] %vm11127, %v11044
      %11140 = vst.msk [vmem:[%s170 + $0x60] sm:$0xff] %vm11127, %v11049
      %11141 = vst.msk [vmem:[%s170 + $0x68] sm:$0xff] %vm11127, %v11052
      %11142 = vst.msk [vmem:[%s170 + $0x70] sm:$0xff] %vm11127, %v11057
      %11143 = vst.msk [vmem:[%s170 + $0x78] sm:$0xff] %vm11127, %v11060
      %11144 = vst.msk [vmem:[%s170 + $0x80] sm:$0xff] %vm11127, %v11065
      %11145 = vst.msk [vmem:[%s170 + $0x88] sm:$0xff] %vm11127, %v11068
      %11146 = vst.msk [vmem:[%s170 + $0x90] sm:$0xff] %vm11127, %v11073
      %11147 = vst.msk [vmem:[%s170 + $0x98] sm:$0xff] %vm11127, %v11076
      %11148 = vst.msk [vmem:[%s170 + $0xa0] sm:$0xff] %vm11127, %v11081
      %11149 = vst.msk [vmem:[%s170 + $0xa8] sm:$0xff] %vm11127, %v11084
      %11150 = vst.msk [vmem:[%s170 + $0xb0] sm:$0xff] %vm11127, %v11089
      %11151 = vst.msk [vmem:[%s170 + $0xb8] sm:$0xff] %vm11127, %v11092
      %11152 = vst.msk [vmem:[%s170 + $0xc0] sm:$0xff] %vm11127, %v11097
      %11153 = vst.msk [vmem:[%s170 + $0xc8] sm:$0xff] %vm11127, %v11100
      %11154 = vst.msk [vmem:[%s170 + $0xd0] sm:$0xff] %vm11127, %v11105
      %11155 = vst.msk [vmem:[%s170 + $0xd8] sm:$0xff] %vm11127, %v11108
      %11156 = vst.msk [vmem:[%s170 + $0xe0] sm:$0xff] %vm11127, %v11113
      %11157 = vst.msk [vmem:[%s170 + $0xe8] sm:$0xff] %vm11127, %v11116
      %11158 = vst.msk [vmem:[%s170 + $0xf0] sm:$0xff] %vm11127, %v11121
      %11159 = vst.msk [vmem:[%s170 + $0xf8] sm:$0xff] %vm11127, %v11124
      %p11160 = scmp.lt.s32.totalorder %s14, 1
      %s11161 = scalar_select %p11160, %s14, 1
      %s11162 = smul.addr %s11161, 32
      %s11163 = smul.addr %s11162, 8
      %s11164 = scalar_lea.vmem %s3, %s11163
      // Predicated region
      $region33: #{tpu_custom_call.1} parent=31 // pred_check
        %p11165 = pneg %p100
      $region34: #{tpu_custom_call.1} parent=31 // pred_check_branch
        %11167 = sbr.rel (%p11165) target = $region36
      $region35: #{tpu_custom_call.1} parent=31 // pred_region
        _
      $region36: #{tpu_custom_call.1} parent=31 // pred_fallthru
        _
    $region32: #{tpu_custom_call.1} parent=5 // pred_fallthru
      _
    %p11168 = scmp.le.s32.totalorder 2, %s9
    // Predicated region
    $region37: #{tpu_custom_call.1} parent=5 // pred_check
      %p11169 = pneg %p11168
    $region38: #{tpu_custom_call.1} parent=5 // pred_check_branch
      %11171 = sbr.rel (%p11169) target = $region40
    $region39: #{tpu_custom_call.1} parent=5 // pred_region
      %s11172 = ssub.s32 %s9, 2
      // Predicated region
      $region41: #{tpu_custom_call.1} parent=39 // pred_check
        %p11173 = pneg %p106
      $region42: #{tpu_custom_call.1} parent=39 // pred_check_branch
        %11175 = sbr.rel (%p11173) target = $region44
      $region43: #{tpu_custom_call.1} parent=39 // pred_region
        %p11176 = scmp.lt.s32.totalorder %s15, 1
        %s11177 = scalar_select %p11176, %s15, 1
        %s11178 = smul.addr %s11177, 32
        %s11179 = smul.addr %s11178, 8
        %s11180 = scalar_lea.vmem %s3, %s11179
      $region44: #{tpu_custom_call.1} parent=39 // pred_fallthru
        _
    $region40: #{tpu_custom_call.1} parent=5 // pred_fallthru
      _
  $region6: #{tpu_custom_call.1} parent=0 // loop_footer
    %s13 = sadd.s32 1, %s9
  $region7: #{tpu_custom_call.1} parent=0 // loop_footer_branch
    %8 = sbr.rel target = $region3
  $region8: #{tpu_custom_call.1} parent=0 // loop_exit
    _

</llo_original>
